<compile_context>
chip_gen: v6e
topology: v6e:2x2x1
jax: 0.10.0
libtpu: 0.0.40
codegen_flags: <defaults>
</compile_context>

<pallas_src>
import functools

import jax
import jax.numpy as jnp
from jax.experimental import pallas as pl
from jax.experimental.pallas import tpu as pltpu


# --------------------------------------------------------------------------
# Kernel 1: streamed mean-pool over the node axis (MXU), per-split partials.
# --------------------------------------------------------------------------
def _pool_kernel(xl_ref, clxl_ref, px_ref, pcl_ref, acc_x, acc_cl,
                 *, n_nodes, tile_n, chunks_per_split, needs_mask):
    """Grid: (split, node-chunk).  Accumulates per-graph node sums on the MXU."""
    c = pl.program_id(1)

    @pl.when(c == 0)
    def _init():
        acc_x[...] = jnp.zeros_like(acc_x)
        acc_cl[...] = jnp.zeros_like(acc_cl)

    x = xl_ref[...]                    # (B, tile_n, D), encoder dtype
    cl = clxl_ref[...]
    b = x.shape[0]

    # All-ones pooling LHS with 8 identical sublane rows (natively tiled MXU
    # operand); every output row therefore holds the same per-graph node sum.
    ones = jnp.ones((b, 8, tile_n), dtype=x.dtype)

    def accumulate(xc, clc):
        acc_x[...] += jnp.einsum(
            "bst,btd->bsd", ones, xc,
            preferred_element_type=jnp.float32,
            precision=jax.lax.Precision.HIGHEST)
        acc_cl[...] += jnp.einsum(
            "bst,btd->bsd", ones, clc,
            preferred_element_type=jnp.float32,
            precision=jax.lax.Precision.HIGHEST)

    if needs_mask:
        start = (pl.program_id(0) * chunks_per_split + c) * tile_n
        full = start + tile_n <= n_nodes

        @pl.when(full)
        def _fast_path():                      # steady state: no mask work
            accumulate(x, cl)

        @pl.when(jnp.logical_not(full))
        def _tail_path():                      # only the (clamped) tail chunks
            # NaN-safe select: OOB block bytes may be garbage; 0*garbage = NaN.
            node = jax.lax.broadcasted_iota(jnp.int32, x.shape, 1) + start
            valid = node < n_nodes
            accumulate(jnp.where(valid, x, 0.0), jnp.where(valid, cl, 0.0))
    else:
        accumulate(x, cl)

    @pl.when(c == chunks_per_split - 1)
    def _store():
        px_ref[0] = acc_x[...]
        pcl_ref[0] = acc_cl[...]


# --------------------------------------------------------------------------
# Kernel 2: combine per-split sums, normalize, similarity (MXU), CrossEntropy.
# --------------------------------------------------------------------------
def _loss_kernel(px_ref, pcl_ref, loss_ref, *, n_nodes):
    b = px_ref.shape[1]

    def pooled_mean(ref):
        tot = ref[0]
        for s in range(1, ref.shape[0]):       # static unroll over splits
            tot = tot + ref[s]
        # the 8 pooling rows are identical copies of the node sum
        return jnp.sum(tot, axis=1) * (1.0 / (8.0 * n_nodes))   # (B, D)

    xg = pooled_mean(px_ref)                   # xl.mean(1)
    clxg = pooled_mean(pcl_ref)                # clxl.mean(1)

    def l2_normalize(v):                       # F.normalize(dim=1, eps=1e-12)
        norm = jnp.sqrt(jnp.sum(v * v, axis=-1, keepdims=True))
        return v / jnp.maximum(norm, 1e-12)

    e1 = l2_normalize(xg)
    e2 = l2_normalize(clxg)

    def gram(a, c):                            # a @ c.T on the MXU, f32 acc
        return jax.lax.dot_general(
            a, c, dimension_numbers=(((1,), (1,)), ((), ())),
            preferred_element_type=jnp.float32,
            precision=jax.lax.Precision.HIGHEST)

    rows = jax.lax.broadcasted_iota(jnp.int32, (b, b), 0)
    cols = jax.lax.broadcasted_iota(jnp.int32, (b, b), 1)
    diag = rows == cols

    # similarity = (emb @ emb.T - eye(2B)*1e12) * 20 in BxB blocks; [e1;e2] is
    # never materialized.  s21 == s12.T mathematically, but it is recomputed as
    # a fourth tiny matmul: in-kernel transposes of small unaligned (B,B) tiles
    # are a lowering risk and the MXU is completely idle in this epilogue.
    g11 = gram(e1, e1)
    g22 = gram(e2, e2)
    s11 = jnp.where(diag, g11 - 1e12, g11) * 20.0
    s22 = jnp.where(diag, g22 - 1e12, g22) * 20.0
    s12 = gram(e1, e2) * 20.0
    s21 = gram(e2, e1) * 20.0

    # CrossEntropy (mean) with label[i] = (B + i) % (2B):
    #   row i < B  -> logits [s11 | s12], target logit = diag(s12) = 20<e1_i,e2_i>
    #   row i >= B -> logits [s21 | s22], target logit = diag(s21) = same value
    m1 = jnp.maximum(jnp.max(s11, axis=-1, keepdims=True),
                     jnp.max(s12, axis=-1, keepdims=True))
    lse1 = m1 + jnp.log(jnp.sum(jnp.exp(s11 - m1), axis=-1, keepdims=True)
                        + jnp.sum(jnp.exp(s12 - m1), axis=-1, keepdims=True))
    m2 = jnp.maximum(jnp.max(s21, axis=-1, keepdims=True),
                     jnp.max(s22, axis=-1, keepdims=True))
    lse2 = m2 + jnp.log(jnp.sum(jnp.exp(s21 - m2), axis=-1, keepdims=True)
                        + jnp.sum(jnp.exp(s22 - m2), axis=-1, keepdims=True))

    tgt = 20.0 * jnp.sum(e1 * e2, axis=-1, keepdims=True)       # (B, 1)

    # TODO(synk): route this scalar through an SMEM output once vreg->sreg
    # stores of reduced values are guaranteed on all target generations; the
    # (1,1) VMEM tile costs a single masked vst + 4-byte DMA per call.
    loss_ref[0, 0] = 0.5 * (jnp.mean(lse1 - tgt) + jnp.mean(lse2 - tgt))


# --------------------------------------------------------------------------
# Wrapper
# --------------------------------------------------------------------------
def contrastive_loss_pallas(xl, clxl, *, tile_n=None, num_splits=None):
    """xl, clxl: (B, N, D) node-level representations of the two encoders.

    Fed in whatever dtype the encoders produce (no wrapper-side cast/pad).
    TODO(synk): for peak HBM BW have rep_model / rep2_model emit bf16,
    lane-dense hidden_dim outputs directly (fuse into the producer).
    """
    assert xl.shape == clxl.shape and xl.ndim == 3
    b, n, d = xl.shape
    elem = jnp.dtype(xl.dtype).itemsize

    # ---- per-generation VMEM budget -> node-chunk size -------------------
    try:
        vmem_cap = int(pltpu.get_tpu_info().vmem_capacity_bytes)
    except Exception:
        vmem_cap = 64 * 1024 * 1024          # conservative fallback (v7x)
    budget = int(vmem_cap * 0.75)            # ~96 MiB on 128 MiB parts, ~48 on v7x

    fixed = 2 * b * 8 * d * 4                # f32 accumulators
    fixed += 2 * 2 * b * 8 * d * 4           # double-buffered output blocks
    per_node = 4 * b * d * elem              # 2 inputs x 2 pipeline buffers
    per_node += 2 * b * 8 * elem             # ones-LHS pooling rows (tiny)

    if tile_n is None:
        tile_n = max(8, (budget - fixed) // max(per_node, 1))
    if tile_n >= n:
        tile_n = n                            # full axis: always layout-legal
    else:
        tile_n = max(8, (tile_n // 8) * 8)    # (8, x) rule for the node block

    chunks_total = pl.cdiv(n, tile_n)
    if num_splits is None:
        num_splits = 2 if chunks_total >= 2 else 1   # megacore split (v7x)
    num_splits = max(1, min(num_splits, chunks_total))
    chunks_per_split = pl.cdiv(chunks_total, num_splits)

    needs_mask = (n % tile_n != 0) or (num_splits * chunks_per_split != chunks_total)

    def node_block(s, c):
        # Clamp so fully-out-of-range chunks (uneven split) re-read the last
        # valid chunk; the in-kernel mask zeroes their contribution.
        chunk = jnp.minimum(s * chunks_per_split + c, chunks_total - 1)
        return (0, chunk, 0)

    # VMEM limit = actual need + headroom (never capped below the need).
    need = (4 * b * tile_n * d * elem + fixed
            + 2 * b * 8 * tile_n * elem + 2 * b * 8 * d * 4)
    vmem_limit = int(min(vmem_cap, need + need // 4 + (2 << 20)))

    pool_kernel = functools.partial(
        _pool_kernel, n_nodes=n, tile_n=tile_n,
        chunks_per_split=chunks_per_split, needs_mask=needs_mask)

    part_shape = jax.ShapeDtypeStruct((num_splits, b, 8, d), jnp.float32)
    px, pcl = pl.pallas_call(
        pool_kernel,
        out_shape=(part_shape, part_shape),
        grid_spec=pltpu.PrefetchScalarGridSpec(
            num_scalar_prefetch=0,
            grid=(num_splits, chunks_per_split),
            in_specs=[
                pl.BlockSpec((b, tile_n, d), node_block),
                pl.BlockSpec((b, tile_n, d), node_block),
            ],
            out_specs=(
                pl.BlockSpec((1, b, 8, d), lambda s, c: (s, 0, 0, 0)),
                pl.BlockSpec((1, b, 8, d), lambda s, c: (s, 0, 0, 0)),
            ),
            scratch_shapes=[
                pltpu.VMEM((b, 8, d), jnp.float32),
                pltpu.VMEM((b, 8, d), jnp.float32),
            ],
        ),
        compiler_params=pltpu.CompilerParams(
            dimension_semantics=("parallel", "arbitrary"),
            vmem_limit_bytes=vmem_limit,
        ),
    )(xl, clxl)

    # Tiny epilogue kernel: inputs/outputs are whole small arrays in VMEM.
    loss = pl.pallas_call(
        functools.partial(_loss_kernel, n_nodes=n),
        out_shape=jax.ShapeDtypeStruct((1, 1), jnp.float32),
    )(px, pcl)
    return loss[0, 0]


# --------------------------------------------------------------------------
# Pure-JAX reference mirroring the PyTorch forward.
# --------------------------------------------------------------------------
def reference_loss(xl, clxl):
    xg = xl.mean(axis=1)
    clxg = clxl.mean(axis=1)
    emb = jnp.concatenate([xg, clxg], axis=0)
    emb = emb / jnp.maximum(jnp.linalg.norm(emb, axis=1, keepdims=True), 1e-12)
    bsz = xg.shape[0]
    sim = jnp.matmul(emb, emb.T, precision=jax.lax.Precision.HIGHEST)
    sim = (sim - jnp.eye(2 * bsz) * 1e12) * 20.0
    labels = (jnp.arange(2 * bsz) + bsz) % (2 * bsz)
    logp = jax.nn.log_softmax(sim, axis=-1)
    return -jnp.mean(logp[jnp.arange(2 * bsz), labels])


if __name__ == "__main__":
    key = jax.random.PRNGKey(0)
    B, N, F_IN, D = 4, 72, 16, 32      # hidden_dim = 32, 72 nodes per graph
    k1, k2, k3, k4 = jax.random.split(key, 4)

    # Synthetic `data`: node features + 3-D positions.
    node_feat = jax.random.normal(k1, (B, N, F_IN), jnp.float32)
    pos = jax.random.normal(k2, (B, N, 3), jnp.float32)
    inp = jnp.concatenate([node_feat, pos], axis=-1)             # (B, N, F_IN+3)

    # TODO(synk): rep_model / rep2_model are arbitrary external GNN encoders;
    # stand-ins here are deterministic linear node encoders (glue, not the loss).
    W1 = jax.random.normal(k3, (F_IN + 3, D), jnp.float32) / jnp.sqrt(F_IN + 3)
    W2 = jax.random.normal(k4, (F_IN + 3, D), jnp.float32) / jnp.sqrt(F_IN + 3)
    xl = jnp.einsum("bnf,fd->bnd", inp, W1)                      # rep_model output
    clxl = jnp.einsum("bnf,fd->bnd", inp, W2)                    # rep2_model output

    # Explicit small tiling: exercises the parallel split axis, full chunks,
    # the NaN-safe masked tail chunk (72 % 16 != 0) and a clamped OOB chunk.
    loss_tiled = jax.block_until_ready(
        contrastive_loss_pallas(xl, clxl, tile_n=16, num_splits=2))
    # Auto (VMEM-budget-derived) tiling path.
    loss_auto = jax.block_until_ready(contrastive_loss_pallas(xl, clxl))

    ref = reference_loss(xl, clxl)

    assert jnp.allclose(loss_tiled, ref, atol=5e-3, rtol=5e-3), (loss_tiled, ref)
    assert jnp.allclose(loss_auto, ref, atol=5e-3, rtol=5e-3), (loss_auto, ref)
    print("KERNEL_OK")
</pallas_src>

<mosaic_0001>
module attributes {stable_mosaic.version = 11 : i64} {
  func.func @_pool_kernel(%arg0: i32, %arg1: i32, %arg2: memref<4x16x32xf32, #tpu.memory_space<vmem>>, %arg3: memref<4x16x32xf32, #tpu.memory_space<vmem>>, %arg4: memref<1x4x8x32xf32, #tpu.memory_space<vmem>>, %arg5: memref<1x4x8x32xf32, #tpu.memory_space<vmem>>, %arg6: memref<4x8x32xf32, #tpu.memory_space<vmem>>, %arg7: memref<4x8x32xf32, #tpu.memory_space<vmem>>) attributes {dimension_semantics = [#tpu.dimension_semantics<parallel>, #tpu.dimension_semantics<arbitrary>], iteration_bounds = array<i64: 2, 3>, scalar_prefetch = 0 : i64, scratch_operands = 2 : i64, tpu.core_type = #tpu.core_type<tc>, window_params = [{transform_indices = @transform_0, window_bounds = array<i64: 4, 16, 32>}, {transform_indices = @transform_1, window_bounds = array<i64: 4, 16, 32>}, {transform_indices = @transform_2, window_bounds = array<i64: 1, 4, 8, 32>}, {transform_indices = @transform_3, window_bounds = array<i64: 1, 4, 8, 32>}]} {
    %c0_i32 = arith.constant 0 : i32
    %0 = arith.cmpi eq, %arg1, %c0_i32 : i32
    %1 = arith.extui %0 : i1 to i32
    %c0_i32_0 = arith.constant 0 : i32
    %2 = arith.cmpi ne, %1, %c0_i32_0 : i32
    scf.if %2 {
      %cst_10 = arith.constant 0.000000e+00 : f32
      %19 = vector.broadcast %cst_10 : f32 to vector<4x8x32xf32>
      %c0_11 = arith.constant 0 : index
      %c0_12 = arith.constant 0 : index
      %c0_13 = arith.constant 0 : index
      %20 = vector.load %arg6[%c0_11, %c0_12, %c0_13] : memref<4x8x32xf32, #tpu.memory_space<vmem>>, vector<4x8x32xf32>
      tpu.vector_store %arg6[%c0_11, %c0_12, %c0_13], %19 {strides = array<i32>} : memref<4x8x32xf32, #tpu.memory_space<vmem>>, vector<4x8x32xf32>,
      %cst_14 = arith.constant 0.000000e+00 : f32
      %21 = vector.broadcast %cst_14 : f32 to vector<4x8x32xf32>
      %c0_15 = arith.constant 0 : index
      %c0_16 = arith.constant 0 : index
      %c0_17 = arith.constant 0 : index
      %22 = vector.load %arg7[%c0_15, %c0_16, %c0_17] : memref<4x8x32xf32, #tpu.memory_space<vmem>>, vector<4x8x32xf32>
      tpu.vector_store %arg7[%c0_15, %c0_16, %c0_17], %21 {strides = array<i32>} : memref<4x8x32xf32, #tpu.memory_space<vmem>>, vector<4x8x32xf32>,
    } else {
    }
    %c0 = arith.constant 0 : index
    %c0_1 = arith.constant 0 : index
    %c0_2 = arith.constant 0 : index
    %3 = vector.load %arg2[%c0, %c0_1, %c0_2] : memref<4x16x32xf32, #tpu.memory_space<vmem>>, vector<4x16x32xf32>
    %c0_3 = arith.constant 0 : index
    %c0_4 = arith.constant 0 : index
    %c0_5 = arith.constant 0 : index
    %4 = vector.load %arg3[%c0_3, %c0_4, %c0_5] : memref<4x16x32xf32, #tpu.memory_space<vmem>>, vector<4x16x32xf32>
    %cst = arith.constant 1.000000e+00 : f32
    %5 = vector.broadcast %cst : f32 to vector<4x8x16xf32>
    %c3_i32 = arith.constant 3 : i32
    %6 = arith.muli %arg0, %c3_i32 : i32
    %7 = arith.addi %6, %arg1 : i32
    %c16_i32 = arith.constant 16 : i32
    %8 = arith.muli %7, %c16_i32 : i32
    %c16_i32_6 = arith.constant 16 : i32
    %9 = arith.addi %8, %c16_i32_6 : i32
    %c72_i32 = arith.constant 72 : i32
    %10 = arith.cmpi sle, %9, %c72_i32 : i32
    %11 = arith.extui %10 : i1 to i32
    %c0_i32_7 = arith.constant 0 : i32
    %12 = arith.cmpi ne, %11, %c0_i32_7 : i32
    scf.if %12 {
      %c0_10 = arith.constant 0 : index
      %c0_11 = arith.constant 0 : index
      %c0_12 = arith.constant 0 : index
      %19 = vector.load %arg6[%c0_10, %c0_11, %c0_12] : memref<4x8x32xf32, #tpu.memory_space<vmem>>, vector<4x8x32xf32>
      "tpu.trace_start"() <{level = 10 : i32, message = "bst,btd->bsd"}> : () -> ()
      %cst_13 = arith.constant dense<0.000000e+00> : vector<4x8x32xf32>
      %20 = tpu.matmul %5, %3, %cst_13 {dimension_numbers = #tpu.dot_dimension_numbers<[2], [1], [1], [2], [0, 0, 0, 1, 1, 2], [0], [0]>, precision = #tpu.contract_precision<fp32>} : vector<4x8x16xf32>, vector<4x16x32xf32>, vector<4x8x32xf32> -> vector<4x8x32xf32>
      "tpu.trace_stop"() : () -> ()
      %21 = arith.addf %19, %20 : vector<4x8x32xf32>
      %c0_14 = arith.constant 0 : index
      %c0_15 = arith.constant 0 : index
      %c0_16 = arith.constant 0 : index
      %22 = vector.load %arg6[%c0_14, %c0_15, %c0_16] : memref<4x8x32xf32, #tpu.memory_space<vmem>>, vector<4x8x32xf32>
      tpu.vector_store %arg6[%c0_14, %c0_15, %c0_16], %21 {strides = array<i32>} : memref<4x8x32xf32, #tpu.memory_space<vmem>>, vector<4x8x32xf32>,
      %c0_17 = arith.constant 0 : index
      %c0_18 = arith.constant 0 : index
      %c0_19 = arith.constant 0 : index
      %23 = vector.load %arg7[%c0_17, %c0_18, %c0_19] : memref<4x8x32xf32, #tpu.memory_space<vmem>>, vector<4x8x32xf32>
      "tpu.trace_start"() <{level = 10 : i32, message = "bst,btd->bsd"}> : () -> ()
      %cst_20 = arith.constant dense<0.000000e+00> : vector<4x8x32xf32>
      %24 = tpu.matmul %5, %4, %cst_20 {dimension_numbers = #tpu.dot_dimension_numbers<[2], [1], [1], [2], [0, 0, 0, 1, 1, 2], [0], [0]>, precision = #tpu.contract_precision<fp32>} : vector<4x8x16xf32>, vector<4x16x32xf32>, vector<4x8x32xf32> -> vector<4x8x32xf32>
      "tpu.trace_stop"() : () -> ()
      %25 = arith.addf %23, %24 : vector<4x8x32xf32>
      %c0_21 = arith.constant 0 : index
      %c0_22 = arith.constant 0 : index
      %c0_23 = arith.constant 0 : index
      %26 = vector.load %arg7[%c0_21, %c0_22, %c0_23] : memref<4x8x32xf32, #tpu.memory_space<vmem>>, vector<4x8x32xf32>
      tpu.vector_store %arg7[%c0_21, %c0_22, %c0_23], %25 {strides = array<i32>} : memref<4x8x32xf32, #tpu.memory_space<vmem>>, vector<4x8x32xf32>,
    } else {
    }
    %true = arith.constant true
    %13 = arith.xori %10, %true : i1
    %14 = arith.extui %13 : i1 to i32
    %c0_i32_8 = arith.constant 0 : i32
    %15 = arith.cmpi ne, %14, %c0_i32_8 : i32
    scf.if %15 {
      %19 = tpu.iota {dimensions = array<i32: 1>} : vector<4x16x32xi32>
      %20 = vector.broadcast %8 : i32 to vector<4x16x32xi32>
      %21 = arith.addi %19, %20 : vector<4x16x32xi32>
      %c72_i32_10 = arith.constant 72 : i32
      %22 = vector.broadcast %c72_i32_10 : i32 to vector<4x16x32xi32>
      %23 = arith.cmpi slt, %21, %22 : vector<4x16x32xi32>
      %cst_11 = arith.constant 0.000000e+00 : f32
      %24 = vector.broadcast %cst_11 : f32 to vector<4x16x32xf32>
      %25 = arith.select %23, %3, %24 : vector<4x16x32xi1>, vector<4x16x32xf32>
      %cst_12 = arith.constant 0.000000e+00 : f32
      %26 = vector.broadcast %cst_12 : f32 to vector<4x16x32xf32>
      %27 = arith.select %23, %4, %26 : vector<4x16x32xi1>, vector<4x16x32xf32>
      %c0_13 = arith.constant 0 : index
      %c0_14 = arith.constant 0 : index
      %c0_15 = arith.constant 0 : index
      %28 = vector.load %arg6[%c0_13, %c0_14, %c0_15] : memref<4x8x32xf32, #tpu.memory_space<vmem>>, vector<4x8x32xf32>
      "tpu.trace_start"() <{level = 10 : i32, message = "bst,btd->bsd"}> : () -> ()
      %cst_16 = arith.constant dense<0.000000e+00> : vector<4x8x32xf32>
      %29 = tpu.matmul %5, %25, %cst_16 {dimension_numbers = #tpu.dot_dimension_numbers<[2], [1], [1], [2], [0, 0, 0, 1, 1, 2], [0], [0]>, precision = #tpu.contract_precision<fp32>} : vector<4x8x16xf32>, vector<4x16x32xf32>, vector<4x8x32xf32> -> vector<4x8x32xf32>
      "tpu.trace_stop"() : () -> ()
      %30 = arith.addf %28, %29 : vector<4x8x32xf32>
      %c0_17 = arith.constant 0 : index
      %c0_18 = arith.constant 0 : index
      %c0_19 = arith.constant 0 : index
      %31 = vector.load %arg6[%c0_17, %c0_18, %c0_19] : memref<4x8x32xf32, #tpu.memory_space<vmem>>, vector<4x8x32xf32>
      tpu.vector_store %arg6[%c0_17, %c0_18, %c0_19], %30 {strides = array<i32>} : memref<4x8x32xf32, #tpu.memory_space<vmem>>, vector<4x8x32xf32>,
      %c0_20 = arith.constant 0 : index
      %c0_21 = arith.constant 0 : index
      %c0_22 = arith.constant 0 : index
      %32 = vector.load %arg7[%c0_20, %c0_21, %c0_22] : memref<4x8x32xf32, #tpu.memory_space<vmem>>, vector<4x8x32xf32>
      "tpu.trace_start"() <{level = 10 : i32, message = "bst,btd->bsd"}> : () -> ()
      %cst_23 = arith.constant dense<0.000000e+00> : vector<4x8x32xf32>
      %33 = tpu.matmul %5, %27, %cst_23 {dimension_numbers = #tpu.dot_dimension_numbers<[2], [1], [1], [2], [0, 0, 0, 1, 1, 2], [0], [0]>, precision = #tpu.contract_precision<fp32>} : vector<4x8x16xf32>, vector<4x16x32xf32>, vector<4x8x32xf32> -> vector<4x8x32xf32>
      "tpu.trace_stop"() : () -> ()
      %34 = arith.addf %32, %33 : vector<4x8x32xf32>
      %c0_24 = arith.constant 0 : index
      %c0_25 = arith.constant 0 : index
      %c0_26 = arith.constant 0 : index
      %35 = vector.load %arg7[%c0_24, %c0_25, %c0_26] : memref<4x8x32xf32, #tpu.memory_space<vmem>>, vector<4x8x32xf32>
      tpu.vector_store %arg7[%c0_24, %c0_25, %c0_26], %34 {strides = array<i32>} : memref<4x8x32xf32, #tpu.memory_space<vmem>>, vector<4x8x32xf32>,
    } else {
    }
    %c2_i32 = arith.constant 2 : i32
    %16 = arith.cmpi eq, %arg1, %c2_i32 : i32
    %17 = arith.extui %16 : i1 to i32
    %c0_i32_9 = arith.constant 0 : i32
    %18 = arith.cmpi ne, %17, %c0_i32_9 : i32
    scf.if %18 {
      %c0_10 = arith.constant 0 : index
      %c0_11 = arith.constant 0 : index
      %c0_12 = arith.constant 0 : index
      %19 = vector.load %arg6[%c0_10, %c0_11, %c0_12] : memref<4x8x32xf32, #tpu.memory_space<vmem>>, vector<4x8x32xf32>
      %c0_13 = arith.constant 0 : index
      %c0_14 = arith.constant 0 : index
      %c0_15 = arith.constant 0 : index
      %c0_16 = arith.constant 0 : index
      %20 = vector.load %arg4[%c0_13, %c0_14, %c0_15, %c0_16] : memref<1x4x8x32xf32, #tpu.memory_space<vmem>>, vector<1x4x8x32xf32>
      %21 = vector.shape_cast %20 : vector<1x4x8x32xf32> to vector<4x8x32xf32>
      %22 = vector.shape_cast %19 : vector<4x8x32xf32> to vector<1x4x8x32xf32>
      tpu.vector_store %arg4[%c0_13, %c0_14, %c0_15, %c0_16], %22 {strides = array<i32>} : memref<1x4x8x32xf32, #tpu.memory_space<vmem>>, vector<1x4x8x32xf32>,
      %c0_17 = arith.constant 0 : index
      %c0_18 = arith.constant 0 : index
      %c0_19 = arith.constant 0 : index
      %23 = vector.load %arg7[%c0_17, %c0_18, %c0_19] : memref<4x8x32xf32, #tpu.memory_space<vmem>>, vector<4x8x32xf32>
      %c0_20 = arith.constant 0 : index
      %c0_21 = arith.constant 0 : index
      %c0_22 = arith.constant 0 : index
      %c0_23 = arith.constant 0 : index
      %24 = vector.load %arg5[%c0_20, %c0_21, %c0_22, %c0_23] : memref<1x4x8x32xf32, #tpu.memory_space<vmem>>, vector<1x4x8x32xf32>
      %25 = vector.shape_cast %24 : vector<1x4x8x32xf32> to vector<4x8x32xf32>
      %26 = vector.shape_cast %23 : vector<4x8x32xf32> to vector<1x4x8x32xf32>
      tpu.vector_store %arg5[%c0_20, %c0_21, %c0_22, %c0_23], %26 {strides = array<i32>} : memref<1x4x8x32xf32, #tpu.memory_space<vmem>>, vector<1x4x8x32xf32>,
    } else {
    }
    return
  }
  func.func @transform_0(%arg0: i32, %arg1: i32) -> (i32, i32, i32) {
    %c3_i32 = arith.constant 3 : i32
    %0 = arith.muli %arg0, %c3_i32 : i32
    %1 = arith.addi %0, %arg1 : i32
    %c4_i32 = arith.constant 4 : i32
    %2 = arith.minsi %1, %c4_i32 : i32
    %c0_i32 = arith.constant 0 : i32
    %c0_i32_0 = arith.constant 0 : i32
    %c0_i32_1 = arith.constant 0 : i32
    return %c0_i32, %2, %c0_i32_0 : i32, i32, i32
  }
  func.func @transform_1(%arg0: i32, %arg1: i32) -> (i32, i32, i32) {
    %c3_i32 = arith.constant 3 : i32
    %0 = arith.muli %arg0, %c3_i32 : i32
    %1 = arith.addi %0, %arg1 : i32
    %c4_i32 = arith.constant 4 : i32
    %2 = arith.minsi %1, %c4_i32 : i32
    %c0_i32 = arith.constant 0 : i32
    %c0_i32_0 = arith.constant 0 : i32
    %c0_i32_1 = arith.constant 0 : i32
    return %c0_i32, %2, %c0_i32_0 : i32, i32, i32
  }
  func.func @transform_2(%arg0: i32, %arg1: i32) -> (i32, i32, i32, i32) {
    %c0_i32 = arith.constant 0 : i32
    %c0_i32_0 = arith.constant 0 : i32
    %c0_i32_1 = arith.constant 0 : i32
    %c0_i32_2 = arith.constant 0 : i32
    return %arg0, %c0_i32, %c0_i32_0, %c0_i32_1 : i32, i32, i32, i32
  }
  func.func @transform_3(%arg0: i32, %arg1: i32) -> (i32, i32, i32, i32) {
    %c0_i32 = arith.constant 0 : i32
    %c0_i32_0 = arith.constant 0 : i32
    %c0_i32_1 = arith.constant 0 : i32
    %c0_i32_2 = arith.constant 0 : i32
    return %arg0, %c0_i32, %c0_i32_0, %c0_i32_1 : i32, i32, i32, i32
  }
}

</mosaic_0001>

<llo_original>
// kernel: tpu_custom_call.1
$region0: #{tpu_custom_call.1}
  #allocation0 [shape = 'u32[]', space=smem, size = 0x4, offset = 0x4, fixed_abs, tag = 'smem constant byte address 0x4 - core index']
  #allocation1 [shape = 'u32[144,128]{1,0:T(1,128)}', space=vmem, size = 0x12000, scoped, tag = 'internal scratch']
  #allocation2 [shape = 'f32[4,8,32]{2,1,0:T(8,128)}', space=vmem, size = 0x4000, scoped, tag = 'scratch operand']
  #allocation3 [shape = 'f32[4,8,32]{2,1,0:T(8,128)}', space=vmem, size = 0x4000, scoped, tag = 'scratch operand']
  %s0 = inlined_call_operand.vmem [shape: f32[4,72,32], index: 0, kind: input, shape index: {}]
  %s1 = inlined_call_operand.vmem [shape: f32[4,72,32], index: 1, kind: input, shape index: {}]
  %s2 = inlined_call_operand.hbm [shape: f32[2,4,8,32], index: 2, kind: output, shape index: {0}]
  %s3 = inlined_call_operand.hbm [shape: f32[2,4,8,32], index: 3, kind: output, shape index: {1}]
  %4 = xla_tuple %s2, %s3
  %s5 = sld [smem:[#allocation0]]
  $region169: #{tpu_custom_call.1} parent=0
    _
  %s7 = ssub.s32 1, %s5
  %s8 = scalar_select 0, %s7, %s5
  $region1: #{tpu_custom_call.1} parent=0
    #allocation4 [shape = 'u8[65536]{0}', space=vmem, size = 0x10000, scoped, tag = 'input window, operand 0']
    #allocation5 [shape = 'u8[65536]{0}', space=vmem, size = 0x10000, scoped, tag = 'input window, operand 1']
    #allocation6 [shape = 'u8[32768]{0}', space=vmem, size = 0x8000, scoped, tag = 'output window, operand 0']
    #allocation7 [shape = 's32[2]{0}', space=sflag, size = 0x8, scoped, tag = 'scoped memory for tpu_custom_call.1']
    #allocation8 [shape = 'u8[32768]{0}', space=vmem, size = 0x8000, scoped, tag = 'output window, operand 1']
    #allocation9 [shape = 's32[2]{0}', space=sflag, size = 0x8, scoped, tag = 'scoped memory for tpu_custom_call.1']
    %9 = vsyncpa [#allocation7], 0
    %s10 = scalar_lea.sflag [#allocation7], 1
    %11 = vsyncpa %s10, 0
    %12 = vsyncpa [#allocation9], 0
    %s13 = scalar_lea.sflag [#allocation9], 1
    %14 = vsyncpa %s13, 0
    loop: start=0, step=1, limit=8
    $region2: #{tpu_custom_call.1} parent=1 // loop_pre_header
      _
    $region3: #{tpu_custom_call.1} parent=1 // loop_header
      %s16 = sphi 0, %s20
      %p17 = scmp.ge.s32.totalorder %s16, 8
      %s23 = sphi 0, %s35
      %s24 = sphi 0, %s31
      %s25 = sphi 0, %s23
      %s26 = sphi 0, %s24
      %s27 = sphi 0, %s25
      %s28 = sphi 0, %s26
      %s46 = sphi 0, %s48
      %s49 = sphi 0, %s46
      %s50 = sphi 0, %s49
      %s66 = sphi 0, %s50
      %s80 = sphi 0, %s82
      %s83 = sphi 0, %s80
      %s84 = sphi 0, %s83
      %s100 = sphi 0, %s84
      %s106 = sphi 0, %s108
      %s109 = sphi 0, %s106
      %s110 = sphi 0, %s109
      %s126 = sphi 0, %s110
      %s132 = sphi 0, %s134
      %s135 = sphi 0, %s132
      %s136 = sphi 0, %s135
      %s152 = sphi 0, %s136
    $region4: #{tpu_custom_call.1} parent=1 // loop_header_branch
      %19 = sbr.rel (%p17) target = $region8
    $region5: #{tpu_custom_call.1} parent=1 // loop_body
      %s21 = ssub.s32 %s16, 1
      %s22 = ssub.s32 %s16, 2
      %s29 = sadd.s32 1, %s24
      %p30 = scmp.ge.s32.totalorder %s29, 3
      %s31 = scalar_select %p30, 0, %s29
      %s32 = sadd.s32 1, %s23
      %s33 = scalar_select %p30, %s32, %s23
      %p34 = scmp.ge.s32.totalorder %s33, 2
      %s35 = scalar_select %p34, 0, %s33
      %s36 = smul.u32 %s23, 3
      %s37 = sadd.s32 %s36, %s24
      %p38 = scmp.lt.s32.totalorder %s37, 4
      %s39 = scalar_select %p38, %s37, 4
      %s40 = smul.u32 %s35, 3
      %s41 = sadd.s32 %s40, %s31
      %p42 = scmp.lt.s32.totalorder %s41, 4
      %s43 = scalar_select %p42, %s41, 4
      %s44 = ssub.s32 %s39, %s43
      %p45 = scmp.eq.s32.totalorder %s44, 0
      %s47 = sadd.s32 %s46, 1
      %s48 = scalar_select %p45, %s46, %s47
      %p51 = pneg %p45
      %p52 = scmp.eq.s32.totalorder %s16, 5
      %p53 = por %p51, %p52
      %p54 = scmp.ne.s32.totalorder %s46, %s49
      %p55 = scmp.eq.s32.totalorder %s16, 0
      %p56 = por %p54, %p55
      %p57 = scmp.ne.s32.totalorder %s46, %s49
      %p58 = scmp.eq.s32.totalorder %s21, 5
      %p59 = por %p57, %p58
      %p60 = scmp.ne.s32.totalorder %s49, %s50
      %p61 = scmp.eq.s32.totalorder %s21, 0
      %p62 = por %p60, %p61
      %p63 = scmp.ne.s32.totalorder %s49, %s50
      %p64 = scmp.eq.s32.totalorder %s22, 5
      %p65 = por %p63, %p64
      %p67 = scmp.ne.s32.totalorder %s50, %s66
      %p68 = scmp.eq.s32.totalorder %s22, 0
      %p69 = por %p67, %p68
      %s70 = smul.u32 %s23, 3
      %s71 = sadd.s32 %s70, %s24
      %p72 = scmp.lt.s32.totalorder %s71, 4
      %s73 = scalar_select %p72, %s71, 4
      %s74 = smul.u32 %s35, 3
      %s75 = sadd.s32 %s74, %s31
      %p76 = scmp.lt.s32.totalorder %s75, 4
      %s77 = scalar_select %p76, %s75, 4
      %s78 = ssub.s32 %s73, %s77
      %p79 = scmp.eq.s32.totalorder %s78, 0
      %s81 = sadd.s32 %s80, 1
      %s82 = scalar_select %p79, %s80, %s81
      %p85 = pneg %p79
      %p86 = scmp.eq.s32.totalorder %s16, 5
      %p87 = por %p85, %p86
      %p88 = scmp.ne.s32.totalorder %s80, %s83
      %p89 = scmp.eq.s32.totalorder %s16, 0
      %p90 = por %p88, %p89
      %p91 = scmp.ne.s32.totalorder %s80, %s83
      %p92 = scmp.eq.s32.totalorder %s21, 5
      %p93 = por %p91, %p92
      %p94 = scmp.ne.s32.totalorder %s83, %s84
      %p95 = scmp.eq.s32.totalorder %s21, 0
      %p96 = por %p94, %p95
      %p97 = scmp.ne.s32.totalorder %s83, %s84
      %p98 = scmp.eq.s32.totalorder %s22, 5
      %p99 = por %p97, %p98
      %p101 = scmp.ne.s32.totalorder %s84, %s100
      %p102 = scmp.eq.s32.totalorder %s22, 0
      %p103 = por %p101, %p102
      %s104 = ssub.s32 %s23, %s35
      %p105 = scmp.eq.s32.totalorder %s104, 0
      %s107 = sadd.s32 %s106, 1
      %s108 = scalar_select %p105, %s106, %s107
      %p111 = pneg %p105
      %p112 = scmp.eq.s32.totalorder %s16, 5
      %p113 = por %p111, %p112
      %p114 = scmp.ne.s32.totalorder %s106, %s109
      %p115 = scmp.eq.s32.totalorder %s16, 0
      %p116 = por %p114, %p115
      %p117 = scmp.ne.s32.totalorder %s106, %s109
      %p118 = scmp.eq.s32.totalorder %s21, 5
      %p119 = por %p117, %p118
      %p120 = scmp.ne.s32.totalorder %s109, %s110
      %p121 = scmp.eq.s32.totalorder %s21, 0
      %p122 = por %p120, %p121
      %p123 = scmp.ne.s32.totalorder %s109, %s110
      %p124 = scmp.eq.s32.totalorder %s22, 5
      %p125 = por %p123, %p124
      %p127 = scmp.ne.s32.totalorder %s110, %s126
      %p128 = scmp.eq.s32.totalorder %s22, 0
      %p129 = por %p127, %p128
      %s130 = ssub.s32 %s23, %s35
      %p131 = scmp.eq.s32.totalorder %s130, 0
      %s133 = sadd.s32 %s132, 1
      %s134 = scalar_select %p131, %s132, %s133
      %p137 = pneg %p131
      %p138 = scmp.eq.s32.totalorder %s16, 5
      %p139 = por %p137, %p138
      %p140 = scmp.ne.s32.totalorder %s132, %s135
      %p141 = scmp.eq.s32.totalorder %s16, 0
      %p142 = por %p140, %p141
      %p143 = scmp.ne.s32.totalorder %s132, %s135
      %p144 = scmp.eq.s32.totalorder %s21, 5
      %p145 = por %p143, %p144
      %p146 = scmp.ne.s32.totalorder %s135, %s136
      %p147 = scmp.eq.s32.totalorder %s21, 0
      %p148 = por %p146, %p147
      %p149 = scmp.ne.s32.totalorder %s135, %s136
      %p150 = scmp.eq.s32.totalorder %s22, 5
      %p151 = por %p149, %p150
      %p153 = scmp.ne.s32.totalorder %s136, %s152
      %p154 = scmp.eq.s32.totalorder %s22, 0
      %p155 = por %p153, %p154
      %p156 = scmp.le.s32.totalorder 1, %s16
      %p157 = scmp.lt.s32.totalorder %s16, 7
      %p158 = pnand %p156, %p157
      %p159 = pneg %p158
      // Predicated region
      $region9: #{tpu_custom_call.1} parent=5 // pred_check
        _
      $region10: #{tpu_custom_call.1} parent=5 // pred_check_branch
        %161 = sbr.rel (%p158) target = $region12
      $region11: #{tpu_custom_call.1} parent=5 // pred_region
        %s162 = ssub.s32 %s16, 1
      $region12: #{tpu_custom_call.1} parent=5 // pred_fallthru
        _
      %p163 = scmp.lt.s32.totalorder %s16, 6
      // Predicated region
      $region13: #{tpu_custom_call.1} parent=5 // pred_check
        %p164 = pneg %p163
      $region14: #{tpu_custom_call.1} parent=5 // pred_check_branch
        %166 = sbr.rel (%p164) target = $region16
      $region15: #{tpu_custom_call.1} parent=5 // pred_region
        // Predicated region
        $region17: #{tpu_custom_call.1} parent=15 // pred_check
          %p167 = pneg %p56
        $region18: #{tpu_custom_call.1} parent=15 // pred_check_branch
          %169 = sbr.rel (%p167) target = $region20
        $region19: #{tpu_custom_call.1} parent=15 // pred_region
          %s170 = sand.u32 %s46, 1
          %s171 = sand.u32 %s46, 1
          %s172 = smul.addr %s171, 64
          %s173 = scalar_lea.vmem [#allocation4], %s172
          %s174 = smul.u32 %s23, 3
          %s175 = sadd.s32 %s174, %s24
          %p176 = scmp.lt.s32.totalorder %s175, 4
          %s177 = scalar_select %p176, %s175, 4
          %s178 = smul.u32 2, %s177
          %s179 = ssub.s32 9, %s178
          %p180 = scmp.lt.s32.totalorder %s179, 2
          %s181 = scalar_select %p180, %s179, 2
          %s182 = smul.u32 512, %s181
          %p183 = scmp.ne.s32.totalorder 0, %s182
          %s184 = smul.addr %s178, 8
          %s185 = scalar_lea.vmem %s0, %s184
          // Predicated region
          $region21: #{tpu_custom_call.1} parent=19 // pred_check
            %p186 = pneg %p183
          $region22: #{tpu_custom_call.1} parent=19 // pred_check_branch
            %188 = sbr.rel (%p186) target = $region24
          $region23: #{tpu_custom_call.1} parent=19 // pred_region
            // Predicated region
            $region25: #{tpu_custom_call.1} parent=23 // pred_check
              _
            $region26: #{tpu_custom_call.1} parent=23 // pred_check_branch
              %190 = sbr.rel (0) target = $region28
            $region27: #{tpu_custom_call.1} parent=23 // pred_region
              // Predicated region
              $region47: #{tpu_custom_call.1} parent=27 // pred_check
                _
              $region48: #{tpu_custom_call.1} parent=27 // pred_check_branch
                %260 = sbr.rel (0) target = $region50
              $region49: #{tpu_custom_call.1} parent=27 // pred_region
                %s261 = sshrl.u32 %s181, 1
                // While loop
                $region51: #{tpu_custom_call.1} parent=49 // loop_pre_header
                  _
                $region52: #{tpu_custom_call.1} parent=49 // loop_header
                  %s263 = sphi 0, %s265
                  %p264 = scmp.ge.s32.totalorder %s263, %s261
                  %s268 = sphi 0, %s289
                  %s269 = sphi %s185, %s292
                  %s270 = sphi %s173, %s293
                $region53: #{tpu_custom_call.1} parent=49 // loop_header_branch
                  %267 = sbr.rel (%p264) target = $region57
                $region54: #{tpu_custom_call.1} parent=49 // loop_body
                  %v271 = vld [vmem:[%s269] sm:$0xff]
                  %272 = vst [vmem:[%s270] sm:$0xff] %v271
                  %v273 = vld [vmem:[%s269 + $0x8] sm:$0xff]
                  %274 = vst [vmem:[%s270 + $0x8] sm:$0xff] %v273
                  %v275 = vld [vmem:[%s269 + $0x48] sm:$0xff]
                  %276 = vst [vmem:[%s270 + $0x10] sm:$0xff] %v275
                  %v277 = vld [vmem:[%s269 + $0x50] sm:$0xff]
                  %278 = vst [vmem:[%s270 + $0x18] sm:$0xff] %v277
                  %v279 = vld [vmem:[%s269 + $0x90] sm:$0xff]
                  %280 = vst [vmem:[%s270 + $0x20] sm:$0xff] %v279
                  %v281 = vld [vmem:[%s269 + $0x98] sm:$0xff]
                  %282 = vst [vmem:[%s270 + $0x28] sm:$0xff] %v281
                  %v283 = vld [vmem:[%s269 + $0xd8] sm:$0xff]
                  %284 = vst [vmem:[%s270 + $0x30] sm:$0xff] %v283
                  %v285 = vld [vmem:[%s269 + $0xe0] sm:$0xff]
                  %286 = vst [vmem:[%s270 + $0x38] sm:$0xff] %v285
                  %s287 = sadd.s32 1, %s268
                  %p288 = scmp.ge.s32.totalorder %s287, %s261
                  %s289 = scalar_select %p288, 0, %s287
                  %s290 = smul.u32 %s289, 16
                  %s291 = smul.u32 %s289, 16
                  %s292 = scalar_lea.vmem %s185, %s290
                  %s293 = scalar_lea.vmem %s173, %s291 [#allocation4]
                $region55: #{tpu_custom_call.1} parent=49 // loop_footer
                  %s265 = sadd.s32 %s263, 1
                $region56: #{tpu_custom_call.1} parent=49 // loop_footer_branch
                  %262 = sbr.rel target = $region52
                $region57: #{tpu_custom_call.1} parent=49 // loop_exit
                  _
                %s294 = sshrl.u32 %s181, 1
                %s295 = sand.u32 %s181, 1
                %s296 = smul.u32 %s294, 2
                %s297 = smul.u32 8, %s296
                %s298 = scalar_lea.vmem %s185, %s297
                %s299 = smul.u32 8, %s296
                %s300 = scalar_lea.vmem %s173, %s299 [#allocation4]
                // While loop
                $region58: #{tpu_custom_call.1} parent=49 // loop_pre_header
                  _
                $region59: #{tpu_custom_call.1} parent=49 // loop_header
                  %s302 = sphi 0, %s304
                  %p303 = scmp.ge.s32.totalorder %s302, %s295
                  %s307 = sphi 0, %s320
                  %s308 = sphi %s298, %s323
                  %s309 = sphi %s300, %s324
                $region60: #{tpu_custom_call.1} parent=49 // loop_header_branch
                  %306 = sbr.rel (%p303) target = $region64
                $region61: #{tpu_custom_call.1} parent=49 // loop_body
                  %v310 = vld [vmem:[%s308] sm:$0xff]
                  %311 = vst [vmem:[%s309] sm:$0xff] %v310
                  %v312 = vld [vmem:[%s308 + $0x48] sm:$0xff]
                  %313 = vst [vmem:[%s309 + $0x10] sm:$0xff] %v312
                  %v314 = vld [vmem:[%s308 + $0x90] sm:$0xff]
                  %315 = vst [vmem:[%s309 + $0x20] sm:$0xff] %v314
                  %v316 = vld [vmem:[%s308 + $0xd8] sm:$0xff]
                  %317 = vst [vmem:[%s309 + $0x30] sm:$0xff] %v316
                  %s318 = sadd.s32 1, %s307
                  %p319 = scmp.ge.s32.totalorder %s318, %s295
                  %s320 = scalar_select %p319, 0, %s318
                  %s321 = smul.u32 %s320, 8
                  %s322 = smul.u32 %s320, 8
                  %s323 = scalar_lea.vmem %s298, %s321
                  %s324 = scalar_lea.vmem %s300, %s322 [#allocation4]
                $region62: #{tpu_custom_call.1} parent=49 // loop_footer
                  %s304 = sadd.s32 %s302, 1
                $region63: #{tpu_custom_call.1} parent=49 // loop_footer_branch
                  %301 = sbr.rel target = $region59
                $region64: #{tpu_custom_call.1} parent=49 // loop_exit
                  _
              $region50: #{tpu_custom_call.1} parent=27 // pred_fallthru
                _
              // Predicated region
              $region65: #{tpu_custom_call.1} parent=27 // pred_check
                _
              $region66: #{tpu_custom_call.1} parent=27 // pred_check_branch
                %326 = sbr.rel target = $region68
              $region67: #{tpu_custom_call.1} parent=27 // pred_region
                _
              $region68: #{tpu_custom_call.1} parent=27 // pred_fallthru
                _
            $region28: #{tpu_custom_call.1} parent=23 // pred_fallthru
              _
            // Predicated region
            $region29: #{tpu_custom_call.1} parent=23 // pred_check
              _
            $region30: #{tpu_custom_call.1} parent=23 // pred_check_branch
              %192 = sbr.rel target = $region32
            $region31: #{tpu_custom_call.1} parent=23 // pred_region
              %s194 = ssub.s32 256, 1
              %s195 = sshrl.u32 %s181, 1
              // While loop
              $region33: #{tpu_custom_call.1} parent=31 // loop_pre_header
                _
              $region34: #{tpu_custom_call.1} parent=31 // loop_header
                %s197 = sphi 0, %s199
                %p198 = scmp.ge.s32.totalorder %s197, %s195
                %s202 = sphi 0, %s223
                %s203 = sphi %s185, %s226
                %s204 = sphi %s173, %s227
              $region35: #{tpu_custom_call.1} parent=31 // loop_header_branch
                %201 = sbr.rel (%p198) target = $region39
              $region36: #{tpu_custom_call.1} parent=31 // loop_body
                %v205 = vld [vmem:[%s203] sm:%s194]
                %206 = vst [vmem:[%s204] sm:%s194] %v205
                %v207 = vld [vmem:[%s203 + $0x8] sm:%s194]
                %208 = vst [vmem:[%s204 + $0x8] sm:%s194] %v207
                %v209 = vld [vmem:[%s203 + $0x48] sm:%s194]
                %210 = vst [vmem:[%s204 + $0x10] sm:%s194] %v209
                %v211 = vld [vmem:[%s203 + $0x50] sm:%s194]
                %212 = vst [vmem:[%s204 + $0x18] sm:%s194] %v211
                %v213 = vld [vmem:[%s203 + $0x90] sm:%s194]
                %214 = vst [vmem:[%s204 + $0x20] sm:%s194] %v213
                %v215 = vld [vmem:[%s203 + $0x98] sm:%s194]
                %216 = vst [vmem:[%s204 + $0x28] sm:%s194] %v215
                %v217 = vld [vmem:[%s203 + $0xd8] sm:%s194]
                %218 = vst [vmem:[%s204 + $0x30] sm:%s194] %v217
                %v219 = vld [vmem:[%s203 + $0xe0] sm:%s194]
                %220 = vst [vmem:[%s204 + $0x38] sm:%s194] %v219
                %s221 = sadd.s32 1, %s202
                %p222 = scmp.ge.s32.totalorder %s221, %s195
                %s223 = scalar_select %p222, 0, %s221
                %s224 = smul.u32 %s223, 16
                %s225 = smul.u32 %s223, 16
                %s226 = scalar_lea.vmem %s185, %s224
                %s227 = scalar_lea.vmem %s173, %s225 [#allocation4]
              $region37: #{tpu_custom_call.1} parent=31 // loop_footer
                %s199 = sadd.s32 %s197, 1
              $region38: #{tpu_custom_call.1} parent=31 // loop_footer_branch
                %196 = sbr.rel target = $region34
              $region39: #{tpu_custom_call.1} parent=31 // loop_exit
                _
              %s228 = sshrl.u32 %s181, 1
              %s229 = sand.u32 %s181, 1
              %s230 = smul.u32 %s228, 2
              %s231 = smul.u32 8, %s230
              %s232 = scalar_lea.vmem %s185, %s231
              %s233 = smul.u32 8, %s230
              %s234 = scalar_lea.vmem %s173, %s233 [#allocation4]
              // While loop
              $region40: #{tpu_custom_call.1} parent=31 // loop_pre_header
                _
              $region41: #{tpu_custom_call.1} parent=31 // loop_header
                %s236 = sphi 0, %s238
                %p237 = scmp.ge.s32.totalorder %s236, %s229
                %s241 = sphi 0, %s254
                %s242 = sphi %s232, %s257
                %s243 = sphi %s234, %s258
              $region42: #{tpu_custom_call.1} parent=31 // loop_header_branch
                %240 = sbr.rel (%p237) target = $region46
              $region43: #{tpu_custom_call.1} parent=31 // loop_body
                %v244 = vld [vmem:[%s242] sm:%s194]
                %245 = vst [vmem:[%s243] sm:%s194] %v244
                %v246 = vld [vmem:[%s242 + $0x48] sm:%s194]
                %247 = vst [vmem:[%s243 + $0x10] sm:%s194] %v246
                %v248 = vld [vmem:[%s242 + $0x90] sm:%s194]
                %249 = vst [vmem:[%s243 + $0x20] sm:%s194] %v248
                %v250 = vld [vmem:[%s242 + $0xd8] sm:%s194]
                %251 = vst [vmem:[%s243 + $0x30] sm:%s194] %v250
                %s252 = sadd.s32 1, %s241
                %p253 = scmp.ge.s32.totalorder %s252, %s229
                %s254 = scalar_select %p253, 0, %s252
                %s255 = smul.u32 %s254, 8
                %s256 = smul.u32 %s254, 8
                %s257 = scalar_lea.vmem %s232, %s255
                %s258 = scalar_lea.vmem %s234, %s256 [#allocation4]
              $region44: #{tpu_custom_call.1} parent=31 // loop_footer
                %s238 = sadd.s32 %s236, 1
              $region45: #{tpu_custom_call.1} parent=31 // loop_footer_branch
                %235 = sbr.rel target = $region41
              $region46: #{tpu_custom_call.1} parent=31 // loop_exit
                _
            $region32: #{tpu_custom_call.1} parent=23 // pred_fallthru
              _
          $region24: #{tpu_custom_call.1} parent=19 // pred_fallthru
            _
          %327 = vnop
        $region20: #{tpu_custom_call.1} parent=15 // pred_fallthru
          _
        // Predicated region
        $region69: #{tpu_custom_call.1} parent=15 // pred_check
          %p328 = pneg %p90
        $region70: #{tpu_custom_call.1} parent=15 // pred_check_branch
          %330 = sbr.rel (%p328) target = $region72
        $region71: #{tpu_custom_call.1} parent=15 // pred_region
          %s331 = sand.u32 %s80, 1
          %s332 = sand.u32 %s80, 1
          %s333 = smul.addr %s332, 64
          %s334 = scalar_lea.vmem [#allocation5], %s333
          %s335 = smul.u32 %s23, 3
          %s336 = sadd.s32 %s335, %s24
          %p337 = scmp.lt.s32.totalorder %s336, 4
          %s338 = scalar_select %p337, %s336, 4
          %s339 = smul.u32 2, %s338
          %s340 = ssub.s32 9, %s339
          %p341 = scmp.lt.s32.totalorder %s340, 2
          %s342 = scalar_select %p341, %s340, 2
          %s343 = smul.u32 512, %s342
          %p344 = scmp.ne.s32.totalorder 0, %s343
          %s345 = smul.addr %s339, 8
          %s346 = scalar_lea.vmem %s1, %s345
          // Predicated region
          $region73: #{tpu_custom_call.1} parent=71 // pred_check
            %p347 = pneg %p344
          $region74: #{tpu_custom_call.1} parent=71 // pred_check_branch
            %349 = sbr.rel (%p347) target = $region76
          $region75: #{tpu_custom_call.1} parent=71 // pred_region
            // Predicated region
            $region77: #{tpu_custom_call.1} parent=75 // pred_check
              _
            $region78: #{tpu_custom_call.1} parent=75 // pred_check_branch
              %351 = sbr.rel (0) target = $region80
            $region79: #{tpu_custom_call.1} parent=75 // pred_region
              // Predicated region
              $region99: #{tpu_custom_call.1} parent=79 // pred_check
                _
              $region100: #{tpu_custom_call.1} parent=79 // pred_check_branch
                %421 = sbr.rel (0) target = $region102
              $region101: #{tpu_custom_call.1} parent=79 // pred_region
                %s422 = sshrl.u32 %s342, 1
                // While loop
                $region103: #{tpu_custom_call.1} parent=101 // loop_pre_header
                  _
                $region104: #{tpu_custom_call.1} parent=101 // loop_header
                  %s424 = sphi 0, %s426
                  %p425 = scmp.ge.s32.totalorder %s424, %s422
                  %s429 = sphi 0, %s450
                  %s430 = sphi %s346, %s453
                  %s431 = sphi %s334, %s454
                $region105: #{tpu_custom_call.1} parent=101 // loop_header_branch
                  %428 = sbr.rel (%p425) target = $region109
                $region106: #{tpu_custom_call.1} parent=101 // loop_body
                  %v432 = vld [vmem:[%s430] sm:$0xff]
                  %433 = vst [vmem:[%s431] sm:$0xff] %v432
                  %v434 = vld [vmem:[%s430 + $0x8] sm:$0xff]
                  %435 = vst [vmem:[%s431 + $0x8] sm:$0xff] %v434
                  %v436 = vld [vmem:[%s430 + $0x48] sm:$0xff]
                  %437 = vst [vmem:[%s431 + $0x10] sm:$0xff] %v436
                  %v438 = vld [vmem:[%s430 + $0x50] sm:$0xff]
                  %439 = vst [vmem:[%s431 + $0x18] sm:$0xff] %v438
                  %v440 = vld [vmem:[%s430 + $0x90] sm:$0xff]
                  %441 = vst [vmem:[%s431 + $0x20] sm:$0xff] %v440
                  %v442 = vld [vmem:[%s430 + $0x98] sm:$0xff]
                  %443 = vst [vmem:[%s431 + $0x28] sm:$0xff] %v442
                  %v444 = vld [vmem:[%s430 + $0xd8] sm:$0xff]
                  %445 = vst [vmem:[%s431 + $0x30] sm:$0xff] %v444
                  %v446 = vld [vmem:[%s430 + $0xe0] sm:$0xff]
                  %447 = vst [vmem:[%s431 + $0x38] sm:$0xff] %v446
                  %s448 = sadd.s32 1, %s429
                  %p449 = scmp.ge.s32.totalorder %s448, %s422
                  %s450 = scalar_select %p449, 0, %s448
                  %s451 = smul.u32 %s450, 16
                  %s452 = smul.u32 %s450, 16
                  %s453 = scalar_lea.vmem %s346, %s451
                  %s454 = scalar_lea.vmem %s334, %s452 [#allocation5]
                $region107: #{tpu_custom_call.1} parent=101 // loop_footer
                  %s426 = sadd.s32 %s424, 1
                $region108: #{tpu_custom_call.1} parent=101 // loop_footer_branch
                  %423 = sbr.rel target = $region104
                $region109: #{tpu_custom_call.1} parent=101 // loop_exit
                  _
                %s455 = sshrl.u32 %s342, 1
                %s456 = sand.u32 %s342, 1
                %s457 = smul.u32 %s455, 2
                %s458 = smul.u32 8, %s457
                %s459 = scalar_lea.vmem %s346, %s458
                %s460 = smul.u32 8, %s457
                %s461 = scalar_lea.vmem %s334, %s460 [#allocation5]
                // While loop
                $region110: #{tpu_custom_call.1} parent=101 // loop_pre_header
                  _
                $region111: #{tpu_custom_call.1} parent=101 // loop_header
                  %s463 = sphi 0, %s465
                  %p464 = scmp.ge.s32.totalorder %s463, %s456
                  %s468 = sphi 0, %s481
                  %s469 = sphi %s459, %s484
                  %s470 = sphi %s461, %s485
                $region112: #{tpu_custom_call.1} parent=101 // loop_header_branch
                  %467 = sbr.rel (%p464) target = $region116
                $region113: #{tpu_custom_call.1} parent=101 // loop_body
                  %v471 = vld [vmem:[%s469] sm:$0xff]
                  %472 = vst [vmem:[%s470] sm:$0xff] %v471
                  %v473 = vld [vmem:[%s469 + $0x48] sm:$0xff]
                  %474 = vst [vmem:[%s470 + $0x10] sm:$0xff] %v473
                  %v475 = vld [vmem:[%s469 + $0x90] sm:$0xff]
                  %476 = vst [vmem:[%s470 + $0x20] sm:$0xff] %v475
                  %v477 = vld [vmem:[%s469 + $0xd8] sm:$0xff]
                  %478 = vst [vmem:[%s470 + $0x30] sm:$0xff] %v477
                  %s479 = sadd.s32 1, %s468
                  %p480 = scmp.ge.s32.totalorder %s479, %s456
                  %s481 = scalar_select %p480, 0, %s479
                  %s482 = smul.u32 %s481, 8
                  %s483 = smul.u32 %s481, 8
                  %s484 = scalar_lea.vmem %s459, %s482
                  %s485 = scalar_lea.vmem %s461, %s483 [#allocation5]
                $region114: #{tpu_custom_call.1} parent=101 // loop_footer
                  %s465 = sadd.s32 %s463, 1
                $region115: #{tpu_custom_call.1} parent=101 // loop_footer_branch
                  %462 = sbr.rel target = $region111
                $region116: #{tpu_custom_call.1} parent=101 // loop_exit
                  _
              $region102: #{tpu_custom_call.1} parent=79 // pred_fallthru
                _
              // Predicated region
              $region117: #{tpu_custom_call.1} parent=79 // pred_check
                _
              $region118: #{tpu_custom_call.1} parent=79 // pred_check_branch
                %487 = sbr.rel target = $region120
              $region119: #{tpu_custom_call.1} parent=79 // pred_region
                _
              $region120: #{tpu_custom_call.1} parent=79 // pred_fallthru
                _
            $region80: #{tpu_custom_call.1} parent=75 // pred_fallthru
              _
            // Predicated region
            $region81: #{tpu_custom_call.1} parent=75 // pred_check
              _
            $region82: #{tpu_custom_call.1} parent=75 // pred_check_branch
              %353 = sbr.rel target = $region84
            $region83: #{tpu_custom_call.1} parent=75 // pred_region
              %s355 = ssub.s32 256, 1
              %s356 = sshrl.u32 %s342, 1
              // While loop
              $region85: #{tpu_custom_call.1} parent=83 // loop_pre_header
                _
              $region86: #{tpu_custom_call.1} parent=83 // loop_header
                %s358 = sphi 0, %s360
                %p359 = scmp.ge.s32.totalorder %s358, %s356
                %s363 = sphi 0, %s384
                %s364 = sphi %s346, %s387
                %s365 = sphi %s334, %s388
              $region87: #{tpu_custom_call.1} parent=83 // loop_header_branch
                %362 = sbr.rel (%p359) target = $region91
              $region88: #{tpu_custom_call.1} parent=83 // loop_body
                %v366 = vld [vmem:[%s364] sm:%s355]
                %367 = vst [vmem:[%s365] sm:%s355] %v366
                %v368 = vld [vmem:[%s364 + $0x8] sm:%s355]
                %369 = vst [vmem:[%s365 + $0x8] sm:%s355] %v368
                %v370 = vld [vmem:[%s364 + $0x48] sm:%s355]
                %371 = vst [vmem:[%s365 + $0x10] sm:%s355] %v370
                %v372 = vld [vmem:[%s364 + $0x50] sm:%s355]
                %373 = vst [vmem:[%s365 + $0x18] sm:%s355] %v372
                %v374 = vld [vmem:[%s364 + $0x90] sm:%s355]
                %375 = vst [vmem:[%s365 + $0x20] sm:%s355] %v374
                %v376 = vld [vmem:[%s364 + $0x98] sm:%s355]
                %377 = vst [vmem:[%s365 + $0x28] sm:%s355] %v376
                %v378 = vld [vmem:[%s364 + $0xd8] sm:%s355]
                %379 = vst [vmem:[%s365 + $0x30] sm:%s355] %v378
                %v380 = vld [vmem:[%s364 + $0xe0] sm:%s355]
                %381 = vst [vmem:[%s365 + $0x38] sm:%s355] %v380
                %s382 = sadd.s32 1, %s363
                %p383 = scmp.ge.s32.totalorder %s382, %s356
                %s384 = scalar_select %p383, 0, %s382
                %s385 = smul.u32 %s384, 16
                %s386 = smul.u32 %s384, 16
                %s387 = scalar_lea.vmem %s346, %s385
                %s388 = scalar_lea.vmem %s334, %s386 [#allocation5]
              $region89: #{tpu_custom_call.1} parent=83 // loop_footer
                %s360 = sadd.s32 %s358, 1
              $region90: #{tpu_custom_call.1} parent=83 // loop_footer_branch
                %357 = sbr.rel target = $region86
              $region91: #{tpu_custom_call.1} parent=83 // loop_exit
                _
              %s389 = sshrl.u32 %s342, 1
              %s390 = sand.u32 %s342, 1
              %s391 = smul.u32 %s389, 2
              %s392 = smul.u32 8, %s391
              %s393 = scalar_lea.vmem %s346, %s392
              %s394 = smul.u32 8, %s391
              %s395 = scalar_lea.vmem %s334, %s394 [#allocation5]
              // While loop
              $region92: #{tpu_custom_call.1} parent=83 // loop_pre_header
                _
              $region93: #{tpu_custom_call.1} parent=83 // loop_header
                %s397 = sphi 0, %s399
                %p398 = scmp.ge.s32.totalorder %s397, %s390
                %s402 = sphi 0, %s415
                %s403 = sphi %s393, %s418
                %s404 = sphi %s395, %s419
              $region94: #{tpu_custom_call.1} parent=83 // loop_header_branch
                %401 = sbr.rel (%p398) target = $region98
              $region95: #{tpu_custom_call.1} parent=83 // loop_body
                %v405 = vld [vmem:[%s403] sm:%s355]
                %406 = vst [vmem:[%s404] sm:%s355] %v405
                %v407 = vld [vmem:[%s403 + $0x48] sm:%s355]
                %408 = vst [vmem:[%s404 + $0x10] sm:%s355] %v407
                %v409 = vld [vmem:[%s403 + $0x90] sm:%s355]
                %410 = vst [vmem:[%s404 + $0x20] sm:%s355] %v409
                %v411 = vld [vmem:[%s403 + $0xd8] sm:%s355]
                %412 = vst [vmem:[%s404 + $0x30] sm:%s355] %v411
                %s413 = sadd.s32 1, %s402
                %p414 = scmp.ge.s32.totalorder %s413, %s390
                %s415 = scalar_select %p414, 0, %s413
                %s416 = smul.u32 %s415, 8
                %s417 = smul.u32 %s415, 8
                %s418 = scalar_lea.vmem %s393, %s416
                %s419 = scalar_lea.vmem %s395, %s417 [#allocation5]
              $region96: #{tpu_custom_call.1} parent=83 // loop_footer
                %s399 = sadd.s32 %s397, 1
              $region97: #{tpu_custom_call.1} parent=83 // loop_footer_branch
                %396 = sbr.rel target = $region93
              $region98: #{tpu_custom_call.1} parent=83 // loop_exit
                _
            $region84: #{tpu_custom_call.1} parent=75 // pred_fallthru
              _
          $region76: #{tpu_custom_call.1} parent=71 // pred_fallthru
            _
          %488 = vnop
        $region72: #{tpu_custom_call.1} parent=15 // pred_fallthru
          _
      $region16: #{tpu_custom_call.1} parent=5 // pred_fallthru
        _
      %p489 = scmp.le.s32.totalorder 1, %s16
      %p490 = scmp.lt.s32.totalorder %s16, 7
      %p491 = pnand %p489, %p490
      %p492 = pneg %p491
      // Predicated region
      $region121: #{tpu_custom_call.1} parent=5 // pred_check
        _
      $region122: #{tpu_custom_call.1} parent=5 // pred_check_branch
        %494 = sbr.rel (%p491) target = $region124
      $region123: #{tpu_custom_call.1} parent=5 // pred_region
        %s495 = ssub.s32 %s16, 1
        %s496 = sand.u32 %s49, 1
        %s497 = sand.u32 %s49, 1
        %s498 = smul.addr %s497, 64
        %s499 = scalar_lea.vmem [#allocation4], %s498
        // Predicated region
        $region125: #{tpu_custom_call.1} parent=123 // pred_check
          %p500 = pneg %p62
        $region126: #{tpu_custom_call.1} parent=123 // pred_check_branch
          %502 = sbr.rel (%p500) target = $region128
        $region127: #{tpu_custom_call.1} parent=123 // pred_region
          _
        $region128: #{tpu_custom_call.1} parent=123 // pred_fallthru
          _
        %s503 = sand.u32 %s83, 1
        %s504 = sand.u32 %s83, 1
        %s505 = smul.addr %s504, 64
        %s506 = scalar_lea.vmem [#allocation5], %s505
        // Predicated region
        $region129: #{tpu_custom_call.1} parent=123 // pred_check
          %p507 = pneg %p96
        $region130: #{tpu_custom_call.1} parent=123 // pred_check_branch
          %509 = sbr.rel (%p507) target = $region132
        $region131: #{tpu_custom_call.1} parent=123 // pred_region
          _
        $region132: #{tpu_custom_call.1} parent=123 // pred_fallthru
          _
        %s510 = sand.u32 %s49, 1
        %s511 = sand.u32 %s49, 1
        %s512 = smul.addr %s511, 64
        %s513 = scalar_lea.vmem [#allocation4], %s512
        %p514 = pneg %p62
        %p515 = pneg %p59
        %s516 = sand.u32 %s83, 1
        %s517 = sand.u32 %s83, 1
        %s518 = smul.addr %s517, 64
        %s519 = scalar_lea.vmem [#allocation5], %s518
        %p520 = pneg %p96
        %p521 = pneg %p93
        %p522 = pneg %p122
        %p523 = pneg %p119
        %s524 = sand.u32 %s109, 1
        %s525 = scalar_lea.sflag [#allocation7], %s524
        %s526 = sand.u32 %s109, 1
        %s527 = smul.addr %s526, 32
        %s528 = scalar_lea.vmem [#allocation6], %s527
        %p529 = pneg %p148
        %p530 = pneg %p145
        %s531 = sand.u32 %s135, 1
        %s532 = scalar_lea.sflag [#allocation9], %s531
        %s533 = sand.u32 %s135, 1
        %s534 = smul.addr %s533, 32
        %s535 = scalar_lea.vmem [#allocation8], %s534
        %s536 = smul.u32 %s25, 3
        %s537 = sadd.s32 %s536, %s26
        %p538 = scmp.lt.s32.totalorder %s537, 4
        %s539 = scalar_select %p538, %s537, 4
        %s540 = smul.u32 2, %s539
        %s541 = ssub.s32 9, %s540
        %p542 = scmp.lt.s32.totalorder %s541, 2
        %s543 = scalar_select %p542, %s541, 2
        %s544 = smul.u32 512, %s543
        %s545 = smul.u32 %s25, 3
        %s546 = sadd.s32 %s545, %s26
        %p547 = scmp.lt.s32.totalorder %s546, 4
        %s548 = scalar_select %p547, %s546, 4
        %s549 = smul.u32 2, %s548
        %s550 = ssub.s32 9, %s549
        %p551 = scmp.lt.s32.totalorder %s550, 2
        %s552 = scalar_select %p551, %s550, 2
        %s553 = smul.u32 512, %s552
        %p554 = scmp.eq.s32.totalorder %s26, 0
        // Predicated region
        $region133: #{tpu_custom_call.1} parent=123 // pred_check
          %p555 = pneg %p554
        $region134: #{tpu_custom_call.1} parent=123 // pred_check_branch
          %557 = sbr.rel (%p555) target = $region136
        $region135: #{tpu_custom_call.1} parent=123 // pred_region
          %vm558 = vcmask 261120
          %559 = vst.msk [vmem:[#allocation2] sm:$0xff] %vm558, 0.0
          %560 = vst.msk [vmem:[#allocation2 + $0x8] sm:$0xff] %vm558, 0.0
          %561 = vst.msk [vmem:[#allocation2 + $0x10] sm:$0xff] %vm558, 0.0
          %562 = vst.msk [vmem:[#allocation2 + $0x18] sm:$0xff] %vm558, 0.0
          %563 = vst.msk [vmem:[#allocation3] sm:$0xff] %vm558, 0.0
          %564 = vst.msk [vmem:[#allocation3 + $0x8] sm:$0xff] %vm558, 0.0
          %565 = vst.msk [vmem:[#allocation3 + $0x10] sm:$0xff] %vm558, 0.0
          %566 = vst.msk [vmem:[#allocation3 + $0x18] sm:$0xff] %vm558, 0.0
        $region136: #{tpu_custom_call.1} parent=123 // pred_fallthru
          _
        %v567 = vld [vmem:[%s499] sm:$0xff]
        %v568 = vld [vmem:[%s499 + $0x8] sm:$0xff]
        %v569 = vld [vmem:[%s499 + $0x10] sm:$0xff]
        %v570 = vld [vmem:[%s499 + $0x18] sm:$0xff]
        %v571 = vld [vmem:[%s499 + $0x20] sm:$0xff]
        %v572 = vld [vmem:[%s499 + $0x28] sm:$0xff]
        %v573 = vld [vmem:[%s499 + $0x30] sm:$0xff]
        %v574 = vld [vmem:[%s499 + $0x38] sm:$0xff]
        %v575 = vld [vmem:[%s506] sm:$0xff]
        %v576 = vld [vmem:[%s506 + $0x8] sm:$0xff]
        %v577 = vld [vmem:[%s506 + $0x10] sm:$0xff]
        %v578 = vld [vmem:[%s506 + $0x18] sm:$0xff]
        %v579 = vld [vmem:[%s506 + $0x20] sm:$0xff]
        %v580 = vld [vmem:[%s506 + $0x28] sm:$0xff]
        %v581 = vld [vmem:[%s506 + $0x30] sm:$0xff]
        %v582 = vld [vmem:[%s506 + $0x38] sm:$0xff]
        %s583 = smul.u32 %s25, 3
        %s584 = sadd.s32 %s583, %s26
        %s585 = smul.u32 %s584, 16
        %s586 = sadd.s32 %s585, 16
        %p587 = scmp.le.s32.totalorder %s586, 72
        // Predicated region
        $region137: #{tpu_custom_call.1} parent=123 // pred_check
          %p588 = pneg %p587
        $region138: #{tpu_custom_call.1} parent=123 // pred_check_branch
          %590 = sbr.rel (%p588) target = $region140
        $region139: #{tpu_custom_call.1} parent=123 // pred_region
          %v591 = vld [vmem:[#allocation2] sm:$0xff]
          %v592 = vld [vmem:[#allocation2 + $0x8] sm:$0xff]
          %v593 = vld [vmem:[#allocation2 + $0x10] sm:$0xff]
          %v594 = vld [vmem:[#allocation2 + $0x18] sm:$0xff]
          %vm595 = vcmask 130048
          %v597 = vsel %vm595, 1.0, 0
          %599 = vmatprep.subr.mxu0 0.0
          %600 = vmatpush1.msra.mxu0 0.0
          %601 = vmatprep.subr.mxu0 0.0
          %602 = vmatpush1.msra.mxu0 0.0
          %603 = vmatprep.subr.mxu0 0.0
          %604 = vmatpush1.msra.mxu0 0.0
          %605 = vmatprep.subr.mxu0 0.0
          %606 = vmatpush1.msra.mxu0 0.0
          %607 = vmatprep.subr.mxu0 0.0
          %608 = vmatpush1.msra.mxu0 0.0
          %609 = vmatprep.subr.mxu0 0.0
          %610 = vmatpush1.msra.mxu0 0.0
          %611 = vmatprep.subr.mxu0 0.0
          %612 = vmatpush1.msra.mxu0 0.0
          %613 = vmatprep.subr.mxu0 0.0
          %614 = vmatpush1.msra.mxu0 0.0
          %615 = vmatprep.subr.mxu0 0.0
          %616 = vmatpush1.msra.mxu0 0.0
          %617 = vmatprep.subr.mxu0 0.0
          %618 = vmatpush1.msra.mxu0 0.0
          %619 = vmatprep.subr.mxu0 0.0
          %620 = vmatpush1.msra.mxu0 0.0
          %621 = vmatprep.subr.mxu0 0.0
          %622 = vmatpush1.msra.mxu0 0.0
          %623 = vmatprep.subr.mxu0 0.0
          %624 = vmatpush1.msra.mxu0 0.0
          %625 = vmatprep.subr.mxu0 0.0
          %626 = vmatpush1.msra.mxu0 0.0
          %627 = vmatprep.subr.mxu0 0.0
          %v628 = vand.u32 %v568, 4294901760
          %629 = vmatpush1.msra.mxu0 %v628
          %630 = vmatprep.subr.mxu0 0.0
          %v631 = vand.u32 %v567, 4294901760
          %632 = vmatpush1.msra.mxu0 %v631
          %633 = vmatprep.subr.mxu0 0.0
          %634 = vmatpush2.msra.mxu0 0.0
          %635 = vmatprep.subr.mxu0 0.0
          %636 = vmatpush2.msra.mxu0 0.0
          %637 = vmatprep.subr.mxu0 0.0
          %638 = vmatpush2.msra.mxu0 0.0
          %639 = vmatprep.subr.mxu0 0.0
          %640 = vmatpush2.msra.mxu0 0.0
          %641 = vmatprep.subr.mxu0 0.0
          %642 = vmatpush2.msra.mxu0 0.0
          %643 = vmatprep.subr.mxu0 0.0
          %644 = vmatpush2.msra.mxu0 0.0
          %645 = vmatprep.subr.mxu0 0.0
          %646 = vmatpush2.msra.mxu0 0.0
          %647 = vmatprep.subr.mxu0 0.0
          %648 = vmatpush2.msra.mxu0 0.0
          %649 = vmatprep.subr.mxu0 0.0
          %650 = vmatpush2.msra.mxu0 0.0
          %651 = vmatprep.subr.mxu0 0.0
          %652 = vmatpush2.msra.mxu0 0.0
          %653 = vmatprep.subr.mxu0 0.0
          %654 = vmatpush2.msra.mxu0 0.0
          %655 = vmatprep.subr.mxu0 0.0
          %656 = vmatpush2.msra.mxu0 0.0
          %657 = vmatprep.subr.mxu0 0.0
          %658 = vmatpush2.msra.mxu0 0.0
          %659 = vmatprep.subr.mxu0 0.0
          %660 = vmatpush2.msra.mxu0 0.0
          %661 = vmatprep.subr.mxu0 0.0
          %662 = vmatpush2.msra.mxu0 0.0
          %663 = vmatprep.subr.mxu0 0.0
          %664 = vmatpush2.msra.mxu0 0.0
          %665 = vmatprep.mubr.f32.mxu0 0.0
          %v666 = vand.u32 %v597, 4294901760
          %v667 = vsub.f32 %v597, %v666
          %v668 = vand.u32 %v667, 4294901760
          %v669 = vsub.f32 %v667, %v668
          %v670 = vand.u32 %v669, 4294901760
          %671 = vmatmul.mubr.f32.gmra.mxu0 %v670
          %v672 = vpop.f32.mrf.mxu0
          %v673 = vadd.f32 0.0, %v672
          %v674 = vpop.f32.mrf.mxu0
          %675 = vdwg.mxu0
          %676 = vmatprep.subr.mxu0 0.0
          %677 = vmatpush1.msra.mxu0 0.0
          %678 = vmatprep.subr.mxu0 0.0
          %679 = vmatpush1.msra.mxu0 0.0
          %680 = vmatprep.subr.mxu0 0.0
          %681 = vmatpush1.msra.mxu0 0.0
          %682 = vmatprep.subr.mxu0 0.0
          %683 = vmatpush1.msra.mxu0 0.0
          %684 = vmatprep.subr.mxu0 0.0
          %685 = vmatpush1.msra.mxu0 0.0
          %686 = vmatprep.subr.mxu0 0.0
          %687 = vmatpush1.msra.mxu0 0.0
          %688 = vmatprep.subr.mxu0 0.0
          %689 = vmatpush1.msra.mxu0 0.0
          %690 = vmatprep.subr.mxu0 0.0
          %691 = vmatpush1.msra.mxu0 0.0
          %692 = vmatprep.subr.mxu0 0.0
          %693 = vmatpush1.msra.mxu0 0.0
          %694 = vmatprep.subr.mxu0 0.0
          %695 = vmatpush1.msra.mxu0 0.0
          %696 = vmatprep.subr.mxu0 0.0
          %697 = vmatpush1.msra.mxu0 0.0
          %698 = vmatprep.subr.mxu0 0.0
          %699 = vmatpush1.msra.mxu0 0.0
          %700 = vmatprep.subr.mxu0 0.0
          %701 = vmatpush1.msra.mxu0 0.0
          %702 = vmatprep.subr.mxu0 0.0
          %703 = vmatpush1.msra.mxu0 0.0
          %704 = vmatprep.subr.mxu0 0.0
          %v705 = vand.u32 %v568, 4294901760
          %v706 = vsub.f32 %v568, %v705
          %v707 = vand.u32 %v706, 4294901760
          %v708 = vsub.f32 %v706, %v707
          %v709 = vand.u32 %v708, 4294901760
          %710 = vmatpush1.msra.mxu0 %v709
          %711 = vmatprep.subr.mxu0 0.0
          %v712 = vand.u32 %v567, 4294901760
          %v713 = vsub.f32 %v567, %v712
          %v714 = vand.u32 %v713, 4294901760
          %v715 = vsub.f32 %v713, %v714
          %v716 = vand.u32 %v715, 4294901760
          %717 = vmatpush1.msra.mxu0 %v716
          %718 = vmatprep.subr.mxu0 0.0
          %719 = vmatpush2.msra.mxu0 0.0
          %720 = vmatprep.subr.mxu0 0.0
          %721 = vmatpush2.msra.mxu0 0.0
          %722 = vmatprep.subr.mxu0 0.0
          %723 = vmatpush2.msra.mxu0 0.0
          %724 = vmatprep.subr.mxu0 0.0
          %725 = vmatpush2.msra.mxu0 0.0
          %726 = vmatprep.subr.mxu0 0.0
          %727 = vmatpush2.msra.mxu0 0.0
          %728 = vmatprep.subr.mxu0 0.0
          %729 = vmatpush2.msra.mxu0 0.0
          %730 = vmatprep.subr.mxu0 0.0
          %731 = vmatpush2.msra.mxu0 0.0
          %732 = vmatprep.subr.mxu0 0.0
          %733 = vmatpush2.msra.mxu0 0.0
          %734 = vmatprep.subr.mxu0 0.0
          %735 = vmatpush2.msra.mxu0 0.0
          %736 = vmatprep.subr.mxu0 0.0
          %737 = vmatpush2.msra.mxu0 0.0
          %738 = vmatprep.subr.mxu0 0.0
          %739 = vmatpush2.msra.mxu0 0.0
          %740 = vmatprep.subr.mxu0 0.0
          %741 = vmatpush2.msra.mxu0 0.0
          %742 = vmatprep.subr.mxu0 0.0
          %743 = vmatpush2.msra.mxu0 0.0
          %744 = vmatprep.subr.mxu0 0.0
          %745 = vmatpush2.msra.mxu0 0.0
          %746 = vmatprep.subr.mxu0 0.0
          %747 = vmatpush2.msra.mxu0 0.0
          %748 = vmatprep.subr.mxu0 0.0
          %749 = vmatpush2.msra.mxu0 0.0
          %750 = vmatprep.mubr.f32.mxu0 0.0
          %v751 = vand.u32 %v597, 4294901760
          %752 = vmatmul.mubr.f32.gmra.mxu0 %v751
          %v753 = vpop.f32.mrf.mxu0
          %v754 = vadd.f32 %v673, %v753
          %v755 = vpop.f32.mrf.mxu0
          %756 = vdwg.mxu0
          %757 = vmatprep.subr.mxu0 0.0
          %758 = vmatpush1.msra.mxu0 0.0
          %759 = vmatprep.subr.mxu0 0.0
          %760 = vmatpush1.msra.mxu0 0.0
          %761 = vmatprep.subr.mxu0 0.0
          %762 = vmatpush1.msra.mxu0 0.0
          %763 = vmatprep.subr.mxu0 0.0
          %764 = vmatpush1.msra.mxu0 0.0
          %765 = vmatprep.subr.mxu0 0.0
          %766 = vmatpush1.msra.mxu0 0.0
          %767 = vmatprep.subr.mxu0 0.0
          %768 = vmatpush1.msra.mxu0 0.0
          %769 = vmatprep.subr.mxu0 0.0
          %770 = vmatpush1.msra.mxu0 0.0
          %771 = vmatprep.subr.mxu0 0.0
          %772 = vmatpush1.msra.mxu0 0.0
          %773 = vmatprep.subr.mxu0 0.0
          %774 = vmatpush1.msra.mxu0 0.0
          %775 = vmatprep.subr.mxu0 0.0
          %776 = vmatpush1.msra.mxu0 0.0
          %777 = vmatprep.subr.mxu0 0.0
          %778 = vmatpush1.msra.mxu0 0.0
          %779 = vmatprep.subr.mxu0 0.0
          %780 = vmatpush1.msra.mxu0 0.0
          %781 = vmatprep.subr.mxu0 0.0
          %782 = vmatpush1.msra.mxu0 0.0
          %783 = vmatprep.subr.mxu0 0.0
          %784 = vmatpush1.msra.mxu0 0.0
          %785 = vmatprep.subr.mxu0 0.0
          %v786 = vand.u32 %v568, 4294901760
          %v787 = vsub.f32 %v568, %v786
          %788 = vmatpush1.msra.mxu0 %v787
          %789 = vmatprep.subr.mxu0 0.0
          %v790 = vand.u32 %v567, 4294901760
          %v791 = vsub.f32 %v567, %v790
          %792 = vmatpush1.msra.mxu0 %v791
          %793 = vmatprep.subr.mxu0 0.0
          %794 = vmatpush2.msra.mxu0 0.0
          %795 = vmatprep.subr.mxu0 0.0
          %796 = vmatpush2.msra.mxu0 0.0
          %797 = vmatprep.subr.mxu0 0.0
          %798 = vmatpush2.msra.mxu0 0.0
          %799 = vmatprep.subr.mxu0 0.0
          %800 = vmatpush2.msra.mxu0 0.0
          %801 = vmatprep.subr.mxu0 0.0
          %802 = vmatpush2.msra.mxu0 0.0
          %803 = vmatprep.subr.mxu0 0.0
          %804 = vmatpush2.msra.mxu0 0.0
          %805 = vmatprep.subr.mxu0 0.0
          %806 = vmatpush2.msra.mxu0 0.0
          %807 = vmatprep.subr.mxu0 0.0
          %808 = vmatpush2.msra.mxu0 0.0
          %809 = vmatprep.subr.mxu0 0.0
          %810 = vmatpush2.msra.mxu0 0.0
          %811 = vmatprep.subr.mxu0 0.0
          %812 = vmatpush2.msra.mxu0 0.0
          %813 = vmatprep.subr.mxu0 0.0
          %814 = vmatpush2.msra.mxu0 0.0
          %815 = vmatprep.subr.mxu0 0.0
          %816 = vmatpush2.msra.mxu0 0.0
          %817 = vmatprep.subr.mxu0 0.0
          %818 = vmatpush2.msra.mxu0 0.0
          %819 = vmatprep.subr.mxu0 0.0
          %820 = vmatpush2.msra.mxu0 0.0
          %821 = vmatprep.subr.mxu0 0.0
          %822 = vmatpush2.msra.mxu0 0.0
          %823 = vmatprep.subr.mxu0 0.0
          %824 = vmatpush2.msra.mxu0 0.0
          %825 = vmatprep.mubr.f32.mxu0 0.0
          %v826 = vand.u32 %v597, 4294901760
          %v827 = vsub.f32 %v597, %v826
          %828 = vmatmul.mubr.f32.gmra.mxu0 %v827
          %v829 = vpop.f32.mrf.mxu0
          %v830 = vadd.f32 %v754, %v829
          %v831 = vpop.f32.mrf.mxu0
          %832 = vdwg.mxu0
          %833 = vmatprep.subr.mxu0 0.0
          %834 = vmatpush1.msra.mxu0 0.0
          %835 = vmatprep.subr.mxu0 0.0
          %836 = vmatpush1.msra.mxu0 0.0
          %837 = vmatprep.subr.mxu0 0.0
          %838 = vmatpush1.msra.mxu0 0.0
          %839 = vmatprep.subr.mxu0 0.0
          %840 = vmatpush1.msra.mxu0 0.0
          %841 = vmatprep.subr.mxu0 0.0
          %842 = vmatpush1.msra.mxu0 0.0
          %843 = vmatprep.subr.mxu0 0.0
          %844 = vmatpush1.msra.mxu0 0.0
          %845 = vmatprep.subr.mxu0 0.0
          %846 = vmatpush1.msra.mxu0 0.0
          %847 = vmatprep.subr.mxu0 0.0
          %848 = vmatpush1.msra.mxu0 0.0
          %849 = vmatprep.subr.mxu0 0.0
          %850 = vmatpush1.msra.mxu0 0.0
          %851 = vmatprep.subr.mxu0 0.0
          %852 = vmatpush1.msra.mxu0 0.0
          %853 = vmatprep.subr.mxu0 0.0
          %854 = vmatpush1.msra.mxu0 0.0
          %855 = vmatprep.subr.mxu0 0.0
          %856 = vmatpush1.msra.mxu0 0.0
          %857 = vmatprep.subr.mxu0 0.0
          %858 = vmatpush1.msra.mxu0 0.0
          %859 = vmatprep.subr.mxu0 0.0
          %860 = vmatpush1.msra.mxu0 0.0
          %861 = vmatprep.subr.mxu0 0.0
          %v862 = vand.u32 %v568, 4294901760
          %863 = vmatpush1.msra.mxu0 %v862
          %864 = vmatprep.subr.mxu0 0.0
          %v865 = vand.u32 %v567, 4294901760
          %866 = vmatpush1.msra.mxu0 %v865
          %867 = vmatprep.subr.mxu0 0.0
          %868 = vmatpush2.msra.mxu0 0.0
          %869 = vmatprep.subr.mxu0 0.0
          %870 = vmatpush2.msra.mxu0 0.0
          %871 = vmatprep.subr.mxu0 0.0
          %872 = vmatpush2.msra.mxu0 0.0
          %873 = vmatprep.subr.mxu0 0.0
          %874 = vmatpush2.msra.mxu0 0.0
          %875 = vmatprep.subr.mxu0 0.0
          %876 = vmatpush2.msra.mxu0 0.0
          %877 = vmatprep.subr.mxu0 0.0
          %878 = vmatpush2.msra.mxu0 0.0
          %879 = vmatprep.subr.mxu0 0.0
          %880 = vmatpush2.msra.mxu0 0.0
          %881 = vmatprep.subr.mxu0 0.0
          %882 = vmatpush2.msra.mxu0 0.0
          %883 = vmatprep.subr.mxu0 0.0
          %884 = vmatpush2.msra.mxu0 0.0
          %885 = vmatprep.subr.mxu0 0.0
          %886 = vmatpush2.msra.mxu0 0.0
          %887 = vmatprep.subr.mxu0 0.0
          %888 = vmatpush2.msra.mxu0 0.0
          %889 = vmatprep.subr.mxu0 0.0
          %890 = vmatpush2.msra.mxu0 0.0
          %891 = vmatprep.subr.mxu0 0.0
          %892 = vmatpush2.msra.mxu0 0.0
          %893 = vmatprep.subr.mxu0 0.0
          %894 = vmatpush2.msra.mxu0 0.0
          %895 = vmatprep.subr.mxu0 0.0
          %896 = vmatpush2.msra.mxu0 0.0
          %897 = vmatprep.subr.mxu0 0.0
          %898 = vmatpush2.msra.mxu0 0.0
          %899 = vmatprep.mubr.f32.mxu0 0.0
          %v900 = vand.u32 %v597, 4294901760
          %v901 = vsub.f32 %v597, %v900
          %v902 = vand.u32 %v901, 4294901760
          %903 = vmatmul.mubr.f32.gmra.mxu0 %v902
          %v904 = vpop.f32.mrf.mxu0
          %v905 = vadd.f32 %v830, %v904
          %v906 = vpop.f32.mrf.mxu0
          %907 = vdwg.mxu0
          %908 = vmatprep.subr.mxu0 0.0
          %909 = vmatpush1.msra.mxu0 0.0
          %910 = vmatprep.subr.mxu0 0.0
          %911 = vmatpush1.msra.mxu0 0.0
          %912 = vmatprep.subr.mxu0 0.0
          %913 = vmatpush1.msra.mxu0 0.0
          %914 = vmatprep.subr.mxu0 0.0
          %915 = vmatpush1.msra.mxu0 0.0
          %916 = vmatprep.subr.mxu0 0.0
          %917 = vmatpush1.msra.mxu0 0.0
          %918 = vmatprep.subr.mxu0 0.0
          %919 = vmatpush1.msra.mxu0 0.0
          %920 = vmatprep.subr.mxu0 0.0
          %921 = vmatpush1.msra.mxu0 0.0
          %922 = vmatprep.subr.mxu0 0.0
          %923 = vmatpush1.msra.mxu0 0.0
          %924 = vmatprep.subr.mxu0 0.0
          %925 = vmatpush1.msra.mxu0 0.0
          %926 = vmatprep.subr.mxu0 0.0
          %927 = vmatpush1.msra.mxu0 0.0
          %928 = vmatprep.subr.mxu0 0.0
          %929 = vmatpush1.msra.mxu0 0.0
          %930 = vmatprep.subr.mxu0 0.0
          %931 = vmatpush1.msra.mxu0 0.0
          %932 = vmatprep.subr.mxu0 0.0
          %933 = vmatpush1.msra.mxu0 0.0
          %934 = vmatprep.subr.mxu0 0.0
          %935 = vmatpush1.msra.mxu0 0.0
          %936 = vmatprep.subr.mxu0 0.0
          %v937 = vand.u32 %v568, 4294901760
          %v938 = vsub.f32 %v568, %v937
          %v939 = vand.u32 %v938, 4294901760
          %940 = vmatpush1.msra.mxu0 %v939
          %941 = vmatprep.subr.mxu0 0.0
          %v942 = vand.u32 %v567, 4294901760
          %v943 = vsub.f32 %v567, %v942
          %v944 = vand.u32 %v943, 4294901760
          %945 = vmatpush1.msra.mxu0 %v944
          %946 = vmatprep.subr.mxu0 0.0
          %947 = vmatpush2.msra.mxu0 0.0
          %948 = vmatprep.subr.mxu0 0.0
          %949 = vmatpush2.msra.mxu0 0.0
          %950 = vmatprep.subr.mxu0 0.0
          %951 = vmatpush2.msra.mxu0 0.0
          %952 = vmatprep.subr.mxu0 0.0
          %953 = vmatpush2.msra.mxu0 0.0
          %954 = vmatprep.subr.mxu0 0.0
          %955 = vmatpush2.msra.mxu0 0.0
          %956 = vmatprep.subr.mxu0 0.0
          %957 = vmatpush2.msra.mxu0 0.0
          %958 = vmatprep.subr.mxu0 0.0
          %959 = vmatpush2.msra.mxu0 0.0
          %960 = vmatprep.subr.mxu0 0.0
          %961 = vmatpush2.msra.mxu0 0.0
          %962 = vmatprep.subr.mxu0 0.0
          %963 = vmatpush2.msra.mxu0 0.0
          %964 = vmatprep.subr.mxu0 0.0
          %965 = vmatpush2.msra.mxu0 0.0
          %966 = vmatprep.subr.mxu0 0.0
          %967 = vmatpush2.msra.mxu0 0.0
          %968 = vmatprep.subr.mxu0 0.0
          %969 = vmatpush2.msra.mxu0 0.0
          %970 = vmatprep.subr.mxu0 0.0
          %971 = vmatpush2.msra.mxu0 0.0
          %972 = vmatprep.subr.mxu0 0.0
          %973 = vmatpush2.msra.mxu0 0.0
          %974 = vmatprep.subr.mxu0 0.0
          %975 = vmatpush2.msra.mxu0 0.0
          %976 = vmatprep.subr.mxu0 0.0
          %977 = vmatpush2.msra.mxu0 0.0
          %978 = vmatprep.mubr.f32.mxu0 0.0
          %v979 = vand.u32 %v597, 4294901760
          %980 = vmatmul.mubr.f32.gmra.mxu0 %v979
          %v981 = vpop.f32.mrf.mxu0
          %v982 = vadd.f32 %v905, %v981
          %v983 = vpop.f32.mrf.mxu0
          %984 = vdwg.mxu0
          %985 = vmatprep.subr.mxu0 0.0
          %986 = vmatpush1.msra.mxu0 0.0
          %987 = vmatprep.subr.mxu0 0.0
          %988 = vmatpush1.msra.mxu0 0.0
          %989 = vmatprep.subr.mxu0 0.0
          %990 = vmatpush1.msra.mxu0 0.0
          %991 = vmatprep.subr.mxu0 0.0
          %992 = vmatpush1.msra.mxu0 0.0
          %993 = vmatprep.subr.mxu0 0.0
          %994 = vmatpush1.msra.mxu0 0.0
          %995 = vmatprep.subr.mxu0 0.0
          %996 = vmatpush1.msra.mxu0 0.0
          %997 = vmatprep.subr.mxu0 0.0
          %998 = vmatpush1.msra.mxu0 0.0
          %999 = vmatprep.subr.mxu0 0.0
          %1000 = vmatpush1.msra.mxu0 0.0
          %1001 = vmatprep.subr.mxu0 0.0
          %1002 = vmatpush1.msra.mxu0 0.0
          %1003 = vmatprep.subr.mxu0 0.0
          %1004 = vmatpush1.msra.mxu0 0.0
          %1005 = vmatprep.subr.mxu0 0.0
          %1006 = vmatpush1.msra.mxu0 0.0
          %1007 = vmatprep.subr.mxu0 0.0
          %1008 = vmatpush1.msra.mxu0 0.0
          %1009 = vmatprep.subr.mxu0 0.0
          %1010 = vmatpush1.msra.mxu0 0.0
          %1011 = vmatprep.subr.mxu0 0.0
          %1012 = vmatpush1.msra.mxu0 0.0
          %1013 = vmatprep.subr.mxu0 0.0
          %v1014 = vand.u32 %v568, 4294901760
          %1015 = vmatpush1.msra.mxu0 %v1014
          %1016 = vmatprep.subr.mxu0 0.0
          %v1017 = vand.u32 %v567, 4294901760
          %1018 = vmatpush1.msra.mxu0 %v1017
          %1019 = vmatprep.subr.mxu0 0.0
          %1020 = vmatpush2.msra.mxu0 0.0
          %1021 = vmatprep.subr.mxu0 0.0
          %1022 = vmatpush2.msra.mxu0 0.0
          %1023 = vmatprep.subr.mxu0 0.0
          %1024 = vmatpush2.msra.mxu0 0.0
          %1025 = vmatprep.subr.mxu0 0.0
          %1026 = vmatpush2.msra.mxu0 0.0
          %1027 = vmatprep.subr.mxu0 0.0
          %1028 = vmatpush2.msra.mxu0 0.0
          %1029 = vmatprep.subr.mxu0 0.0
          %1030 = vmatpush2.msra.mxu0 0.0
          %1031 = vmatprep.subr.mxu0 0.0
          %1032 = vmatpush2.msra.mxu0 0.0
          %1033 = vmatprep.subr.mxu0 0.0
          %1034 = vmatpush2.msra.mxu0 0.0
          %1035 = vmatprep.subr.mxu0 0.0
          %1036 = vmatpush2.msra.mxu0 0.0
          %1037 = vmatprep.subr.mxu0 0.0
          %1038 = vmatpush2.msra.mxu0 0.0
          %1039 = vmatprep.subr.mxu0 0.0
          %1040 = vmatpush2.msra.mxu0 0.0
          %1041 = vmatprep.subr.mxu0 0.0
          %1042 = vmatpush2.msra.mxu0 0.0
          %1043 = vmatprep.subr.mxu0 0.0
          %1044 = vmatpush2.msra.mxu0 0.0
          %1045 = vmatprep.subr.mxu0 0.0
          %1046 = vmatpush2.msra.mxu0 0.0
          %1047 = vmatprep.subr.mxu0 0.0
          %1048 = vmatpush2.msra.mxu0 0.0
          %1049 = vmatprep.subr.mxu0 0.0
          %1050 = vmatpush2.msra.mxu0 0.0
          %1051 = vmatprep.mubr.f32.mxu0 0.0
          %v1052 = vand.u32 %v597, 4294901760
          %1053 = vmatmul.mubr.f32.gmra.mxu0 %v1052
          %v1054 = vpop.f32.mrf.mxu0
          %v1055 = vadd.f32 %v982, %v1054
          %v1056 = vpop.f32.mrf.mxu0
          %1057 = vdwg.mxu0
          %1058 = vmatprep.subr.mxu0 0.0
          %1059 = vmatpush1.msra.mxu0 0.0
          %1060 = vmatprep.subr.mxu0 0.0
          %1061 = vmatpush1.msra.mxu0 0.0
          %1062 = vmatprep.subr.mxu0 0.0
          %1063 = vmatpush1.msra.mxu0 0.0
          %1064 = vmatprep.subr.mxu0 0.0
          %1065 = vmatpush1.msra.mxu0 0.0
          %1066 = vmatprep.subr.mxu0 0.0
          %1067 = vmatpush1.msra.mxu0 0.0
          %1068 = vmatprep.subr.mxu0 0.0
          %1069 = vmatpush1.msra.mxu0 0.0
          %1070 = vmatprep.subr.mxu0 0.0
          %1071 = vmatpush1.msra.mxu0 0.0
          %1072 = vmatprep.subr.mxu0 0.0
          %1073 = vmatpush1.msra.mxu0 0.0
          %1074 = vmatprep.subr.mxu0 0.0
          %1075 = vmatpush1.msra.mxu0 0.0
          %1076 = vmatprep.subr.mxu0 0.0
          %1077 = vmatpush1.msra.mxu0 0.0
          %1078 = vmatprep.subr.mxu0 0.0
          %1079 = vmatpush1.msra.mxu0 0.0
          %1080 = vmatprep.subr.mxu0 0.0
          %1081 = vmatpush1.msra.mxu0 0.0
          %1082 = vmatprep.subr.mxu0 0.0
          %1083 = vmatpush1.msra.mxu0 0.0
          %1084 = vmatprep.subr.mxu0 0.0
          %1085 = vmatpush1.msra.mxu0 0.0
          %1086 = vmatprep.subr.mxu0 0.0
          %v1087 = vand.u32 %v570, 4294901760
          %1088 = vmatpush1.msra.mxu0 %v1087
          %1089 = vmatprep.subr.mxu0 0.0
          %v1090 = vand.u32 %v569, 4294901760
          %1091 = vmatpush1.msra.mxu0 %v1090
          %1092 = vmatprep.subr.mxu0 0.0
          %1093 = vmatpush2.msra.mxu0 0.0
          %1094 = vmatprep.subr.mxu0 0.0
          %1095 = vmatpush2.msra.mxu0 0.0
          %1096 = vmatprep.subr.mxu0 0.0
          %1097 = vmatpush2.msra.mxu0 0.0
          %1098 = vmatprep.subr.mxu0 0.0
          %1099 = vmatpush2.msra.mxu0 0.0
          %1100 = vmatprep.subr.mxu0 0.0
          %1101 = vmatpush2.msra.mxu0 0.0
          %1102 = vmatprep.subr.mxu0 0.0
          %1103 = vmatpush2.msra.mxu0 0.0
          %1104 = vmatprep.subr.mxu0 0.0
          %1105 = vmatpush2.msra.mxu0 0.0
          %1106 = vmatprep.subr.mxu0 0.0
          %1107 = vmatpush2.msra.mxu0 0.0
          %1108 = vmatprep.subr.mxu0 0.0
          %1109 = vmatpush2.msra.mxu0 0.0
          %1110 = vmatprep.subr.mxu0 0.0
          %1111 = vmatpush2.msra.mxu0 0.0
          %1112 = vmatprep.subr.mxu0 0.0
          %1113 = vmatpush2.msra.mxu0 0.0
          %1114 = vmatprep.subr.mxu0 0.0
          %1115 = vmatpush2.msra.mxu0 0.0
          %1116 = vmatprep.subr.mxu0 0.0
          %1117 = vmatpush2.msra.mxu0 0.0
          %1118 = vmatprep.subr.mxu0 0.0
          %1119 = vmatpush2.msra.mxu0 0.0
          %1120 = vmatprep.subr.mxu0 0.0
          %1121 = vmatpush2.msra.mxu0 0.0
          %1122 = vmatprep.subr.mxu0 0.0
          %1123 = vmatpush2.msra.mxu0 0.0
          %1124 = vmatprep.mubr.f32.mxu0 0.0
          %v1125 = vand.u32 %v597, 4294901760
          %v1126 = vsub.f32 %v597, %v1125
          %v1127 = vand.u32 %v1126, 4294901760
          %v1128 = vsub.f32 %v1126, %v1127
          %v1129 = vand.u32 %v1128, 4294901760
          %1130 = vmatmul.mubr.f32.gmra.mxu0 %v1129
          %v1131 = vpop.f32.mrf.mxu0
          %v1132 = vadd.f32 0.0, %v1131
          %v1133 = vpop.f32.mrf.mxu0
          %1134 = vdwg.mxu0
          %1135 = vmatprep.subr.mxu0 0.0
          %1136 = vmatpush1.msra.mxu0 0.0
          %1137 = vmatprep.subr.mxu0 0.0
          %1138 = vmatpush1.msra.mxu0 0.0
          %1139 = vmatprep.subr.mxu0 0.0
          %1140 = vmatpush1.msra.mxu0 0.0
          %1141 = vmatprep.subr.mxu0 0.0
          %1142 = vmatpush1.msra.mxu0 0.0
          %1143 = vmatprep.subr.mxu0 0.0
          %1144 = vmatpush1.msra.mxu0 0.0
          %1145 = vmatprep.subr.mxu0 0.0
          %1146 = vmatpush1.msra.mxu0 0.0
          %1147 = vmatprep.subr.mxu0 0.0
          %1148 = vmatpush1.msra.mxu0 0.0
          %1149 = vmatprep.subr.mxu0 0.0
          %1150 = vmatpush1.msra.mxu0 0.0
          %1151 = vmatprep.subr.mxu0 0.0
          %1152 = vmatpush1.msra.mxu0 0.0
          %1153 = vmatprep.subr.mxu0 0.0
          %1154 = vmatpush1.msra.mxu0 0.0
          %1155 = vmatprep.subr.mxu0 0.0
          %1156 = vmatpush1.msra.mxu0 0.0
          %1157 = vmatprep.subr.mxu0 0.0
          %1158 = vmatpush1.msra.mxu0 0.0
          %1159 = vmatprep.subr.mxu0 0.0
          %1160 = vmatpush1.msra.mxu0 0.0
          %1161 = vmatprep.subr.mxu0 0.0
          %1162 = vmatpush1.msra.mxu0 0.0
          %1163 = vmatprep.subr.mxu0 0.0
          %v1164 = vand.u32 %v570, 4294901760
          %v1165 = vsub.f32 %v570, %v1164
          %v1166 = vand.u32 %v1165, 4294901760
          %v1167 = vsub.f32 %v1165, %v1166
          %v1168 = vand.u32 %v1167, 4294901760
          %1169 = vmatpush1.msra.mxu0 %v1168
          %1170 = vmatprep.subr.mxu0 0.0
          %v1171 = vand.u32 %v569, 4294901760
          %v1172 = vsub.f32 %v569, %v1171
          %v1173 = vand.u32 %v1172, 4294901760
          %v1174 = vsub.f32 %v1172, %v1173
          %v1175 = vand.u32 %v1174, 4294901760
          %1176 = vmatpush1.msra.mxu0 %v1175
          %1177 = vmatprep.subr.mxu0 0.0
          %1178 = vmatpush2.msra.mxu0 0.0
          %1179 = vmatprep.subr.mxu0 0.0
          %1180 = vmatpush2.msra.mxu0 0.0
          %1181 = vmatprep.subr.mxu0 0.0
          %1182 = vmatpush2.msra.mxu0 0.0
          %1183 = vmatprep.subr.mxu0 0.0
          %1184 = vmatpush2.msra.mxu0 0.0
          %1185 = vmatprep.subr.mxu0 0.0
          %1186 = vmatpush2.msra.mxu0 0.0
          %1187 = vmatprep.subr.mxu0 0.0
          %1188 = vmatpush2.msra.mxu0 0.0
          %1189 = vmatprep.subr.mxu0 0.0
          %1190 = vmatpush2.msra.mxu0 0.0
          %1191 = vmatprep.subr.mxu0 0.0
          %1192 = vmatpush2.msra.mxu0 0.0
          %1193 = vmatprep.subr.mxu0 0.0
          %1194 = vmatpush2.msra.mxu0 0.0
          %1195 = vmatprep.subr.mxu0 0.0
          %1196 = vmatpush2.msra.mxu0 0.0
          %1197 = vmatprep.subr.mxu0 0.0
          %1198 = vmatpush2.msra.mxu0 0.0
          %1199 = vmatprep.subr.mxu0 0.0
          %1200 = vmatpush2.msra.mxu0 0.0
          %1201 = vmatprep.subr.mxu0 0.0
          %1202 = vmatpush2.msra.mxu0 0.0
          %1203 = vmatprep.subr.mxu0 0.0
          %1204 = vmatpush2.msra.mxu0 0.0
          %1205 = vmatprep.subr.mxu0 0.0
          %1206 = vmatpush2.msra.mxu0 0.0
          %1207 = vmatprep.subr.mxu0 0.0
          %1208 = vmatpush2.msra.mxu0 0.0
          %1209 = vmatprep.mubr.f32.mxu0 0.0
          %v1210 = vand.u32 %v597, 4294901760
          %1211 = vmatmul.mubr.f32.gmra.mxu0 %v1210
          %v1212 = vpop.f32.mrf.mxu0
          %v1213 = vadd.f32 %v1132, %v1212
          %v1214 = vpop.f32.mrf.mxu0
          %1215 = vdwg.mxu0
          %1216 = vmatprep.subr.mxu0 0.0
          %1217 = vmatpush1.msra.mxu0 0.0
          %1218 = vmatprep.subr.mxu0 0.0
          %1219 = vmatpush1.msra.mxu0 0.0
          %1220 = vmatprep.subr.mxu0 0.0
          %1221 = vmatpush1.msra.mxu0 0.0
          %1222 = vmatprep.subr.mxu0 0.0
          %1223 = vmatpush1.msra.mxu0 0.0
          %1224 = vmatprep.subr.mxu0 0.0
          %1225 = vmatpush1.msra.mxu0 0.0
          %1226 = vmatprep.subr.mxu0 0.0
          %1227 = vmatpush1.msra.mxu0 0.0
          %1228 = vmatprep.subr.mxu0 0.0
          %1229 = vmatpush1.msra.mxu0 0.0
          %1230 = vmatprep.subr.mxu0 0.0
          %1231 = vmatpush1.msra.mxu0 0.0
          %1232 = vmatprep.subr.mxu0 0.0
          %1233 = vmatpush1.msra.mxu0 0.0
          %1234 = vmatprep.subr.mxu0 0.0
          %1235 = vmatpush1.msra.mxu0 0.0
          %1236 = vmatprep.subr.mxu0 0.0
          %1237 = vmatpush1.msra.mxu0 0.0
          %1238 = vmatprep.subr.mxu0 0.0
          %1239 = vmatpush1.msra.mxu0 0.0
          %1240 = vmatprep.subr.mxu0 0.0
          %1241 = vmatpush1.msra.mxu0 0.0
          %1242 = vmatprep.subr.mxu0 0.0
          %1243 = vmatpush1.msra.mxu0 0.0
          %1244 = vmatprep.subr.mxu0 0.0
          %v1245 = vand.u32 %v570, 4294901760
          %v1246 = vsub.f32 %v570, %v1245
          %1247 = vmatpush1.msra.mxu0 %v1246
          %1248 = vmatprep.subr.mxu0 0.0
          %v1249 = vand.u32 %v569, 4294901760
          %v1250 = vsub.f32 %v569, %v1249
          %1251 = vmatpush1.msra.mxu0 %v1250
          %1252 = vmatprep.subr.mxu0 0.0
          %1253 = vmatpush2.msra.mxu0 0.0
          %1254 = vmatprep.subr.mxu0 0.0
          %1255 = vmatpush2.msra.mxu0 0.0
          %1256 = vmatprep.subr.mxu0 0.0
          %1257 = vmatpush2.msra.mxu0 0.0
          %1258 = vmatprep.subr.mxu0 0.0
          %1259 = vmatpush2.msra.mxu0 0.0
          %1260 = vmatprep.subr.mxu0 0.0
          %1261 = vmatpush2.msra.mxu0 0.0
          %1262 = vmatprep.subr.mxu0 0.0
          %1263 = vmatpush2.msra.mxu0 0.0
          %1264 = vmatprep.subr.mxu0 0.0
          %1265 = vmatpush2.msra.mxu0 0.0
          %1266 = vmatprep.subr.mxu0 0.0
          %1267 = vmatpush2.msra.mxu0 0.0
          %1268 = vmatprep.subr.mxu0 0.0
          %1269 = vmatpush2.msra.mxu0 0.0
          %1270 = vmatprep.subr.mxu0 0.0
          %1271 = vmatpush2.msra.mxu0 0.0
          %1272 = vmatprep.subr.mxu0 0.0
          %1273 = vmatpush2.msra.mxu0 0.0
          %1274 = vmatprep.subr.mxu0 0.0
          %1275 = vmatpush2.msra.mxu0 0.0
          %1276 = vmatprep.subr.mxu0 0.0
          %1277 = vmatpush2.msra.mxu0 0.0
          %1278 = vmatprep.subr.mxu0 0.0
          %1279 = vmatpush2.msra.mxu0 0.0
          %1280 = vmatprep.subr.mxu0 0.0
          %1281 = vmatpush2.msra.mxu0 0.0
          %1282 = vmatprep.subr.mxu0 0.0
          %1283 = vmatpush2.msra.mxu0 0.0
          %1284 = vmatprep.mubr.f32.mxu0 0.0
          %v1285 = vand.u32 %v597, 4294901760
          %v1286 = vsub.f32 %v597, %v1285
          %1287 = vmatmul.mubr.f32.gmra.mxu0 %v1286
          %v1288 = vpop.f32.mrf.mxu0
          %v1289 = vadd.f32 %v1213, %v1288
          %v1290 = vpop.f32.mrf.mxu0
          %1291 = vdwg.mxu0
          %1292 = vmatprep.subr.mxu0 0.0
          %1293 = vmatpush1.msra.mxu0 0.0
          %1294 = vmatprep.subr.mxu0 0.0
          %1295 = vmatpush1.msra.mxu0 0.0
          %1296 = vmatprep.subr.mxu0 0.0
          %1297 = vmatpush1.msra.mxu0 0.0
          %1298 = vmatprep.subr.mxu0 0.0
          %1299 = vmatpush1.msra.mxu0 0.0
          %1300 = vmatprep.subr.mxu0 0.0
          %1301 = vmatpush1.msra.mxu0 0.0
          %1302 = vmatprep.subr.mxu0 0.0
          %1303 = vmatpush1.msra.mxu0 0.0
          %1304 = vmatprep.subr.mxu0 0.0
          %1305 = vmatpush1.msra.mxu0 0.0
          %1306 = vmatprep.subr.mxu0 0.0
          %1307 = vmatpush1.msra.mxu0 0.0
          %1308 = vmatprep.subr.mxu0 0.0
          %1309 = vmatpush1.msra.mxu0 0.0
          %1310 = vmatprep.subr.mxu0 0.0
          %1311 = vmatpush1.msra.mxu0 0.0
          %1312 = vmatprep.subr.mxu0 0.0
          %1313 = vmatpush1.msra.mxu0 0.0
          %1314 = vmatprep.subr.mxu0 0.0
          %1315 = vmatpush1.msra.mxu0 0.0
          %1316 = vmatprep.subr.mxu0 0.0
          %1317 = vmatpush1.msra.mxu0 0.0
          %1318 = vmatprep.subr.mxu0 0.0
          %1319 = vmatpush1.msra.mxu0 0.0
          %1320 = vmatprep.subr.mxu0 0.0
          %v1321 = vand.u32 %v570, 4294901760
          %1322 = vmatpush1.msra.mxu0 %v1321
          %1323 = vmatprep.subr.mxu0 0.0
          %v1324 = vand.u32 %v569, 4294901760
          %1325 = vmatpush1.msra.mxu0 %v1324
          %1326 = vmatprep.subr.mxu0 0.0
          %1327 = vmatpush2.msra.mxu0 0.0
          %1328 = vmatprep.subr.mxu0 0.0
          %1329 = vmatpush2.msra.mxu0 0.0
          %1330 = vmatprep.subr.mxu0 0.0
          %1331 = vmatpush2.msra.mxu0 0.0
          %1332 = vmatprep.subr.mxu0 0.0
          %1333 = vmatpush2.msra.mxu0 0.0
          %1334 = vmatprep.subr.mxu0 0.0
          %1335 = vmatpush2.msra.mxu0 0.0
          %1336 = vmatprep.subr.mxu0 0.0
          %1337 = vmatpush2.msra.mxu0 0.0
          %1338 = vmatprep.subr.mxu0 0.0
          %1339 = vmatpush2.msra.mxu0 0.0
          %1340 = vmatprep.subr.mxu0 0.0
          %1341 = vmatpush2.msra.mxu0 0.0
          %1342 = vmatprep.subr.mxu0 0.0
          %1343 = vmatpush2.msra.mxu0 0.0
          %1344 = vmatprep.subr.mxu0 0.0
          %1345 = vmatpush2.msra.mxu0 0.0
          %1346 = vmatprep.subr.mxu0 0.0
          %1347 = vmatpush2.msra.mxu0 0.0
          %1348 = vmatprep.subr.mxu0 0.0
          %1349 = vmatpush2.msra.mxu0 0.0
          %1350 = vmatprep.subr.mxu0 0.0
          %1351 = vmatpush2.msra.mxu0 0.0
          %1352 = vmatprep.subr.mxu0 0.0
          %1353 = vmatpush2.msra.mxu0 0.0
          %1354 = vmatprep.subr.mxu0 0.0
          %1355 = vmatpush2.msra.mxu0 0.0
          %1356 = vmatprep.subr.mxu0 0.0
          %1357 = vmatpush2.msra.mxu0 0.0
          %1358 = vmatprep.mubr.f32.mxu0 0.0
          %v1359 = vand.u32 %v597, 4294901760
          %v1360 = vsub.f32 %v597, %v1359
          %v1361 = vand.u32 %v1360, 4294901760
          %1362 = vmatmul.mubr.f32.gmra.mxu0 %v1361
          %v1363 = vpop.f32.mrf.mxu0
          %v1364 = vadd.f32 %v1289, %v1363
          %v1365 = vpop.f32.mrf.mxu0
          %1366 = vdwg.mxu0
          %1367 = vmatprep.subr.mxu0 0.0
          %1368 = vmatpush1.msra.mxu0 0.0
          %1369 = vmatprep.subr.mxu0 0.0
          %1370 = vmatpush1.msra.mxu0 0.0
          %1371 = vmatprep.subr.mxu0 0.0
          %1372 = vmatpush1.msra.mxu0 0.0
          %1373 = vmatprep.subr.mxu0 0.0
          %1374 = vmatpush1.msra.mxu0 0.0
          %1375 = vmatprep.subr.mxu0 0.0
          %1376 = vmatpush1.msra.mxu0 0.0
          %1377 = vmatprep.subr.mxu0 0.0
          %1378 = vmatpush1.msra.mxu0 0.0
          %1379 = vmatprep.subr.mxu0 0.0
          %1380 = vmatpush1.msra.mxu0 0.0
          %1381 = vmatprep.subr.mxu0 0.0
          %1382 = vmatpush1.msra.mxu0 0.0
          %1383 = vmatprep.subr.mxu0 0.0
          %1384 = vmatpush1.msra.mxu0 0.0
          %1385 = vmatprep.subr.mxu0 0.0
          %1386 = vmatpush1.msra.mxu0 0.0
          %1387 = vmatprep.subr.mxu0 0.0
          %1388 = vmatpush1.msra.mxu0 0.0
          %1389 = vmatprep.subr.mxu0 0.0
          %1390 = vmatpush1.msra.mxu0 0.0
          %1391 = vmatprep.subr.mxu0 0.0
          %1392 = vmatpush1.msra.mxu0 0.0
          %1393 = vmatprep.subr.mxu0 0.0
          %1394 = vmatpush1.msra.mxu0 0.0
          %1395 = vmatprep.subr.mxu0 0.0
          %v1396 = vand.u32 %v570, 4294901760
          %v1397 = vsub.f32 %v570, %v1396
          %v1398 = vand.u32 %v1397, 4294901760
          %1399 = vmatpush1.msra.mxu0 %v1398
          %1400 = vmatprep.subr.mxu0 0.0
          %v1401 = vand.u32 %v569, 4294901760
          %v1402 = vsub.f32 %v569, %v1401
          %v1403 = vand.u32 %v1402, 4294901760
          %1404 = vmatpush1.msra.mxu0 %v1403
          %1405 = vmatprep.subr.mxu0 0.0
          %1406 = vmatpush2.msra.mxu0 0.0
          %1407 = vmatprep.subr.mxu0 0.0
          %1408 = vmatpush2.msra.mxu0 0.0
          %1409 = vmatprep.subr.mxu0 0.0
          %1410 = vmatpush2.msra.mxu0 0.0
          %1411 = vmatprep.subr.mxu0 0.0
          %1412 = vmatpush2.msra.mxu0 0.0
          %1413 = vmatprep.subr.mxu0 0.0
          %1414 = vmatpush2.msra.mxu0 0.0
          %1415 = vmatprep.subr.mxu0 0.0
          %1416 = vmatpush2.msra.mxu0 0.0
          %1417 = vmatprep.subr.mxu0 0.0
          %1418 = vmatpush2.msra.mxu0 0.0
          %1419 = vmatprep.subr.mxu0 0.0
          %1420 = vmatpush2.msra.mxu0 0.0
          %1421 = vmatprep.subr.mxu0 0.0
          %1422 = vmatpush2.msra.mxu0 0.0
          %1423 = vmatprep.subr.mxu0 0.0
          %1424 = vmatpush2.msra.mxu0 0.0
          %1425 = vmatprep.subr.mxu0 0.0
          %1426 = vmatpush2.msra.mxu0 0.0
          %1427 = vmatprep.subr.mxu0 0.0
          %1428 = vmatpush2.msra.mxu0 0.0
          %1429 = vmatprep.subr.mxu0 0.0
          %1430 = vmatpush2.msra.mxu0 0.0
          %1431 = vmatprep.subr.mxu0 0.0
          %1432 = vmatpush2.msra.mxu0 0.0
          %1433 = vmatprep.subr.mxu0 0.0
          %1434 = vmatpush2.msra.mxu0 0.0
          %1435 = vmatprep.subr.mxu0 0.0
          %1436 = vmatpush2.msra.mxu0 0.0
          %1437 = vmatprep.mubr.f32.mxu0 0.0
          %v1438 = vand.u32 %v597, 4294901760
          %1439 = vmatmul.mubr.f32.gmra.mxu0 %v1438
          %v1440 = vpop.f32.mrf.mxu0
          %v1441 = vadd.f32 %v1364, %v1440
          %v1442 = vpop.f32.mrf.mxu0
          %1443 = vdwg.mxu0
          %1444 = vmatprep.subr.mxu0 0.0
          %1445 = vmatpush1.msra.mxu0 0.0
          %1446 = vmatprep.subr.mxu0 0.0
          %1447 = vmatpush1.msra.mxu0 0.0
          %1448 = vmatprep.subr.mxu0 0.0
          %1449 = vmatpush1.msra.mxu0 0.0
          %1450 = vmatprep.subr.mxu0 0.0
          %1451 = vmatpush1.msra.mxu0 0.0
          %1452 = vmatprep.subr.mxu0 0.0
          %1453 = vmatpush1.msra.mxu0 0.0
          %1454 = vmatprep.subr.mxu0 0.0
          %1455 = vmatpush1.msra.mxu0 0.0
          %1456 = vmatprep.subr.mxu0 0.0
          %1457 = vmatpush1.msra.mxu0 0.0
          %1458 = vmatprep.subr.mxu0 0.0
          %1459 = vmatpush1.msra.mxu0 0.0
          %1460 = vmatprep.subr.mxu0 0.0
          %1461 = vmatpush1.msra.mxu0 0.0
          %1462 = vmatprep.subr.mxu0 0.0
          %1463 = vmatpush1.msra.mxu0 0.0
          %1464 = vmatprep.subr.mxu0 0.0
          %1465 = vmatpush1.msra.mxu0 0.0
          %1466 = vmatprep.subr.mxu0 0.0
          %1467 = vmatpush1.msra.mxu0 0.0
          %1468 = vmatprep.subr.mxu0 0.0
          %1469 = vmatpush1.msra.mxu0 0.0
          %1470 = vmatprep.subr.mxu0 0.0
          %1471 = vmatpush1.msra.mxu0 0.0
          %1472 = vmatprep.subr.mxu0 0.0
          %v1473 = vand.u32 %v570, 4294901760
          %1474 = vmatpush1.msra.mxu0 %v1473
          %1475 = vmatprep.subr.mxu0 0.0
          %v1476 = vand.u32 %v569, 4294901760
          %1477 = vmatpush1.msra.mxu0 %v1476
          %1478 = vmatprep.subr.mxu0 0.0
          %1479 = vmatpush2.msra.mxu0 0.0
          %1480 = vmatprep.subr.mxu0 0.0
          %1481 = vmatpush2.msra.mxu0 0.0
          %1482 = vmatprep.subr.mxu0 0.0
          %1483 = vmatpush2.msra.mxu0 0.0
          %1484 = vmatprep.subr.mxu0 0.0
          %1485 = vmatpush2.msra.mxu0 0.0
          %1486 = vmatprep.subr.mxu0 0.0
          %1487 = vmatpush2.msra.mxu0 0.0
          %1488 = vmatprep.subr.mxu0 0.0
          %1489 = vmatpush2.msra.mxu0 0.0
          %1490 = vmatprep.subr.mxu0 0.0
          %1491 = vmatpush2.msra.mxu0 0.0
          %1492 = vmatprep.subr.mxu0 0.0
          %1493 = vmatpush2.msra.mxu0 0.0
          %1494 = vmatprep.subr.mxu0 0.0
          %1495 = vmatpush2.msra.mxu0 0.0
          %1496 = vmatprep.subr.mxu0 0.0
          %1497 = vmatpush2.msra.mxu0 0.0
          %1498 = vmatprep.subr.mxu0 0.0
          %1499 = vmatpush2.msra.mxu0 0.0
          %1500 = vmatprep.subr.mxu0 0.0
          %1501 = vmatpush2.msra.mxu0 0.0
          %1502 = vmatprep.subr.mxu0 0.0
          %1503 = vmatpush2.msra.mxu0 0.0
          %1504 = vmatprep.subr.mxu0 0.0
          %1505 = vmatpush2.msra.mxu0 0.0
          %1506 = vmatprep.subr.mxu0 0.0
          %1507 = vmatpush2.msra.mxu0 0.0
          %1508 = vmatprep.subr.mxu0 0.0
          %1509 = vmatpush2.msra.mxu0 0.0
          %1510 = vmatprep.mubr.f32.mxu0 0.0
          %v1511 = vand.u32 %v597, 4294901760
          %1512 = vmatmul.mubr.f32.gmra.mxu0 %v1511
          %v1513 = vpop.f32.mrf.mxu0
          %v1514 = vadd.f32 %v1441, %v1513
          %v1515 = vpop.f32.mrf.mxu0
          %1516 = vdwg.mxu0
          %1517 = vmatprep.subr.mxu0 0.0
          %1518 = vmatpush1.msra.mxu0 0.0
          %1519 = vmatprep.subr.mxu0 0.0
          %1520 = vmatpush1.msra.mxu0 0.0
          %1521 = vmatprep.subr.mxu0 0.0
          %1522 = vmatpush1.msra.mxu0 0.0
          %1523 = vmatprep.subr.mxu0 0.0
          %1524 = vmatpush1.msra.mxu0 0.0
          %1525 = vmatprep.subr.mxu0 0.0
          %1526 = vmatpush1.msra.mxu0 0.0
          %1527 = vmatprep.subr.mxu0 0.0
          %1528 = vmatpush1.msra.mxu0 0.0
          %1529 = vmatprep.subr.mxu0 0.0
          %1530 = vmatpush1.msra.mxu0 0.0
          %1531 = vmatprep.subr.mxu0 0.0
          %1532 = vmatpush1.msra.mxu0 0.0
          %1533 = vmatprep.subr.mxu0 0.0
          %1534 = vmatpush1.msra.mxu0 0.0
          %1535 = vmatprep.subr.mxu0 0.0
          %1536 = vmatpush1.msra.mxu0 0.0
          %1537 = vmatprep.subr.mxu0 0.0
          %1538 = vmatpush1.msra.mxu0 0.0
          %1539 = vmatprep.subr.mxu0 0.0
          %1540 = vmatpush1.msra.mxu0 0.0
          %1541 = vmatprep.subr.mxu0 0.0
          %1542 = vmatpush1.msra.mxu0 0.0
          %1543 = vmatprep.subr.mxu0 0.0
          %1544 = vmatpush1.msra.mxu0 0.0
          %1545 = vmatprep.subr.mxu0 0.0
          %v1546 = vand.u32 %v572, 4294901760
          %1547 = vmatpush1.msra.mxu0 %v1546
          %1548 = vmatprep.subr.mxu0 0.0
          %v1549 = vand.u32 %v571, 4294901760
          %1550 = vmatpush1.msra.mxu0 %v1549
          %1551 = vmatprep.subr.mxu0 0.0
          %1552 = vmatpush2.msra.mxu0 0.0
          %1553 = vmatprep.subr.mxu0 0.0
          %1554 = vmatpush2.msra.mxu0 0.0
          %1555 = vmatprep.subr.mxu0 0.0
          %1556 = vmatpush2.msra.mxu0 0.0
          %1557 = vmatprep.subr.mxu0 0.0
          %1558 = vmatpush2.msra.mxu0 0.0
          %1559 = vmatprep.subr.mxu0 0.0
          %1560 = vmatpush2.msra.mxu0 0.0
          %1561 = vmatprep.subr.mxu0 0.0
          %1562 = vmatpush2.msra.mxu0 0.0
          %1563 = vmatprep.subr.mxu0 0.0
          %1564 = vmatpush2.msra.mxu0 0.0
          %1565 = vmatprep.subr.mxu0 0.0
          %1566 = vmatpush2.msra.mxu0 0.0
          %1567 = vmatprep.subr.mxu0 0.0
          %1568 = vmatpush2.msra.mxu0 0.0
          %1569 = vmatprep.subr.mxu0 0.0
          %1570 = vmatpush2.msra.mxu0 0.0
          %1571 = vmatprep.subr.mxu0 0.0
          %1572 = vmatpush2.msra.mxu0 0.0
          %1573 = vmatprep.subr.mxu0 0.0
          %1574 = vmatpush2.msra.mxu0 0.0
          %1575 = vmatprep.subr.mxu0 0.0
          %1576 = vmatpush2.msra.mxu0 0.0
          %1577 = vmatprep.subr.mxu0 0.0
          %1578 = vmatpush2.msra.mxu0 0.0
          %1579 = vmatprep.subr.mxu0 0.0
          %1580 = vmatpush2.msra.mxu0 0.0
          %1581 = vmatprep.subr.mxu0 0.0
          %1582 = vmatpush2.msra.mxu0 0.0
          %1583 = vmatprep.mubr.f32.mxu0 0.0
          %v1584 = vand.u32 %v597, 4294901760
          %v1585 = vsub.f32 %v597, %v1584
          %v1586 = vand.u32 %v1585, 4294901760
          %v1587 = vsub.f32 %v1585, %v1586
          %v1588 = vand.u32 %v1587, 4294901760
          %1589 = vmatmul.mubr.f32.gmra.mxu0 %v1588
          %v1590 = vpop.f32.mrf.mxu0
          %v1591 = vadd.f32 0.0, %v1590
          %v1592 = vpop.f32.mrf.mxu0
          %1593 = vdwg.mxu0
          %1594 = vmatprep.subr.mxu0 0.0
          %1595 = vmatpush1.msra.mxu0 0.0
          %1596 = vmatprep.subr.mxu0 0.0
          %1597 = vmatpush1.msra.mxu0 0.0
          %1598 = vmatprep.subr.mxu0 0.0
          %1599 = vmatpush1.msra.mxu0 0.0
          %1600 = vmatprep.subr.mxu0 0.0
          %1601 = vmatpush1.msra.mxu0 0.0
          %1602 = vmatprep.subr.mxu0 0.0
          %1603 = vmatpush1.msra.mxu0 0.0
          %1604 = vmatprep.subr.mxu0 0.0
          %1605 = vmatpush1.msra.mxu0 0.0
          %1606 = vmatprep.subr.mxu0 0.0
          %1607 = vmatpush1.msra.mxu0 0.0
          %1608 = vmatprep.subr.mxu0 0.0
          %1609 = vmatpush1.msra.mxu0 0.0
          %1610 = vmatprep.subr.mxu0 0.0
          %1611 = vmatpush1.msra.mxu0 0.0
          %1612 = vmatprep.subr.mxu0 0.0
          %1613 = vmatpush1.msra.mxu0 0.0
          %1614 = vmatprep.subr.mxu0 0.0
          %1615 = vmatpush1.msra.mxu0 0.0
          %1616 = vmatprep.subr.mxu0 0.0
          %1617 = vmatpush1.msra.mxu0 0.0
          %1618 = vmatprep.subr.mxu0 0.0
          %1619 = vmatpush1.msra.mxu0 0.0
          %1620 = vmatprep.subr.mxu0 0.0
          %1621 = vmatpush1.msra.mxu0 0.0
          %1622 = vmatprep.subr.mxu0 0.0
          %v1623 = vand.u32 %v572, 4294901760
          %v1624 = vsub.f32 %v572, %v1623
          %v1625 = vand.u32 %v1624, 4294901760
          %v1626 = vsub.f32 %v1624, %v1625
          %v1627 = vand.u32 %v1626, 4294901760
          %1628 = vmatpush1.msra.mxu0 %v1627
          %1629 = vmatprep.subr.mxu0 0.0
          %v1630 = vand.u32 %v571, 4294901760
          %v1631 = vsub.f32 %v571, %v1630
          %v1632 = vand.u32 %v1631, 4294901760
          %v1633 = vsub.f32 %v1631, %v1632
          %v1634 = vand.u32 %v1633, 4294901760
          %1635 = vmatpush1.msra.mxu0 %v1634
          %1636 = vmatprep.subr.mxu0 0.0
          %1637 = vmatpush2.msra.mxu0 0.0
          %1638 = vmatprep.subr.mxu0 0.0
          %1639 = vmatpush2.msra.mxu0 0.0
          %1640 = vmatprep.subr.mxu0 0.0
          %1641 = vmatpush2.msra.mxu0 0.0
          %1642 = vmatprep.subr.mxu0 0.0
          %1643 = vmatpush2.msra.mxu0 0.0
          %1644 = vmatprep.subr.mxu0 0.0
          %1645 = vmatpush2.msra.mxu0 0.0
          %1646 = vmatprep.subr.mxu0 0.0
          %1647 = vmatpush2.msra.mxu0 0.0
          %1648 = vmatprep.subr.mxu0 0.0
          %1649 = vmatpush2.msra.mxu0 0.0
          %1650 = vmatprep.subr.mxu0 0.0
          %1651 = vmatpush2.msra.mxu0 0.0
          %1652 = vmatprep.subr.mxu0 0.0
          %1653 = vmatpush2.msra.mxu0 0.0
          %1654 = vmatprep.subr.mxu0 0.0
          %1655 = vmatpush2.msra.mxu0 0.0
          %1656 = vmatprep.subr.mxu0 0.0
          %1657 = vmatpush2.msra.mxu0 0.0
          %1658 = vmatprep.subr.mxu0 0.0
          %1659 = vmatpush2.msra.mxu0 0.0
          %1660 = vmatprep.subr.mxu0 0.0
          %1661 = vmatpush2.msra.mxu0 0.0
          %1662 = vmatprep.subr.mxu0 0.0
          %1663 = vmatpush2.msra.mxu0 0.0
          %1664 = vmatprep.subr.mxu0 0.0
          %1665 = vmatpush2.msra.mxu0 0.0
          %1666 = vmatprep.subr.mxu0 0.0
          %1667 = vmatpush2.msra.mxu0 0.0
          %1668 = vmatprep.mubr.f32.mxu0 0.0
          %v1669 = vand.u32 %v597, 4294901760
          %1670 = vmatmul.mubr.f32.gmra.mxu0 %v1669
          %v1671 = vpop.f32.mrf.mxu0
          %v1672 = vadd.f32 %v1591, %v1671
          %v1673 = vpop.f32.mrf.mxu0
          %1674 = vdwg.mxu0
          %1675 = vmatprep.subr.mxu0 0.0
          %1676 = vmatpush1.msra.mxu0 0.0
          %1677 = vmatprep.subr.mxu0 0.0
          %1678 = vmatpush1.msra.mxu0 0.0
          %1679 = vmatprep.subr.mxu0 0.0
          %1680 = vmatpush1.msra.mxu0 0.0
          %1681 = vmatprep.subr.mxu0 0.0
          %1682 = vmatpush1.msra.mxu0 0.0
          %1683 = vmatprep.subr.mxu0 0.0
          %1684 = vmatpush1.msra.mxu0 0.0
          %1685 = vmatprep.subr.mxu0 0.0
          %1686 = vmatpush1.msra.mxu0 0.0
          %1687 = vmatprep.subr.mxu0 0.0
          %1688 = vmatpush1.msra.mxu0 0.0
          %1689 = vmatprep.subr.mxu0 0.0
          %1690 = vmatpush1.msra.mxu0 0.0
          %1691 = vmatprep.subr.mxu0 0.0
          %1692 = vmatpush1.msra.mxu0 0.0
          %1693 = vmatprep.subr.mxu0 0.0
          %1694 = vmatpush1.msra.mxu0 0.0
          %1695 = vmatprep.subr.mxu0 0.0
          %1696 = vmatpush1.msra.mxu0 0.0
          %1697 = vmatprep.subr.mxu0 0.0
          %1698 = vmatpush1.msra.mxu0 0.0
          %1699 = vmatprep.subr.mxu0 0.0
          %1700 = vmatpush1.msra.mxu0 0.0
          %1701 = vmatprep.subr.mxu0 0.0
          %1702 = vmatpush1.msra.mxu0 0.0
          %1703 = vmatprep.subr.mxu0 0.0
          %v1704 = vand.u32 %v572, 4294901760
          %v1705 = vsub.f32 %v572, %v1704
          %1706 = vmatpush1.msra.mxu0 %v1705
          %1707 = vmatprep.subr.mxu0 0.0
          %v1708 = vand.u32 %v571, 4294901760
          %v1709 = vsub.f32 %v571, %v1708
          %1710 = vmatpush1.msra.mxu0 %v1709
          %1711 = vmatprep.subr.mxu0 0.0
          %1712 = vmatpush2.msra.mxu0 0.0
          %1713 = vmatprep.subr.mxu0 0.0
          %1714 = vmatpush2.msra.mxu0 0.0
          %1715 = vmatprep.subr.mxu0 0.0
          %1716 = vmatpush2.msra.mxu0 0.0
          %1717 = vmatprep.subr.mxu0 0.0
          %1718 = vmatpush2.msra.mxu0 0.0
          %1719 = vmatprep.subr.mxu0 0.0
          %1720 = vmatpush2.msra.mxu0 0.0
          %1721 = vmatprep.subr.mxu0 0.0
          %1722 = vmatpush2.msra.mxu0 0.0
          %1723 = vmatprep.subr.mxu0 0.0
          %1724 = vmatpush2.msra.mxu0 0.0
          %1725 = vmatprep.subr.mxu0 0.0
          %1726 = vmatpush2.msra.mxu0 0.0
          %1727 = vmatprep.subr.mxu0 0.0
          %1728 = vmatpush2.msra.mxu0 0.0
          %1729 = vmatprep.subr.mxu0 0.0
          %1730 = vmatpush2.msra.mxu0 0.0
          %1731 = vmatprep.subr.mxu0 0.0
          %1732 = vmatpush2.msra.mxu0 0.0
          %1733 = vmatprep.subr.mxu0 0.0
          %1734 = vmatpush2.msra.mxu0 0.0
          %1735 = vmatprep.subr.mxu0 0.0
          %1736 = vmatpush2.msra.mxu0 0.0
          %1737 = vmatprep.subr.mxu0 0.0
          %1738 = vmatpush2.msra.mxu0 0.0
          %1739 = vmatprep.subr.mxu0 0.0
          %1740 = vmatpush2.msra.mxu0 0.0
          %1741 = vmatprep.subr.mxu0 0.0
          %1742 = vmatpush2.msra.mxu0 0.0
          %1743 = vmatprep.mubr.f32.mxu0 0.0
          %v1744 = vand.u32 %v597, 4294901760
          %v1745 = vsub.f32 %v597, %v1744
          %1746 = vmatmul.mubr.f32.gmra.mxu0 %v1745
          %v1747 = vpop.f32.mrf.mxu0
          %v1748 = vadd.f32 %v1672, %v1747
          %v1749 = vpop.f32.mrf.mxu0
          %1750 = vdwg.mxu0
          %1751 = vmatprep.subr.mxu0 0.0
          %1752 = vmatpush1.msra.mxu0 0.0
          %1753 = vmatprep.subr.mxu0 0.0
          %1754 = vmatpush1.msra.mxu0 0.0
          %1755 = vmatprep.subr.mxu0 0.0
          %1756 = vmatpush1.msra.mxu0 0.0
          %1757 = vmatprep.subr.mxu0 0.0
          %1758 = vmatpush1.msra.mxu0 0.0
          %1759 = vmatprep.subr.mxu0 0.0
          %1760 = vmatpush1.msra.mxu0 0.0
          %1761 = vmatprep.subr.mxu0 0.0
          %1762 = vmatpush1.msra.mxu0 0.0
          %1763 = vmatprep.subr.mxu0 0.0
          %1764 = vmatpush1.msra.mxu0 0.0
          %1765 = vmatprep.subr.mxu0 0.0
          %1766 = vmatpush1.msra.mxu0 0.0
          %1767 = vmatprep.subr.mxu0 0.0
          %1768 = vmatpush1.msra.mxu0 0.0
          %1769 = vmatprep.subr.mxu0 0.0
          %1770 = vmatpush1.msra.mxu0 0.0
          %1771 = vmatprep.subr.mxu0 0.0
          %1772 = vmatpush1.msra.mxu0 0.0
          %1773 = vmatprep.subr.mxu0 0.0
          %1774 = vmatpush1.msra.mxu0 0.0
          %1775 = vmatprep.subr.mxu0 0.0
          %1776 = vmatpush1.msra.mxu0 0.0
          %1777 = vmatprep.subr.mxu0 0.0
          %1778 = vmatpush1.msra.mxu0 0.0
          %1779 = vmatprep.subr.mxu0 0.0
          %v1780 = vand.u32 %v572, 4294901760
          %1781 = vmatpush1.msra.mxu0 %v1780
          %1782 = vmatprep.subr.mxu0 0.0
          %v1783 = vand.u32 %v571, 4294901760
          %1784 = vmatpush1.msra.mxu0 %v1783
          %1785 = vmatprep.subr.mxu0 0.0
          %1786 = vmatpush2.msra.mxu0 0.0
          %1787 = vmatprep.subr.mxu0 0.0
          %1788 = vmatpush2.msra.mxu0 0.0
          %1789 = vmatprep.subr.mxu0 0.0
          %1790 = vmatpush2.msra.mxu0 0.0
          %1791 = vmatprep.subr.mxu0 0.0
          %1792 = vmatpush2.msra.mxu0 0.0
          %1793 = vmatprep.subr.mxu0 0.0
          %1794 = vmatpush2.msra.mxu0 0.0
          %1795 = vmatprep.subr.mxu0 0.0
          %1796 = vmatpush2.msra.mxu0 0.0
          %1797 = vmatprep.subr.mxu0 0.0
          %1798 = vmatpush2.msra.mxu0 0.0
          %1799 = vmatprep.subr.mxu0 0.0
          %1800 = vmatpush2.msra.mxu0 0.0
          %1801 = vmatprep.subr.mxu0 0.0
          %1802 = vmatpush2.msra.mxu0 0.0
          %1803 = vmatprep.subr.mxu0 0.0
          %1804 = vmatpush2.msra.mxu0 0.0
          %1805 = vmatprep.subr.mxu0 0.0
          %1806 = vmatpush2.msra.mxu0 0.0
          %1807 = vmatprep.subr.mxu0 0.0
          %1808 = vmatpush2.msra.mxu0 0.0
          %1809 = vmatprep.subr.mxu0 0.0
          %1810 = vmatpush2.msra.mxu0 0.0
          %1811 = vmatprep.subr.mxu0 0.0
          %1812 = vmatpush2.msra.mxu0 0.0
          %1813 = vmatprep.subr.mxu0 0.0
          %1814 = vmatpush2.msra.mxu0 0.0
          %1815 = vmatprep.subr.mxu0 0.0
          %1816 = vmatpush2.msra.mxu0 0.0
          %1817 = vmatprep.mubr.f32.mxu0 0.0
          %v1818 = vand.u32 %v597, 4294901760
          %v1819 = vsub.f32 %v597, %v1818
          %v1820 = vand.u32 %v1819, 4294901760
          %1821 = vmatmul.mubr.f32.gmra.mxu0 %v1820
          %v1822 = vpop.f32.mrf.mxu0
          %v1823 = vadd.f32 %v1748, %v1822
          %v1824 = vpop.f32.mrf.mxu0
          %1825 = vdwg.mxu0
          %1826 = vmatprep.subr.mxu0 0.0
          %1827 = vmatpush1.msra.mxu0 0.0
          %1828 = vmatprep.subr.mxu0 0.0
          %1829 = vmatpush1.msra.mxu0 0.0
          %1830 = vmatprep.subr.mxu0 0.0
          %1831 = vmatpush1.msra.mxu0 0.0
          %1832 = vmatprep.subr.mxu0 0.0
          %1833 = vmatpush1.msra.mxu0 0.0
          %1834 = vmatprep.subr.mxu0 0.0
          %1835 = vmatpush1.msra.mxu0 0.0
          %1836 = vmatprep.subr.mxu0 0.0
          %1837 = vmatpush1.msra.mxu0 0.0
          %1838 = vmatprep.subr.mxu0 0.0
          %1839 = vmatpush1.msra.mxu0 0.0
          %1840 = vmatprep.subr.mxu0 0.0
          %1841 = vmatpush1.msra.mxu0 0.0
          %1842 = vmatprep.subr.mxu0 0.0
          %1843 = vmatpush1.msra.mxu0 0.0
          %1844 = vmatprep.subr.mxu0 0.0
          %1845 = vmatpush1.msra.mxu0 0.0
          %1846 = vmatprep.subr.mxu0 0.0
          %1847 = vmatpush1.msra.mxu0 0.0
          %1848 = vmatprep.subr.mxu0 0.0
          %1849 = vmatpush1.msra.mxu0 0.0
          %1850 = vmatprep.subr.mxu0 0.0
          %1851 = vmatpush1.msra.mxu0 0.0
          %1852 = vmatprep.subr.mxu0 0.0
          %1853 = vmatpush1.msra.mxu0 0.0
          %1854 = vmatprep.subr.mxu0 0.0
          %v1855 = vand.u32 %v572, 4294901760
          %v1856 = vsub.f32 %v572, %v1855
          %v1857 = vand.u32 %v1856, 4294901760
          %1858 = vmatpush1.msra.mxu0 %v1857
          %1859 = vmatprep.subr.mxu0 0.0
          %v1860 = vand.u32 %v571, 4294901760
          %v1861 = vsub.f32 %v571, %v1860
          %v1862 = vand.u32 %v1861, 4294901760
          %1863 = vmatpush1.msra.mxu0 %v1862
          %1864 = vmatprep.subr.mxu0 0.0
          %1865 = vmatpush2.msra.mxu0 0.0
          %1866 = vmatprep.subr.mxu0 0.0
          %1867 = vmatpush2.msra.mxu0 0.0
          %1868 = vmatprep.subr.mxu0 0.0
          %1869 = vmatpush2.msra.mxu0 0.0
          %1870 = vmatprep.subr.mxu0 0.0
          %1871 = vmatpush2.msra.mxu0 0.0
          %1872 = vmatprep.subr.mxu0 0.0
          %1873 = vmatpush2.msra.mxu0 0.0
          %1874 = vmatprep.subr.mxu0 0.0
          %1875 = vmatpush2.msra.mxu0 0.0
          %1876 = vmatprep.subr.mxu0 0.0
          %1877 = vmatpush2.msra.mxu0 0.0
          %1878 = vmatprep.subr.mxu0 0.0
          %1879 = vmatpush2.msra.mxu0 0.0
          %1880 = vmatprep.subr.mxu0 0.0
          %1881 = vmatpush2.msra.mxu0 0.0
          %1882 = vmatprep.subr.mxu0 0.0
          %1883 = vmatpush2.msra.mxu0 0.0
          %1884 = vmatprep.subr.mxu0 0.0
          %1885 = vmatpush2.msra.mxu0 0.0
          %1886 = vmatprep.subr.mxu0 0.0
          %1887 = vmatpush2.msra.mxu0 0.0
          %1888 = vmatprep.subr.mxu0 0.0
          %1889 = vmatpush2.msra.mxu0 0.0
          %1890 = vmatprep.subr.mxu0 0.0
          %1891 = vmatpush2.msra.mxu0 0.0
          %1892 = vmatprep.subr.mxu0 0.0
          %1893 = vmatpush2.msra.mxu0 0.0
          %1894 = vmatprep.subr.mxu0 0.0
          %1895 = vmatpush2.msra.mxu0 0.0
          %1896 = vmatprep.mubr.f32.mxu0 0.0
          %v1897 = vand.u32 %v597, 4294901760
          %1898 = vmatmul.mubr.f32.gmra.mxu0 %v1897
          %v1899 = vpop.f32.mrf.mxu0
          %v1900 = vadd.f32 %v1823, %v1899
          %v1901 = vpop.f32.mrf.mxu0
          %1902 = vdwg.mxu0
          %1903 = vmatprep.subr.mxu0 0.0
          %1904 = vmatpush1.msra.mxu0 0.0
          %1905 = vmatprep.subr.mxu0 0.0
          %1906 = vmatpush1.msra.mxu0 0.0
          %1907 = vmatprep.subr.mxu0 0.0
          %1908 = vmatpush1.msra.mxu0 0.0
          %1909 = vmatprep.subr.mxu0 0.0
          %1910 = vmatpush1.msra.mxu0 0.0
          %1911 = vmatprep.subr.mxu0 0.0
          %1912 = vmatpush1.msra.mxu0 0.0
          %1913 = vmatprep.subr.mxu0 0.0
          %1914 = vmatpush1.msra.mxu0 0.0
          %1915 = vmatprep.subr.mxu0 0.0
          %1916 = vmatpush1.msra.mxu0 0.0
          %1917 = vmatprep.subr.mxu0 0.0
          %1918 = vmatpush1.msra.mxu0 0.0
          %1919 = vmatprep.subr.mxu0 0.0
          %1920 = vmatpush1.msra.mxu0 0.0
          %1921 = vmatprep.subr.mxu0 0.0
          %1922 = vmatpush1.msra.mxu0 0.0
          %1923 = vmatprep.subr.mxu0 0.0
          %1924 = vmatpush1.msra.mxu0 0.0
          %1925 = vmatprep.subr.mxu0 0.0
          %1926 = vmatpush1.msra.mxu0 0.0
          %1927 = vmatprep.subr.mxu0 0.0
          %1928 = vmatpush1.msra.mxu0 0.0
          %1929 = vmatprep.subr.mxu0 0.0
          %1930 = vmatpush1.msra.mxu0 0.0
          %1931 = vmatprep.subr.mxu0 0.0
          %v1932 = vand.u32 %v572, 4294901760
          %1933 = vmatpush1.msra.mxu0 %v1932
          %1934 = vmatprep.subr.mxu0 0.0
          %v1935 = vand.u32 %v571, 4294901760
          %1936 = vmatpush1.msra.mxu0 %v1935
          %1937 = vmatprep.subr.mxu0 0.0
          %1938 = vmatpush2.msra.mxu0 0.0
          %1939 = vmatprep.subr.mxu0 0.0
          %1940 = vmatpush2.msra.mxu0 0.0
          %1941 = vmatprep.subr.mxu0 0.0
          %1942 = vmatpush2.msra.mxu0 0.0
          %1943 = vmatprep.subr.mxu0 0.0
          %1944 = vmatpush2.msra.mxu0 0.0
          %1945 = vmatprep.subr.mxu0 0.0
          %1946 = vmatpush2.msra.mxu0 0.0
          %1947 = vmatprep.subr.mxu0 0.0
          %1948 = vmatpush2.msra.mxu0 0.0
          %1949 = vmatprep.subr.mxu0 0.0
          %1950 = vmatpush2.msra.mxu0 0.0
          %1951 = vmatprep.subr.mxu0 0.0
          %1952 = vmatpush2.msra.mxu0 0.0
          %1953 = vmatprep.subr.mxu0 0.0
          %1954 = vmatpush2.msra.mxu0 0.0
          %1955 = vmatprep.subr.mxu0 0.0
          %1956 = vmatpush2.msra.mxu0 0.0
          %1957 = vmatprep.subr.mxu0 0.0
          %1958 = vmatpush2.msra.mxu0 0.0
          %1959 = vmatprep.subr.mxu0 0.0
          %1960 = vmatpush2.msra.mxu0 0.0
          %1961 = vmatprep.subr.mxu0 0.0
          %1962 = vmatpush2.msra.mxu0 0.0
          %1963 = vmatprep.subr.mxu0 0.0
          %1964 = vmatpush2.msra.mxu0 0.0
          %1965 = vmatprep.subr.mxu0 0.0
          %1966 = vmatpush2.msra.mxu0 0.0
          %1967 = vmatprep.subr.mxu0 0.0
          %1968 = vmatpush2.msra.mxu0 0.0
          %1969 = vmatprep.mubr.f32.mxu0 0.0
          %v1970 = vand.u32 %v597, 4294901760
          %1971 = vmatmul.mubr.f32.gmra.mxu0 %v1970
          %v1972 = vpop.f32.mrf.mxu0
          %v1973 = vadd.f32 %v1900, %v1972
          %v1974 = vpop.f32.mrf.mxu0
          %1975 = vdwg.mxu0
          %1976 = vmatprep.subr.mxu0 0.0
          %1977 = vmatpush1.msra.mxu0 0.0
          %1978 = vmatprep.subr.mxu0 0.0
          %1979 = vmatpush1.msra.mxu0 0.0
          %1980 = vmatprep.subr.mxu0 0.0
          %1981 = vmatpush1.msra.mxu0 0.0
          %1982 = vmatprep.subr.mxu0 0.0
          %1983 = vmatpush1.msra.mxu0 0.0
          %1984 = vmatprep.subr.mxu0 0.0
          %1985 = vmatpush1.msra.mxu0 0.0
          %1986 = vmatprep.subr.mxu0 0.0
          %1987 = vmatpush1.msra.mxu0 0.0
          %1988 = vmatprep.subr.mxu0 0.0
          %1989 = vmatpush1.msra.mxu0 0.0
          %1990 = vmatprep.subr.mxu0 0.0
          %1991 = vmatpush1.msra.mxu0 0.0
          %1992 = vmatprep.subr.mxu0 0.0
          %1993 = vmatpush1.msra.mxu0 0.0
          %1994 = vmatprep.subr.mxu0 0.0
          %1995 = vmatpush1.msra.mxu0 0.0
          %1996 = vmatprep.subr.mxu0 0.0
          %1997 = vmatpush1.msra.mxu0 0.0
          %1998 = vmatprep.subr.mxu0 0.0
          %1999 = vmatpush1.msra.mxu0 0.0
          %2000 = vmatprep.subr.mxu0 0.0
          %2001 = vmatpush1.msra.mxu0 0.0
          %2002 = vmatprep.subr.mxu0 0.0
          %2003 = vmatpush1.msra.mxu0 0.0
          %2004 = vmatprep.subr.mxu0 0.0
          %v2005 = vand.u32 %v574, 4294901760
          %2006 = vmatpush1.msra.mxu0 %v2005
          %2007 = vmatprep.subr.mxu0 0.0
          %v2008 = vand.u32 %v573, 4294901760
          %2009 = vmatpush1.msra.mxu0 %v2008
          %2010 = vmatprep.subr.mxu0 0.0
          %2011 = vmatpush2.msra.mxu0 0.0
          %2012 = vmatprep.subr.mxu0 0.0
          %2013 = vmatpush2.msra.mxu0 0.0
          %2014 = vmatprep.subr.mxu0 0.0
          %2015 = vmatpush2.msra.mxu0 0.0
          %2016 = vmatprep.subr.mxu0 0.0
          %2017 = vmatpush2.msra.mxu0 0.0
          %2018 = vmatprep.subr.mxu0 0.0
          %2019 = vmatpush2.msra.mxu0 0.0
          %2020 = vmatprep.subr.mxu0 0.0
          %2021 = vmatpush2.msra.mxu0 0.0
          %2022 = vmatprep.subr.mxu0 0.0
          %2023 = vmatpush2.msra.mxu0 0.0
          %2024 = vmatprep.subr.mxu0 0.0
          %2025 = vmatpush2.msra.mxu0 0.0
          %2026 = vmatprep.subr.mxu0 0.0
          %2027 = vmatpush2.msra.mxu0 0.0
          %2028 = vmatprep.subr.mxu0 0.0
          %2029 = vmatpush2.msra.mxu0 0.0
          %2030 = vmatprep.subr.mxu0 0.0
          %2031 = vmatpush2.msra.mxu0 0.0
          %2032 = vmatprep.subr.mxu0 0.0
          %2033 = vmatpush2.msra.mxu0 0.0
          %2034 = vmatprep.subr.mxu0 0.0
          %2035 = vmatpush2.msra.mxu0 0.0
          %2036 = vmatprep.subr.mxu0 0.0
          %2037 = vmatpush2.msra.mxu0 0.0
          %2038 = vmatprep.subr.mxu0 0.0
          %2039 = vmatpush2.msra.mxu0 0.0
          %2040 = vmatprep.subr.mxu0 0.0
          %2041 = vmatpush2.msra.mxu0 0.0
          %2042 = vmatprep.mubr.f32.mxu0 0.0
          %v2043 = vand.u32 %v597, 4294901760
          %v2044 = vsub.f32 %v597, %v2043
          %v2045 = vand.u32 %v2044, 4294901760
          %v2046 = vsub.f32 %v2044, %v2045
          %v2047 = vand.u32 %v2046, 4294901760
          %2048 = vmatmul.mubr.f32.gmra.mxu0 %v2047
          %v2049 = vpop.f32.mrf.mxu0
          %v2050 = vadd.f32 0.0, %v2049
          %v2051 = vpop.f32.mrf.mxu0
          %2052 = vdwg.mxu0
          %2053 = vmatprep.subr.mxu0 0.0
          %2054 = vmatpush1.msra.mxu0 0.0
          %2055 = vmatprep.subr.mxu0 0.0
          %2056 = vmatpush1.msra.mxu0 0.0
          %2057 = vmatprep.subr.mxu0 0.0
          %2058 = vmatpush1.msra.mxu0 0.0
          %2059 = vmatprep.subr.mxu0 0.0
          %2060 = vmatpush1.msra.mxu0 0.0
          %2061 = vmatprep.subr.mxu0 0.0
          %2062 = vmatpush1.msra.mxu0 0.0
          %2063 = vmatprep.subr.mxu0 0.0
          %2064 = vmatpush1.msra.mxu0 0.0
          %2065 = vmatprep.subr.mxu0 0.0
          %2066 = vmatpush1.msra.mxu0 0.0
          %2067 = vmatprep.subr.mxu0 0.0
          %2068 = vmatpush1.msra.mxu0 0.0
          %2069 = vmatprep.subr.mxu0 0.0
          %2070 = vmatpush1.msra.mxu0 0.0
          %2071 = vmatprep.subr.mxu0 0.0
          %2072 = vmatpush1.msra.mxu0 0.0
          %2073 = vmatprep.subr.mxu0 0.0
          %2074 = vmatpush1.msra.mxu0 0.0
          %2075 = vmatprep.subr.mxu0 0.0
          %2076 = vmatpush1.msra.mxu0 0.0
          %2077 = vmatprep.subr.mxu0 0.0
          %2078 = vmatpush1.msra.mxu0 0.0
          %2079 = vmatprep.subr.mxu0 0.0
          %2080 = vmatpush1.msra.mxu0 0.0
          %2081 = vmatprep.subr.mxu0 0.0
          %v2082 = vand.u32 %v574, 4294901760
          %v2083 = vsub.f32 %v574, %v2082
          %v2084 = vand.u32 %v2083, 4294901760
          %v2085 = vsub.f32 %v2083, %v2084
          %v2086 = vand.u32 %v2085, 4294901760
          %2087 = vmatpush1.msra.mxu0 %v2086
          %2088 = vmatprep.subr.mxu0 0.0
          %v2089 = vand.u32 %v573, 4294901760
          %v2090 = vsub.f32 %v573, %v2089
          %v2091 = vand.u32 %v2090, 4294901760
          %v2092 = vsub.f32 %v2090, %v2091
          %v2093 = vand.u32 %v2092, 4294901760
          %2094 = vmatpush1.msra.mxu0 %v2093
          %2095 = vmatprep.subr.mxu0 0.0
          %2096 = vmatpush2.msra.mxu0 0.0
          %2097 = vmatprep.subr.mxu0 0.0
          %2098 = vmatpush2.msra.mxu0 0.0
          %2099 = vmatprep.subr.mxu0 0.0
          %2100 = vmatpush2.msra.mxu0 0.0
          %2101 = vmatprep.subr.mxu0 0.0
          %2102 = vmatpush2.msra.mxu0 0.0
          %2103 = vmatprep.subr.mxu0 0.0
          %2104 = vmatpush2.msra.mxu0 0.0
          %2105 = vmatprep.subr.mxu0 0.0
          %2106 = vmatpush2.msra.mxu0 0.0
          %2107 = vmatprep.subr.mxu0 0.0
          %2108 = vmatpush2.msra.mxu0 0.0
          %2109 = vmatprep.subr.mxu0 0.0
          %2110 = vmatpush2.msra.mxu0 0.0
          %2111 = vmatprep.subr.mxu0 0.0
          %2112 = vmatpush2.msra.mxu0 0.0
          %2113 = vmatprep.subr.mxu0 0.0
          %2114 = vmatpush2.msra.mxu0 0.0
          %2115 = vmatprep.subr.mxu0 0.0
          %2116 = vmatpush2.msra.mxu0 0.0
          %2117 = vmatprep.subr.mxu0 0.0
          %2118 = vmatpush2.msra.mxu0 0.0
          %2119 = vmatprep.subr.mxu0 0.0
          %2120 = vmatpush2.msra.mxu0 0.0
          %2121 = vmatprep.subr.mxu0 0.0
          %2122 = vmatpush2.msra.mxu0 0.0
          %2123 = vmatprep.subr.mxu0 0.0
          %2124 = vmatpush2.msra.mxu0 0.0
          %2125 = vmatprep.subr.mxu0 0.0
          %2126 = vmatpush2.msra.mxu0 0.0
          %2127 = vmatprep.mubr.f32.mxu0 0.0
          %v2128 = vand.u32 %v597, 4294901760
          %2129 = vmatmul.mubr.f32.gmra.mxu0 %v2128
          %v2130 = vpop.f32.mrf.mxu0
          %v2131 = vadd.f32 %v2050, %v2130
          %v2132 = vpop.f32.mrf.mxu0
          %2133 = vdwg.mxu0
          %2134 = vmatprep.subr.mxu0 0.0
          %2135 = vmatpush1.msra.mxu0 0.0
          %2136 = vmatprep.subr.mxu0 0.0
          %2137 = vmatpush1.msra.mxu0 0.0
          %2138 = vmatprep.subr.mxu0 0.0
          %2139 = vmatpush1.msra.mxu0 0.0
          %2140 = vmatprep.subr.mxu0 0.0
          %2141 = vmatpush1.msra.mxu0 0.0
          %2142 = vmatprep.subr.mxu0 0.0
          %2143 = vmatpush1.msra.mxu0 0.0
          %2144 = vmatprep.subr.mxu0 0.0
          %2145 = vmatpush1.msra.mxu0 0.0
          %2146 = vmatprep.subr.mxu0 0.0
          %2147 = vmatpush1.msra.mxu0 0.0
          %2148 = vmatprep.subr.mxu0 0.0
          %2149 = vmatpush1.msra.mxu0 0.0
          %2150 = vmatprep.subr.mxu0 0.0
          %2151 = vmatpush1.msra.mxu0 0.0
          %2152 = vmatprep.subr.mxu0 0.0
          %2153 = vmatpush1.msra.mxu0 0.0
          %2154 = vmatprep.subr.mxu0 0.0
          %2155 = vmatpush1.msra.mxu0 0.0
          %2156 = vmatprep.subr.mxu0 0.0
          %2157 = vmatpush1.msra.mxu0 0.0
          %2158 = vmatprep.subr.mxu0 0.0
          %2159 = vmatpush1.msra.mxu0 0.0
          %2160 = vmatprep.subr.mxu0 0.0
          %2161 = vmatpush1.msra.mxu0 0.0
          %2162 = vmatprep.subr.mxu0 0.0
          %v2163 = vand.u32 %v574, 4294901760
          %v2164 = vsub.f32 %v574, %v2163
          %2165 = vmatpush1.msra.mxu0 %v2164
          %2166 = vmatprep.subr.mxu0 0.0
          %v2167 = vand.u32 %v573, 4294901760
          %v2168 = vsub.f32 %v573, %v2167
          %2169 = vmatpush1.msra.mxu0 %v2168
          %2170 = vmatprep.subr.mxu0 0.0
          %2171 = vmatpush2.msra.mxu0 0.0
          %2172 = vmatprep.subr.mxu0 0.0
          %2173 = vmatpush2.msra.mxu0 0.0
          %2174 = vmatprep.subr.mxu0 0.0
          %2175 = vmatpush2.msra.mxu0 0.0
          %2176 = vmatprep.subr.mxu0 0.0
          %2177 = vmatpush2.msra.mxu0 0.0
          %2178 = vmatprep.subr.mxu0 0.0
          %2179 = vmatpush2.msra.mxu0 0.0
          %2180 = vmatprep.subr.mxu0 0.0
          %2181 = vmatpush2.msra.mxu0 0.0
          %2182 = vmatprep.subr.mxu0 0.0
          %2183 = vmatpush2.msra.mxu0 0.0
          %2184 = vmatprep.subr.mxu0 0.0
          %2185 = vmatpush2.msra.mxu0 0.0
          %2186 = vmatprep.subr.mxu0 0.0
          %2187 = vmatpush2.msra.mxu0 0.0
          %2188 = vmatprep.subr.mxu0 0.0
          %2189 = vmatpush2.msra.mxu0 0.0
          %2190 = vmatprep.subr.mxu0 0.0
          %2191 = vmatpush2.msra.mxu0 0.0
          %2192 = vmatprep.subr.mxu0 0.0
          %2193 = vmatpush2.msra.mxu0 0.0
          %2194 = vmatprep.subr.mxu0 0.0
          %2195 = vmatpush2.msra.mxu0 0.0
          %2196 = vmatprep.subr.mxu0 0.0
          %2197 = vmatpush2.msra.mxu0 0.0
          %2198 = vmatprep.subr.mxu0 0.0
          %2199 = vmatpush2.msra.mxu0 0.0
          %2200 = vmatprep.subr.mxu0 0.0
          %2201 = vmatpush2.msra.mxu0 0.0
          %2202 = vmatprep.mubr.f32.mxu0 0.0
          %v2203 = vand.u32 %v597, 4294901760
          %v2204 = vsub.f32 %v597, %v2203
          %2205 = vmatmul.mubr.f32.gmra.mxu0 %v2204
          %v2206 = vpop.f32.mrf.mxu0
          %v2207 = vadd.f32 %v2131, %v2206
          %v2208 = vpop.f32.mrf.mxu0
          %2209 = vdwg.mxu0
          %2210 = vmatprep.subr.mxu0 0.0
          %2211 = vmatpush1.msra.mxu0 0.0
          %2212 = vmatprep.subr.mxu0 0.0
          %2213 = vmatpush1.msra.mxu0 0.0
          %2214 = vmatprep.subr.mxu0 0.0
          %2215 = vmatpush1.msra.mxu0 0.0
          %2216 = vmatprep.subr.mxu0 0.0
          %2217 = vmatpush1.msra.mxu0 0.0
          %2218 = vmatprep.subr.mxu0 0.0
          %2219 = vmatpush1.msra.mxu0 0.0
          %2220 = vmatprep.subr.mxu0 0.0
          %2221 = vmatpush1.msra.mxu0 0.0
          %2222 = vmatprep.subr.mxu0 0.0
          %2223 = vmatpush1.msra.mxu0 0.0
          %2224 = vmatprep.subr.mxu0 0.0
          %2225 = vmatpush1.msra.mxu0 0.0
          %2226 = vmatprep.subr.mxu0 0.0
          %2227 = vmatpush1.msra.mxu0 0.0
          %2228 = vmatprep.subr.mxu0 0.0
          %2229 = vmatpush1.msra.mxu0 0.0
          %2230 = vmatprep.subr.mxu0 0.0
          %2231 = vmatpush1.msra.mxu0 0.0
          %2232 = vmatprep.subr.mxu0 0.0
          %2233 = vmatpush1.msra.mxu0 0.0
          %2234 = vmatprep.subr.mxu0 0.0
          %2235 = vmatpush1.msra.mxu0 0.0
          %2236 = vmatprep.subr.mxu0 0.0
          %2237 = vmatpush1.msra.mxu0 0.0
          %2238 = vmatprep.subr.mxu0 0.0
          %v2239 = vand.u32 %v574, 4294901760
          %2240 = vmatpush1.msra.mxu0 %v2239
          %2241 = vmatprep.subr.mxu0 0.0
          %v2242 = vand.u32 %v573, 4294901760
          %2243 = vmatpush1.msra.mxu0 %v2242
          %2244 = vmatprep.subr.mxu0 0.0
          %2245 = vmatpush2.msra.mxu0 0.0
          %2246 = vmatprep.subr.mxu0 0.0
          %2247 = vmatpush2.msra.mxu0 0.0
          %2248 = vmatprep.subr.mxu0 0.0
          %2249 = vmatpush2.msra.mxu0 0.0
          %2250 = vmatprep.subr.mxu0 0.0
          %2251 = vmatpush2.msra.mxu0 0.0
          %2252 = vmatprep.subr.mxu0 0.0
          %2253 = vmatpush2.msra.mxu0 0.0
          %2254 = vmatprep.subr.mxu0 0.0
          %2255 = vmatpush2.msra.mxu0 0.0
          %2256 = vmatprep.subr.mxu0 0.0
          %2257 = vmatpush2.msra.mxu0 0.0
          %2258 = vmatprep.subr.mxu0 0.0
          %2259 = vmatpush2.msra.mxu0 0.0
          %2260 = vmatprep.subr.mxu0 0.0
          %2261 = vmatpush2.msra.mxu0 0.0
          %2262 = vmatprep.subr.mxu0 0.0
          %2263 = vmatpush2.msra.mxu0 0.0
          %2264 = vmatprep.subr.mxu0 0.0
          %2265 = vmatpush2.msra.mxu0 0.0
          %2266 = vmatprep.subr.mxu0 0.0
          %2267 = vmatpush2.msra.mxu0 0.0
          %2268 = vmatprep.subr.mxu0 0.0
          %2269 = vmatpush2.msra.mxu0 0.0
          %2270 = vmatprep.subr.mxu0 0.0
          %2271 = vmatpush2.msra.mxu0 0.0
          %2272 = vmatprep.subr.mxu0 0.0
          %2273 = vmatpush2.msra.mxu0 0.0
          %2274 = vmatprep.subr.mxu0 0.0
          %2275 = vmatpush2.msra.mxu0 0.0
          %2276 = vmatprep.mubr.f32.mxu0 0.0
          %v2277 = vand.u32 %v597, 4294901760
          %v2278 = vsub.f32 %v597, %v2277
          %v2279 = vand.u32 %v2278, 4294901760
          %2280 = vmatmul.mubr.f32.gmra.mxu0 %v2279
          %v2281 = vpop.f32.mrf.mxu0
          %v2282 = vadd.f32 %v2207, %v2281
          %v2283 = vpop.f32.mrf.mxu0
          %2284 = vdwg.mxu0
          %2285 = vmatprep.subr.mxu0 0.0
          %2286 = vmatpush1.msra.mxu0 0.0
          %2287 = vmatprep.subr.mxu0 0.0
          %2288 = vmatpush1.msra.mxu0 0.0
          %2289 = vmatprep.subr.mxu0 0.0
          %2290 = vmatpush1.msra.mxu0 0.0
          %2291 = vmatprep.subr.mxu0 0.0
          %2292 = vmatpush1.msra.mxu0 0.0
          %2293 = vmatprep.subr.mxu0 0.0
          %2294 = vmatpush1.msra.mxu0 0.0
          %2295 = vmatprep.subr.mxu0 0.0
          %2296 = vmatpush1.msra.mxu0 0.0
          %2297 = vmatprep.subr.mxu0 0.0
          %2298 = vmatpush1.msra.mxu0 0.0
          %2299 = vmatprep.subr.mxu0 0.0
          %2300 = vmatpush1.msra.mxu0 0.0
          %2301 = vmatprep.subr.mxu0 0.0
          %2302 = vmatpush1.msra.mxu0 0.0
          %2303 = vmatprep.subr.mxu0 0.0
          %2304 = vmatpush1.msra.mxu0 0.0
          %2305 = vmatprep.subr.mxu0 0.0
          %2306 = vmatpush1.msra.mxu0 0.0
          %2307 = vmatprep.subr.mxu0 0.0
          %2308 = vmatpush1.msra.mxu0 0.0
          %2309 = vmatprep.subr.mxu0 0.0
          %2310 = vmatpush1.msra.mxu0 0.0
          %2311 = vmatprep.subr.mxu0 0.0
          %2312 = vmatpush1.msra.mxu0 0.0
          %2313 = vmatprep.subr.mxu0 0.0
          %v2314 = vand.u32 %v574, 4294901760
          %v2315 = vsub.f32 %v574, %v2314
          %v2316 = vand.u32 %v2315, 4294901760
          %2317 = vmatpush1.msra.mxu0 %v2316
          %2318 = vmatprep.subr.mxu0 0.0
          %v2319 = vand.u32 %v573, 4294901760
          %v2320 = vsub.f32 %v573, %v2319
          %v2321 = vand.u32 %v2320, 4294901760
          %2322 = vmatpush1.msra.mxu0 %v2321
          %2323 = vmatprep.subr.mxu0 0.0
          %2324 = vmatpush2.msra.mxu0 0.0
          %2325 = vmatprep.subr.mxu0 0.0
          %2326 = vmatpush2.msra.mxu0 0.0
          %2327 = vmatprep.subr.mxu0 0.0
          %2328 = vmatpush2.msra.mxu0 0.0
          %2329 = vmatprep.subr.mxu0 0.0
          %2330 = vmatpush2.msra.mxu0 0.0
          %2331 = vmatprep.subr.mxu0 0.0
          %2332 = vmatpush2.msra.mxu0 0.0
          %2333 = vmatprep.subr.mxu0 0.0
          %2334 = vmatpush2.msra.mxu0 0.0
          %2335 = vmatprep.subr.mxu0 0.0
          %2336 = vmatpush2.msra.mxu0 0.0
          %2337 = vmatprep.subr.mxu0 0.0
          %2338 = vmatpush2.msra.mxu0 0.0
          %2339 = vmatprep.subr.mxu0 0.0
          %2340 = vmatpush2.msra.mxu0 0.0
          %2341 = vmatprep.subr.mxu0 0.0
          %2342 = vmatpush2.msra.mxu0 0.0
          %2343 = vmatprep.subr.mxu0 0.0
          %2344 = vmatpush2.msra.mxu0 0.0
          %2345 = vmatprep.subr.mxu0 0.0
          %2346 = vmatpush2.msra.mxu0 0.0
          %2347 = vmatprep.subr.mxu0 0.0
          %2348 = vmatpush2.msra.mxu0 0.0
          %2349 = vmatprep.subr.mxu0 0.0
          %2350 = vmatpush2.msra.mxu0 0.0
          %2351 = vmatprep.subr.mxu0 0.0
          %2352 = vmatpush2.msra.mxu0 0.0
          %2353 = vmatprep.subr.mxu0 0.0
          %2354 = vmatpush2.msra.mxu0 0.0
          %2355 = vmatprep.mubr.f32.mxu0 0.0
          %v2356 = vand.u32 %v597, 4294901760
          %2357 = vmatmul.mubr.f32.gmra.mxu0 %v2356
          %v2358 = vpop.f32.mrf.mxu0
          %v2359 = vadd.f32 %v2282, %v2358
          %v2360 = vpop.f32.mrf.mxu0
          %2361 = vdwg.mxu0
          %2362 = vmatprep.subr.mxu0 0.0
          %2363 = vmatpush1.msra.mxu0 0.0
          %2364 = vmatprep.subr.mxu0 0.0
          %2365 = vmatpush1.msra.mxu0 0.0
          %2366 = vmatprep.subr.mxu0 0.0
          %2367 = vmatpush1.msra.mxu0 0.0
          %2368 = vmatprep.subr.mxu0 0.0
          %2369 = vmatpush1.msra.mxu0 0.0
          %2370 = vmatprep.subr.mxu0 0.0
          %2371 = vmatpush1.msra.mxu0 0.0
          %2372 = vmatprep.subr.mxu0 0.0
          %2373 = vmatpush1.msra.mxu0 0.0
          %2374 = vmatprep.subr.mxu0 0.0
          %2375 = vmatpush1.msra.mxu0 0.0
          %2376 = vmatprep.subr.mxu0 0.0
          %2377 = vmatpush1.msra.mxu0 0.0
          %2378 = vmatprep.subr.mxu0 0.0
          %2379 = vmatpush1.msra.mxu0 0.0
          %2380 = vmatprep.subr.mxu0 0.0
          %2381 = vmatpush1.msra.mxu0 0.0
          %2382 = vmatprep.subr.mxu0 0.0
          %2383 = vmatpush1.msra.mxu0 0.0
          %2384 = vmatprep.subr.mxu0 0.0
          %2385 = vmatpush1.msra.mxu0 0.0
          %2386 = vmatprep.subr.mxu0 0.0
          %2387 = vmatpush1.msra.mxu0 0.0
          %2388 = vmatprep.subr.mxu0 0.0
          %2389 = vmatpush1.msra.mxu0 0.0
          %2390 = vmatprep.subr.mxu0 0.0
          %v2391 = vand.u32 %v574, 4294901760
          %2392 = vmatpush1.msra.mxu0 %v2391
          %2393 = vmatprep.subr.mxu0 0.0
          %v2394 = vand.u32 %v573, 4294901760
          %2395 = vmatpush1.msra.mxu0 %v2394
          %2396 = vmatprep.subr.mxu0 0.0
          %2397 = vmatpush2.msra.mxu0 0.0
          %2398 = vmatprep.subr.mxu0 0.0
          %2399 = vmatpush2.msra.mxu0 0.0
          %2400 = vmatprep.subr.mxu0 0.0
          %2401 = vmatpush2.msra.mxu0 0.0
          %2402 = vmatprep.subr.mxu0 0.0
          %2403 = vmatpush2.msra.mxu0 0.0
          %2404 = vmatprep.subr.mxu0 0.0
          %2405 = vmatpush2.msra.mxu0 0.0
          %2406 = vmatprep.subr.mxu0 0.0
          %2407 = vmatpush2.msra.mxu0 0.0
          %2408 = vmatprep.subr.mxu0 0.0
          %2409 = vmatpush2.msra.mxu0 0.0
          %2410 = vmatprep.subr.mxu0 0.0
          %2411 = vmatpush2.msra.mxu0 0.0
          %2412 = vmatprep.subr.mxu0 0.0
          %2413 = vmatpush2.msra.mxu0 0.0
          %2414 = vmatprep.subr.mxu0 0.0
          %2415 = vmatpush2.msra.mxu0 0.0
          %2416 = vmatprep.subr.mxu0 0.0
          %2417 = vmatpush2.msra.mxu0 0.0
          %2418 = vmatprep.subr.mxu0 0.0
          %2419 = vmatpush2.msra.mxu0 0.0
          %2420 = vmatprep.subr.mxu0 0.0
          %2421 = vmatpush2.msra.mxu0 0.0
          %2422 = vmatprep.subr.mxu0 0.0
          %2423 = vmatpush2.msra.mxu0 0.0
          %2424 = vmatprep.subr.mxu0 0.0
          %2425 = vmatpush2.msra.mxu0 0.0
          %2426 = vmatprep.subr.mxu0 0.0
          %2427 = vmatpush2.msra.mxu0 0.0
          %2428 = vmatprep.mubr.f32.mxu0 0.0
          %v2429 = vand.u32 %v597, 4294901760
          %2430 = vmatmul.mubr.f32.gmra.mxu0 %v2429
          %v2431 = vpop.f32.mrf.mxu0
          %v2432 = vadd.f32 %v2359, %v2431
          %v2433 = vpop.f32.mrf.mxu0
          %2434 = vdwg.mxu0
          %v2435 = vadd.f32 %v591, %v1055
          %v2436 = vadd.f32 %v592, %v1514
          %v2437 = vadd.f32 %v593, %v1973
          %v2438 = vadd.f32 %v594, %v2432
          %vm2439 = vcmask 261120
          %2440 = vst.msk [vmem:[#allocation2] sm:$0xff] %vm2439, %v2435
          %2441 = vst.msk [vmem:[#allocation2 + $0x8] sm:$0xff] %vm2439, %v2436
          %2442 = vst.msk [vmem:[#allocation2 + $0x10] sm:$0xff] %vm2439, %v2437
          %2443 = vst.msk [vmem:[#allocation2 + $0x18] sm:$0xff] %vm2439, %v2438
          %v2444 = vld [vmem:[#allocation3] sm:$0xff]
          %v2445 = vld [vmem:[#allocation3 + $0x8] sm:$0xff]
          %v2446 = vld [vmem:[#allocation3 + $0x10] sm:$0xff]
          %v2447 = vld [vmem:[#allocation3 + $0x18] sm:$0xff]
          %2448 = vmatprep.subr.mxu0 0.0
          %2449 = vmatpush1.msra.mxu0 0.0
          %2450 = vmatprep.subr.mxu0 0.0
          %2451 = vmatpush1.msra.mxu0 0.0
          %2452 = vmatprep.subr.mxu0 0.0
          %2453 = vmatpush1.msra.mxu0 0.0
          %2454 = vmatprep.subr.mxu0 0.0
          %2455 = vmatpush1.msra.mxu0 0.0
          %2456 = vmatprep.subr.mxu0 0.0
          %2457 = vmatpush1.msra.mxu0 0.0
          %2458 = vmatprep.subr.mxu0 0.0
          %2459 = vmatpush1.msra.mxu0 0.0
          %2460 = vmatprep.subr.mxu0 0.0
          %2461 = vmatpush1.msra.mxu0 0.0
          %2462 = vmatprep.subr.mxu0 0.0
          %2463 = vmatpush1.msra.mxu0 0.0
          %2464 = vmatprep.subr.mxu0 0.0
          %2465 = vmatpush1.msra.mxu0 0.0
          %2466 = vmatprep.subr.mxu0 0.0
          %2467 = vmatpush1.msra.mxu0 0.0
          %2468 = vmatprep.subr.mxu0 0.0
          %2469 = vmatpush1.msra.mxu0 0.0
          %2470 = vmatprep.subr.mxu0 0.0
          %2471 = vmatpush1.msra.mxu0 0.0
          %2472 = vmatprep.subr.mxu0 0.0
          %2473 = vmatpush1.msra.mxu0 0.0
          %2474 = vmatprep.subr.mxu0 0.0
          %2475 = vmatpush1.msra.mxu0 0.0
          %2476 = vmatprep.subr.mxu0 0.0
          %v2477 = vand.u32 %v576, 4294901760
          %2478 = vmatpush1.msra.mxu0 %v2477
          %2479 = vmatprep.subr.mxu0 0.0
          %v2480 = vand.u32 %v575, 4294901760
          %2481 = vmatpush1.msra.mxu0 %v2480
          %2482 = vmatprep.subr.mxu0 0.0
          %2483 = vmatpush2.msra.mxu0 0.0
          %2484 = vmatprep.subr.mxu0 0.0
          %2485 = vmatpush2.msra.mxu0 0.0
          %2486 = vmatprep.subr.mxu0 0.0
          %2487 = vmatpush2.msra.mxu0 0.0
          %2488 = vmatprep.subr.mxu0 0.0
          %2489 = vmatpush2.msra.mxu0 0.0
          %2490 = vmatprep.subr.mxu0 0.0
          %2491 = vmatpush2.msra.mxu0 0.0
          %2492 = vmatprep.subr.mxu0 0.0
          %2493 = vmatpush2.msra.mxu0 0.0
          %2494 = vmatprep.subr.mxu0 0.0
          %2495 = vmatpush2.msra.mxu0 0.0
          %2496 = vmatprep.subr.mxu0 0.0
          %2497 = vmatpush2.msra.mxu0 0.0
          %2498 = vmatprep.subr.mxu0 0.0
          %2499 = vmatpush2.msra.mxu0 0.0
          %2500 = vmatprep.subr.mxu0 0.0
          %2501 = vmatpush2.msra.mxu0 0.0
          %2502 = vmatprep.subr.mxu0 0.0
          %2503 = vmatpush2.msra.mxu0 0.0
          %2504 = vmatprep.subr.mxu0 0.0
          %2505 = vmatpush2.msra.mxu0 0.0
          %2506 = vmatprep.subr.mxu0 0.0
          %2507 = vmatpush2.msra.mxu0 0.0
          %2508 = vmatprep.subr.mxu0 0.0
          %2509 = vmatpush2.msra.mxu0 0.0
          %2510 = vmatprep.subr.mxu0 0.0
          %2511 = vmatpush2.msra.mxu0 0.0
          %2512 = vmatprep.subr.mxu0 0.0
          %2513 = vmatpush2.msra.mxu0 0.0
          %2514 = vmatprep.mubr.f32.mxu0 0.0
          %v2515 = vand.u32 %v597, 4294901760
          %v2516 = vsub.f32 %v597, %v2515
          %v2517 = vand.u32 %v2516, 4294901760
          %v2518 = vsub.f32 %v2516, %v2517
          %v2519 = vand.u32 %v2518, 4294901760
          %2520 = vmatmul.mubr.f32.gmra.mxu0 %v2519
          %v2521 = vpop.f32.mrf.mxu0
          %v2522 = vadd.f32 0.0, %v2521
          %v2523 = vpop.f32.mrf.mxu0
          %2524 = vdwg.mxu0
          %2525 = vmatprep.subr.mxu0 0.0
          %2526 = vmatpush1.msra.mxu0 0.0
          %2527 = vmatprep.subr.mxu0 0.0
          %2528 = vmatpush1.msra.mxu0 0.0
          %2529 = vmatprep.subr.mxu0 0.0
          %2530 = vmatpush1.msra.mxu0 0.0
          %2531 = vmatprep.subr.mxu0 0.0
          %2532 = vmatpush1.msra.mxu0 0.0
          %2533 = vmatprep.subr.mxu0 0.0
          %2534 = vmatpush1.msra.mxu0 0.0
          %2535 = vmatprep.subr.mxu0 0.0
          %2536 = vmatpush1.msra.mxu0 0.0
          %2537 = vmatprep.subr.mxu0 0.0
          %2538 = vmatpush1.msra.mxu0 0.0
          %2539 = vmatprep.subr.mxu0 0.0
          %2540 = vmatpush1.msra.mxu0 0.0
          %2541 = vmatprep.subr.mxu0 0.0
          %2542 = vmatpush1.msra.mxu0 0.0
          %2543 = vmatprep.subr.mxu0 0.0
          %2544 = vmatpush1.msra.mxu0 0.0
          %2545 = vmatprep.subr.mxu0 0.0
          %2546 = vmatpush1.msra.mxu0 0.0
          %2547 = vmatprep.subr.mxu0 0.0
          %2548 = vmatpush1.msra.mxu0 0.0
          %2549 = vmatprep.subr.mxu0 0.0
          %2550 = vmatpush1.msra.mxu0 0.0
          %2551 = vmatprep.subr.mxu0 0.0
          %2552 = vmatpush1.msra.mxu0 0.0
          %2553 = vmatprep.subr.mxu0 0.0
          %v2554 = vand.u32 %v576, 4294901760
          %v2555 = vsub.f32 %v576, %v2554
          %v2556 = vand.u32 %v2555, 4294901760
          %v2557 = vsub.f32 %v2555, %v2556
          %v2558 = vand.u32 %v2557, 4294901760
          %2559 = vmatpush1.msra.mxu0 %v2558
          %2560 = vmatprep.subr.mxu0 0.0
          %v2561 = vand.u32 %v575, 4294901760
          %v2562 = vsub.f32 %v575, %v2561
          %v2563 = vand.u32 %v2562, 4294901760
          %v2564 = vsub.f32 %v2562, %v2563
          %v2565 = vand.u32 %v2564, 4294901760
          %2566 = vmatpush1.msra.mxu0 %v2565
          %2567 = vmatprep.subr.mxu0 0.0
          %2568 = vmatpush2.msra.mxu0 0.0
          %2569 = vmatprep.subr.mxu0 0.0
          %2570 = vmatpush2.msra.mxu0 0.0
          %2571 = vmatprep.subr.mxu0 0.0
          %2572 = vmatpush2.msra.mxu0 0.0
          %2573 = vmatprep.subr.mxu0 0.0
          %2574 = vmatpush2.msra.mxu0 0.0
          %2575 = vmatprep.subr.mxu0 0.0
          %2576 = vmatpush2.msra.mxu0 0.0
          %2577 = vmatprep.subr.mxu0 0.0
          %2578 = vmatpush2.msra.mxu0 0.0
          %2579 = vmatprep.subr.mxu0 0.0
          %2580 = vmatpush2.msra.mxu0 0.0
          %2581 = vmatprep.subr.mxu0 0.0
          %2582 = vmatpush2.msra.mxu0 0.0
          %2583 = vmatprep.subr.mxu0 0.0
          %2584 = vmatpush2.msra.mxu0 0.0
          %2585 = vmatprep.subr.mxu0 0.0
          %2586 = vmatpush2.msra.mxu0 0.0
          %2587 = vmatprep.subr.mxu0 0.0
          %2588 = vmatpush2.msra.mxu0 0.0
          %2589 = vmatprep.subr.mxu0 0.0
          %2590 = vmatpush2.msra.mxu0 0.0
          %2591 = vmatprep.subr.mxu0 0.0
          %2592 = vmatpush2.msra.mxu0 0.0
          %2593 = vmatprep.subr.mxu0 0.0
          %2594 = vmatpush2.msra.mxu0 0.0
          %2595 = vmatprep.subr.mxu0 0.0
          %2596 = vmatpush2.msra.mxu0 0.0
          %2597 = vmatprep.subr.mxu0 0.0
          %2598 = vmatpush2.msra.mxu0 0.0
          %2599 = vmatprep.mubr.f32.mxu0 0.0
          %v2600 = vand.u32 %v597, 4294901760
          %2601 = vmatmul.mubr.f32.gmra.mxu0 %v2600
          %v2602 = vpop.f32.mrf.mxu0
          %v2603 = vadd.f32 %v2522, %v2602
          %v2604 = vpop.f32.mrf.mxu0
          %2605 = vdwg.mxu0
          %2606 = vmatprep.subr.mxu0 0.0
          %2607 = vmatpush1.msra.mxu0 0.0
          %2608 = vmatprep.subr.mxu0 0.0
          %2609 = vmatpush1.msra.mxu0 0.0
          %2610 = vmatprep.subr.mxu0 0.0
          %2611 = vmatpush1.msra.mxu0 0.0
          %2612 = vmatprep.subr.mxu0 0.0
          %2613 = vmatpush1.msra.mxu0 0.0
          %2614 = vmatprep.subr.mxu0 0.0
          %2615 = vmatpush1.msra.mxu0 0.0
          %2616 = vmatprep.subr.mxu0 0.0
          %2617 = vmatpush1.msra.mxu0 0.0
          %2618 = vmatprep.subr.mxu0 0.0
          %2619 = vmatpush1.msra.mxu0 0.0
          %2620 = vmatprep.subr.mxu0 0.0
          %2621 = vmatpush1.msra.mxu0 0.0
          %2622 = vmatprep.subr.mxu0 0.0
          %2623 = vmatpush1.msra.mxu0 0.0
          %2624 = vmatprep.subr.mxu0 0.0
          %2625 = vmatpush1.msra.mxu0 0.0
          %2626 = vmatprep.subr.mxu0 0.0
          %2627 = vmatpush1.msra.mxu0 0.0
          %2628 = vmatprep.subr.mxu0 0.0
          %2629 = vmatpush1.msra.mxu0 0.0
          %2630 = vmatprep.subr.mxu0 0.0
          %2631 = vmatpush1.msra.mxu0 0.0
          %2632 = vmatprep.subr.mxu0 0.0
          %2633 = vmatpush1.msra.mxu0 0.0
          %2634 = vmatprep.subr.mxu0 0.0
          %v2635 = vand.u32 %v576, 4294901760
          %v2636 = vsub.f32 %v576, %v2635
          %2637 = vmatpush1.msra.mxu0 %v2636
          %2638 = vmatprep.subr.mxu0 0.0
          %v2639 = vand.u32 %v575, 4294901760
          %v2640 = vsub.f32 %v575, %v2639
          %2641 = vmatpush1.msra.mxu0 %v2640
          %2642 = vmatprep.subr.mxu0 0.0
          %2643 = vmatpush2.msra.mxu0 0.0
          %2644 = vmatprep.subr.mxu0 0.0
          %2645 = vmatpush2.msra.mxu0 0.0
          %2646 = vmatprep.subr.mxu0 0.0
          %2647 = vmatpush2.msra.mxu0 0.0
          %2648 = vmatprep.subr.mxu0 0.0
          %2649 = vmatpush2.msra.mxu0 0.0
          %2650 = vmatprep.subr.mxu0 0.0
          %2651 = vmatpush2.msra.mxu0 0.0
          %2652 = vmatprep.subr.mxu0 0.0
          %2653 = vmatpush2.msra.mxu0 0.0
          %2654 = vmatprep.subr.mxu0 0.0
          %2655 = vmatpush2.msra.mxu0 0.0
          %2656 = vmatprep.subr.mxu0 0.0
          %2657 = vmatpush2.msra.mxu0 0.0
          %2658 = vmatprep.subr.mxu0 0.0
          %2659 = vmatpush2.msra.mxu0 0.0
          %2660 = vmatprep.subr.mxu0 0.0
          %2661 = vmatpush2.msra.mxu0 0.0
          %2662 = vmatprep.subr.mxu0 0.0
          %2663 = vmatpush2.msra.mxu0 0.0
          %2664 = vmatprep.subr.mxu0 0.0
          %2665 = vmatpush2.msra.mxu0 0.0
          %2666 = vmatprep.subr.mxu0 0.0
          %2667 = vmatpush2.msra.mxu0 0.0
          %2668 = vmatprep.subr.mxu0 0.0
          %2669 = vmatpush2.msra.mxu0 0.0
          %2670 = vmatprep.subr.mxu0 0.0
          %2671 = vmatpush2.msra.mxu0 0.0
          %2672 = vmatprep.subr.mxu0 0.0
          %2673 = vmatpush2.msra.mxu0 0.0
          %2674 = vmatprep.mubr.f32.mxu0 0.0
          %v2675 = vand.u32 %v597, 4294901760
          %v2676 = vsub.f32 %v597, %v2675
          %2677 = vmatmul.mubr.f32.gmra.mxu0 %v2676
          %v2678 = vpop.f32.mrf.mxu0
          %v2679 = vadd.f32 %v2603, %v2678
          %v2680 = vpop.f32.mrf.mxu0
          %2681 = vdwg.mxu0
          %2682 = vmatprep.subr.mxu0 0.0
          %2683 = vmatpush1.msra.mxu0 0.0
          %2684 = vmatprep.subr.mxu0 0.0
          %2685 = vmatpush1.msra.mxu0 0.0
          %2686 = vmatprep.subr.mxu0 0.0
          %2687 = vmatpush1.msra.mxu0 0.0
          %2688 = vmatprep.subr.mxu0 0.0
          %2689 = vmatpush1.msra.mxu0 0.0
          %2690 = vmatprep.subr.mxu0 0.0
          %2691 = vmatpush1.msra.mxu0 0.0
          %2692 = vmatprep.subr.mxu0 0.0
          %2693 = vmatpush1.msra.mxu0 0.0
          %2694 = vmatprep.subr.mxu0 0.0
          %2695 = vmatpush1.msra.mxu0 0.0
          %2696 = vmatprep.subr.mxu0 0.0
          %2697 = vmatpush1.msra.mxu0 0.0
          %2698 = vmatprep.subr.mxu0 0.0
          %2699 = vmatpush1.msra.mxu0 0.0
          %2700 = vmatprep.subr.mxu0 0.0
          %2701 = vmatpush1.msra.mxu0 0.0
          %2702 = vmatprep.subr.mxu0 0.0
          %2703 = vmatpush1.msra.mxu0 0.0
          %2704 = vmatprep.subr.mxu0 0.0
          %2705 = vmatpush1.msra.mxu0 0.0
          %2706 = vmatprep.subr.mxu0 0.0
          %2707 = vmatpush1.msra.mxu0 0.0
          %2708 = vmatprep.subr.mxu0 0.0
          %2709 = vmatpush1.msra.mxu0 0.0
          %2710 = vmatprep.subr.mxu0 0.0
          %v2711 = vand.u32 %v576, 4294901760
          %2712 = vmatpush1.msra.mxu0 %v2711
          %2713 = vmatprep.subr.mxu0 0.0
          %v2714 = vand.u32 %v575, 4294901760
          %2715 = vmatpush1.msra.mxu0 %v2714
          %2716 = vmatprep.subr.mxu0 0.0
          %2717 = vmatpush2.msra.mxu0 0.0
          %2718 = vmatprep.subr.mxu0 0.0
          %2719 = vmatpush2.msra.mxu0 0.0
          %2720 = vmatprep.subr.mxu0 0.0
          %2721 = vmatpush2.msra.mxu0 0.0
          %2722 = vmatprep.subr.mxu0 0.0
          %2723 = vmatpush2.msra.mxu0 0.0
          %2724 = vmatprep.subr.mxu0 0.0
          %2725 = vmatpush2.msra.mxu0 0.0
          %2726 = vmatprep.subr.mxu0 0.0
          %2727 = vmatpush2.msra.mxu0 0.0
          %2728 = vmatprep.subr.mxu0 0.0
          %2729 = vmatpush2.msra.mxu0 0.0
          %2730 = vmatprep.subr.mxu0 0.0
          %2731 = vmatpush2.msra.mxu0 0.0
          %2732 = vmatprep.subr.mxu0 0.0
          %2733 = vmatpush2.msra.mxu0 0.0
          %2734 = vmatprep.subr.mxu0 0.0
          %2735 = vmatpush2.msra.mxu0 0.0
          %2736 = vmatprep.subr.mxu0 0.0
          %2737 = vmatpush2.msra.mxu0 0.0
          %2738 = vmatprep.subr.mxu0 0.0
          %2739 = vmatpush2.msra.mxu0 0.0
          %2740 = vmatprep.subr.mxu0 0.0
          %2741 = vmatpush2.msra.mxu0 0.0
          %2742 = vmatprep.subr.mxu0 0.0
          %2743 = vmatpush2.msra.mxu0 0.0
          %2744 = vmatprep.subr.mxu0 0.0
          %2745 = vmatpush2.msra.mxu0 0.0
          %2746 = vmatprep.subr.mxu0 0.0
          %2747 = vmatpush2.msra.mxu0 0.0
          %2748 = vmatprep.mubr.f32.mxu0 0.0
          %v2749 = vand.u32 %v597, 4294901760
          %v2750 = vsub.f32 %v597, %v2749
          %v2751 = vand.u32 %v2750, 4294901760
          %2752 = vmatmul.mubr.f32.gmra.mxu0 %v2751
          %v2753 = vpop.f32.mrf.mxu0
          %v2754 = vadd.f32 %v2679, %v2753
          %v2755 = vpop.f32.mrf.mxu0
          %2756 = vdwg.mxu0
          %2757 = vmatprep.subr.mxu0 0.0
          %2758 = vmatpush1.msra.mxu0 0.0
          %2759 = vmatprep.subr.mxu0 0.0
          %2760 = vmatpush1.msra.mxu0 0.0
          %2761 = vmatprep.subr.mxu0 0.0
          %2762 = vmatpush1.msra.mxu0 0.0
          %2763 = vmatprep.subr.mxu0 0.0
          %2764 = vmatpush1.msra.mxu0 0.0
          %2765 = vmatprep.subr.mxu0 0.0
          %2766 = vmatpush1.msra.mxu0 0.0
          %2767 = vmatprep.subr.mxu0 0.0
          %2768 = vmatpush1.msra.mxu0 0.0
          %2769 = vmatprep.subr.mxu0 0.0
          %2770 = vmatpush1.msra.mxu0 0.0
          %2771 = vmatprep.subr.mxu0 0.0
          %2772 = vmatpush1.msra.mxu0 0.0
          %2773 = vmatprep.subr.mxu0 0.0
          %2774 = vmatpush1.msra.mxu0 0.0
          %2775 = vmatprep.subr.mxu0 0.0
          %2776 = vmatpush1.msra.mxu0 0.0
          %2777 = vmatprep.subr.mxu0 0.0
          %2778 = vmatpush1.msra.mxu0 0.0
          %2779 = vmatprep.subr.mxu0 0.0
          %2780 = vmatpush1.msra.mxu0 0.0
          %2781 = vmatprep.subr.mxu0 0.0
          %2782 = vmatpush1.msra.mxu0 0.0
          %2783 = vmatprep.subr.mxu0 0.0
          %2784 = vmatpush1.msra.mxu0 0.0
          %2785 = vmatprep.subr.mxu0 0.0
          %v2786 = vand.u32 %v576, 4294901760
          %v2787 = vsub.f32 %v576, %v2786
          %v2788 = vand.u32 %v2787, 4294901760
          %2789 = vmatpush1.msra.mxu0 %v2788
          %2790 = vmatprep.subr.mxu0 0.0
          %v2791 = vand.u32 %v575, 4294901760
          %v2792 = vsub.f32 %v575, %v2791
          %v2793 = vand.u32 %v2792, 4294901760
          %2794 = vmatpush1.msra.mxu0 %v2793
          %2795 = vmatprep.subr.mxu0 0.0
          %2796 = vmatpush2.msra.mxu0 0.0
          %2797 = vmatprep.subr.mxu0 0.0
          %2798 = vmatpush2.msra.mxu0 0.0
          %2799 = vmatprep.subr.mxu0 0.0
          %2800 = vmatpush2.msra.mxu0 0.0
          %2801 = vmatprep.subr.mxu0 0.0
          %2802 = vmatpush2.msra.mxu0 0.0
          %2803 = vmatprep.subr.mxu0 0.0
          %2804 = vmatpush2.msra.mxu0 0.0
          %2805 = vmatprep.subr.mxu0 0.0
          %2806 = vmatpush2.msra.mxu0 0.0
          %2807 = vmatprep.subr.mxu0 0.0
          %2808 = vmatpush2.msra.mxu0 0.0
          %2809 = vmatprep.subr.mxu0 0.0
          %2810 = vmatpush2.msra.mxu0 0.0
          %2811 = vmatprep.subr.mxu0 0.0
          %2812 = vmatpush2.msra.mxu0 0.0
          %2813 = vmatprep.subr.mxu0 0.0
          %2814 = vmatpush2.msra.mxu0 0.0
          %2815 = vmatprep.subr.mxu0 0.0
          %2816 = vmatpush2.msra.mxu0 0.0
          %2817 = vmatprep.subr.mxu0 0.0
          %2818 = vmatpush2.msra.mxu0 0.0
          %2819 = vmatprep.subr.mxu0 0.0
          %2820 = vmatpush2.msra.mxu0 0.0
          %2821 = vmatprep.subr.mxu0 0.0
          %2822 = vmatpush2.msra.mxu0 0.0
          %2823 = vmatprep.subr.mxu0 0.0
          %2824 = vmatpush2.msra.mxu0 0.0
          %2825 = vmatprep.subr.mxu0 0.0
          %2826 = vmatpush2.msra.mxu0 0.0
          %2827 = vmatprep.mubr.f32.mxu0 0.0
          %v2828 = vand.u32 %v597, 4294901760
          %2829 = vmatmul.mubr.f32.gmra.mxu0 %v2828
          %v2830 = vpop.f32.mrf.mxu0
          %v2831 = vadd.f32 %v2754, %v2830
          %v2832 = vpop.f32.mrf.mxu0
          %2833 = vdwg.mxu0
          %2834 = vmatprep.subr.mxu0 0.0
          %2835 = vmatpush1.msra.mxu0 0.0
          %2836 = vmatprep.subr.mxu0 0.0
          %2837 = vmatpush1.msra.mxu0 0.0
          %2838 = vmatprep.subr.mxu0 0.0
          %2839 = vmatpush1.msra.mxu0 0.0
          %2840 = vmatprep.subr.mxu0 0.0
          %2841 = vmatpush1.msra.mxu0 0.0
          %2842 = vmatprep.subr.mxu0 0.0
          %2843 = vmatpush1.msra.mxu0 0.0
          %2844 = vmatprep.subr.mxu0 0.0
          %2845 = vmatpush1.msra.mxu0 0.0
          %2846 = vmatprep.subr.mxu0 0.0
          %2847 = vmatpush1.msra.mxu0 0.0
          %2848 = vmatprep.subr.mxu0 0.0
          %2849 = vmatpush1.msra.mxu0 0.0
          %2850 = vmatprep.subr.mxu0 0.0
          %2851 = vmatpush1.msra.mxu0 0.0
          %2852 = vmatprep.subr.mxu0 0.0
          %2853 = vmatpush1.msra.mxu0 0.0
          %2854 = vmatprep.subr.mxu0 0.0
          %2855 = vmatpush1.msra.mxu0 0.0
          %2856 = vmatprep.subr.mxu0 0.0
          %2857 = vmatpush1.msra.mxu0 0.0
          %2858 = vmatprep.subr.mxu0 0.0
          %2859 = vmatpush1.msra.mxu0 0.0
          %2860 = vmatprep.subr.mxu0 0.0
          %2861 = vmatpush1.msra.mxu0 0.0
          %2862 = vmatprep.subr.mxu0 0.0
          %v2863 = vand.u32 %v576, 4294901760
          %2864 = vmatpush1.msra.mxu0 %v2863
          %2865 = vmatprep.subr.mxu0 0.0
          %v2866 = vand.u32 %v575, 4294901760
          %2867 = vmatpush1.msra.mxu0 %v2866
          %2868 = vmatprep.subr.mxu0 0.0
          %2869 = vmatpush2.msra.mxu0 0.0
          %2870 = vmatprep.subr.mxu0 0.0
          %2871 = vmatpush2.msra.mxu0 0.0
          %2872 = vmatprep.subr.mxu0 0.0
          %2873 = vmatpush2.msra.mxu0 0.0
          %2874 = vmatprep.subr.mxu0 0.0
          %2875 = vmatpush2.msra.mxu0 0.0
          %2876 = vmatprep.subr.mxu0 0.0
          %2877 = vmatpush2.msra.mxu0 0.0
          %2878 = vmatprep.subr.mxu0 0.0
          %2879 = vmatpush2.msra.mxu0 0.0
          %2880 = vmatprep.subr.mxu0 0.0
          %2881 = vmatpush2.msra.mxu0 0.0
          %2882 = vmatprep.subr.mxu0 0.0
          %2883 = vmatpush2.msra.mxu0 0.0
          %2884 = vmatprep.subr.mxu0 0.0
          %2885 = vmatpush2.msra.mxu0 0.0
          %2886 = vmatprep.subr.mxu0 0.0
          %2887 = vmatpush2.msra.mxu0 0.0
          %2888 = vmatprep.subr.mxu0 0.0
          %2889 = vmatpush2.msra.mxu0 0.0
          %2890 = vmatprep.subr.mxu0 0.0
          %2891 = vmatpush2.msra.mxu0 0.0
          %2892 = vmatprep.subr.mxu0 0.0
          %2893 = vmatpush2.msra.mxu0 0.0
          %2894 = vmatprep.subr.mxu0 0.0
          %2895 = vmatpush2.msra.mxu0 0.0
          %2896 = vmatprep.subr.mxu0 0.0
          %2897 = vmatpush2.msra.mxu0 0.0
          %2898 = vmatprep.subr.mxu0 0.0
          %2899 = vmatpush2.msra.mxu0 0.0
          %2900 = vmatprep.mubr.f32.mxu0 0.0
          %v2901 = vand.u32 %v597, 4294901760
          %2902 = vmatmul.mubr.f32.gmra.mxu0 %v2901
          %v2903 = vpop.f32.mrf.mxu0
          %v2904 = vadd.f32 %v2831, %v2903
          %v2905 = vpop.f32.mrf.mxu0
          %2906 = vdwg.mxu0
          %2907 = vmatprep.subr.mxu0 0.0
          %2908 = vmatpush1.msra.mxu0 0.0
          %2909 = vmatprep.subr.mxu0 0.0
          %2910 = vmatpush1.msra.mxu0 0.0
          %2911 = vmatprep.subr.mxu0 0.0
          %2912 = vmatpush1.msra.mxu0 0.0
          %2913 = vmatprep.subr.mxu0 0.0
          %2914 = vmatpush1.msra.mxu0 0.0
          %2915 = vmatprep.subr.mxu0 0.0
          %2916 = vmatpush1.msra.mxu0 0.0
          %2917 = vmatprep.subr.mxu0 0.0
          %2918 = vmatpush1.msra.mxu0 0.0
          %2919 = vmatprep.subr.mxu0 0.0
          %2920 = vmatpush1.msra.mxu0 0.0
          %2921 = vmatprep.subr.mxu0 0.0
          %2922 = vmatpush1.msra.mxu0 0.0
          %2923 = vmatprep.subr.mxu0 0.0
          %2924 = vmatpush1.msra.mxu0 0.0
          %2925 = vmatprep.subr.mxu0 0.0
          %2926 = vmatpush1.msra.mxu0 0.0
          %2927 = vmatprep.subr.mxu0 0.0
          %2928 = vmatpush1.msra.mxu0 0.0
          %2929 = vmatprep.subr.mxu0 0.0
          %2930 = vmatpush1.msra.mxu0 0.0
          %2931 = vmatprep.subr.mxu0 0.0
          %2932 = vmatpush1.msra.mxu0 0.0
          %2933 = vmatprep.subr.mxu0 0.0
          %2934 = vmatpush1.msra.mxu0 0.0
          %2935 = vmatprep.subr.mxu0 0.0
          %v2936 = vand.u32 %v578, 4294901760
          %2937 = vmatpush1.msra.mxu0 %v2936
          %2938 = vmatprep.subr.mxu0 0.0
          %v2939 = vand.u32 %v577, 4294901760
          %2940 = vmatpush1.msra.mxu0 %v2939
          %2941 = vmatprep.subr.mxu0 0.0
          %2942 = vmatpush2.msra.mxu0 0.0
          %2943 = vmatprep.subr.mxu0 0.0
          %2944 = vmatpush2.msra.mxu0 0.0
          %2945 = vmatprep.subr.mxu0 0.0
          %2946 = vmatpush2.msra.mxu0 0.0
          %2947 = vmatprep.subr.mxu0 0.0
          %2948 = vmatpush2.msra.mxu0 0.0
          %2949 = vmatprep.subr.mxu0 0.0
          %2950 = vmatpush2.msra.mxu0 0.0
          %2951 = vmatprep.subr.mxu0 0.0
          %2952 = vmatpush2.msra.mxu0 0.0
          %2953 = vmatprep.subr.mxu0 0.0
          %2954 = vmatpush2.msra.mxu0 0.0
          %2955 = vmatprep.subr.mxu0 0.0
          %2956 = vmatpush2.msra.mxu0 0.0
          %2957 = vmatprep.subr.mxu0 0.0
          %2958 = vmatpush2.msra.mxu0 0.0
          %2959 = vmatprep.subr.mxu0 0.0
          %2960 = vmatpush2.msra.mxu0 0.0
          %2961 = vmatprep.subr.mxu0 0.0
          %2962 = vmatpush2.msra.mxu0 0.0
          %2963 = vmatprep.subr.mxu0 0.0
          %2964 = vmatpush2.msra.mxu0 0.0
          %2965 = vmatprep.subr.mxu0 0.0
          %2966 = vmatpush2.msra.mxu0 0.0
          %2967 = vmatprep.subr.mxu0 0.0
          %2968 = vmatpush2.msra.mxu0 0.0
          %2969 = vmatprep.subr.mxu0 0.0
          %2970 = vmatpush2.msra.mxu0 0.0
          %2971 = vmatprep.subr.mxu0 0.0
          %2972 = vmatpush2.msra.mxu0 0.0
          %2973 = vmatprep.mubr.f32.mxu0 0.0
          %v2974 = vand.u32 %v597, 4294901760
          %v2975 = vsub.f32 %v597, %v2974
          %v2976 = vand.u32 %v2975, 4294901760
          %v2977 = vsub.f32 %v2975, %v2976
          %v2978 = vand.u32 %v2977, 4294901760
          %2979 = vmatmul.mubr.f32.gmra.mxu0 %v2978
          %v2980 = vpop.f32.mrf.mxu0
          %v2981 = vadd.f32 0.0, %v2980
          %v2982 = vpop.f32.mrf.mxu0
          %2983 = vdwg.mxu0
          %2984 = vmatprep.subr.mxu0 0.0
          %2985 = vmatpush1.msra.mxu0 0.0
          %2986 = vmatprep.subr.mxu0 0.0
          %2987 = vmatpush1.msra.mxu0 0.0
          %2988 = vmatprep.subr.mxu0 0.0
          %2989 = vmatpush1.msra.mxu0 0.0
          %2990 = vmatprep.subr.mxu0 0.0
          %2991 = vmatpush1.msra.mxu0 0.0
          %2992 = vmatprep.subr.mxu0 0.0
          %2993 = vmatpush1.msra.mxu0 0.0
          %2994 = vmatprep.subr.mxu0 0.0
          %2995 = vmatpush1.msra.mxu0 0.0
          %2996 = vmatprep.subr.mxu0 0.0
          %2997 = vmatpush1.msra.mxu0 0.0
          %2998 = vmatprep.subr.mxu0 0.0
          %2999 = vmatpush1.msra.mxu0 0.0
          %3000 = vmatprep.subr.mxu0 0.0
          %3001 = vmatpush1.msra.mxu0 0.0
          %3002 = vmatprep.subr.mxu0 0.0
          %3003 = vmatpush1.msra.mxu0 0.0
          %3004 = vmatprep.subr.mxu0 0.0
          %3005 = vmatpush1.msra.mxu0 0.0
          %3006 = vmatprep.subr.mxu0 0.0
          %3007 = vmatpush1.msra.mxu0 0.0
          %3008 = vmatprep.subr.mxu0 0.0
          %3009 = vmatpush1.msra.mxu0 0.0
          %3010 = vmatprep.subr.mxu0 0.0
          %3011 = vmatpush1.msra.mxu0 0.0
          %3012 = vmatprep.subr.mxu0 0.0
          %v3013 = vand.u32 %v578, 4294901760
          %v3014 = vsub.f32 %v578, %v3013
          %v3015 = vand.u32 %v3014, 4294901760
          %v3016 = vsub.f32 %v3014, %v3015
          %v3017 = vand.u32 %v3016, 4294901760
          %3018 = vmatpush1.msra.mxu0 %v3017
          %3019 = vmatprep.subr.mxu0 0.0
          %v3020 = vand.u32 %v577, 4294901760
          %v3021 = vsub.f32 %v577, %v3020
          %v3022 = vand.u32 %v3021, 4294901760
          %v3023 = vsub.f32 %v3021, %v3022
          %v3024 = vand.u32 %v3023, 4294901760
          %3025 = vmatpush1.msra.mxu0 %v3024
          %3026 = vmatprep.subr.mxu0 0.0
          %3027 = vmatpush2.msra.mxu0 0.0
          %3028 = vmatprep.subr.mxu0 0.0
          %3029 = vmatpush2.msra.mxu0 0.0
          %3030 = vmatprep.subr.mxu0 0.0
          %3031 = vmatpush2.msra.mxu0 0.0
          %3032 = vmatprep.subr.mxu0 0.0
          %3033 = vmatpush2.msra.mxu0 0.0
          %3034 = vmatprep.subr.mxu0 0.0
          %3035 = vmatpush2.msra.mxu0 0.0
          %3036 = vmatprep.subr.mxu0 0.0
          %3037 = vmatpush2.msra.mxu0 0.0
          %3038 = vmatprep.subr.mxu0 0.0
          %3039 = vmatpush2.msra.mxu0 0.0
          %3040 = vmatprep.subr.mxu0 0.0
          %3041 = vmatpush2.msra.mxu0 0.0
          %3042 = vmatprep.subr.mxu0 0.0
          %3043 = vmatpush2.msra.mxu0 0.0
          %3044 = vmatprep.subr.mxu0 0.0
          %3045 = vmatpush2.msra.mxu0 0.0
          %3046 = vmatprep.subr.mxu0 0.0
          %3047 = vmatpush2.msra.mxu0 0.0
          %3048 = vmatprep.subr.mxu0 0.0
          %3049 = vmatpush2.msra.mxu0 0.0
          %3050 = vmatprep.subr.mxu0 0.0
          %3051 = vmatpush2.msra.mxu0 0.0
          %3052 = vmatprep.subr.mxu0 0.0
          %3053 = vmatpush2.msra.mxu0 0.0
          %3054 = vmatprep.subr.mxu0 0.0
          %3055 = vmatpush2.msra.mxu0 0.0
          %3056 = vmatprep.subr.mxu0 0.0
          %3057 = vmatpush2.msra.mxu0 0.0
          %3058 = vmatprep.mubr.f32.mxu0 0.0
          %v3059 = vand.u32 %v597, 4294901760
          %3060 = vmatmul.mubr.f32.gmra.mxu0 %v3059
          %v3061 = vpop.f32.mrf.mxu0
          %v3062 = vadd.f32 %v2981, %v3061
          %v3063 = vpop.f32.mrf.mxu0
          %3064 = vdwg.mxu0
          %3065 = vmatprep.subr.mxu0 0.0
          %3066 = vmatpush1.msra.mxu0 0.0
          %3067 = vmatprep.subr.mxu0 0.0
          %3068 = vmatpush1.msra.mxu0 0.0
          %3069 = vmatprep.subr.mxu0 0.0
          %3070 = vmatpush1.msra.mxu0 0.0
          %3071 = vmatprep.subr.mxu0 0.0
          %3072 = vmatpush1.msra.mxu0 0.0
          %3073 = vmatprep.subr.mxu0 0.0
          %3074 = vmatpush1.msra.mxu0 0.0
          %3075 = vmatprep.subr.mxu0 0.0
          %3076 = vmatpush1.msra.mxu0 0.0
          %3077 = vmatprep.subr.mxu0 0.0
          %3078 = vmatpush1.msra.mxu0 0.0
          %3079 = vmatprep.subr.mxu0 0.0
          %3080 = vmatpush1.msra.mxu0 0.0
          %3081 = vmatprep.subr.mxu0 0.0
          %3082 = vmatpush1.msra.mxu0 0.0
          %3083 = vmatprep.subr.mxu0 0.0
          %3084 = vmatpush1.msra.mxu0 0.0
          %3085 = vmatprep.subr.mxu0 0.0
          %3086 = vmatpush1.msra.mxu0 0.0
          %3087 = vmatprep.subr.mxu0 0.0
          %3088 = vmatpush1.msra.mxu0 0.0
          %3089 = vmatprep.subr.mxu0 0.0
          %3090 = vmatpush1.msra.mxu0 0.0
          %3091 = vmatprep.subr.mxu0 0.0
          %3092 = vmatpush1.msra.mxu0 0.0
          %3093 = vmatprep.subr.mxu0 0.0
          %v3094 = vand.u32 %v578, 4294901760
          %v3095 = vsub.f32 %v578, %v3094
          %3096 = vmatpush1.msra.mxu0 %v3095
          %3097 = vmatprep.subr.mxu0 0.0
          %v3098 = vand.u32 %v577, 4294901760
          %v3099 = vsub.f32 %v577, %v3098
          %3100 = vmatpush1.msra.mxu0 %v3099
          %3101 = vmatprep.subr.mxu0 0.0
          %3102 = vmatpush2.msra.mxu0 0.0
          %3103 = vmatprep.subr.mxu0 0.0
          %3104 = vmatpush2.msra.mxu0 0.0
          %3105 = vmatprep.subr.mxu0 0.0
          %3106 = vmatpush2.msra.mxu0 0.0
          %3107 = vmatprep.subr.mxu0 0.0
          %3108 = vmatpush2.msra.mxu0 0.0
          %3109 = vmatprep.subr.mxu0 0.0
          %3110 = vmatpush2.msra.mxu0 0.0
          %3111 = vmatprep.subr.mxu0 0.0
          %3112 = vmatpush2.msra.mxu0 0.0
          %3113 = vmatprep.subr.mxu0 0.0
          %3114 = vmatpush2.msra.mxu0 0.0
          %3115 = vmatprep.subr.mxu0 0.0
          %3116 = vmatpush2.msra.mxu0 0.0
          %3117 = vmatprep.subr.mxu0 0.0
          %3118 = vmatpush2.msra.mxu0 0.0
          %3119 = vmatprep.subr.mxu0 0.0
          %3120 = vmatpush2.msra.mxu0 0.0
          %3121 = vmatprep.subr.mxu0 0.0
          %3122 = vmatpush2.msra.mxu0 0.0
          %3123 = vmatprep.subr.mxu0 0.0
          %3124 = vmatpush2.msra.mxu0 0.0
          %3125 = vmatprep.subr.mxu0 0.0
          %3126 = vmatpush2.msra.mxu0 0.0
          %3127 = vmatprep.subr.mxu0 0.0
          %3128 = vmatpush2.msra.mxu0 0.0
          %3129 = vmatprep.subr.mxu0 0.0
          %3130 = vmatpush2.msra.mxu0 0.0
          %3131 = vmatprep.subr.mxu0 0.0
          %3132 = vmatpush2.msra.mxu0 0.0
          %3133 = vmatprep.mubr.f32.mxu0 0.0
          %v3134 = vand.u32 %v597, 4294901760
          %v3135 = vsub.f32 %v597, %v3134
          %3136 = vmatmul.mubr.f32.gmra.mxu0 %v3135
          %v3137 = vpop.f32.mrf.mxu0
          %v3138 = vadd.f32 %v3062, %v3137
          %v3139 = vpop.f32.mrf.mxu0
          %3140 = vdwg.mxu0
          %3141 = vmatprep.subr.mxu0 0.0
          %3142 = vmatpush1.msra.mxu0 0.0
          %3143 = vmatprep.subr.mxu0 0.0
          %3144 = vmatpush1.msra.mxu0 0.0
          %3145 = vmatprep.subr.mxu0 0.0
          %3146 = vmatpush1.msra.mxu0 0.0
          %3147 = vmatprep.subr.mxu0 0.0
          %3148 = vmatpush1.msra.mxu0 0.0
          %3149 = vmatprep.subr.mxu0 0.0
          %3150 = vmatpush1.msra.mxu0 0.0
          %3151 = vmatprep.subr.mxu0 0.0
          %3152 = vmatpush1.msra.mxu0 0.0
          %3153 = vmatprep.subr.mxu0 0.0
          %3154 = vmatpush1.msra.mxu0 0.0
          %3155 = vmatprep.subr.mxu0 0.0
          %3156 = vmatpush1.msra.mxu0 0.0
          %3157 = vmatprep.subr.mxu0 0.0
          %3158 = vmatpush1.msra.mxu0 0.0
          %3159 = vmatprep.subr.mxu0 0.0
          %3160 = vmatpush1.msra.mxu0 0.0
          %3161 = vmatprep.subr.mxu0 0.0
          %3162 = vmatpush1.msra.mxu0 0.0
          %3163 = vmatprep.subr.mxu0 0.0
          %3164 = vmatpush1.msra.mxu0 0.0
          %3165 = vmatprep.subr.mxu0 0.0
          %3166 = vmatpush1.msra.mxu0 0.0
          %3167 = vmatprep.subr.mxu0 0.0
          %3168 = vmatpush1.msra.mxu0 0.0
          %3169 = vmatprep.subr.mxu0 0.0
          %v3170 = vand.u32 %v578, 4294901760
          %3171 = vmatpush1.msra.mxu0 %v3170
          %3172 = vmatprep.subr.mxu0 0.0
          %v3173 = vand.u32 %v577, 4294901760
          %3174 = vmatpush1.msra.mxu0 %v3173
          %3175 = vmatprep.subr.mxu0 0.0
          %3176 = vmatpush2.msra.mxu0 0.0
          %3177 = vmatprep.subr.mxu0 0.0
          %3178 = vmatpush2.msra.mxu0 0.0
          %3179 = vmatprep.subr.mxu0 0.0
          %3180 = vmatpush2.msra.mxu0 0.0
          %3181 = vmatprep.subr.mxu0 0.0
          %3182 = vmatpush2.msra.mxu0 0.0
          %3183 = vmatprep.subr.mxu0 0.0
          %3184 = vmatpush2.msra.mxu0 0.0
          %3185 = vmatprep.subr.mxu0 0.0
          %3186 = vmatpush2.msra.mxu0 0.0
          %3187 = vmatprep.subr.mxu0 0.0
          %3188 = vmatpush2.msra.mxu0 0.0
          %3189 = vmatprep.subr.mxu0 0.0
          %3190 = vmatpush2.msra.mxu0 0.0
          %3191 = vmatprep.subr.mxu0 0.0
          %3192 = vmatpush2.msra.mxu0 0.0
          %3193 = vmatprep.subr.mxu0 0.0
          %3194 = vmatpush2.msra.mxu0 0.0
          %3195 = vmatprep.subr.mxu0 0.0
          %3196 = vmatpush2.msra.mxu0 0.0
          %3197 = vmatprep.subr.mxu0 0.0
          %3198 = vmatpush2.msra.mxu0 0.0
          %3199 = vmatprep.subr.mxu0 0.0
          %3200 = vmatpush2.msra.mxu0 0.0
          %3201 = vmatprep.subr.mxu0 0.0
          %3202 = vmatpush2.msra.mxu0 0.0
          %3203 = vmatprep.subr.mxu0 0.0
          %3204 = vmatpush2.msra.mxu0 0.0
          %3205 = vmatprep.subr.mxu0 0.0
          %3206 = vmatpush2.msra.mxu0 0.0
          %3207 = vmatprep.mubr.f32.mxu0 0.0
          %v3208 = vand.u32 %v597, 4294901760
          %v3209 = vsub.f32 %v597, %v3208
          %v3210 = vand.u32 %v3209, 4294901760
          %3211 = vmatmul.mubr.f32.gmra.mxu0 %v3210
          %v3212 = vpop.f32.mrf.mxu0
          %v3213 = vadd.f32 %v3138, %v3212
          %v3214 = vpop.f32.mrf.mxu0
          %3215 = vdwg.mxu0
          %3216 = vmatprep.subr.mxu0 0.0
          %3217 = vmatpush1.msra.mxu0 0.0
          %3218 = vmatprep.subr.mxu0 0.0
          %3219 = vmatpush1.msra.mxu0 0.0
          %3220 = vmatprep.subr.mxu0 0.0
          %3221 = vmatpush1.msra.mxu0 0.0
          %3222 = vmatprep.subr.mxu0 0.0
          %3223 = vmatpush1.msra.mxu0 0.0
          %3224 = vmatprep.subr.mxu0 0.0
          %3225 = vmatpush1.msra.mxu0 0.0
          %3226 = vmatprep.subr.mxu0 0.0
          %3227 = vmatpush1.msra.mxu0 0.0
          %3228 = vmatprep.subr.mxu0 0.0
          %3229 = vmatpush1.msra.mxu0 0.0
          %3230 = vmatprep.subr.mxu0 0.0
          %3231 = vmatpush1.msra.mxu0 0.0
          %3232 = vmatprep.subr.mxu0 0.0
          %3233 = vmatpush1.msra.mxu0 0.0
          %3234 = vmatprep.subr.mxu0 0.0
          %3235 = vmatpush1.msra.mxu0 0.0
          %3236 = vmatprep.subr.mxu0 0.0
          %3237 = vmatpush1.msra.mxu0 0.0
          %3238 = vmatprep.subr.mxu0 0.0
          %3239 = vmatpush1.msra.mxu0 0.0
          %3240 = vmatprep.subr.mxu0 0.0
          %3241 = vmatpush1.msra.mxu0 0.0
          %3242 = vmatprep.subr.mxu0 0.0
          %3243 = vmatpush1.msra.mxu0 0.0
          %3244 = vmatprep.subr.mxu0 0.0
          %v3245 = vand.u32 %v578, 4294901760
          %v3246 = vsub.f32 %v578, %v3245
          %v3247 = vand.u32 %v3246, 4294901760
          %3248 = vmatpush1.msra.mxu0 %v3247
          %3249 = vmatprep.subr.mxu0 0.0
          %v3250 = vand.u32 %v577, 4294901760
          %v3251 = vsub.f32 %v577, %v3250
          %v3252 = vand.u32 %v3251, 4294901760
          %3253 = vmatpush1.msra.mxu0 %v3252
          %3254 = vmatprep.subr.mxu0 0.0
          %3255 = vmatpush2.msra.mxu0 0.0
          %3256 = vmatprep.subr.mxu0 0.0
          %3257 = vmatpush2.msra.mxu0 0.0
          %3258 = vmatprep.subr.mxu0 0.0
          %3259 = vmatpush2.msra.mxu0 0.0
          %3260 = vmatprep.subr.mxu0 0.0
          %3261 = vmatpush2.msra.mxu0 0.0
          %3262 = vmatprep.subr.mxu0 0.0
          %3263 = vmatpush2.msra.mxu0 0.0
          %3264 = vmatprep.subr.mxu0 0.0
          %3265 = vmatpush2.msra.mxu0 0.0
          %3266 = vmatprep.subr.mxu0 0.0
          %3267 = vmatpush2.msra.mxu0 0.0
          %3268 = vmatprep.subr.mxu0 0.0
          %3269 = vmatpush2.msra.mxu0 0.0
          %3270 = vmatprep.subr.mxu0 0.0
          %3271 = vmatpush2.msra.mxu0 0.0
          %3272 = vmatprep.subr.mxu0 0.0
          %3273 = vmatpush2.msra.mxu0 0.0
          %3274 = vmatprep.subr.mxu0 0.0
          %3275 = vmatpush2.msra.mxu0 0.0
          %3276 = vmatprep.subr.mxu0 0.0
          %3277 = vmatpush2.msra.mxu0 0.0
          %3278 = vmatprep.subr.mxu0 0.0
          %3279 = vmatpush2.msra.mxu0 0.0
          %3280 = vmatprep.subr.mxu0 0.0
          %3281 = vmatpush2.msra.mxu0 0.0
          %3282 = vmatprep.subr.mxu0 0.0
          %3283 = vmatpush2.msra.mxu0 0.0
          %3284 = vmatprep.subr.mxu0 0.0
          %3285 = vmatpush2.msra.mxu0 0.0
          %3286 = vmatprep.mubr.f32.mxu0 0.0
          %v3287 = vand.u32 %v597, 4294901760
          %3288 = vmatmul.mubr.f32.gmra.mxu0 %v3287
          %v3289 = vpop.f32.mrf.mxu0
          %v3290 = vadd.f32 %v3213, %v3289
          %v3291 = vpop.f32.mrf.mxu0
          %3292 = vdwg.mxu0
          %3293 = vmatprep.subr.mxu0 0.0
          %3294 = vmatpush1.msra.mxu0 0.0
          %3295 = vmatprep.subr.mxu0 0.0
          %3296 = vmatpush1.msra.mxu0 0.0
          %3297 = vmatprep.subr.mxu0 0.0
          %3298 = vmatpush1.msra.mxu0 0.0
          %3299 = vmatprep.subr.mxu0 0.0
          %3300 = vmatpush1.msra.mxu0 0.0
          %3301 = vmatprep.subr.mxu0 0.0
          %3302 = vmatpush1.msra.mxu0 0.0
          %3303 = vmatprep.subr.mxu0 0.0
          %3304 = vmatpush1.msra.mxu0 0.0
          %3305 = vmatprep.subr.mxu0 0.0
          %3306 = vmatpush1.msra.mxu0 0.0
          %3307 = vmatprep.subr.mxu0 0.0
          %3308 = vmatpush1.msra.mxu0 0.0
          %3309 = vmatprep.subr.mxu0 0.0
          %3310 = vmatpush1.msra.mxu0 0.0
          %3311 = vmatprep.subr.mxu0 0.0
          %3312 = vmatpush1.msra.mxu0 0.0
          %3313 = vmatprep.subr.mxu0 0.0
          %3314 = vmatpush1.msra.mxu0 0.0
          %3315 = vmatprep.subr.mxu0 0.0
          %3316 = vmatpush1.msra.mxu0 0.0
          %3317 = vmatprep.subr.mxu0 0.0
          %3318 = vmatpush1.msra.mxu0 0.0
          %3319 = vmatprep.subr.mxu0 0.0
          %3320 = vmatpush1.msra.mxu0 0.0
          %3321 = vmatprep.subr.mxu0 0.0
          %v3322 = vand.u32 %v578, 4294901760
          %3323 = vmatpush1.msra.mxu0 %v3322
          %3324 = vmatprep.subr.mxu0 0.0
          %v3325 = vand.u32 %v577, 4294901760
          %3326 = vmatpush1.msra.mxu0 %v3325
          %3327 = vmatprep.subr.mxu0 0.0
          %3328 = vmatpush2.msra.mxu0 0.0
          %3329 = vmatprep.subr.mxu0 0.0
          %3330 = vmatpush2.msra.mxu0 0.0
          %3331 = vmatprep.subr.mxu0 0.0
          %3332 = vmatpush2.msra.mxu0 0.0
          %3333 = vmatprep.subr.mxu0 0.0
          %3334 = vmatpush2.msra.mxu0 0.0
          %3335 = vmatprep.subr.mxu0 0.0
          %3336 = vmatpush2.msra.mxu0 0.0
          %3337 = vmatprep.subr.mxu0 0.0
          %3338 = vmatpush2.msra.mxu0 0.0
          %3339 = vmatprep.subr.mxu0 0.0
          %3340 = vmatpush2.msra.mxu0 0.0
          %3341 = vmatprep.subr.mxu0 0.0
          %3342 = vmatpush2.msra.mxu0 0.0
          %3343 = vmatprep.subr.mxu0 0.0
          %3344 = vmatpush2.msra.mxu0 0.0
          %3345 = vmatprep.subr.mxu0 0.0
          %3346 = vmatpush2.msra.mxu0 0.0
          %3347 = vmatprep.subr.mxu0 0.0
          %3348 = vmatpush2.msra.mxu0 0.0
          %3349 = vmatprep.subr.mxu0 0.0
          %3350 = vmatpush2.msra.mxu0 0.0
          %3351 = vmatprep.subr.mxu0 0.0
          %3352 = vmatpush2.msra.mxu0 0.0
          %3353 = vmatprep.subr.mxu0 0.0
          %3354 = vmatpush2.msra.mxu0 0.0
          %3355 = vmatprep.subr.mxu0 0.0
          %3356 = vmatpush2.msra.mxu0 0.0
          %3357 = vmatprep.subr.mxu0 0.0
          %3358 = vmatpush2.msra.mxu0 0.0
          %3359 = vmatprep.mubr.f32.mxu0 0.0
          %v3360 = vand.u32 %v597, 4294901760
          %3361 = vmatmul.mubr.f32.gmra.mxu0 %v3360
          %v3362 = vpop.f32.mrf.mxu0
          %v3363 = vadd.f32 %v3290, %v3362
          %v3364 = vpop.f32.mrf.mxu0
          %3365 = vdwg.mxu0
          %3366 = vmatprep.subr.mxu0 0.0
          %3367 = vmatpush1.msra.mxu0 0.0
          %3368 = vmatprep.subr.mxu0 0.0
          %3369 = vmatpush1.msra.mxu0 0.0
          %3370 = vmatprep.subr.mxu0 0.0
          %3371 = vmatpush1.msra.mxu0 0.0
          %3372 = vmatprep.subr.mxu0 0.0
          %3373 = vmatpush1.msra.mxu0 0.0
          %3374 = vmatprep.subr.mxu0 0.0
          %3375 = vmatpush1.msra.mxu0 0.0
          %3376 = vmatprep.subr.mxu0 0.0
          %3377 = vmatpush1.msra.mxu0 0.0
          %3378 = vmatprep.subr.mxu0 0.0
          %3379 = vmatpush1.msra.mxu0 0.0
          %3380 = vmatprep.subr.mxu0 0.0
          %3381 = vmatpush1.msra.mxu0 0.0
          %3382 = vmatprep.subr.mxu0 0.0
          %3383 = vmatpush1.msra.mxu0 0.0
          %3384 = vmatprep.subr.mxu0 0.0
          %3385 = vmatpush1.msra.mxu0 0.0
          %3386 = vmatprep.subr.mxu0 0.0
          %3387 = vmatpush1.msra.mxu0 0.0
          %3388 = vmatprep.subr.mxu0 0.0
          %3389 = vmatpush1.msra.mxu0 0.0
          %3390 = vmatprep.subr.mxu0 0.0
          %3391 = vmatpush1.msra.mxu0 0.0
          %3392 = vmatprep.subr.mxu0 0.0
          %3393 = vmatpush1.msra.mxu0 0.0
          %3394 = vmatprep.subr.mxu0 0.0
          %v3395 = vand.u32 %v580, 4294901760
          %3396 = vmatpush1.msra.mxu0 %v3395
          %3397 = vmatprep.subr.mxu0 0.0
          %v3398 = vand.u32 %v579, 4294901760
          %3399 = vmatpush1.msra.mxu0 %v3398
          %3400 = vmatprep.subr.mxu0 0.0
          %3401 = vmatpush2.msra.mxu0 0.0
          %3402 = vmatprep.subr.mxu0 0.0
          %3403 = vmatpush2.msra.mxu0 0.0
          %3404 = vmatprep.subr.mxu0 0.0
          %3405 = vmatpush2.msra.mxu0 0.0
          %3406 = vmatprep.subr.mxu0 0.0
          %3407 = vmatpush2.msra.mxu0 0.0
          %3408 = vmatprep.subr.mxu0 0.0
          %3409 = vmatpush2.msra.mxu0 0.0
          %3410 = vmatprep.subr.mxu0 0.0
          %3411 = vmatpush2.msra.mxu0 0.0
          %3412 = vmatprep.subr.mxu0 0.0
          %3413 = vmatpush2.msra.mxu0 0.0
          %3414 = vmatprep.subr.mxu0 0.0
          %3415 = vmatpush2.msra.mxu0 0.0
          %3416 = vmatprep.subr.mxu0 0.0
          %3417 = vmatpush2.msra.mxu0 0.0
          %3418 = vmatprep.subr.mxu0 0.0
          %3419 = vmatpush2.msra.mxu0 0.0
          %3420 = vmatprep.subr.mxu0 0.0
          %3421 = vmatpush2.msra.mxu0 0.0
          %3422 = vmatprep.subr.mxu0 0.0
          %3423 = vmatpush2.msra.mxu0 0.0
          %3424 = vmatprep.subr.mxu0 0.0
          %3425 = vmatpush2.msra.mxu0 0.0
          %3426 = vmatprep.subr.mxu0 0.0
          %3427 = vmatpush2.msra.mxu0 0.0
          %3428 = vmatprep.subr.mxu0 0.0
          %3429 = vmatpush2.msra.mxu0 0.0
          %3430 = vmatprep.subr.mxu0 0.0
          %3431 = vmatpush2.msra.mxu0 0.0
          %3432 = vmatprep.mubr.f32.mxu0 0.0
          %v3433 = vand.u32 %v597, 4294901760
          %v3434 = vsub.f32 %v597, %v3433
          %v3435 = vand.u32 %v3434, 4294901760
          %v3436 = vsub.f32 %v3434, %v3435
          %v3437 = vand.u32 %v3436, 4294901760
          %3438 = vmatmul.mubr.f32.gmra.mxu0 %v3437
          %v3439 = vpop.f32.mrf.mxu0
          %v3440 = vadd.f32 0.0, %v3439
          %v3441 = vpop.f32.mrf.mxu0
          %3442 = vdwg.mxu0
          %3443 = vmatprep.subr.mxu0 0.0
          %3444 = vmatpush1.msra.mxu0 0.0
          %3445 = vmatprep.subr.mxu0 0.0
          %3446 = vmatpush1.msra.mxu0 0.0
          %3447 = vmatprep.subr.mxu0 0.0
          %3448 = vmatpush1.msra.mxu0 0.0
          %3449 = vmatprep.subr.mxu0 0.0
          %3450 = vmatpush1.msra.mxu0 0.0
          %3451 = vmatprep.subr.mxu0 0.0
          %3452 = vmatpush1.msra.mxu0 0.0
          %3453 = vmatprep.subr.mxu0 0.0
          %3454 = vmatpush1.msra.mxu0 0.0
          %3455 = vmatprep.subr.mxu0 0.0
          %3456 = vmatpush1.msra.mxu0 0.0
          %3457 = vmatprep.subr.mxu0 0.0
          %3458 = vmatpush1.msra.mxu0 0.0
          %3459 = vmatprep.subr.mxu0 0.0
          %3460 = vmatpush1.msra.mxu0 0.0
          %3461 = vmatprep.subr.mxu0 0.0
          %3462 = vmatpush1.msra.mxu0 0.0
          %3463 = vmatprep.subr.mxu0 0.0
          %3464 = vmatpush1.msra.mxu0 0.0
          %3465 = vmatprep.subr.mxu0 0.0
          %3466 = vmatpush1.msra.mxu0 0.0
          %3467 = vmatprep.subr.mxu0 0.0
          %3468 = vmatpush1.msra.mxu0 0.0
          %3469 = vmatprep.subr.mxu0 0.0
          %3470 = vmatpush1.msra.mxu0 0.0
          %3471 = vmatprep.subr.mxu0 0.0
          %v3472 = vand.u32 %v580, 4294901760
          %v3473 = vsub.f32 %v580, %v3472
          %v3474 = vand.u32 %v3473, 4294901760
          %v3475 = vsub.f32 %v3473, %v3474
          %v3476 = vand.u32 %v3475, 4294901760
          %3477 = vmatpush1.msra.mxu0 %v3476
          %3478 = vmatprep.subr.mxu0 0.0
          %v3479 = vand.u32 %v579, 4294901760
          %v3480 = vsub.f32 %v579, %v3479
          %v3481 = vand.u32 %v3480, 4294901760
          %v3482 = vsub.f32 %v3480, %v3481
          %v3483 = vand.u32 %v3482, 4294901760
          %3484 = vmatpush1.msra.mxu0 %v3483
          %3485 = vmatprep.subr.mxu0 0.0
          %3486 = vmatpush2.msra.mxu0 0.0
          %3487 = vmatprep.subr.mxu0 0.0
          %3488 = vmatpush2.msra.mxu0 0.0
          %3489 = vmatprep.subr.mxu0 0.0
          %3490 = vmatpush2.msra.mxu0 0.0
          %3491 = vmatprep.subr.mxu0 0.0
          %3492 = vmatpush2.msra.mxu0 0.0
          %3493 = vmatprep.subr.mxu0 0.0
          %3494 = vmatpush2.msra.mxu0 0.0
          %3495 = vmatprep.subr.mxu0 0.0
          %3496 = vmatpush2.msra.mxu0 0.0
          %3497 = vmatprep.subr.mxu0 0.0
          %3498 = vmatpush2.msra.mxu0 0.0
          %3499 = vmatprep.subr.mxu0 0.0
          %3500 = vmatpush2.msra.mxu0 0.0
          %3501 = vmatprep.subr.mxu0 0.0
          %3502 = vmatpush2.msra.mxu0 0.0
          %3503 = vmatprep.subr.mxu0 0.0
          %3504 = vmatpush2.msra.mxu0 0.0
          %3505 = vmatprep.subr.mxu0 0.0
          %3506 = vmatpush2.msra.mxu0 0.0
          %3507 = vmatprep.subr.mxu0 0.0
          %3508 = vmatpush2.msra.mxu0 0.0
          %3509 = vmatprep.subr.mxu0 0.0
          %3510 = vmatpush2.msra.mxu0 0.0
          %3511 = vmatprep.subr.mxu0 0.0
          %3512 = vmatpush2.msra.mxu0 0.0
          %3513 = vmatprep.subr.mxu0 0.0
          %3514 = vmatpush2.msra.mxu0 0.0
          %3515 = vmatprep.subr.mxu0 0.0
          %3516 = vmatpush2.msra.mxu0 0.0
          %3517 = vmatprep.mubr.f32.mxu0 0.0
          %v3518 = vand.u32 %v597, 4294901760
          %3519 = vmatmul.mubr.f32.gmra.mxu0 %v3518
          %v3520 = vpop.f32.mrf.mxu0
          %v3521 = vadd.f32 %v3440, %v3520
          %v3522 = vpop.f32.mrf.mxu0
          %3523 = vdwg.mxu0
          %3524 = vmatprep.subr.mxu0 0.0
          %3525 = vmatpush1.msra.mxu0 0.0
          %3526 = vmatprep.subr.mxu0 0.0
          %3527 = vmatpush1.msra.mxu0 0.0
          %3528 = vmatprep.subr.mxu0 0.0
          %3529 = vmatpush1.msra.mxu0 0.0
          %3530 = vmatprep.subr.mxu0 0.0
          %3531 = vmatpush1.msra.mxu0 0.0
          %3532 = vmatprep.subr.mxu0 0.0
          %3533 = vmatpush1.msra.mxu0 0.0
          %3534 = vmatprep.subr.mxu0 0.0
          %3535 = vmatpush1.msra.mxu0 0.0
          %3536 = vmatprep.subr.mxu0 0.0
          %3537 = vmatpush1.msra.mxu0 0.0
          %3538 = vmatprep.subr.mxu0 0.0
          %3539 = vmatpush1.msra.mxu0 0.0
          %3540 = vmatprep.subr.mxu0 0.0
          %3541 = vmatpush1.msra.mxu0 0.0
          %3542 = vmatprep.subr.mxu0 0.0
          %3543 = vmatpush1.msra.mxu0 0.0
          %3544 = vmatprep.subr.mxu0 0.0
          %3545 = vmatpush1.msra.mxu0 0.0
          %3546 = vmatprep.subr.mxu0 0.0
          %3547 = vmatpush1.msra.mxu0 0.0
          %3548 = vmatprep.subr.mxu0 0.0
          %3549 = vmatpush1.msra.mxu0 0.0
          %3550 = vmatprep.subr.mxu0 0.0
          %3551 = vmatpush1.msra.mxu0 0.0
          %3552 = vmatprep.subr.mxu0 0.0
          %v3553 = vand.u32 %v580, 4294901760
          %v3554 = vsub.f32 %v580, %v3553
          %3555 = vmatpush1.msra.mxu0 %v3554
          %3556 = vmatprep.subr.mxu0 0.0
          %v3557 = vand.u32 %v579, 4294901760
          %v3558 = vsub.f32 %v579, %v3557
          %3559 = vmatpush1.msra.mxu0 %v3558
          %3560 = vmatprep.subr.mxu0 0.0
          %3561 = vmatpush2.msra.mxu0 0.0
          %3562 = vmatprep.subr.mxu0 0.0
          %3563 = vmatpush2.msra.mxu0 0.0
          %3564 = vmatprep.subr.mxu0 0.0
          %3565 = vmatpush2.msra.mxu0 0.0
          %3566 = vmatprep.subr.mxu0 0.0
          %3567 = vmatpush2.msra.mxu0 0.0
          %3568 = vmatprep.subr.mxu0 0.0
          %3569 = vmatpush2.msra.mxu0 0.0
          %3570 = vmatprep.subr.mxu0 0.0
          %3571 = vmatpush2.msra.mxu0 0.0
          %3572 = vmatprep.subr.mxu0 0.0
          %3573 = vmatpush2.msra.mxu0 0.0
          %3574 = vmatprep.subr.mxu0 0.0
          %3575 = vmatpush2.msra.mxu0 0.0
          %3576 = vmatprep.subr.mxu0 0.0
          %3577 = vmatpush2.msra.mxu0 0.0
          %3578 = vmatprep.subr.mxu0 0.0
          %3579 = vmatpush2.msra.mxu0 0.0
          %3580 = vmatprep.subr.mxu0 0.0
          %3581 = vmatpush2.msra.mxu0 0.0
          %3582 = vmatprep.subr.mxu0 0.0
          %3583 = vmatpush2.msra.mxu0 0.0
          %3584 = vmatprep.subr.mxu0 0.0
          %3585 = vmatpush2.msra.mxu0 0.0
          %3586 = vmatprep.subr.mxu0 0.0
          %3587 = vmatpush2.msra.mxu0 0.0
          %3588 = vmatprep.subr.mxu0 0.0
          %3589 = vmatpush2.msra.mxu0 0.0
          %3590 = vmatprep.subr.mxu0 0.0
          %3591 = vmatpush2.msra.mxu0 0.0
          %3592 = vmatprep.mubr.f32.mxu0 0.0
          %v3593 = vand.u32 %v597, 4294901760
          %v3594 = vsub.f32 %v597, %v3593
          %3595 = vmatmul.mubr.f32.gmra.mxu0 %v3594
          %v3596 = vpop.f32.mrf.mxu0
          %v3597 = vadd.f32 %v3521, %v3596
          %v3598 = vpop.f32.mrf.mxu0
          %3599 = vdwg.mxu0
          %3600 = vmatprep.subr.mxu0 0.0
          %3601 = vmatpush1.msra.mxu0 0.0
          %3602 = vmatprep.subr.mxu0 0.0
          %3603 = vmatpush1.msra.mxu0 0.0
          %3604 = vmatprep.subr.mxu0 0.0
          %3605 = vmatpush1.msra.mxu0 0.0
          %3606 = vmatprep.subr.mxu0 0.0
          %3607 = vmatpush1.msra.mxu0 0.0
          %3608 = vmatprep.subr.mxu0 0.0
          %3609 = vmatpush1.msra.mxu0 0.0
          %3610 = vmatprep.subr.mxu0 0.0
          %3611 = vmatpush1.msra.mxu0 0.0
          %3612 = vmatprep.subr.mxu0 0.0
          %3613 = vmatpush1.msra.mxu0 0.0
          %3614 = vmatprep.subr.mxu0 0.0
          %3615 = vmatpush1.msra.mxu0 0.0
          %3616 = vmatprep.subr.mxu0 0.0
          %3617 = vmatpush1.msra.mxu0 0.0
          %3618 = vmatprep.subr.mxu0 0.0
          %3619 = vmatpush1.msra.mxu0 0.0
          %3620 = vmatprep.subr.mxu0 0.0
          %3621 = vmatpush1.msra.mxu0 0.0
          %3622 = vmatprep.subr.mxu0 0.0
          %3623 = vmatpush1.msra.mxu0 0.0
          %3624 = vmatprep.subr.mxu0 0.0
          %3625 = vmatpush1.msra.mxu0 0.0
          %3626 = vmatprep.subr.mxu0 0.0
          %3627 = vmatpush1.msra.mxu0 0.0
          %3628 = vmatprep.subr.mxu0 0.0
          %v3629 = vand.u32 %v580, 4294901760
          %3630 = vmatpush1.msra.mxu0 %v3629
          %3631 = vmatprep.subr.mxu0 0.0
          %v3632 = vand.u32 %v579, 4294901760
          %3633 = vmatpush1.msra.mxu0 %v3632
          %3634 = vmatprep.subr.mxu0 0.0
          %3635 = vmatpush2.msra.mxu0 0.0
          %3636 = vmatprep.subr.mxu0 0.0
          %3637 = vmatpush2.msra.mxu0 0.0
          %3638 = vmatprep.subr.mxu0 0.0
          %3639 = vmatpush2.msra.mxu0 0.0
          %3640 = vmatprep.subr.mxu0 0.0
          %3641 = vmatpush2.msra.mxu0 0.0
          %3642 = vmatprep.subr.mxu0 0.0
          %3643 = vmatpush2.msra.mxu0 0.0
          %3644 = vmatprep.subr.mxu0 0.0
          %3645 = vmatpush2.msra.mxu0 0.0
          %3646 = vmatprep.subr.mxu0 0.0
          %3647 = vmatpush2.msra.mxu0 0.0
          %3648 = vmatprep.subr.mxu0 0.0
          %3649 = vmatpush2.msra.mxu0 0.0
          %3650 = vmatprep.subr.mxu0 0.0
          %3651 = vmatpush2.msra.mxu0 0.0
          %3652 = vmatprep.subr.mxu0 0.0
          %3653 = vmatpush2.msra.mxu0 0.0
          %3654 = vmatprep.subr.mxu0 0.0
          %3655 = vmatpush2.msra.mxu0 0.0
          %3656 = vmatprep.subr.mxu0 0.0
          %3657 = vmatpush2.msra.mxu0 0.0
          %3658 = vmatprep.subr.mxu0 0.0
          %3659 = vmatpush2.msra.mxu0 0.0
          %3660 = vmatprep.subr.mxu0 0.0
          %3661 = vmatpush2.msra.mxu0 0.0
          %3662 = vmatprep.subr.mxu0 0.0
          %3663 = vmatpush2.msra.mxu0 0.0
          %3664 = vmatprep.subr.mxu0 0.0
          %3665 = vmatpush2.msra.mxu0 0.0
          %3666 = vmatprep.mubr.f32.mxu0 0.0
          %v3667 = vand.u32 %v597, 4294901760
          %v3668 = vsub.f32 %v597, %v3667
          %v3669 = vand.u32 %v3668, 4294901760
          %3670 = vmatmul.mubr.f32.gmra.mxu0 %v3669
          %v3671 = vpop.f32.mrf.mxu0
          %v3672 = vadd.f32 %v3597, %v3671
          %v3673 = vpop.f32.mrf.mxu0
          %3674 = vdwg.mxu0
          %3675 = vmatprep.subr.mxu0 0.0
          %3676 = vmatpush1.msra.mxu0 0.0
          %3677 = vmatprep.subr.mxu0 0.0
          %3678 = vmatpush1.msra.mxu0 0.0
          %3679 = vmatprep.subr.mxu0 0.0
          %3680 = vmatpush1.msra.mxu0 0.0
          %3681 = vmatprep.subr.mxu0 0.0
          %3682 = vmatpush1.msra.mxu0 0.0
          %3683 = vmatprep.subr.mxu0 0.0
          %3684 = vmatpush1.msra.mxu0 0.0
          %3685 = vmatprep.subr.mxu0 0.0
          %3686 = vmatpush1.msra.mxu0 0.0
          %3687 = vmatprep.subr.mxu0 0.0
          %3688 = vmatpush1.msra.mxu0 0.0
          %3689 = vmatprep.subr.mxu0 0.0
          %3690 = vmatpush1.msra.mxu0 0.0
          %3691 = vmatprep.subr.mxu0 0.0
          %3692 = vmatpush1.msra.mxu0 0.0
          %3693 = vmatprep.subr.mxu0 0.0
          %3694 = vmatpush1.msra.mxu0 0.0
          %3695 = vmatprep.subr.mxu0 0.0
          %3696 = vmatpush1.msra.mxu0 0.0
          %3697 = vmatprep.subr.mxu0 0.0
          %3698 = vmatpush1.msra.mxu0 0.0
          %3699 = vmatprep.subr.mxu0 0.0
          %3700 = vmatpush1.msra.mxu0 0.0
          %3701 = vmatprep.subr.mxu0 0.0
          %3702 = vmatpush1.msra.mxu0 0.0
          %3703 = vmatprep.subr.mxu0 0.0
          %v3704 = vand.u32 %v580, 4294901760
          %v3705 = vsub.f32 %v580, %v3704
          %v3706 = vand.u32 %v3705, 4294901760
          %3707 = vmatpush1.msra.mxu0 %v3706
          %3708 = vmatprep.subr.mxu0 0.0
          %v3709 = vand.u32 %v579, 4294901760
          %v3710 = vsub.f32 %v579, %v3709
          %v3711 = vand.u32 %v3710, 4294901760
          %3712 = vmatpush1.msra.mxu0 %v3711
          %3713 = vmatprep.subr.mxu0 0.0
          %3714 = vmatpush2.msra.mxu0 0.0
          %3715 = vmatprep.subr.mxu0 0.0
          %3716 = vmatpush2.msra.mxu0 0.0
          %3717 = vmatprep.subr.mxu0 0.0
          %3718 = vmatpush2.msra.mxu0 0.0
          %3719 = vmatprep.subr.mxu0 0.0
          %3720 = vmatpush2.msra.mxu0 0.0
          %3721 = vmatprep.subr.mxu0 0.0
          %3722 = vmatpush2.msra.mxu0 0.0
          %3723 = vmatprep.subr.mxu0 0.0
          %3724 = vmatpush2.msra.mxu0 0.0
          %3725 = vmatprep.subr.mxu0 0.0
          %3726 = vmatpush2.msra.mxu0 0.0
          %3727 = vmatprep.subr.mxu0 0.0
          %3728 = vmatpush2.msra.mxu0 0.0
          %3729 = vmatprep.subr.mxu0 0.0
          %3730 = vmatpush2.msra.mxu0 0.0
          %3731 = vmatprep.subr.mxu0 0.0
          %3732 = vmatpush2.msra.mxu0 0.0
          %3733 = vmatprep.subr.mxu0 0.0
          %3734 = vmatpush2.msra.mxu0 0.0
          %3735 = vmatprep.subr.mxu0 0.0
          %3736 = vmatpush2.msra.mxu0 0.0
          %3737 = vmatprep.subr.mxu0 0.0
          %3738 = vmatpush2.msra.mxu0 0.0
          %3739 = vmatprep.subr.mxu0 0.0
          %3740 = vmatpush2.msra.mxu0 0.0
          %3741 = vmatprep.subr.mxu0 0.0
          %3742 = vmatpush2.msra.mxu0 0.0
          %3743 = vmatprep.subr.mxu0 0.0
          %3744 = vmatpush2.msra.mxu0 0.0
          %3745 = vmatprep.mubr.f32.mxu0 0.0
          %v3746 = vand.u32 %v597, 4294901760
          %3747 = vmatmul.mubr.f32.gmra.mxu0 %v3746
          %v3748 = vpop.f32.mrf.mxu0
          %v3749 = vadd.f32 %v3672, %v3748
          %v3750 = vpop.f32.mrf.mxu0
          %3751 = vdwg.mxu0
          %3752 = vmatprep.subr.mxu0 0.0
          %3753 = vmatpush1.msra.mxu0 0.0
          %3754 = vmatprep.subr.mxu0 0.0
          %3755 = vmatpush1.msra.mxu0 0.0
          %3756 = vmatprep.subr.mxu0 0.0
          %3757 = vmatpush1.msra.mxu0 0.0
          %3758 = vmatprep.subr.mxu0 0.0
          %3759 = vmatpush1.msra.mxu0 0.0
          %3760 = vmatprep.subr.mxu0 0.0
          %3761 = vmatpush1.msra.mxu0 0.0
          %3762 = vmatprep.subr.mxu0 0.0
          %3763 = vmatpush1.msra.mxu0 0.0
          %3764 = vmatprep.subr.mxu0 0.0
          %3765 = vmatpush1.msra.mxu0 0.0
          %3766 = vmatprep.subr.mxu0 0.0
          %3767 = vmatpush1.msra.mxu0 0.0
          %3768 = vmatprep.subr.mxu0 0.0
          %3769 = vmatpush1.msra.mxu0 0.0
          %3770 = vmatprep.subr.mxu0 0.0
          %3771 = vmatpush1.msra.mxu0 0.0
          %3772 = vmatprep.subr.mxu0 0.0
          %3773 = vmatpush1.msra.mxu0 0.0
          %3774 = vmatprep.subr.mxu0 0.0
          %3775 = vmatpush1.msra.mxu0 0.0
          %3776 = vmatprep.subr.mxu0 0.0
          %3777 = vmatpush1.msra.mxu0 0.0
          %3778 = vmatprep.subr.mxu0 0.0
          %3779 = vmatpush1.msra.mxu0 0.0
          %3780 = vmatprep.subr.mxu0 0.0
          %v3781 = vand.u32 %v580, 4294901760
          %3782 = vmatpush1.msra.mxu0 %v3781
          %3783 = vmatprep.subr.mxu0 0.0
          %v3784 = vand.u32 %v579, 4294901760
          %3785 = vmatpush1.msra.mxu0 %v3784
          %3786 = vmatprep.subr.mxu0 0.0
          %3787 = vmatpush2.msra.mxu0 0.0
          %3788 = vmatprep.subr.mxu0 0.0
          %3789 = vmatpush2.msra.mxu0 0.0
          %3790 = vmatprep.subr.mxu0 0.0
          %3791 = vmatpush2.msra.mxu0 0.0
          %3792 = vmatprep.subr.mxu0 0.0
          %3793 = vmatpush2.msra.mxu0 0.0
          %3794 = vmatprep.subr.mxu0 0.0
          %3795 = vmatpush2.msra.mxu0 0.0
          %3796 = vmatprep.subr.mxu0 0.0
          %3797 = vmatpush2.msra.mxu0 0.0
          %3798 = vmatprep.subr.mxu0 0.0
          %3799 = vmatpush2.msra.mxu0 0.0
          %3800 = vmatprep.subr.mxu0 0.0
          %3801 = vmatpush2.msra.mxu0 0.0
          %3802 = vmatprep.subr.mxu0 0.0
          %3803 = vmatpush2.msra.mxu0 0.0
          %3804 = vmatprep.subr.mxu0 0.0
          %3805 = vmatpush2.msra.mxu0 0.0
          %3806 = vmatprep.subr.mxu0 0.0
          %3807 = vmatpush2.msra.mxu0 0.0
          %3808 = vmatprep.subr.mxu0 0.0
          %3809 = vmatpush2.msra.mxu0 0.0
          %3810 = vmatprep.subr.mxu0 0.0
          %3811 = vmatpush2.msra.mxu0 0.0
          %3812 = vmatprep.subr.mxu0 0.0
          %3813 = vmatpush2.msra.mxu0 0.0
          %3814 = vmatprep.subr.mxu0 0.0
          %3815 = vmatpush2.msra.mxu0 0.0
          %3816 = vmatprep.subr.mxu0 0.0
          %3817 = vmatpush2.msra.mxu0 0.0
          %3818 = vmatprep.mubr.f32.mxu0 0.0
          %v3819 = vand.u32 %v597, 4294901760
          %3820 = vmatmul.mubr.f32.gmra.mxu0 %v3819
          %v3821 = vpop.f32.mrf.mxu0
          %v3822 = vadd.f32 %v3749, %v3821
          %v3823 = vpop.f32.mrf.mxu0
          %3824 = vdwg.mxu0
          %3825 = vmatprep.subr.mxu0 0.0
          %3826 = vmatpush1.msra.mxu0 0.0
          %3827 = vmatprep.subr.mxu0 0.0
          %3828 = vmatpush1.msra.mxu0 0.0
          %3829 = vmatprep.subr.mxu0 0.0
          %3830 = vmatpush1.msra.mxu0 0.0
          %3831 = vmatprep.subr.mxu0 0.0
          %3832 = vmatpush1.msra.mxu0 0.0
          %3833 = vmatprep.subr.mxu0 0.0
          %3834 = vmatpush1.msra.mxu0 0.0
          %3835 = vmatprep.subr.mxu0 0.0
          %3836 = vmatpush1.msra.mxu0 0.0
          %3837 = vmatprep.subr.mxu0 0.0
          %3838 = vmatpush1.msra.mxu0 0.0
          %3839 = vmatprep.subr.mxu0 0.0
          %3840 = vmatpush1.msra.mxu0 0.0
          %3841 = vmatprep.subr.mxu0 0.0
          %3842 = vmatpush1.msra.mxu0 0.0
          %3843 = vmatprep.subr.mxu0 0.0
          %3844 = vmatpush1.msra.mxu0 0.0
          %3845 = vmatprep.subr.mxu0 0.0
          %3846 = vmatpush1.msra.mxu0 0.0
          %3847 = vmatprep.subr.mxu0 0.0
          %3848 = vmatpush1.msra.mxu0 0.0
          %3849 = vmatprep.subr.mxu0 0.0
          %3850 = vmatpush1.msra.mxu0 0.0
          %3851 = vmatprep.subr.mxu0 0.0
          %3852 = vmatpush1.msra.mxu0 0.0
          %3853 = vmatprep.subr.mxu0 0.0
          %v3854 = vand.u32 %v582, 4294901760
          %3855 = vmatpush1.msra.mxu0 %v3854
          %3856 = vmatprep.subr.mxu0 0.0
          %v3857 = vand.u32 %v581, 4294901760
          %3858 = vmatpush1.msra.mxu0 %v3857
          %3859 = vmatprep.subr.mxu0 0.0
          %3860 = vmatpush2.msra.mxu0 0.0
          %3861 = vmatprep.subr.mxu0 0.0
          %3862 = vmatpush2.msra.mxu0 0.0
          %3863 = vmatprep.subr.mxu0 0.0
          %3864 = vmatpush2.msra.mxu0 0.0
          %3865 = vmatprep.subr.mxu0 0.0
          %3866 = vmatpush2.msra.mxu0 0.0
          %3867 = vmatprep.subr.mxu0 0.0
          %3868 = vmatpush2.msra.mxu0 0.0
          %3869 = vmatprep.subr.mxu0 0.0
          %3870 = vmatpush2.msra.mxu0 0.0
          %3871 = vmatprep.subr.mxu0 0.0
          %3872 = vmatpush2.msra.mxu0 0.0
          %3873 = vmatprep.subr.mxu0 0.0
          %3874 = vmatpush2.msra.mxu0 0.0
          %3875 = vmatprep.subr.mxu0 0.0
          %3876 = vmatpush2.msra.mxu0 0.0
          %3877 = vmatprep.subr.mxu0 0.0
          %3878 = vmatpush2.msra.mxu0 0.0
          %3879 = vmatprep.subr.mxu0 0.0
          %3880 = vmatpush2.msra.mxu0 0.0
          %3881 = vmatprep.subr.mxu0 0.0
          %3882 = vmatpush2.msra.mxu0 0.0
          %3883 = vmatprep.subr.mxu0 0.0
          %3884 = vmatpush2.msra.mxu0 0.0
          %3885 = vmatprep.subr.mxu0 0.0
          %3886 = vmatpush2.msra.mxu0 0.0
          %3887 = vmatprep.subr.mxu0 0.0
          %3888 = vmatpush2.msra.mxu0 0.0
          %3889 = vmatprep.subr.mxu0 0.0
          %3890 = vmatpush2.msra.mxu0 0.0
          %3891 = vmatprep.mubr.f32.mxu0 0.0
          %v3892 = vand.u32 %v597, 4294901760
          %v3893 = vsub.f32 %v597, %v3892
          %v3894 = vand.u32 %v3893, 4294901760
          %v3895 = vsub.f32 %v3893, %v3894
          %v3896 = vand.u32 %v3895, 4294901760
          %3897 = vmatmul.mubr.f32.gmra.mxu0 %v3896
          %v3898 = vpop.f32.mrf.mxu0
          %v3899 = vadd.f32 0.0, %v3898
          %v3900 = vpop.f32.mrf.mxu0
          %3901 = vdwg.mxu0
          %3902 = vmatprep.subr.mxu0 0.0
          %3903 = vmatpush1.msra.mxu0 0.0
          %3904 = vmatprep.subr.mxu0 0.0
          %3905 = vmatpush1.msra.mxu0 0.0
          %3906 = vmatprep.subr.mxu0 0.0
          %3907 = vmatpush1.msra.mxu0 0.0
          %3908 = vmatprep.subr.mxu0 0.0
          %3909 = vmatpush1.msra.mxu0 0.0
          %3910 = vmatprep.subr.mxu0 0.0
          %3911 = vmatpush1.msra.mxu0 0.0
          %3912 = vmatprep.subr.mxu0 0.0
          %3913 = vmatpush1.msra.mxu0 0.0
          %3914 = vmatprep.subr.mxu0 0.0
          %3915 = vmatpush1.msra.mxu0 0.0
          %3916 = vmatprep.subr.mxu0 0.0
          %3917 = vmatpush1.msra.mxu0 0.0
          %3918 = vmatprep.subr.mxu0 0.0
          %3919 = vmatpush1.msra.mxu0 0.0
          %3920 = vmatprep.subr.mxu0 0.0
          %3921 = vmatpush1.msra.mxu0 0.0
          %3922 = vmatprep.subr.mxu0 0.0
          %3923 = vmatpush1.msra.mxu0 0.0
          %3924 = vmatprep.subr.mxu0 0.0
          %3925 = vmatpush1.msra.mxu0 0.0
          %3926 = vmatprep.subr.mxu0 0.0
          %3927 = vmatpush1.msra.mxu0 0.0
          %3928 = vmatprep.subr.mxu0 0.0
          %3929 = vmatpush1.msra.mxu0 0.0
          %3930 = vmatprep.subr.mxu0 0.0
          %v3931 = vand.u32 %v582, 4294901760
          %v3932 = vsub.f32 %v582, %v3931
          %v3933 = vand.u32 %v3932, 4294901760
          %v3934 = vsub.f32 %v3932, %v3933
          %v3935 = vand.u32 %v3934, 4294901760
          %3936 = vmatpush1.msra.mxu0 %v3935
          %3937 = vmatprep.subr.mxu0 0.0
          %v3938 = vand.u32 %v581, 4294901760
          %v3939 = vsub.f32 %v581, %v3938
          %v3940 = vand.u32 %v3939, 4294901760
          %v3941 = vsub.f32 %v3939, %v3940
          %v3942 = vand.u32 %v3941, 4294901760
          %3943 = vmatpush1.msra.mxu0 %v3942
          %3944 = vmatprep.subr.mxu0 0.0
          %3945 = vmatpush2.msra.mxu0 0.0
          %3946 = vmatprep.subr.mxu0 0.0
          %3947 = vmatpush2.msra.mxu0 0.0
          %3948 = vmatprep.subr.mxu0 0.0
          %3949 = vmatpush2.msra.mxu0 0.0
          %3950 = vmatprep.subr.mxu0 0.0
          %3951 = vmatpush2.msra.mxu0 0.0
          %3952 = vmatprep.subr.mxu0 0.0
          %3953 = vmatpush2.msra.mxu0 0.0
          %3954 = vmatprep.subr.mxu0 0.0
          %3955 = vmatpush2.msra.mxu0 0.0
          %3956 = vmatprep.subr.mxu0 0.0
          %3957 = vmatpush2.msra.mxu0 0.0
          %3958 = vmatprep.subr.mxu0 0.0
          %3959 = vmatpush2.msra.mxu0 0.0
          %3960 = vmatprep.subr.mxu0 0.0
          %3961 = vmatpush2.msra.mxu0 0.0
          %3962 = vmatprep.subr.mxu0 0.0
          %3963 = vmatpush2.msra.mxu0 0.0
          %3964 = vmatprep.subr.mxu0 0.0
          %3965 = vmatpush2.msra.mxu0 0.0
          %3966 = vmatprep.subr.mxu0 0.0
          %3967 = vmatpush2.msra.mxu0 0.0
          %3968 = vmatprep.subr.mxu0 0.0
          %3969 = vmatpush2.msra.mxu0 0.0
          %3970 = vmatprep.subr.mxu0 0.0
          %3971 = vmatpush2.msra.mxu0 0.0
          %3972 = vmatprep.subr.mxu0 0.0
          %3973 = vmatpush2.msra.mxu0 0.0
          %3974 = vmatprep.subr.mxu0 0.0
          %3975 = vmatpush2.msra.mxu0 0.0
          %3976 = vmatprep.mubr.f32.mxu0 0.0
          %v3977 = vand.u32 %v597, 4294901760
          %3978 = vmatmul.mubr.f32.gmra.mxu0 %v3977
          %v3979 = vpop.f32.mrf.mxu0
          %v3980 = vadd.f32 %v3899, %v3979
          %v3981 = vpop.f32.mrf.mxu0
          %3982 = vdwg.mxu0
          %3983 = vmatprep.subr.mxu0 0.0
          %3984 = vmatpush1.msra.mxu0 0.0
          %3985 = vmatprep.subr.mxu0 0.0
          %3986 = vmatpush1.msra.mxu0 0.0
          %3987 = vmatprep.subr.mxu0 0.0
          %3988 = vmatpush1.msra.mxu0 0.0
          %3989 = vmatprep.subr.mxu0 0.0
          %3990 = vmatpush1.msra.mxu0 0.0
          %3991 = vmatprep.subr.mxu0 0.0
          %3992 = vmatpush1.msra.mxu0 0.0
          %3993 = vmatprep.subr.mxu0 0.0
          %3994 = vmatpush1.msra.mxu0 0.0
          %3995 = vmatprep.subr.mxu0 0.0
          %3996 = vmatpush1.msra.mxu0 0.0
          %3997 = vmatprep.subr.mxu0 0.0
          %3998 = vmatpush1.msra.mxu0 0.0
          %3999 = vmatprep.subr.mxu0 0.0
          %4000 = vmatpush1.msra.mxu0 0.0
          %4001 = vmatprep.subr.mxu0 0.0
          %4002 = vmatpush1.msra.mxu0 0.0
          %4003 = vmatprep.subr.mxu0 0.0
          %4004 = vmatpush1.msra.mxu0 0.0
          %4005 = vmatprep.subr.mxu0 0.0
          %4006 = vmatpush1.msra.mxu0 0.0
          %4007 = vmatprep.subr.mxu0 0.0
          %4008 = vmatpush1.msra.mxu0 0.0
          %4009 = vmatprep.subr.mxu0 0.0
          %4010 = vmatpush1.msra.mxu0 0.0
          %4011 = vmatprep.subr.mxu0 0.0
          %v4012 = vand.u32 %v582, 4294901760
          %v4013 = vsub.f32 %v582, %v4012
          %4014 = vmatpush1.msra.mxu0 %v4013
          %4015 = vmatprep.subr.mxu0 0.0
          %v4016 = vand.u32 %v581, 4294901760
          %v4017 = vsub.f32 %v581, %v4016
          %4018 = vmatpush1.msra.mxu0 %v4017
          %4019 = vmatprep.subr.mxu0 0.0
          %4020 = vmatpush2.msra.mxu0 0.0
          %4021 = vmatprep.subr.mxu0 0.0
          %4022 = vmatpush2.msra.mxu0 0.0
          %4023 = vmatprep.subr.mxu0 0.0
          %4024 = vmatpush2.msra.mxu0 0.0
          %4025 = vmatprep.subr.mxu0 0.0
          %4026 = vmatpush2.msra.mxu0 0.0
          %4027 = vmatprep.subr.mxu0 0.0
          %4028 = vmatpush2.msra.mxu0 0.0
          %4029 = vmatprep.subr.mxu0 0.0
          %4030 = vmatpush2.msra.mxu0 0.0
          %4031 = vmatprep.subr.mxu0 0.0
          %4032 = vmatpush2.msra.mxu0 0.0
          %4033 = vmatprep.subr.mxu0 0.0
          %4034 = vmatpush2.msra.mxu0 0.0
          %4035 = vmatprep.subr.mxu0 0.0
          %4036 = vmatpush2.msra.mxu0 0.0
          %4037 = vmatprep.subr.mxu0 0.0
          %4038 = vmatpush2.msra.mxu0 0.0
          %4039 = vmatprep.subr.mxu0 0.0
          %4040 = vmatpush2.msra.mxu0 0.0
          %4041 = vmatprep.subr.mxu0 0.0
          %4042 = vmatpush2.msra.mxu0 0.0
          %4043 = vmatprep.subr.mxu0 0.0
          %4044 = vmatpush2.msra.mxu0 0.0
          %4045 = vmatprep.subr.mxu0 0.0
          %4046 = vmatpush2.msra.mxu0 0.0
          %4047 = vmatprep.subr.mxu0 0.0
          %4048 = vmatpush2.msra.mxu0 0.0
          %4049 = vmatprep.subr.mxu0 0.0
          %4050 = vmatpush2.msra.mxu0 0.0
          %4051 = vmatprep.mubr.f32.mxu0 0.0
          %v4052 = vand.u32 %v597, 4294901760
          %v4053 = vsub.f32 %v597, %v4052
          %4054 = vmatmul.mubr.f32.gmra.mxu0 %v4053
          %v4055 = vpop.f32.mrf.mxu0
          %v4056 = vadd.f32 %v3980, %v4055
          %v4057 = vpop.f32.mrf.mxu0
          %4058 = vdwg.mxu0
          %4059 = vmatprep.subr.mxu0 0.0
          %4060 = vmatpush1.msra.mxu0 0.0
          %4061 = vmatprep.subr.mxu0 0.0
          %4062 = vmatpush1.msra.mxu0 0.0
          %4063 = vmatprep.subr.mxu0 0.0
          %4064 = vmatpush1.msra.mxu0 0.0
          %4065 = vmatprep.subr.mxu0 0.0
          %4066 = vmatpush1.msra.mxu0 0.0
          %4067 = vmatprep.subr.mxu0 0.0
          %4068 = vmatpush1.msra.mxu0 0.0
          %4069 = vmatprep.subr.mxu0 0.0
          %4070 = vmatpush1.msra.mxu0 0.0
          %4071 = vmatprep.subr.mxu0 0.0
          %4072 = vmatpush1.msra.mxu0 0.0
          %4073 = vmatprep.subr.mxu0 0.0
          %4074 = vmatpush1.msra.mxu0 0.0
          %4075 = vmatprep.subr.mxu0 0.0
          %4076 = vmatpush1.msra.mxu0 0.0
          %4077 = vmatprep.subr.mxu0 0.0
          %4078 = vmatpush1.msra.mxu0 0.0
          %4079 = vmatprep.subr.mxu0 0.0
          %4080 = vmatpush1.msra.mxu0 0.0
          %4081 = vmatprep.subr.mxu0 0.0
          %4082 = vmatpush1.msra.mxu0 0.0
          %4083 = vmatprep.subr.mxu0 0.0
          %4084 = vmatpush1.msra.mxu0 0.0
          %4085 = vmatprep.subr.mxu0 0.0
          %4086 = vmatpush1.msra.mxu0 0.0
          %4087 = vmatprep.subr.mxu0 0.0
          %v4088 = vand.u32 %v582, 4294901760
          %4089 = vmatpush1.msra.mxu0 %v4088
          %4090 = vmatprep.subr.mxu0 0.0
          %v4091 = vand.u32 %v581, 4294901760
          %4092 = vmatpush1.msra.mxu0 %v4091
          %4093 = vmatprep.subr.mxu0 0.0
          %4094 = vmatpush2.msra.mxu0 0.0
          %4095 = vmatprep.subr.mxu0 0.0
          %4096 = vmatpush2.msra.mxu0 0.0
          %4097 = vmatprep.subr.mxu0 0.0
          %4098 = vmatpush2.msra.mxu0 0.0
          %4099 = vmatprep.subr.mxu0 0.0
          %4100 = vmatpush2.msra.mxu0 0.0
          %4101 = vmatprep.subr.mxu0 0.0
          %4102 = vmatpush2.msra.mxu0 0.0
          %4103 = vmatprep.subr.mxu0 0.0
          %4104 = vmatpush2.msra.mxu0 0.0
          %4105 = vmatprep.subr.mxu0 0.0
          %4106 = vmatpush2.msra.mxu0 0.0
          %4107 = vmatprep.subr.mxu0 0.0
          %4108 = vmatpush2.msra.mxu0 0.0
          %4109 = vmatprep.subr.mxu0 0.0
          %4110 = vmatpush2.msra.mxu0 0.0
          %4111 = vmatprep.subr.mxu0 0.0
          %4112 = vmatpush2.msra.mxu0 0.0
          %4113 = vmatprep.subr.mxu0 0.0
          %4114 = vmatpush2.msra.mxu0 0.0
          %4115 = vmatprep.subr.mxu0 0.0
          %4116 = vmatpush2.msra.mxu0 0.0
          %4117 = vmatprep.subr.mxu0 0.0
          %4118 = vmatpush2.msra.mxu0 0.0
          %4119 = vmatprep.subr.mxu0 0.0
          %4120 = vmatpush2.msra.mxu0 0.0
          %4121 = vmatprep.subr.mxu0 0.0
          %4122 = vmatpush2.msra.mxu0 0.0
          %4123 = vmatprep.subr.mxu0 0.0
          %4124 = vmatpush2.msra.mxu0 0.0
          %4125 = vmatprep.mubr.f32.mxu0 0.0
          %v4126 = vand.u32 %v597, 4294901760
          %v4127 = vsub.f32 %v597, %v4126
          %v4128 = vand.u32 %v4127, 4294901760
          %4129 = vmatmul.mubr.f32.gmra.mxu0 %v4128
          %v4130 = vpop.f32.mrf.mxu0
          %v4131 = vadd.f32 %v4056, %v4130
          %v4132 = vpop.f32.mrf.mxu0
          %4133 = vdwg.mxu0
          %4134 = vmatprep.subr.mxu0 0.0
          %4135 = vmatpush1.msra.mxu0 0.0
          %4136 = vmatprep.subr.mxu0 0.0
          %4137 = vmatpush1.msra.mxu0 0.0
          %4138 = vmatprep.subr.mxu0 0.0
          %4139 = vmatpush1.msra.mxu0 0.0
          %4140 = vmatprep.subr.mxu0 0.0
          %4141 = vmatpush1.msra.mxu0 0.0
          %4142 = vmatprep.subr.mxu0 0.0
          %4143 = vmatpush1.msra.mxu0 0.0
          %4144 = vmatprep.subr.mxu0 0.0
          %4145 = vmatpush1.msra.mxu0 0.0
          %4146 = vmatprep.subr.mxu0 0.0
          %4147 = vmatpush1.msra.mxu0 0.0
          %4148 = vmatprep.subr.mxu0 0.0
          %4149 = vmatpush1.msra.mxu0 0.0
          %4150 = vmatprep.subr.mxu0 0.0
          %4151 = vmatpush1.msra.mxu0 0.0
          %4152 = vmatprep.subr.mxu0 0.0
          %4153 = vmatpush1.msra.mxu0 0.0
          %4154 = vmatprep.subr.mxu0 0.0
          %4155 = vmatpush1.msra.mxu0 0.0
          %4156 = vmatprep.subr.mxu0 0.0
          %4157 = vmatpush1.msra.mxu0 0.0
          %4158 = vmatprep.subr.mxu0 0.0
          %4159 = vmatpush1.msra.mxu0 0.0
          %4160 = vmatprep.subr.mxu0 0.0
          %4161 = vmatpush1.msra.mxu0 0.0
          %4162 = vmatprep.subr.mxu0 0.0
          %v4163 = vand.u32 %v582, 4294901760
          %v4164 = vsub.f32 %v582, %v4163
          %v4165 = vand.u32 %v4164, 4294901760
          %4166 = vmatpush1.msra.mxu0 %v4165
          %4167 = vmatprep.subr.mxu0 0.0
          %v4168 = vand.u32 %v581, 4294901760
          %v4169 = vsub.f32 %v581, %v4168
          %v4170 = vand.u32 %v4169, 4294901760
          %4171 = vmatpush1.msra.mxu0 %v4170
          %4172 = vmatprep.subr.mxu0 0.0
          %4173 = vmatpush2.msra.mxu0 0.0
          %4174 = vmatprep.subr.mxu0 0.0
          %4175 = vmatpush2.msra.mxu0 0.0
          %4176 = vmatprep.subr.mxu0 0.0
          %4177 = vmatpush2.msra.mxu0 0.0
          %4178 = vmatprep.subr.mxu0 0.0
          %4179 = vmatpush2.msra.mxu0 0.0
          %4180 = vmatprep.subr.mxu0 0.0
          %4181 = vmatpush2.msra.mxu0 0.0
          %4182 = vmatprep.subr.mxu0 0.0
          %4183 = vmatpush2.msra.mxu0 0.0
          %4184 = vmatprep.subr.mxu0 0.0
          %4185 = vmatpush2.msra.mxu0 0.0
          %4186 = vmatprep.subr.mxu0 0.0
          %4187 = vmatpush2.msra.mxu0 0.0
          %4188 = vmatprep.subr.mxu0 0.0
          %4189 = vmatpush2.msra.mxu0 0.0
          %4190 = vmatprep.subr.mxu0 0.0
          %4191 = vmatpush2.msra.mxu0 0.0
          %4192 = vmatprep.subr.mxu0 0.0
          %4193 = vmatpush2.msra.mxu0 0.0
          %4194 = vmatprep.subr.mxu0 0.0
          %4195 = vmatpush2.msra.mxu0 0.0
          %4196 = vmatprep.subr.mxu0 0.0
          %4197 = vmatpush2.msra.mxu0 0.0
          %4198 = vmatprep.subr.mxu0 0.0
          %4199 = vmatpush2.msra.mxu0 0.0
          %4200 = vmatprep.subr.mxu0 0.0
          %4201 = vmatpush2.msra.mxu0 0.0
          %4202 = vmatprep.subr.mxu0 0.0
          %4203 = vmatpush2.msra.mxu0 0.0
          %4204 = vmatprep.mubr.f32.mxu0 0.0
          %v4205 = vand.u32 %v597, 4294901760
          %4206 = vmatmul.mubr.f32.gmra.mxu0 %v4205
          %v4207 = vpop.f32.mrf.mxu0
          %v4208 = vadd.f32 %v4131, %v4207
          %v4209 = vpop.f32.mrf.mxu0
          %4210 = vdwg.mxu0
          %4211 = vmatprep.subr.mxu0 0.0
          %4212 = vmatpush1.msra.mxu0 0.0
          %4213 = vmatprep.subr.mxu0 0.0
          %4214 = vmatpush1.msra.mxu0 0.0
          %4215 = vmatprep.subr.mxu0 0.0
          %4216 = vmatpush1.msra.mxu0 0.0
          %4217 = vmatprep.subr.mxu0 0.0
          %4218 = vmatpush1.msra.mxu0 0.0
          %4219 = vmatprep.subr.mxu0 0.0
          %4220 = vmatpush1.msra.mxu0 0.0
          %4221 = vmatprep.subr.mxu0 0.0
          %4222 = vmatpush1.msra.mxu0 0.0
          %4223 = vmatprep.subr.mxu0 0.0
          %4224 = vmatpush1.msra.mxu0 0.0
          %4225 = vmatprep.subr.mxu0 0.0
          %4226 = vmatpush1.msra.mxu0 0.0
          %4227 = vmatprep.subr.mxu0 0.0
          %4228 = vmatpush1.msra.mxu0 0.0
          %4229 = vmatprep.subr.mxu0 0.0
          %4230 = vmatpush1.msra.mxu0 0.0
          %4231 = vmatprep.subr.mxu0 0.0
          %4232 = vmatpush1.msra.mxu0 0.0
          %4233 = vmatprep.subr.mxu0 0.0
          %4234 = vmatpush1.msra.mxu0 0.0
          %4235 = vmatprep.subr.mxu0 0.0
          %4236 = vmatpush1.msra.mxu0 0.0
          %4237 = vmatprep.subr.mxu0 0.0
          %4238 = vmatpush1.msra.mxu0 0.0
          %4239 = vmatprep.subr.mxu0 0.0
          %v4240 = vand.u32 %v582, 4294901760
          %4241 = vmatpush1.msra.mxu0 %v4240
          %4242 = vmatprep.subr.mxu0 0.0
          %v4243 = vand.u32 %v581, 4294901760
          %4244 = vmatpush1.msra.mxu0 %v4243
          %4245 = vmatprep.subr.mxu0 0.0
          %4246 = vmatpush2.msra.mxu0 0.0
          %4247 = vmatprep.subr.mxu0 0.0
          %4248 = vmatpush2.msra.mxu0 0.0
          %4249 = vmatprep.subr.mxu0 0.0
          %4250 = vmatpush2.msra.mxu0 0.0
          %4251 = vmatprep.subr.mxu0 0.0
          %4252 = vmatpush2.msra.mxu0 0.0
          %4253 = vmatprep.subr.mxu0 0.0
          %4254 = vmatpush2.msra.mxu0 0.0
          %4255 = vmatprep.subr.mxu0 0.0
          %4256 = vmatpush2.msra.mxu0 0.0
          %4257 = vmatprep.subr.mxu0 0.0
          %4258 = vmatpush2.msra.mxu0 0.0
          %4259 = vmatprep.subr.mxu0 0.0
          %4260 = vmatpush2.msra.mxu0 0.0
          %4261 = vmatprep.subr.mxu0 0.0
          %4262 = vmatpush2.msra.mxu0 0.0
          %4263 = vmatprep.subr.mxu0 0.0
          %4264 = vmatpush2.msra.mxu0 0.0
          %4265 = vmatprep.subr.mxu0 0.0
          %4266 = vmatpush2.msra.mxu0 0.0
          %4267 = vmatprep.subr.mxu0 0.0
          %4268 = vmatpush2.msra.mxu0 0.0
          %4269 = vmatprep.subr.mxu0 0.0
          %4270 = vmatpush2.msra.mxu0 0.0
          %4271 = vmatprep.subr.mxu0 0.0
          %4272 = vmatpush2.msra.mxu0 0.0
          %4273 = vmatprep.subr.mxu0 0.0
          %4274 = vmatpush2.msra.mxu0 0.0
          %4275 = vmatprep.subr.mxu0 0.0
          %4276 = vmatpush2.msra.mxu0 0.0
          %4277 = vmatprep.mubr.f32.mxu0 0.0
          %v4278 = vand.u32 %v597, 4294901760
          %4279 = vmatmul.mubr.f32.gmra.mxu0 %v4278
          %v4280 = vpop.f32.mrf.mxu0
          %v4281 = vadd.f32 %v4208, %v4280
          %v4282 = vpop.f32.mrf.mxu0
          %4283 = vdwg.mxu0
          %v4284 = vadd.f32 %v2444, %v2904
          %v4285 = vadd.f32 %v2445, %v3363
          %v4286 = vadd.f32 %v2446, %v3822
          %v4287 = vadd.f32 %v2447, %v4281
          %4288 = vst.msk [vmem:[#allocation3] sm:$0xff] %vm2439, %v4284
          %4289 = vst.msk [vmem:[#allocation3 + $0x8] sm:$0xff] %vm2439, %v4285
          %4290 = vst.msk [vmem:[#allocation3 + $0x10] sm:$0xff] %vm2439, %v4286
          %4291 = vst.msk [vmem:[#allocation3 + $0x18] sm:$0xff] %vm2439, %v4287
        $region140: #{tpu_custom_call.1} parent=123 // pred_fallthru
          _
        %p4292 = scmp.gt.s32.totalorder %s586, 72
        // Predicated region
        $region141: #{tpu_custom_call.1} parent=123 // pred_check
          %p4293 = pneg %p4292
        $region142: #{tpu_custom_call.1} parent=123 // pred_check_branch
          %4295 = sbr.rel (%p4293) target = $region144
        $region143: #{tpu_custom_call.1} parent=123 // pred_region
          %v4296 = vlaneseq
          %v4297 = vshrl.u32 %v4296, 7
          %v4298 = vadd.s32 %v4297, 8
          %v4299 = vstv %s585
          %v4300 = vadd.s32 %v4297, %v4299
          %v4301 = vadd.s32 %v4298, %v4299
          %vm4302 = vcmp.lt.s32.totalorder %v4300, 72
          %vm4303 = vcmp.lt.s32.totalorder %v4301, 72
          %v4304 = vsel %vm4302, %v567, 0.0
          %v4305 = vsel %vm4303, %v568, 0.0
          %v4306 = vsel %vm4302, %v569, 0.0
          %v4307 = vsel %vm4303, %v570, 0.0
          %v4308 = vsel %vm4302, %v571, 0.0
          %v4309 = vsel %vm4303, %v572, 0.0
          %v4310 = vsel %vm4302, %v573, 0.0
          %v4311 = vsel %vm4303, %v574, 0.0
          %v4312 = vsel %vm4302, %v575, 0.0
          %v4313 = vsel %vm4303, %v576, 0.0
          %v4314 = vsel %vm4302, %v577, 0.0
          %v4315 = vsel %vm4303, %v578, 0.0
          %v4316 = vsel %vm4302, %v579, 0.0
          %v4317 = vsel %vm4303, %v580, 0.0
          %v4318 = vsel %vm4302, %v581, 0.0
          %v4319 = vsel %vm4303, %v582, 0.0
          %v4320 = vld [vmem:[#allocation2] sm:$0xff]
          %v4321 = vld [vmem:[#allocation2 + $0x8] sm:$0xff]
          %v4322 = vld [vmem:[#allocation2 + $0x10] sm:$0xff]
          %v4323 = vld [vmem:[#allocation2 + $0x18] sm:$0xff]
          %vm4324 = vcmask 130048
          %v4326 = vsel %vm4324, 1.0, 0
          %4328 = vmatprep.subr.mxu0 0.0
          %4329 = vmatpush1.msra.mxu0 0.0
          %4330 = vmatprep.subr.mxu0 0.0
          %4331 = vmatpush1.msra.mxu0 0.0
          %4332 = vmatprep.subr.mxu0 0.0
          %4333 = vmatpush1.msra.mxu0 0.0
          %4334 = vmatprep.subr.mxu0 0.0
          %4335 = vmatpush1.msra.mxu0 0.0
          %4336 = vmatprep.subr.mxu0 0.0
          %4337 = vmatpush1.msra.mxu0 0.0
          %4338 = vmatprep.subr.mxu0 0.0
          %4339 = vmatpush1.msra.mxu0 0.0
          %4340 = vmatprep.subr.mxu0 0.0
          %4341 = vmatpush1.msra.mxu0 0.0
          %4342 = vmatprep.subr.mxu0 0.0
          %4343 = vmatpush1.msra.mxu0 0.0
          %4344 = vmatprep.subr.mxu0 0.0
          %4345 = vmatpush1.msra.mxu0 0.0
          %4346 = vmatprep.subr.mxu0 0.0
          %4347 = vmatpush1.msra.mxu0 0.0
          %4348 = vmatprep.subr.mxu0 0.0
          %4349 = vmatpush1.msra.mxu0 0.0
          %4350 = vmatprep.subr.mxu0 0.0
          %4351 = vmatpush1.msra.mxu0 0.0
          %4352 = vmatprep.subr.mxu0 0.0
          %4353 = vmatpush1.msra.mxu0 0.0
          %4354 = vmatprep.subr.mxu0 0.0
          %4355 = vmatpush1.msra.mxu0 0.0
          %4356 = vmatprep.subr.mxu0 0.0
          %v4357 = vand.u32 %v4305, 4294901760
          %4358 = vmatpush1.msra.mxu0 %v4357
          %4359 = vmatprep.subr.mxu0 0.0
          %v4360 = vand.u32 %v4304, 4294901760
          %4361 = vmatpush1.msra.mxu0 %v4360
          %4362 = vmatprep.subr.mxu0 0.0
          %4363 = vmatpush2.msra.mxu0 0.0
          %4364 = vmatprep.subr.mxu0 0.0
          %4365 = vmatpush2.msra.mxu0 0.0
          %4366 = vmatprep.subr.mxu0 0.0
          %4367 = vmatpush2.msra.mxu0 0.0
          %4368 = vmatprep.subr.mxu0 0.0
          %4369 = vmatpush2.msra.mxu0 0.0
          %4370 = vmatprep.subr.mxu0 0.0
          %4371 = vmatpush2.msra.mxu0 0.0
          %4372 = vmatprep.subr.mxu0 0.0
          %4373 = vmatpush2.msra.mxu0 0.0
          %4374 = vmatprep.subr.mxu0 0.0
          %4375 = vmatpush2.msra.mxu0 0.0
          %4376 = vmatprep.subr.mxu0 0.0
          %4377 = vmatpush2.msra.mxu0 0.0
          %4378 = vmatprep.subr.mxu0 0.0
          %4379 = vmatpush2.msra.mxu0 0.0
          %4380 = vmatprep.subr.mxu0 0.0
          %4381 = vmatpush2.msra.mxu0 0.0
          %4382 = vmatprep.subr.mxu0 0.0
          %4383 = vmatpush2.msra.mxu0 0.0
          %4384 = vmatprep.subr.mxu0 0.0
          %4385 = vmatpush2.msra.mxu0 0.0
          %4386 = vmatprep.subr.mxu0 0.0
          %4387 = vmatpush2.msra.mxu0 0.0
          %4388 = vmatprep.subr.mxu0 0.0
          %4389 = vmatpush2.msra.mxu0 0.0
          %4390 = vmatprep.subr.mxu0 0.0
          %4391 = vmatpush2.msra.mxu0 0.0
          %4392 = vmatprep.subr.mxu0 0.0
          %4393 = vmatpush2.msra.mxu0 0.0
          %4394 = vmatprep.mubr.f32.mxu0 0.0
          %v4395 = vand.u32 %v4326, 4294901760
          %v4396 = vsub.f32 %v4326, %v4395
          %v4397 = vand.u32 %v4396, 4294901760
          %v4398 = vsub.f32 %v4396, %v4397
          %v4399 = vand.u32 %v4398, 4294901760
          %4400 = vmatmul.mubr.f32.gmra.mxu0 %v4399
          %v4401 = vpop.f32.mrf.mxu0
          %v4402 = vadd.f32 0.0, %v4401
          %v4403 = vpop.f32.mrf.mxu0
          %4404 = vdwg.mxu0
          %4405 = vmatprep.subr.mxu0 0.0
          %4406 = vmatpush1.msra.mxu0 0.0
          %4407 = vmatprep.subr.mxu0 0.0
          %4408 = vmatpush1.msra.mxu0 0.0
          %4409 = vmatprep.subr.mxu0 0.0
          %4410 = vmatpush1.msra.mxu0 0.0
          %4411 = vmatprep.subr.mxu0 0.0
          %4412 = vmatpush1.msra.mxu0 0.0
          %4413 = vmatprep.subr.mxu0 0.0
          %4414 = vmatpush1.msra.mxu0 0.0
          %4415 = vmatprep.subr.mxu0 0.0
          %4416 = vmatpush1.msra.mxu0 0.0
          %4417 = vmatprep.subr.mxu0 0.0
          %4418 = vmatpush1.msra.mxu0 0.0
          %4419 = vmatprep.subr.mxu0 0.0
          %4420 = vmatpush1.msra.mxu0 0.0
          %4421 = vmatprep.subr.mxu0 0.0
          %4422 = vmatpush1.msra.mxu0 0.0
          %4423 = vmatprep.subr.mxu0 0.0
          %4424 = vmatpush1.msra.mxu0 0.0
          %4425 = vmatprep.subr.mxu0 0.0
          %4426 = vmatpush1.msra.mxu0 0.0
          %4427 = vmatprep.subr.mxu0 0.0
          %4428 = vmatpush1.msra.mxu0 0.0
          %4429 = vmatprep.subr.mxu0 0.0
          %4430 = vmatpush1.msra.mxu0 0.0
          %4431 = vmatprep.subr.mxu0 0.0
          %4432 = vmatpush1.msra.mxu0 0.0
          %4433 = vmatprep.subr.mxu0 0.0
          %v4434 = vand.u32 %v4305, 4294901760
          %v4435 = vsub.f32 %v4305, %v4434
          %v4436 = vand.u32 %v4435, 4294901760
          %v4437 = vsub.f32 %v4435, %v4436
          %v4438 = vand.u32 %v4437, 4294901760
          %4439 = vmatpush1.msra.mxu0 %v4438
          %4440 = vmatprep.subr.mxu0 0.0
          %v4441 = vand.u32 %v4304, 4294901760
          %v4442 = vsub.f32 %v4304, %v4441
          %v4443 = vand.u32 %v4442, 4294901760
          %v4444 = vsub.f32 %v4442, %v4443
          %v4445 = vand.u32 %v4444, 4294901760
          %4446 = vmatpush1.msra.mxu0 %v4445
          %4447 = vmatprep.subr.mxu0 0.0
          %4448 = vmatpush2.msra.mxu0 0.0
          %4449 = vmatprep.subr.mxu0 0.0
          %4450 = vmatpush2.msra.mxu0 0.0
          %4451 = vmatprep.subr.mxu0 0.0
          %4452 = vmatpush2.msra.mxu0 0.0
          %4453 = vmatprep.subr.mxu0 0.0
          %4454 = vmatpush2.msra.mxu0 0.0
          %4455 = vmatprep.subr.mxu0 0.0
          %4456 = vmatpush2.msra.mxu0 0.0
          %4457 = vmatprep.subr.mxu0 0.0
          %4458 = vmatpush2.msra.mxu0 0.0
          %4459 = vmatprep.subr.mxu0 0.0
          %4460 = vmatpush2.msra.mxu0 0.0
          %4461 = vmatprep.subr.mxu0 0.0
          %4462 = vmatpush2.msra.mxu0 0.0
          %4463 = vmatprep.subr.mxu0 0.0
          %4464 = vmatpush2.msra.mxu0 0.0
          %4465 = vmatprep.subr.mxu0 0.0
          %4466 = vmatpush2.msra.mxu0 0.0
          %4467 = vmatprep.subr.mxu0 0.0
          %4468 = vmatpush2.msra.mxu0 0.0
          %4469 = vmatprep.subr.mxu0 0.0
          %4470 = vmatpush2.msra.mxu0 0.0
          %4471 = vmatprep.subr.mxu0 0.0
          %4472 = vmatpush2.msra.mxu0 0.0
          %4473 = vmatprep.subr.mxu0 0.0
          %4474 = vmatpush2.msra.mxu0 0.0
          %4475 = vmatprep.subr.mxu0 0.0
          %4476 = vmatpush2.msra.mxu0 0.0
          %4477 = vmatprep.subr.mxu0 0.0
          %4478 = vmatpush2.msra.mxu0 0.0
          %4479 = vmatprep.mubr.f32.mxu0 0.0
          %v4480 = vand.u32 %v4326, 4294901760
          %4481 = vmatmul.mubr.f32.gmra.mxu0 %v4480
          %v4482 = vpop.f32.mrf.mxu0
          %v4483 = vadd.f32 %v4402, %v4482
          %v4484 = vpop.f32.mrf.mxu0
          %4485 = vdwg.mxu0
          %4486 = vmatprep.subr.mxu0 0.0
          %4487 = vmatpush1.msra.mxu0 0.0
          %4488 = vmatprep.subr.mxu0 0.0
          %4489 = vmatpush1.msra.mxu0 0.0
          %4490 = vmatprep.subr.mxu0 0.0
          %4491 = vmatpush1.msra.mxu0 0.0
          %4492 = vmatprep.subr.mxu0 0.0
          %4493 = vmatpush1.msra.mxu0 0.0
          %4494 = vmatprep.subr.mxu0 0.0
          %4495 = vmatpush1.msra.mxu0 0.0
          %4496 = vmatprep.subr.mxu0 0.0
          %4497 = vmatpush1.msra.mxu0 0.0
          %4498 = vmatprep.subr.mxu0 0.0
          %4499 = vmatpush1.msra.mxu0 0.0
          %4500 = vmatprep.subr.mxu0 0.0
          %4501 = vmatpush1.msra.mxu0 0.0
          %4502 = vmatprep.subr.mxu0 0.0
          %4503 = vmatpush1.msra.mxu0 0.0
          %4504 = vmatprep.subr.mxu0 0.0
          %4505 = vmatpush1.msra.mxu0 0.0
          %4506 = vmatprep.subr.mxu0 0.0
          %4507 = vmatpush1.msra.mxu0 0.0
          %4508 = vmatprep.subr.mxu0 0.0
          %4509 = vmatpush1.msra.mxu0 0.0
          %4510 = vmatprep.subr.mxu0 0.0
          %4511 = vmatpush1.msra.mxu0 0.0
          %4512 = vmatprep.subr.mxu0 0.0
          %4513 = vmatpush1.msra.mxu0 0.0
          %4514 = vmatprep.subr.mxu0 0.0
          %v4515 = vand.u32 %v4305, 4294901760
          %v4516 = vsub.f32 %v4305, %v4515
          %4517 = vmatpush1.msra.mxu0 %v4516
          %4518 = vmatprep.subr.mxu0 0.0
          %v4519 = vand.u32 %v4304, 4294901760
          %v4520 = vsub.f32 %v4304, %v4519
          %4521 = vmatpush1.msra.mxu0 %v4520
          %4522 = vmatprep.subr.mxu0 0.0
          %4523 = vmatpush2.msra.mxu0 0.0
          %4524 = vmatprep.subr.mxu0 0.0
          %4525 = vmatpush2.msra.mxu0 0.0
          %4526 = vmatprep.subr.mxu0 0.0
          %4527 = vmatpush2.msra.mxu0 0.0
          %4528 = vmatprep.subr.mxu0 0.0
          %4529 = vmatpush2.msra.mxu0 0.0
          %4530 = vmatprep.subr.mxu0 0.0
          %4531 = vmatpush2.msra.mxu0 0.0
          %4532 = vmatprep.subr.mxu0 0.0
          %4533 = vmatpush2.msra.mxu0 0.0
          %4534 = vmatprep.subr.mxu0 0.0
          %4535 = vmatpush2.msra.mxu0 0.0
          %4536 = vmatprep.subr.mxu0 0.0
          %4537 = vmatpush2.msra.mxu0 0.0
          %4538 = vmatprep.subr.mxu0 0.0
          %4539 = vmatpush2.msra.mxu0 0.0
          %4540 = vmatprep.subr.mxu0 0.0
          %4541 = vmatpush2.msra.mxu0 0.0
          %4542 = vmatprep.subr.mxu0 0.0
          %4543 = vmatpush2.msra.mxu0 0.0
          %4544 = vmatprep.subr.mxu0 0.0
          %4545 = vmatpush2.msra.mxu0 0.0
          %4546 = vmatprep.subr.mxu0 0.0
          %4547 = vmatpush2.msra.mxu0 0.0
          %4548 = vmatprep.subr.mxu0 0.0
          %4549 = vmatpush2.msra.mxu0 0.0
          %4550 = vmatprep.subr.mxu0 0.0
          %4551 = vmatpush2.msra.mxu0 0.0
          %4552 = vmatprep.subr.mxu0 0.0
          %4553 = vmatpush2.msra.mxu0 0.0
          %4554 = vmatprep.mubr.f32.mxu0 0.0
          %v4555 = vand.u32 %v4326, 4294901760
          %v4556 = vsub.f32 %v4326, %v4555
          %4557 = vmatmul.mubr.f32.gmra.mxu0 %v4556
          %v4558 = vpop.f32.mrf.mxu0
          %v4559 = vadd.f32 %v4483, %v4558
          %v4560 = vpop.f32.mrf.mxu0
          %4561 = vdwg.mxu0
          %4562 = vmatprep.subr.mxu0 0.0
          %4563 = vmatpush1.msra.mxu0 0.0
          %4564 = vmatprep.subr.mxu0 0.0
          %4565 = vmatpush1.msra.mxu0 0.0
          %4566 = vmatprep.subr.mxu0 0.0
          %4567 = vmatpush1.msra.mxu0 0.0
          %4568 = vmatprep.subr.mxu0 0.0
          %4569 = vmatpush1.msra.mxu0 0.0
          %4570 = vmatprep.subr.mxu0 0.0
          %4571 = vmatpush1.msra.mxu0 0.0
          %4572 = vmatprep.subr.mxu0 0.0
          %4573 = vmatpush1.msra.mxu0 0.0
          %4574 = vmatprep.subr.mxu0 0.0
          %4575 = vmatpush1.msra.mxu0 0.0
          %4576 = vmatprep.subr.mxu0 0.0
          %4577 = vmatpush1.msra.mxu0 0.0
          %4578 = vmatprep.subr.mxu0 0.0
          %4579 = vmatpush1.msra.mxu0 0.0
          %4580 = vmatprep.subr.mxu0 0.0
          %4581 = vmatpush1.msra.mxu0 0.0
          %4582 = vmatprep.subr.mxu0 0.0
          %4583 = vmatpush1.msra.mxu0 0.0
          %4584 = vmatprep.subr.mxu0 0.0
          %4585 = vmatpush1.msra.mxu0 0.0
          %4586 = vmatprep.subr.mxu0 0.0
          %4587 = vmatpush1.msra.mxu0 0.0
          %4588 = vmatprep.subr.mxu0 0.0
          %4589 = vmatpush1.msra.mxu0 0.0
          %4590 = vmatprep.subr.mxu0 0.0
          %v4591 = vand.u32 %v4305, 4294901760
          %4592 = vmatpush1.msra.mxu0 %v4591
          %4593 = vmatprep.subr.mxu0 0.0
          %v4594 = vand.u32 %v4304, 4294901760
          %4595 = vmatpush1.msra.mxu0 %v4594
          %4596 = vmatprep.subr.mxu0 0.0
          %4597 = vmatpush2.msra.mxu0 0.0
          %4598 = vmatprep.subr.mxu0 0.0
          %4599 = vmatpush2.msra.mxu0 0.0
          %4600 = vmatprep.subr.mxu0 0.0
          %4601 = vmatpush2.msra.mxu0 0.0
          %4602 = vmatprep.subr.mxu0 0.0
          %4603 = vmatpush2.msra.mxu0 0.0
          %4604 = vmatprep.subr.mxu0 0.0
          %4605 = vmatpush2.msra.mxu0 0.0
          %4606 = vmatprep.subr.mxu0 0.0
          %4607 = vmatpush2.msra.mxu0 0.0
          %4608 = vmatprep.subr.mxu0 0.0
          %4609 = vmatpush2.msra.mxu0 0.0
          %4610 = vmatprep.subr.mxu0 0.0
          %4611 = vmatpush2.msra.mxu0 0.0
          %4612 = vmatprep.subr.mxu0 0.0
          %4613 = vmatpush2.msra.mxu0 0.0
          %4614 = vmatprep.subr.mxu0 0.0
          %4615 = vmatpush2.msra.mxu0 0.0
          %4616 = vmatprep.subr.mxu0 0.0
          %4617 = vmatpush2.msra.mxu0 0.0
          %4618 = vmatprep.subr.mxu0 0.0
          %4619 = vmatpush2.msra.mxu0 0.0
          %4620 = vmatprep.subr.mxu0 0.0
          %4621 = vmatpush2.msra.mxu0 0.0
          %4622 = vmatprep.subr.mxu0 0.0
          %4623 = vmatpush2.msra.mxu0 0.0
          %4624 = vmatprep.subr.mxu0 0.0
          %4625 = vmatpush2.msra.mxu0 0.0
          %4626 = vmatprep.subr.mxu0 0.0
          %4627 = vmatpush2.msra.mxu0 0.0
          %4628 = vmatprep.mubr.f32.mxu0 0.0
          %v4629 = vand.u32 %v4326, 4294901760
          %v4630 = vsub.f32 %v4326, %v4629
          %v4631 = vand.u32 %v4630, 4294901760
          %4632 = vmatmul.mubr.f32.gmra.mxu0 %v4631
          %v4633 = vpop.f32.mrf.mxu0
          %v4634 = vadd.f32 %v4559, %v4633
          %v4635 = vpop.f32.mrf.mxu0
          %4636 = vdwg.mxu0
          %4637 = vmatprep.subr.mxu0 0.0
          %4638 = vmatpush1.msra.mxu0 0.0
          %4639 = vmatprep.subr.mxu0 0.0
          %4640 = vmatpush1.msra.mxu0 0.0
          %4641 = vmatprep.subr.mxu0 0.0
          %4642 = vmatpush1.msra.mxu0 0.0
          %4643 = vmatprep.subr.mxu0 0.0
          %4644 = vmatpush1.msra.mxu0 0.0
          %4645 = vmatprep.subr.mxu0 0.0
          %4646 = vmatpush1.msra.mxu0 0.0
          %4647 = vmatprep.subr.mxu0 0.0
          %4648 = vmatpush1.msra.mxu0 0.0
          %4649 = vmatprep.subr.mxu0 0.0
          %4650 = vmatpush1.msra.mxu0 0.0
          %4651 = vmatprep.subr.mxu0 0.0
          %4652 = vmatpush1.msra.mxu0 0.0
          %4653 = vmatprep.subr.mxu0 0.0
          %4654 = vmatpush1.msra.mxu0 0.0
          %4655 = vmatprep.subr.mxu0 0.0
          %4656 = vmatpush1.msra.mxu0 0.0
          %4657 = vmatprep.subr.mxu0 0.0
          %4658 = vmatpush1.msra.mxu0 0.0
          %4659 = vmatprep.subr.mxu0 0.0
          %4660 = vmatpush1.msra.mxu0 0.0
          %4661 = vmatprep.subr.mxu0 0.0
          %4662 = vmatpush1.msra.mxu0 0.0
          %4663 = vmatprep.subr.mxu0 0.0
          %4664 = vmatpush1.msra.mxu0 0.0
          %4665 = vmatprep.subr.mxu0 0.0
          %v4666 = vand.u32 %v4305, 4294901760
          %v4667 = vsub.f32 %v4305, %v4666
          %v4668 = vand.u32 %v4667, 4294901760
          %4669 = vmatpush1.msra.mxu0 %v4668
          %4670 = vmatprep.subr.mxu0 0.0
          %v4671 = vand.u32 %v4304, 4294901760
          %v4672 = vsub.f32 %v4304, %v4671
          %v4673 = vand.u32 %v4672, 4294901760
          %4674 = vmatpush1.msra.mxu0 %v4673
          %4675 = vmatprep.subr.mxu0 0.0
          %4676 = vmatpush2.msra.mxu0 0.0
          %4677 = vmatprep.subr.mxu0 0.0
          %4678 = vmatpush2.msra.mxu0 0.0
          %4679 = vmatprep.subr.mxu0 0.0
          %4680 = vmatpush2.msra.mxu0 0.0
          %4681 = vmatprep.subr.mxu0 0.0
          %4682 = vmatpush2.msra.mxu0 0.0
          %4683 = vmatprep.subr.mxu0 0.0
          %4684 = vmatpush2.msra.mxu0 0.0
          %4685 = vmatprep.subr.mxu0 0.0
          %4686 = vmatpush2.msra.mxu0 0.0
          %4687 = vmatprep.subr.mxu0 0.0
          %4688 = vmatpush2.msra.mxu0 0.0
          %4689 = vmatprep.subr.mxu0 0.0
          %4690 = vmatpush2.msra.mxu0 0.0
          %4691 = vmatprep.subr.mxu0 0.0
          %4692 = vmatpush2.msra.mxu0 0.0
          %4693 = vmatprep.subr.mxu0 0.0
          %4694 = vmatpush2.msra.mxu0 0.0
          %4695 = vmatprep.subr.mxu0 0.0
          %4696 = vmatpush2.msra.mxu0 0.0
          %4697 = vmatprep.subr.mxu0 0.0
          %4698 = vmatpush2.msra.mxu0 0.0
          %4699 = vmatprep.subr.mxu0 0.0
          %4700 = vmatpush2.msra.mxu0 0.0
          %4701 = vmatprep.subr.mxu0 0.0
          %4702 = vmatpush2.msra.mxu0 0.0
          %4703 = vmatprep.subr.mxu0 0.0
          %4704 = vmatpush2.msra.mxu0 0.0
          %4705 = vmatprep.subr.mxu0 0.0
          %4706 = vmatpush2.msra.mxu0 0.0
          %4707 = vmatprep.mubr.f32.mxu0 0.0
          %v4708 = vand.u32 %v4326, 4294901760
          %4709 = vmatmul.mubr.f32.gmra.mxu0 %v4708
          %v4710 = vpop.f32.mrf.mxu0
          %v4711 = vadd.f32 %v4634, %v4710
          %v4712 = vpop.f32.mrf.mxu0
          %4713 = vdwg.mxu0
          %4714 = vmatprep.subr.mxu0 0.0
          %4715 = vmatpush1.msra.mxu0 0.0
          %4716 = vmatprep.subr.mxu0 0.0
          %4717 = vmatpush1.msra.mxu0 0.0
          %4718 = vmatprep.subr.mxu0 0.0
          %4719 = vmatpush1.msra.mxu0 0.0
          %4720 = vmatprep.subr.mxu0 0.0
          %4721 = vmatpush1.msra.mxu0 0.0
          %4722 = vmatprep.subr.mxu0 0.0
          %4723 = vmatpush1.msra.mxu0 0.0
          %4724 = vmatprep.subr.mxu0 0.0
          %4725 = vmatpush1.msra.mxu0 0.0
          %4726 = vmatprep.subr.mxu0 0.0
          %4727 = vmatpush1.msra.mxu0 0.0
          %4728 = vmatprep.subr.mxu0 0.0
          %4729 = vmatpush1.msra.mxu0 0.0
          %4730 = vmatprep.subr.mxu0 0.0
          %4731 = vmatpush1.msra.mxu0 0.0
          %4732 = vmatprep.subr.mxu0 0.0
          %4733 = vmatpush1.msra.mxu0 0.0
          %4734 = vmatprep.subr.mxu0 0.0
          %4735 = vmatpush1.msra.mxu0 0.0
          %4736 = vmatprep.subr.mxu0 0.0
          %4737 = vmatpush1.msra.mxu0 0.0
          %4738 = vmatprep.subr.mxu0 0.0
          %4739 = vmatpush1.msra.mxu0 0.0
          %4740 = vmatprep.subr.mxu0 0.0
          %4741 = vmatpush1.msra.mxu0 0.0
          %4742 = vmatprep.subr.mxu0 0.0
          %v4743 = vand.u32 %v4305, 4294901760
          %4744 = vmatpush1.msra.mxu0 %v4743
          %4745 = vmatprep.subr.mxu0 0.0
          %v4746 = vand.u32 %v4304, 4294901760
          %4747 = vmatpush1.msra.mxu0 %v4746
          %4748 = vmatprep.subr.mxu0 0.0
          %4749 = vmatpush2.msra.mxu0 0.0
          %4750 = vmatprep.subr.mxu0 0.0
          %4751 = vmatpush2.msra.mxu0 0.0
          %4752 = vmatprep.subr.mxu0 0.0
          %4753 = vmatpush2.msra.mxu0 0.0
          %4754 = vmatprep.subr.mxu0 0.0
          %4755 = vmatpush2.msra.mxu0 0.0
          %4756 = vmatprep.subr.mxu0 0.0
          %4757 = vmatpush2.msra.mxu0 0.0
          %4758 = vmatprep.subr.mxu0 0.0
          %4759 = vmatpush2.msra.mxu0 0.0
          %4760 = vmatprep.subr.mxu0 0.0
          %4761 = vmatpush2.msra.mxu0 0.0
          %4762 = vmatprep.subr.mxu0 0.0
          %4763 = vmatpush2.msra.mxu0 0.0
          %4764 = vmatprep.subr.mxu0 0.0
          %4765 = vmatpush2.msra.mxu0 0.0
          %4766 = vmatprep.subr.mxu0 0.0
          %4767 = vmatpush2.msra.mxu0 0.0
          %4768 = vmatprep.subr.mxu0 0.0
          %4769 = vmatpush2.msra.mxu0 0.0
          %4770 = vmatprep.subr.mxu0 0.0
          %4771 = vmatpush2.msra.mxu0 0.0
          %4772 = vmatprep.subr.mxu0 0.0
          %4773 = vmatpush2.msra.mxu0 0.0
          %4774 = vmatprep.subr.mxu0 0.0
          %4775 = vmatpush2.msra.mxu0 0.0
          %4776 = vmatprep.subr.mxu0 0.0
          %4777 = vmatpush2.msra.mxu0 0.0
          %4778 = vmatprep.subr.mxu0 0.0
          %4779 = vmatpush2.msra.mxu0 0.0
          %4780 = vmatprep.mubr.f32.mxu0 0.0
          %v4781 = vand.u32 %v4326, 4294901760
          %4782 = vmatmul.mubr.f32.gmra.mxu0 %v4781
          %v4783 = vpop.f32.mrf.mxu0
          %v4784 = vadd.f32 %v4711, %v4783
          %v4785 = vpop.f32.mrf.mxu0
          %4786 = vdwg.mxu0
          %4787 = vmatprep.subr.mxu0 0.0
          %4788 = vmatpush1.msra.mxu0 0.0
          %4789 = vmatprep.subr.mxu0 0.0
          %4790 = vmatpush1.msra.mxu0 0.0
          %4791 = vmatprep.subr.mxu0 0.0
          %4792 = vmatpush1.msra.mxu0 0.0
          %4793 = vmatprep.subr.mxu0 0.0
          %4794 = vmatpush1.msra.mxu0 0.0
          %4795 = vmatprep.subr.mxu0 0.0
          %4796 = vmatpush1.msra.mxu0 0.0
          %4797 = vmatprep.subr.mxu0 0.0
          %4798 = vmatpush1.msra.mxu0 0.0
          %4799 = vmatprep.subr.mxu0 0.0
          %4800 = vmatpush1.msra.mxu0 0.0
          %4801 = vmatprep.subr.mxu0 0.0
          %4802 = vmatpush1.msra.mxu0 0.0
          %4803 = vmatprep.subr.mxu0 0.0
          %4804 = vmatpush1.msra.mxu0 0.0
          %4805 = vmatprep.subr.mxu0 0.0
          %4806 = vmatpush1.msra.mxu0 0.0
          %4807 = vmatprep.subr.mxu0 0.0
          %4808 = vmatpush1.msra.mxu0 0.0
          %4809 = vmatprep.subr.mxu0 0.0
          %4810 = vmatpush1.msra.mxu0 0.0
          %4811 = vmatprep.subr.mxu0 0.0
          %4812 = vmatpush1.msra.mxu0 0.0
          %4813 = vmatprep.subr.mxu0 0.0
          %4814 = vmatpush1.msra.mxu0 0.0
          %4815 = vmatprep.subr.mxu0 0.0
          %v4816 = vand.u32 %v4307, 4294901760
          %4817 = vmatpush1.msra.mxu0 %v4816
          %4818 = vmatprep.subr.mxu0 0.0
          %v4819 = vand.u32 %v4306, 4294901760
          %4820 = vmatpush1.msra.mxu0 %v4819
          %4821 = vmatprep.subr.mxu0 0.0
          %4822 = vmatpush2.msra.mxu0 0.0
          %4823 = vmatprep.subr.mxu0 0.0
          %4824 = vmatpush2.msra.mxu0 0.0
          %4825 = vmatprep.subr.mxu0 0.0
          %4826 = vmatpush2.msra.mxu0 0.0
          %4827 = vmatprep.subr.mxu0 0.0
          %4828 = vmatpush2.msra.mxu0 0.0
          %4829 = vmatprep.subr.mxu0 0.0
          %4830 = vmatpush2.msra.mxu0 0.0
          %4831 = vmatprep.subr.mxu0 0.0
          %4832 = vmatpush2.msra.mxu0 0.0
          %4833 = vmatprep.subr.mxu0 0.0
          %4834 = vmatpush2.msra.mxu0 0.0
          %4835 = vmatprep.subr.mxu0 0.0
          %4836 = vmatpush2.msra.mxu0 0.0
          %4837 = vmatprep.subr.mxu0 0.0
          %4838 = vmatpush2.msra.mxu0 0.0
          %4839 = vmatprep.subr.mxu0 0.0
          %4840 = vmatpush2.msra.mxu0 0.0
          %4841 = vmatprep.subr.mxu0 0.0
          %4842 = vmatpush2.msra.mxu0 0.0
          %4843 = vmatprep.subr.mxu0 0.0
          %4844 = vmatpush2.msra.mxu0 0.0
          %4845 = vmatprep.subr.mxu0 0.0
          %4846 = vmatpush2.msra.mxu0 0.0
          %4847 = vmatprep.subr.mxu0 0.0
          %4848 = vmatpush2.msra.mxu0 0.0
          %4849 = vmatprep.subr.mxu0 0.0
          %4850 = vmatpush2.msra.mxu0 0.0
          %4851 = vmatprep.subr.mxu0 0.0
          %4852 = vmatpush2.msra.mxu0 0.0
          %4853 = vmatprep.mubr.f32.mxu0 0.0
          %v4854 = vand.u32 %v4326, 4294901760
          %v4855 = vsub.f32 %v4326, %v4854
          %v4856 = vand.u32 %v4855, 4294901760
          %v4857 = vsub.f32 %v4855, %v4856
          %v4858 = vand.u32 %v4857, 4294901760
          %4859 = vmatmul.mubr.f32.gmra.mxu0 %v4858
          %v4860 = vpop.f32.mrf.mxu0
          %v4861 = vadd.f32 0.0, %v4860
          %v4862 = vpop.f32.mrf.mxu0
          %4863 = vdwg.mxu0
          %4864 = vmatprep.subr.mxu0 0.0
          %4865 = vmatpush1.msra.mxu0 0.0
          %4866 = vmatprep.subr.mxu0 0.0
          %4867 = vmatpush1.msra.mxu0 0.0
          %4868 = vmatprep.subr.mxu0 0.0
          %4869 = vmatpush1.msra.mxu0 0.0
          %4870 = vmatprep.subr.mxu0 0.0
          %4871 = vmatpush1.msra.mxu0 0.0
          %4872 = vmatprep.subr.mxu0 0.0
          %4873 = vmatpush1.msra.mxu0 0.0
          %4874 = vmatprep.subr.mxu0 0.0
          %4875 = vmatpush1.msra.mxu0 0.0
          %4876 = vmatprep.subr.mxu0 0.0
          %4877 = vmatpush1.msra.mxu0 0.0
          %4878 = vmatprep.subr.mxu0 0.0
          %4879 = vmatpush1.msra.mxu0 0.0
          %4880 = vmatprep.subr.mxu0 0.0
          %4881 = vmatpush1.msra.mxu0 0.0
          %4882 = vmatprep.subr.mxu0 0.0
          %4883 = vmatpush1.msra.mxu0 0.0
          %4884 = vmatprep.subr.mxu0 0.0
          %4885 = vmatpush1.msra.mxu0 0.0
          %4886 = vmatprep.subr.mxu0 0.0
          %4887 = vmatpush1.msra.mxu0 0.0
          %4888 = vmatprep.subr.mxu0 0.0
          %4889 = vmatpush1.msra.mxu0 0.0
          %4890 = vmatprep.subr.mxu0 0.0
          %4891 = vmatpush1.msra.mxu0 0.0
          %4892 = vmatprep.subr.mxu0 0.0
          %v4893 = vand.u32 %v4307, 4294901760
          %v4894 = vsub.f32 %v4307, %v4893
          %v4895 = vand.u32 %v4894, 4294901760
          %v4896 = vsub.f32 %v4894, %v4895
          %v4897 = vand.u32 %v4896, 4294901760
          %4898 = vmatpush1.msra.mxu0 %v4897
          %4899 = vmatprep.subr.mxu0 0.0
          %v4900 = vand.u32 %v4306, 4294901760
          %v4901 = vsub.f32 %v4306, %v4900
          %v4902 = vand.u32 %v4901, 4294901760
          %v4903 = vsub.f32 %v4901, %v4902
          %v4904 = vand.u32 %v4903, 4294901760
          %4905 = vmatpush1.msra.mxu0 %v4904
          %4906 = vmatprep.subr.mxu0 0.0
          %4907 = vmatpush2.msra.mxu0 0.0
          %4908 = vmatprep.subr.mxu0 0.0
          %4909 = vmatpush2.msra.mxu0 0.0
          %4910 = vmatprep.subr.mxu0 0.0
          %4911 = vmatpush2.msra.mxu0 0.0
          %4912 = vmatprep.subr.mxu0 0.0
          %4913 = vmatpush2.msra.mxu0 0.0
          %4914 = vmatprep.subr.mxu0 0.0
          %4915 = vmatpush2.msra.mxu0 0.0
          %4916 = vmatprep.subr.mxu0 0.0
          %4917 = vmatpush2.msra.mxu0 0.0
          %4918 = vmatprep.subr.mxu0 0.0
          %4919 = vmatpush2.msra.mxu0 0.0
          %4920 = vmatprep.subr.mxu0 0.0
          %4921 = vmatpush2.msra.mxu0 0.0
          %4922 = vmatprep.subr.mxu0 0.0
          %4923 = vmatpush2.msra.mxu0 0.0
          %4924 = vmatprep.subr.mxu0 0.0
          %4925 = vmatpush2.msra.mxu0 0.0
          %4926 = vmatprep.subr.mxu0 0.0
          %4927 = vmatpush2.msra.mxu0 0.0
          %4928 = vmatprep.subr.mxu0 0.0
          %4929 = vmatpush2.msra.mxu0 0.0
          %4930 = vmatprep.subr.mxu0 0.0
          %4931 = vmatpush2.msra.mxu0 0.0
          %4932 = vmatprep.subr.mxu0 0.0
          %4933 = vmatpush2.msra.mxu0 0.0
          %4934 = vmatprep.subr.mxu0 0.0
          %4935 = vmatpush2.msra.mxu0 0.0
          %4936 = vmatprep.subr.mxu0 0.0
          %4937 = vmatpush2.msra.mxu0 0.0
          %4938 = vmatprep.mubr.f32.mxu0 0.0
          %v4939 = vand.u32 %v4326, 4294901760
          %4940 = vmatmul.mubr.f32.gmra.mxu0 %v4939
          %v4941 = vpop.f32.mrf.mxu0
          %v4942 = vadd.f32 %v4861, %v4941
          %v4943 = vpop.f32.mrf.mxu0
          %4944 = vdwg.mxu0
          %4945 = vmatprep.subr.mxu0 0.0
          %4946 = vmatpush1.msra.mxu0 0.0
          %4947 = vmatprep.subr.mxu0 0.0
          %4948 = vmatpush1.msra.mxu0 0.0
          %4949 = vmatprep.subr.mxu0 0.0
          %4950 = vmatpush1.msra.mxu0 0.0
          %4951 = vmatprep.subr.mxu0 0.0
          %4952 = vmatpush1.msra.mxu0 0.0
          %4953 = vmatprep.subr.mxu0 0.0
          %4954 = vmatpush1.msra.mxu0 0.0
          %4955 = vmatprep.subr.mxu0 0.0
          %4956 = vmatpush1.msra.mxu0 0.0
          %4957 = vmatprep.subr.mxu0 0.0
          %4958 = vmatpush1.msra.mxu0 0.0
          %4959 = vmatprep.subr.mxu0 0.0
          %4960 = vmatpush1.msra.mxu0 0.0
          %4961 = vmatprep.subr.mxu0 0.0
          %4962 = vmatpush1.msra.mxu0 0.0
          %4963 = vmatprep.subr.mxu0 0.0
          %4964 = vmatpush1.msra.mxu0 0.0
          %4965 = vmatprep.subr.mxu0 0.0
          %4966 = vmatpush1.msra.mxu0 0.0
          %4967 = vmatprep.subr.mxu0 0.0
          %4968 = vmatpush1.msra.mxu0 0.0
          %4969 = vmatprep.subr.mxu0 0.0
          %4970 = vmatpush1.msra.mxu0 0.0
          %4971 = vmatprep.subr.mxu0 0.0
          %4972 = vmatpush1.msra.mxu0 0.0
          %4973 = vmatprep.subr.mxu0 0.0
          %v4974 = vand.u32 %v4307, 4294901760
          %v4975 = vsub.f32 %v4307, %v4974
          %4976 = vmatpush1.msra.mxu0 %v4975
          %4977 = vmatprep.subr.mxu0 0.0
          %v4978 = vand.u32 %v4306, 4294901760
          %v4979 = vsub.f32 %v4306, %v4978
          %4980 = vmatpush1.msra.mxu0 %v4979
          %4981 = vmatprep.subr.mxu0 0.0
          %4982 = vmatpush2.msra.mxu0 0.0
          %4983 = vmatprep.subr.mxu0 0.0
          %4984 = vmatpush2.msra.mxu0 0.0
          %4985 = vmatprep.subr.mxu0 0.0
          %4986 = vmatpush2.msra.mxu0 0.0
          %4987 = vmatprep.subr.mxu0 0.0
          %4988 = vmatpush2.msra.mxu0 0.0
          %4989 = vmatprep.subr.mxu0 0.0
          %4990 = vmatpush2.msra.mxu0 0.0
          %4991 = vmatprep.subr.mxu0 0.0
          %4992 = vmatpush2.msra.mxu0 0.0
          %4993 = vmatprep.subr.mxu0 0.0
          %4994 = vmatpush2.msra.mxu0 0.0
          %4995 = vmatprep.subr.mxu0 0.0
          %4996 = vmatpush2.msra.mxu0 0.0
          %4997 = vmatprep.subr.mxu0 0.0
          %4998 = vmatpush2.msra.mxu0 0.0
          %4999 = vmatprep.subr.mxu0 0.0
          %5000 = vmatpush2.msra.mxu0 0.0
          %5001 = vmatprep.subr.mxu0 0.0
          %5002 = vmatpush2.msra.mxu0 0.0
          %5003 = vmatprep.subr.mxu0 0.0
          %5004 = vmatpush2.msra.mxu0 0.0
          %5005 = vmatprep.subr.mxu0 0.0
          %5006 = vmatpush2.msra.mxu0 0.0
          %5007 = vmatprep.subr.mxu0 0.0
          %5008 = vmatpush2.msra.mxu0 0.0
          %5009 = vmatprep.subr.mxu0 0.0
          %5010 = vmatpush2.msra.mxu0 0.0
          %5011 = vmatprep.subr.mxu0 0.0
          %5012 = vmatpush2.msra.mxu0 0.0
          %5013 = vmatprep.mubr.f32.mxu0 0.0
          %v5014 = vand.u32 %v4326, 4294901760
          %v5015 = vsub.f32 %v4326, %v5014
          %5016 = vmatmul.mubr.f32.gmra.mxu0 %v5015
          %v5017 = vpop.f32.mrf.mxu0
          %v5018 = vadd.f32 %v4942, %v5017
          %v5019 = vpop.f32.mrf.mxu0
          %5020 = vdwg.mxu0
          %5021 = vmatprep.subr.mxu0 0.0
          %5022 = vmatpush1.msra.mxu0 0.0
          %5023 = vmatprep.subr.mxu0 0.0
          %5024 = vmatpush1.msra.mxu0 0.0
          %5025 = vmatprep.subr.mxu0 0.0
          %5026 = vmatpush1.msra.mxu0 0.0
          %5027 = vmatprep.subr.mxu0 0.0
          %5028 = vmatpush1.msra.mxu0 0.0
          %5029 = vmatprep.subr.mxu0 0.0
          %5030 = vmatpush1.msra.mxu0 0.0
          %5031 = vmatprep.subr.mxu0 0.0
          %5032 = vmatpush1.msra.mxu0 0.0
          %5033 = vmatprep.subr.mxu0 0.0
          %5034 = vmatpush1.msra.mxu0 0.0
          %5035 = vmatprep.subr.mxu0 0.0
          %5036 = vmatpush1.msra.mxu0 0.0
          %5037 = vmatprep.subr.mxu0 0.0
          %5038 = vmatpush1.msra.mxu0 0.0
          %5039 = vmatprep.subr.mxu0 0.0
          %5040 = vmatpush1.msra.mxu0 0.0
          %5041 = vmatprep.subr.mxu0 0.0
          %5042 = vmatpush1.msra.mxu0 0.0
          %5043 = vmatprep.subr.mxu0 0.0
          %5044 = vmatpush1.msra.mxu0 0.0
          %5045 = vmatprep.subr.mxu0 0.0
          %5046 = vmatpush1.msra.mxu0 0.0
          %5047 = vmatprep.subr.mxu0 0.0
          %5048 = vmatpush1.msra.mxu0 0.0
          %5049 = vmatprep.subr.mxu0 0.0
          %v5050 = vand.u32 %v4307, 4294901760
          %5051 = vmatpush1.msra.mxu0 %v5050
          %5052 = vmatprep.subr.mxu0 0.0
          %v5053 = vand.u32 %v4306, 4294901760
          %5054 = vmatpush1.msra.mxu0 %v5053
          %5055 = vmatprep.subr.mxu0 0.0
          %5056 = vmatpush2.msra.mxu0 0.0
          %5057 = vmatprep.subr.mxu0 0.0
          %5058 = vmatpush2.msra.mxu0 0.0
          %5059 = vmatprep.subr.mxu0 0.0
          %5060 = vmatpush2.msra.mxu0 0.0
          %5061 = vmatprep.subr.mxu0 0.0
          %5062 = vmatpush2.msra.mxu0 0.0
          %5063 = vmatprep.subr.mxu0 0.0
          %5064 = vmatpush2.msra.mxu0 0.0
          %5065 = vmatprep.subr.mxu0 0.0
          %5066 = vmatpush2.msra.mxu0 0.0
          %5067 = vmatprep.subr.mxu0 0.0
          %5068 = vmatpush2.msra.mxu0 0.0
          %5069 = vmatprep.subr.mxu0 0.0
          %5070 = vmatpush2.msra.mxu0 0.0
          %5071 = vmatprep.subr.mxu0 0.0
          %5072 = vmatpush2.msra.mxu0 0.0
          %5073 = vmatprep.subr.mxu0 0.0
          %5074 = vmatpush2.msra.mxu0 0.0
          %5075 = vmatprep.subr.mxu0 0.0
          %5076 = vmatpush2.msra.mxu0 0.0
          %5077 = vmatprep.subr.mxu0 0.0
          %5078 = vmatpush2.msra.mxu0 0.0
          %5079 = vmatprep.subr.mxu0 0.0
          %5080 = vmatpush2.msra.mxu0 0.0
          %5081 = vmatprep.subr.mxu0 0.0
          %5082 = vmatpush2.msra.mxu0 0.0
          %5083 = vmatprep.subr.mxu0 0.0
          %5084 = vmatpush2.msra.mxu0 0.0
          %5085 = vmatprep.subr.mxu0 0.0
          %5086 = vmatpush2.msra.mxu0 0.0
          %5087 = vmatprep.mubr.f32.mxu0 0.0
          %v5088 = vand.u32 %v4326, 4294901760
          %v5089 = vsub.f32 %v4326, %v5088
          %v5090 = vand.u32 %v5089, 4294901760
          %5091 = vmatmul.mubr.f32.gmra.mxu0 %v5090
          %v5092 = vpop.f32.mrf.mxu0
          %v5093 = vadd.f32 %v5018, %v5092
          %v5094 = vpop.f32.mrf.mxu0
          %5095 = vdwg.mxu0
          %5096 = vmatprep.subr.mxu0 0.0
          %5097 = vmatpush1.msra.mxu0 0.0
          %5098 = vmatprep.subr.mxu0 0.0
          %5099 = vmatpush1.msra.mxu0 0.0
          %5100 = vmatprep.subr.mxu0 0.0
          %5101 = vmatpush1.msra.mxu0 0.0
          %5102 = vmatprep.subr.mxu0 0.0
          %5103 = vmatpush1.msra.mxu0 0.0
          %5104 = vmatprep.subr.mxu0 0.0
          %5105 = vmatpush1.msra.mxu0 0.0
          %5106 = vmatprep.subr.mxu0 0.0
          %5107 = vmatpush1.msra.mxu0 0.0
          %5108 = vmatprep.subr.mxu0 0.0
          %5109 = vmatpush1.msra.mxu0 0.0
          %5110 = vmatprep.subr.mxu0 0.0
          %5111 = vmatpush1.msra.mxu0 0.0
          %5112 = vmatprep.subr.mxu0 0.0
          %5113 = vmatpush1.msra.mxu0 0.0
          %5114 = vmatprep.subr.mxu0 0.0
          %5115 = vmatpush1.msra.mxu0 0.0
          %5116 = vmatprep.subr.mxu0 0.0
          %5117 = vmatpush1.msra.mxu0 0.0
          %5118 = vmatprep.subr.mxu0 0.0
          %5119 = vmatpush1.msra.mxu0 0.0
          %5120 = vmatprep.subr.mxu0 0.0
          %5121 = vmatpush1.msra.mxu0 0.0
          %5122 = vmatprep.subr.mxu0 0.0
          %5123 = vmatpush1.msra.mxu0 0.0
          %5124 = vmatprep.subr.mxu0 0.0
          %v5125 = vand.u32 %v4307, 4294901760
          %v5126 = vsub.f32 %v4307, %v5125
          %v5127 = vand.u32 %v5126, 4294901760
          %5128 = vmatpush1.msra.mxu0 %v5127
          %5129 = vmatprep.subr.mxu0 0.0
          %v5130 = vand.u32 %v4306, 4294901760
          %v5131 = vsub.f32 %v4306, %v5130
          %v5132 = vand.u32 %v5131, 4294901760
          %5133 = vmatpush1.msra.mxu0 %v5132
          %5134 = vmatprep.subr.mxu0 0.0
          %5135 = vmatpush2.msra.mxu0 0.0
          %5136 = vmatprep.subr.mxu0 0.0
          %5137 = vmatpush2.msra.mxu0 0.0
          %5138 = vmatprep.subr.mxu0 0.0
          %5139 = vmatpush2.msra.mxu0 0.0
          %5140 = vmatprep.subr.mxu0 0.0
          %5141 = vmatpush2.msra.mxu0 0.0
          %5142 = vmatprep.subr.mxu0 0.0
          %5143 = vmatpush2.msra.mxu0 0.0
          %5144 = vmatprep.subr.mxu0 0.0
          %5145 = vmatpush2.msra.mxu0 0.0
          %5146 = vmatprep.subr.mxu0 0.0
          %5147 = vmatpush2.msra.mxu0 0.0
          %5148 = vmatprep.subr.mxu0 0.0
          %5149 = vmatpush2.msra.mxu0 0.0
          %5150 = vmatprep.subr.mxu0 0.0
          %5151 = vmatpush2.msra.mxu0 0.0
          %5152 = vmatprep.subr.mxu0 0.0
          %5153 = vmatpush2.msra.mxu0 0.0
          %5154 = vmatprep.subr.mxu0 0.0
          %5155 = vmatpush2.msra.mxu0 0.0
          %5156 = vmatprep.subr.mxu0 0.0
          %5157 = vmatpush2.msra.mxu0 0.0
          %5158 = vmatprep.subr.mxu0 0.0
          %5159 = vmatpush2.msra.mxu0 0.0
          %5160 = vmatprep.subr.mxu0 0.0
          %5161 = vmatpush2.msra.mxu0 0.0
          %5162 = vmatprep.subr.mxu0 0.0
          %5163 = vmatpush2.msra.mxu0 0.0
          %5164 = vmatprep.subr.mxu0 0.0
          %5165 = vmatpush2.msra.mxu0 0.0
          %5166 = vmatprep.mubr.f32.mxu0 0.0
          %v5167 = vand.u32 %v4326, 4294901760
          %5168 = vmatmul.mubr.f32.gmra.mxu0 %v5167
          %v5169 = vpop.f32.mrf.mxu0
          %v5170 = vadd.f32 %v5093, %v5169
          %v5171 = vpop.f32.mrf.mxu0
          %5172 = vdwg.mxu0
          %5173 = vmatprep.subr.mxu0 0.0
          %5174 = vmatpush1.msra.mxu0 0.0
          %5175 = vmatprep.subr.mxu0 0.0
          %5176 = vmatpush1.msra.mxu0 0.0
          %5177 = vmatprep.subr.mxu0 0.0
          %5178 = vmatpush1.msra.mxu0 0.0
          %5179 = vmatprep.subr.mxu0 0.0
          %5180 = vmatpush1.msra.mxu0 0.0
          %5181 = vmatprep.subr.mxu0 0.0
          %5182 = vmatpush1.msra.mxu0 0.0
          %5183 = vmatprep.subr.mxu0 0.0
          %5184 = vmatpush1.msra.mxu0 0.0
          %5185 = vmatprep.subr.mxu0 0.0
          %5186 = vmatpush1.msra.mxu0 0.0
          %5187 = vmatprep.subr.mxu0 0.0
          %5188 = vmatpush1.msra.mxu0 0.0
          %5189 = vmatprep.subr.mxu0 0.0
          %5190 = vmatpush1.msra.mxu0 0.0
          %5191 = vmatprep.subr.mxu0 0.0
          %5192 = vmatpush1.msra.mxu0 0.0
          %5193 = vmatprep.subr.mxu0 0.0
          %5194 = vmatpush1.msra.mxu0 0.0
          %5195 = vmatprep.subr.mxu0 0.0
          %5196 = vmatpush1.msra.mxu0 0.0
          %5197 = vmatprep.subr.mxu0 0.0
          %5198 = vmatpush1.msra.mxu0 0.0
          %5199 = vmatprep.subr.mxu0 0.0
          %5200 = vmatpush1.msra.mxu0 0.0
          %5201 = vmatprep.subr.mxu0 0.0
          %v5202 = vand.u32 %v4307, 4294901760
          %5203 = vmatpush1.msra.mxu0 %v5202
          %5204 = vmatprep.subr.mxu0 0.0
          %v5205 = vand.u32 %v4306, 4294901760
          %5206 = vmatpush1.msra.mxu0 %v5205
          %5207 = vmatprep.subr.mxu0 0.0
          %5208 = vmatpush2.msra.mxu0 0.0
          %5209 = vmatprep.subr.mxu0 0.0
          %5210 = vmatpush2.msra.mxu0 0.0
          %5211 = vmatprep.subr.mxu0 0.0
          %5212 = vmatpush2.msra.mxu0 0.0
          %5213 = vmatprep.subr.mxu0 0.0
          %5214 = vmatpush2.msra.mxu0 0.0
          %5215 = vmatprep.subr.mxu0 0.0
          %5216 = vmatpush2.msra.mxu0 0.0
          %5217 = vmatprep.subr.mxu0 0.0
          %5218 = vmatpush2.msra.mxu0 0.0
          %5219 = vmatprep.subr.mxu0 0.0
          %5220 = vmatpush2.msra.mxu0 0.0
          %5221 = vmatprep.subr.mxu0 0.0
          %5222 = vmatpush2.msra.mxu0 0.0
          %5223 = vmatprep.subr.mxu0 0.0
          %5224 = vmatpush2.msra.mxu0 0.0
          %5225 = vmatprep.subr.mxu0 0.0
          %5226 = vmatpush2.msra.mxu0 0.0
          %5227 = vmatprep.subr.mxu0 0.0
          %5228 = vmatpush2.msra.mxu0 0.0
          %5229 = vmatprep.subr.mxu0 0.0
          %5230 = vmatpush2.msra.mxu0 0.0
          %5231 = vmatprep.subr.mxu0 0.0
          %5232 = vmatpush2.msra.mxu0 0.0
          %5233 = vmatprep.subr.mxu0 0.0
          %5234 = vmatpush2.msra.mxu0 0.0
          %5235 = vmatprep.subr.mxu0 0.0
          %5236 = vmatpush2.msra.mxu0 0.0
          %5237 = vmatprep.subr.mxu0 0.0
          %5238 = vmatpush2.msra.mxu0 0.0
          %5239 = vmatprep.mubr.f32.mxu0 0.0
          %v5240 = vand.u32 %v4326, 4294901760
          %5241 = vmatmul.mubr.f32.gmra.mxu0 %v5240
          %v5242 = vpop.f32.mrf.mxu0
          %v5243 = vadd.f32 %v5170, %v5242
          %v5244 = vpop.f32.mrf.mxu0
          %5245 = vdwg.mxu0
          %5246 = vmatprep.subr.mxu0 0.0
          %5247 = vmatpush1.msra.mxu0 0.0
          %5248 = vmatprep.subr.mxu0 0.0
          %5249 = vmatpush1.msra.mxu0 0.0
          %5250 = vmatprep.subr.mxu0 0.0
          %5251 = vmatpush1.msra.mxu0 0.0
          %5252 = vmatprep.subr.mxu0 0.0
          %5253 = vmatpush1.msra.mxu0 0.0
          %5254 = vmatprep.subr.mxu0 0.0
          %5255 = vmatpush1.msra.mxu0 0.0
          %5256 = vmatprep.subr.mxu0 0.0
          %5257 = vmatpush1.msra.mxu0 0.0
          %5258 = vmatprep.subr.mxu0 0.0
          %5259 = vmatpush1.msra.mxu0 0.0
          %5260 = vmatprep.subr.mxu0 0.0
          %5261 = vmatpush1.msra.mxu0 0.0
          %5262 = vmatprep.subr.mxu0 0.0
          %5263 = vmatpush1.msra.mxu0 0.0
          %5264 = vmatprep.subr.mxu0 0.0
          %5265 = vmatpush1.msra.mxu0 0.0
          %5266 = vmatprep.subr.mxu0 0.0
          %5267 = vmatpush1.msra.mxu0 0.0
          %5268 = vmatprep.subr.mxu0 0.0
          %5269 = vmatpush1.msra.mxu0 0.0
          %5270 = vmatprep.subr.mxu0 0.0
          %5271 = vmatpush1.msra.mxu0 0.0
          %5272 = vmatprep.subr.mxu0 0.0
          %5273 = vmatpush1.msra.mxu0 0.0
          %5274 = vmatprep.subr.mxu0 0.0
          %v5275 = vand.u32 %v4309, 4294901760
          %5276 = vmatpush1.msra.mxu0 %v5275
          %5277 = vmatprep.subr.mxu0 0.0
          %v5278 = vand.u32 %v4308, 4294901760
          %5279 = vmatpush1.msra.mxu0 %v5278
          %5280 = vmatprep.subr.mxu0 0.0
          %5281 = vmatpush2.msra.mxu0 0.0
          %5282 = vmatprep.subr.mxu0 0.0
          %5283 = vmatpush2.msra.mxu0 0.0
          %5284 = vmatprep.subr.mxu0 0.0
          %5285 = vmatpush2.msra.mxu0 0.0
          %5286 = vmatprep.subr.mxu0 0.0
          %5287 = vmatpush2.msra.mxu0 0.0
          %5288 = vmatprep.subr.mxu0 0.0
          %5289 = vmatpush2.msra.mxu0 0.0
          %5290 = vmatprep.subr.mxu0 0.0
          %5291 = vmatpush2.msra.mxu0 0.0
          %5292 = vmatprep.subr.mxu0 0.0
          %5293 = vmatpush2.msra.mxu0 0.0
          %5294 = vmatprep.subr.mxu0 0.0
          %5295 = vmatpush2.msra.mxu0 0.0
          %5296 = vmatprep.subr.mxu0 0.0
          %5297 = vmatpush2.msra.mxu0 0.0
          %5298 = vmatprep.subr.mxu0 0.0
          %5299 = vmatpush2.msra.mxu0 0.0
          %5300 = vmatprep.subr.mxu0 0.0
          %5301 = vmatpush2.msra.mxu0 0.0
          %5302 = vmatprep.subr.mxu0 0.0
          %5303 = vmatpush2.msra.mxu0 0.0
          %5304 = vmatprep.subr.mxu0 0.0
          %5305 = vmatpush2.msra.mxu0 0.0
          %5306 = vmatprep.subr.mxu0 0.0
          %5307 = vmatpush2.msra.mxu0 0.0
          %5308 = vmatprep.subr.mxu0 0.0
          %5309 = vmatpush2.msra.mxu0 0.0
          %5310 = vmatprep.subr.mxu0 0.0
          %5311 = vmatpush2.msra.mxu0 0.0
          %5312 = vmatprep.mubr.f32.mxu0 0.0
          %v5313 = vand.u32 %v4326, 4294901760
          %v5314 = vsub.f32 %v4326, %v5313
          %v5315 = vand.u32 %v5314, 4294901760
          %v5316 = vsub.f32 %v5314, %v5315
          %v5317 = vand.u32 %v5316, 4294901760
          %5318 = vmatmul.mubr.f32.gmra.mxu0 %v5317
          %v5319 = vpop.f32.mrf.mxu0
          %v5320 = vadd.f32 0.0, %v5319
          %v5321 = vpop.f32.mrf.mxu0
          %5322 = vdwg.mxu0
          %5323 = vmatprep.subr.mxu0 0.0
          %5324 = vmatpush1.msra.mxu0 0.0
          %5325 = vmatprep.subr.mxu0 0.0
          %5326 = vmatpush1.msra.mxu0 0.0
          %5327 = vmatprep.subr.mxu0 0.0
          %5328 = vmatpush1.msra.mxu0 0.0
          %5329 = vmatprep.subr.mxu0 0.0
          %5330 = vmatpush1.msra.mxu0 0.0
          %5331 = vmatprep.subr.mxu0 0.0
          %5332 = vmatpush1.msra.mxu0 0.0
          %5333 = vmatprep.subr.mxu0 0.0
          %5334 = vmatpush1.msra.mxu0 0.0
          %5335 = vmatprep.subr.mxu0 0.0
          %5336 = vmatpush1.msra.mxu0 0.0
          %5337 = vmatprep.subr.mxu0 0.0
          %5338 = vmatpush1.msra.mxu0 0.0
          %5339 = vmatprep.subr.mxu0 0.0
          %5340 = vmatpush1.msra.mxu0 0.0
          %5341 = vmatprep.subr.mxu0 0.0
          %5342 = vmatpush1.msra.mxu0 0.0
          %5343 = vmatprep.subr.mxu0 0.0
          %5344 = vmatpush1.msra.mxu0 0.0
          %5345 = vmatprep.subr.mxu0 0.0
          %5346 = vmatpush1.msra.mxu0 0.0
          %5347 = vmatprep.subr.mxu0 0.0
          %5348 = vmatpush1.msra.mxu0 0.0
          %5349 = vmatprep.subr.mxu0 0.0
          %5350 = vmatpush1.msra.mxu0 0.0
          %5351 = vmatprep.subr.mxu0 0.0
          %v5352 = vand.u32 %v4309, 4294901760
          %v5353 = vsub.f32 %v4309, %v5352
          %v5354 = vand.u32 %v5353, 4294901760
          %v5355 = vsub.f32 %v5353, %v5354
          %v5356 = vand.u32 %v5355, 4294901760
          %5357 = vmatpush1.msra.mxu0 %v5356
          %5358 = vmatprep.subr.mxu0 0.0
          %v5359 = vand.u32 %v4308, 4294901760
          %v5360 = vsub.f32 %v4308, %v5359
          %v5361 = vand.u32 %v5360, 4294901760
          %v5362 = vsub.f32 %v5360, %v5361
          %v5363 = vand.u32 %v5362, 4294901760
          %5364 = vmatpush1.msra.mxu0 %v5363
          %5365 = vmatprep.subr.mxu0 0.0
          %5366 = vmatpush2.msra.mxu0 0.0
          %5367 = vmatprep.subr.mxu0 0.0
          %5368 = vmatpush2.msra.mxu0 0.0
          %5369 = vmatprep.subr.mxu0 0.0
          %5370 = vmatpush2.msra.mxu0 0.0
          %5371 = vmatprep.subr.mxu0 0.0
          %5372 = vmatpush2.msra.mxu0 0.0
          %5373 = vmatprep.subr.mxu0 0.0
          %5374 = vmatpush2.msra.mxu0 0.0
          %5375 = vmatprep.subr.mxu0 0.0
          %5376 = vmatpush2.msra.mxu0 0.0
          %5377 = vmatprep.subr.mxu0 0.0
          %5378 = vmatpush2.msra.mxu0 0.0
          %5379 = vmatprep.subr.mxu0 0.0
          %5380 = vmatpush2.msra.mxu0 0.0
          %5381 = vmatprep.subr.mxu0 0.0
          %5382 = vmatpush2.msra.mxu0 0.0
          %5383 = vmatprep.subr.mxu0 0.0
          %5384 = vmatpush2.msra.mxu0 0.0
          %5385 = vmatprep.subr.mxu0 0.0
          %5386 = vmatpush2.msra.mxu0 0.0
          %5387 = vmatprep.subr.mxu0 0.0
          %5388 = vmatpush2.msra.mxu0 0.0
          %5389 = vmatprep.subr.mxu0 0.0
          %5390 = vmatpush2.msra.mxu0 0.0
          %5391 = vmatprep.subr.mxu0 0.0
          %5392 = vmatpush2.msra.mxu0 0.0
          %5393 = vmatprep.subr.mxu0 0.0
          %5394 = vmatpush2.msra.mxu0 0.0
          %5395 = vmatprep.subr.mxu0 0.0
          %5396 = vmatpush2.msra.mxu0 0.0
          %5397 = vmatprep.mubr.f32.mxu0 0.0
          %v5398 = vand.u32 %v4326, 4294901760
          %5399 = vmatmul.mubr.f32.gmra.mxu0 %v5398
          %v5400 = vpop.f32.mrf.mxu0
          %v5401 = vadd.f32 %v5320, %v5400
          %v5402 = vpop.f32.mrf.mxu0
          %5403 = vdwg.mxu0
          %5404 = vmatprep.subr.mxu0 0.0
          %5405 = vmatpush1.msra.mxu0 0.0
          %5406 = vmatprep.subr.mxu0 0.0
          %5407 = vmatpush1.msra.mxu0 0.0
          %5408 = vmatprep.subr.mxu0 0.0
          %5409 = vmatpush1.msra.mxu0 0.0
          %5410 = vmatprep.subr.mxu0 0.0
          %5411 = vmatpush1.msra.mxu0 0.0
          %5412 = vmatprep.subr.mxu0 0.0
          %5413 = vmatpush1.msra.mxu0 0.0
          %5414 = vmatprep.subr.mxu0 0.0
          %5415 = vmatpush1.msra.mxu0 0.0
          %5416 = vmatprep.subr.mxu0 0.0
          %5417 = vmatpush1.msra.mxu0 0.0
          %5418 = vmatprep.subr.mxu0 0.0
          %5419 = vmatpush1.msra.mxu0 0.0
          %5420 = vmatprep.subr.mxu0 0.0
          %5421 = vmatpush1.msra.mxu0 0.0
          %5422 = vmatprep.subr.mxu0 0.0
          %5423 = vmatpush1.msra.mxu0 0.0
          %5424 = vmatprep.subr.mxu0 0.0
          %5425 = vmatpush1.msra.mxu0 0.0
          %5426 = vmatprep.subr.mxu0 0.0
          %5427 = vmatpush1.msra.mxu0 0.0
          %5428 = vmatprep.subr.mxu0 0.0
          %5429 = vmatpush1.msra.mxu0 0.0
          %5430 = vmatprep.subr.mxu0 0.0
          %5431 = vmatpush1.msra.mxu0 0.0
          %5432 = vmatprep.subr.mxu0 0.0
          %v5433 = vand.u32 %v4309, 4294901760
          %v5434 = vsub.f32 %v4309, %v5433
          %5435 = vmatpush1.msra.mxu0 %v5434
          %5436 = vmatprep.subr.mxu0 0.0
          %v5437 = vand.u32 %v4308, 4294901760
          %v5438 = vsub.f32 %v4308, %v5437
          %5439 = vmatpush1.msra.mxu0 %v5438
          %5440 = vmatprep.subr.mxu0 0.0
          %5441 = vmatpush2.msra.mxu0 0.0
          %5442 = vmatprep.subr.mxu0 0.0
          %5443 = vmatpush2.msra.mxu0 0.0
          %5444 = vmatprep.subr.mxu0 0.0
          %5445 = vmatpush2.msra.mxu0 0.0
          %5446 = vmatprep.subr.mxu0 0.0
          %5447 = vmatpush2.msra.mxu0 0.0
          %5448 = vmatprep.subr.mxu0 0.0
          %5449 = vmatpush2.msra.mxu0 0.0
          %5450 = vmatprep.subr.mxu0 0.0
          %5451 = vmatpush2.msra.mxu0 0.0
          %5452 = vmatprep.subr.mxu0 0.0
          %5453 = vmatpush2.msra.mxu0 0.0
          %5454 = vmatprep.subr.mxu0 0.0
          %5455 = vmatpush2.msra.mxu0 0.0
          %5456 = vmatprep.subr.mxu0 0.0
          %5457 = vmatpush2.msra.mxu0 0.0
          %5458 = vmatprep.subr.mxu0 0.0
          %5459 = vmatpush2.msra.mxu0 0.0
          %5460 = vmatprep.subr.mxu0 0.0
          %5461 = vmatpush2.msra.mxu0 0.0
          %5462 = vmatprep.subr.mxu0 0.0
          %5463 = vmatpush2.msra.mxu0 0.0
          %5464 = vmatprep.subr.mxu0 0.0
          %5465 = vmatpush2.msra.mxu0 0.0
          %5466 = vmatprep.subr.mxu0 0.0
          %5467 = vmatpush2.msra.mxu0 0.0
          %5468 = vmatprep.subr.mxu0 0.0
          %5469 = vmatpush2.msra.mxu0 0.0
          %5470 = vmatprep.subr.mxu0 0.0
          %5471 = vmatpush2.msra.mxu0 0.0
          %5472 = vmatprep.mubr.f32.mxu0 0.0
          %v5473 = vand.u32 %v4326, 4294901760
          %v5474 = vsub.f32 %v4326, %v5473
          %5475 = vmatmul.mubr.f32.gmra.mxu0 %v5474
          %v5476 = vpop.f32.mrf.mxu0
          %v5477 = vadd.f32 %v5401, %v5476
          %v5478 = vpop.f32.mrf.mxu0
          %5479 = vdwg.mxu0
          %5480 = vmatprep.subr.mxu0 0.0
          %5481 = vmatpush1.msra.mxu0 0.0
          %5482 = vmatprep.subr.mxu0 0.0
          %5483 = vmatpush1.msra.mxu0 0.0
          %5484 = vmatprep.subr.mxu0 0.0
          %5485 = vmatpush1.msra.mxu0 0.0
          %5486 = vmatprep.subr.mxu0 0.0
          %5487 = vmatpush1.msra.mxu0 0.0
          %5488 = vmatprep.subr.mxu0 0.0
          %5489 = vmatpush1.msra.mxu0 0.0
          %5490 = vmatprep.subr.mxu0 0.0
          %5491 = vmatpush1.msra.mxu0 0.0
          %5492 = vmatprep.subr.mxu0 0.0
          %5493 = vmatpush1.msra.mxu0 0.0
          %5494 = vmatprep.subr.mxu0 0.0
          %5495 = vmatpush1.msra.mxu0 0.0
          %5496 = vmatprep.subr.mxu0 0.0
          %5497 = vmatpush1.msra.mxu0 0.0
          %5498 = vmatprep.subr.mxu0 0.0
          %5499 = vmatpush1.msra.mxu0 0.0
          %5500 = vmatprep.subr.mxu0 0.0
          %5501 = vmatpush1.msra.mxu0 0.0
          %5502 = vmatprep.subr.mxu0 0.0
          %5503 = vmatpush1.msra.mxu0 0.0
          %5504 = vmatprep.subr.mxu0 0.0
          %5505 = vmatpush1.msra.mxu0 0.0
          %5506 = vmatprep.subr.mxu0 0.0
          %5507 = vmatpush1.msra.mxu0 0.0
          %5508 = vmatprep.subr.mxu0 0.0
          %v5509 = vand.u32 %v4309, 4294901760
          %5510 = vmatpush1.msra.mxu0 %v5509
          %5511 = vmatprep.subr.mxu0 0.0
          %v5512 = vand.u32 %v4308, 4294901760
          %5513 = vmatpush1.msra.mxu0 %v5512
          %5514 = vmatprep.subr.mxu0 0.0
          %5515 = vmatpush2.msra.mxu0 0.0
          %5516 = vmatprep.subr.mxu0 0.0
          %5517 = vmatpush2.msra.mxu0 0.0
          %5518 = vmatprep.subr.mxu0 0.0
          %5519 = vmatpush2.msra.mxu0 0.0
          %5520 = vmatprep.subr.mxu0 0.0
          %5521 = vmatpush2.msra.mxu0 0.0
          %5522 = vmatprep.subr.mxu0 0.0
          %5523 = vmatpush2.msra.mxu0 0.0
          %5524 = vmatprep.subr.mxu0 0.0
          %5525 = vmatpush2.msra.mxu0 0.0
          %5526 = vmatprep.subr.mxu0 0.0
          %5527 = vmatpush2.msra.mxu0 0.0
          %5528 = vmatprep.subr.mxu0 0.0
          %5529 = vmatpush2.msra.mxu0 0.0
          %5530 = vmatprep.subr.mxu0 0.0
          %5531 = vmatpush2.msra.mxu0 0.0
          %5532 = vmatprep.subr.mxu0 0.0
          %5533 = vmatpush2.msra.mxu0 0.0
          %5534 = vmatprep.subr.mxu0 0.0
          %5535 = vmatpush2.msra.mxu0 0.0
          %5536 = vmatprep.subr.mxu0 0.0
          %5537 = vmatpush2.msra.mxu0 0.0
          %5538 = vmatprep.subr.mxu0 0.0
          %5539 = vmatpush2.msra.mxu0 0.0
          %5540 = vmatprep.subr.mxu0 0.0
          %5541 = vmatpush2.msra.mxu0 0.0
          %5542 = vmatprep.subr.mxu0 0.0
          %5543 = vmatpush2.msra.mxu0 0.0
          %5544 = vmatprep.subr.mxu0 0.0
          %5545 = vmatpush2.msra.mxu0 0.0
          %5546 = vmatprep.mubr.f32.mxu0 0.0
          %v5547 = vand.u32 %v4326, 4294901760
          %v5548 = vsub.f32 %v4326, %v5547
          %v5549 = vand.u32 %v5548, 4294901760
          %5550 = vmatmul.mubr.f32.gmra.mxu0 %v5549
          %v5551 = vpop.f32.mrf.mxu0
          %v5552 = vadd.f32 %v5477, %v5551
          %v5553 = vpop.f32.mrf.mxu0
          %5554 = vdwg.mxu0
          %5555 = vmatprep.subr.mxu0 0.0
          %5556 = vmatpush1.msra.mxu0 0.0
          %5557 = vmatprep.subr.mxu0 0.0
          %5558 = vmatpush1.msra.mxu0 0.0
          %5559 = vmatprep.subr.mxu0 0.0
          %5560 = vmatpush1.msra.mxu0 0.0
          %5561 = vmatprep.subr.mxu0 0.0
          %5562 = vmatpush1.msra.mxu0 0.0
          %5563 = vmatprep.subr.mxu0 0.0
          %5564 = vmatpush1.msra.mxu0 0.0
          %5565 = vmatprep.subr.mxu0 0.0
          %5566 = vmatpush1.msra.mxu0 0.0
          %5567 = vmatprep.subr.mxu0 0.0
          %5568 = vmatpush1.msra.mxu0 0.0
          %5569 = vmatprep.subr.mxu0 0.0
          %5570 = vmatpush1.msra.mxu0 0.0
          %5571 = vmatprep.subr.mxu0 0.0
          %5572 = vmatpush1.msra.mxu0 0.0
          %5573 = vmatprep.subr.mxu0 0.0
          %5574 = vmatpush1.msra.mxu0 0.0
          %5575 = vmatprep.subr.mxu0 0.0
          %5576 = vmatpush1.msra.mxu0 0.0
          %5577 = vmatprep.subr.mxu0 0.0
          %5578 = vmatpush1.msra.mxu0 0.0
          %5579 = vmatprep.subr.mxu0 0.0
          %5580 = vmatpush1.msra.mxu0 0.0
          %5581 = vmatprep.subr.mxu0 0.0
          %5582 = vmatpush1.msra.mxu0 0.0
          %5583 = vmatprep.subr.mxu0 0.0
          %v5584 = vand.u32 %v4309, 4294901760
          %v5585 = vsub.f32 %v4309, %v5584
          %v5586 = vand.u32 %v5585, 4294901760
          %5587 = vmatpush1.msra.mxu0 %v5586
          %5588 = vmatprep.subr.mxu0 0.0
          %v5589 = vand.u32 %v4308, 4294901760
          %v5590 = vsub.f32 %v4308, %v5589
          %v5591 = vand.u32 %v5590, 4294901760
          %5592 = vmatpush1.msra.mxu0 %v5591
          %5593 = vmatprep.subr.mxu0 0.0
          %5594 = vmatpush2.msra.mxu0 0.0
          %5595 = vmatprep.subr.mxu0 0.0
          %5596 = vmatpush2.msra.mxu0 0.0
          %5597 = vmatprep.subr.mxu0 0.0
          %5598 = vmatpush2.msra.mxu0 0.0
          %5599 = vmatprep.subr.mxu0 0.0
          %5600 = vmatpush2.msra.mxu0 0.0
          %5601 = vmatprep.subr.mxu0 0.0
          %5602 = vmatpush2.msra.mxu0 0.0
          %5603 = vmatprep.subr.mxu0 0.0
          %5604 = vmatpush2.msra.mxu0 0.0
          %5605 = vmatprep.subr.mxu0 0.0
          %5606 = vmatpush2.msra.mxu0 0.0
          %5607 = vmatprep.subr.mxu0 0.0
          %5608 = vmatpush2.msra.mxu0 0.0
          %5609 = vmatprep.subr.mxu0 0.0
          %5610 = vmatpush2.msra.mxu0 0.0
          %5611 = vmatprep.subr.mxu0 0.0
          %5612 = vmatpush2.msra.mxu0 0.0
          %5613 = vmatprep.subr.mxu0 0.0
          %5614 = vmatpush2.msra.mxu0 0.0
          %5615 = vmatprep.subr.mxu0 0.0
          %5616 = vmatpush2.msra.mxu0 0.0
          %5617 = vmatprep.subr.mxu0 0.0
          %5618 = vmatpush2.msra.mxu0 0.0
          %5619 = vmatprep.subr.mxu0 0.0
          %5620 = vmatpush2.msra.mxu0 0.0
          %5621 = vmatprep.subr.mxu0 0.0
          %5622 = vmatpush2.msra.mxu0 0.0
          %5623 = vmatprep.subr.mxu0 0.0
          %5624 = vmatpush2.msra.mxu0 0.0
          %5625 = vmatprep.mubr.f32.mxu0 0.0
          %v5626 = vand.u32 %v4326, 4294901760
          %5627 = vmatmul.mubr.f32.gmra.mxu0 %v5626
          %v5628 = vpop.f32.mrf.mxu0
          %v5629 = vadd.f32 %v5552, %v5628
          %v5630 = vpop.f32.mrf.mxu0
          %5631 = vdwg.mxu0
          %5632 = vmatprep.subr.mxu0 0.0
          %5633 = vmatpush1.msra.mxu0 0.0
          %5634 = vmatprep.subr.mxu0 0.0
          %5635 = vmatpush1.msra.mxu0 0.0
          %5636 = vmatprep.subr.mxu0 0.0
          %5637 = vmatpush1.msra.mxu0 0.0
          %5638 = vmatprep.subr.mxu0 0.0
          %5639 = vmatpush1.msra.mxu0 0.0
          %5640 = vmatprep.subr.mxu0 0.0
          %5641 = vmatpush1.msra.mxu0 0.0
          %5642 = vmatprep.subr.mxu0 0.0
          %5643 = vmatpush1.msra.mxu0 0.0
          %5644 = vmatprep.subr.mxu0 0.0
          %5645 = vmatpush1.msra.mxu0 0.0
          %5646 = vmatprep.subr.mxu0 0.0
          %5647 = vmatpush1.msra.mxu0 0.0
          %5648 = vmatprep.subr.mxu0 0.0
          %5649 = vmatpush1.msra.mxu0 0.0
          %5650 = vmatprep.subr.mxu0 0.0
          %5651 = vmatpush1.msra.mxu0 0.0
          %5652 = vmatprep.subr.mxu0 0.0
          %5653 = vmatpush1.msra.mxu0 0.0
          %5654 = vmatprep.subr.mxu0 0.0
          %5655 = vmatpush1.msra.mxu0 0.0
          %5656 = vmatprep.subr.mxu0 0.0
          %5657 = vmatpush1.msra.mxu0 0.0
          %5658 = vmatprep.subr.mxu0 0.0
          %5659 = vmatpush1.msra.mxu0 0.0
          %5660 = vmatprep.subr.mxu0 0.0
          %v5661 = vand.u32 %v4309, 4294901760
          %5662 = vmatpush1.msra.mxu0 %v5661
          %5663 = vmatprep.subr.mxu0 0.0
          %v5664 = vand.u32 %v4308, 4294901760
          %5665 = vmatpush1.msra.mxu0 %v5664
          %5666 = vmatprep.subr.mxu0 0.0
          %5667 = vmatpush2.msra.mxu0 0.0
          %5668 = vmatprep.subr.mxu0 0.0
          %5669 = vmatpush2.msra.mxu0 0.0
          %5670 = vmatprep.subr.mxu0 0.0
          %5671 = vmatpush2.msra.mxu0 0.0
          %5672 = vmatprep.subr.mxu0 0.0
          %5673 = vmatpush2.msra.mxu0 0.0
          %5674 = vmatprep.subr.mxu0 0.0
          %5675 = vmatpush2.msra.mxu0 0.0
          %5676 = vmatprep.subr.mxu0 0.0
          %5677 = vmatpush2.msra.mxu0 0.0
          %5678 = vmatprep.subr.mxu0 0.0
          %5679 = vmatpush2.msra.mxu0 0.0
          %5680 = vmatprep.subr.mxu0 0.0
          %5681 = vmatpush2.msra.mxu0 0.0
          %5682 = vmatprep.subr.mxu0 0.0
          %5683 = vmatpush2.msra.mxu0 0.0
          %5684 = vmatprep.subr.mxu0 0.0
          %5685 = vmatpush2.msra.mxu0 0.0
          %5686 = vmatprep.subr.mxu0 0.0
          %5687 = vmatpush2.msra.mxu0 0.0
          %5688 = vmatprep.subr.mxu0 0.0
          %5689 = vmatpush2.msra.mxu0 0.0
          %5690 = vmatprep.subr.mxu0 0.0
          %5691 = vmatpush2.msra.mxu0 0.0
          %5692 = vmatprep.subr.mxu0 0.0
          %5693 = vmatpush2.msra.mxu0 0.0
          %5694 = vmatprep.subr.mxu0 0.0
          %5695 = vmatpush2.msra.mxu0 0.0
          %5696 = vmatprep.subr.mxu0 0.0
          %5697 = vmatpush2.msra.mxu0 0.0
          %5698 = vmatprep.mubr.f32.mxu0 0.0
          %v5699 = vand.u32 %v4326, 4294901760
          %5700 = vmatmul.mubr.f32.gmra.mxu0 %v5699
          %v5701 = vpop.f32.mrf.mxu0
          %v5702 = vadd.f32 %v5629, %v5701
          %v5703 = vpop.f32.mrf.mxu0
          %5704 = vdwg.mxu0
          %5705 = vmatprep.subr.mxu0 0.0
          %5706 = vmatpush1.msra.mxu0 0.0
          %5707 = vmatprep.subr.mxu0 0.0
          %5708 = vmatpush1.msra.mxu0 0.0
          %5709 = vmatprep.subr.mxu0 0.0
          %5710 = vmatpush1.msra.mxu0 0.0
          %5711 = vmatprep.subr.mxu0 0.0
          %5712 = vmatpush1.msra.mxu0 0.0
          %5713 = vmatprep.subr.mxu0 0.0
          %5714 = vmatpush1.msra.mxu0 0.0
          %5715 = vmatprep.subr.mxu0 0.0
          %5716 = vmatpush1.msra.mxu0 0.0
          %5717 = vmatprep.subr.mxu0 0.0
          %5718 = vmatpush1.msra.mxu0 0.0
          %5719 = vmatprep.subr.mxu0 0.0
          %5720 = vmatpush1.msra.mxu0 0.0
          %5721 = vmatprep.subr.mxu0 0.0
          %5722 = vmatpush1.msra.mxu0 0.0
          %5723 = vmatprep.subr.mxu0 0.0
          %5724 = vmatpush1.msra.mxu0 0.0
          %5725 = vmatprep.subr.mxu0 0.0
          %5726 = vmatpush1.msra.mxu0 0.0
          %5727 = vmatprep.subr.mxu0 0.0
          %5728 = vmatpush1.msra.mxu0 0.0
          %5729 = vmatprep.subr.mxu0 0.0
          %5730 = vmatpush1.msra.mxu0 0.0
          %5731 = vmatprep.subr.mxu0 0.0
          %5732 = vmatpush1.msra.mxu0 0.0
          %5733 = vmatprep.subr.mxu0 0.0
          %v5734 = vand.u32 %v4311, 4294901760
          %5735 = vmatpush1.msra.mxu0 %v5734
          %5736 = vmatprep.subr.mxu0 0.0
          %v5737 = vand.u32 %v4310, 4294901760
          %5738 = vmatpush1.msra.mxu0 %v5737
          %5739 = vmatprep.subr.mxu0 0.0
          %5740 = vmatpush2.msra.mxu0 0.0
          %5741 = vmatprep.subr.mxu0 0.0
          %5742 = vmatpush2.msra.mxu0 0.0
          %5743 = vmatprep.subr.mxu0 0.0
          %5744 = vmatpush2.msra.mxu0 0.0
          %5745 = vmatprep.subr.mxu0 0.0
          %5746 = vmatpush2.msra.mxu0 0.0
          %5747 = vmatprep.subr.mxu0 0.0
          %5748 = vmatpush2.msra.mxu0 0.0
          %5749 = vmatprep.subr.mxu0 0.0
          %5750 = vmatpush2.msra.mxu0 0.0
          %5751 = vmatprep.subr.mxu0 0.0
          %5752 = vmatpush2.msra.mxu0 0.0
          %5753 = vmatprep.subr.mxu0 0.0
          %5754 = vmatpush2.msra.mxu0 0.0
          %5755 = vmatprep.subr.mxu0 0.0
          %5756 = vmatpush2.msra.mxu0 0.0
          %5757 = vmatprep.subr.mxu0 0.0
          %5758 = vmatpush2.msra.mxu0 0.0
          %5759 = vmatprep.subr.mxu0 0.0
          %5760 = vmatpush2.msra.mxu0 0.0
          %5761 = vmatprep.subr.mxu0 0.0
          %5762 = vmatpush2.msra.mxu0 0.0
          %5763 = vmatprep.subr.mxu0 0.0
          %5764 = vmatpush2.msra.mxu0 0.0
          %5765 = vmatprep.subr.mxu0 0.0
          %5766 = vmatpush2.msra.mxu0 0.0
          %5767 = vmatprep.subr.mxu0 0.0
          %5768 = vmatpush2.msra.mxu0 0.0
          %5769 = vmatprep.subr.mxu0 0.0
          %5770 = vmatpush2.msra.mxu0 0.0
          %5771 = vmatprep.mubr.f32.mxu0 0.0
          %v5772 = vand.u32 %v4326, 4294901760
          %v5773 = vsub.f32 %v4326, %v5772
          %v5774 = vand.u32 %v5773, 4294901760
          %v5775 = vsub.f32 %v5773, %v5774
          %v5776 = vand.u32 %v5775, 4294901760
          %5777 = vmatmul.mubr.f32.gmra.mxu0 %v5776
          %v5778 = vpop.f32.mrf.mxu0
          %v5779 = vadd.f32 0.0, %v5778
          %v5780 = vpop.f32.mrf.mxu0
          %5781 = vdwg.mxu0
          %5782 = vmatprep.subr.mxu0 0.0
          %5783 = vmatpush1.msra.mxu0 0.0
          %5784 = vmatprep.subr.mxu0 0.0
          %5785 = vmatpush1.msra.mxu0 0.0
          %5786 = vmatprep.subr.mxu0 0.0
          %5787 = vmatpush1.msra.mxu0 0.0
          %5788 = vmatprep.subr.mxu0 0.0
          %5789 = vmatpush1.msra.mxu0 0.0
          %5790 = vmatprep.subr.mxu0 0.0
          %5791 = vmatpush1.msra.mxu0 0.0
          %5792 = vmatprep.subr.mxu0 0.0
          %5793 = vmatpush1.msra.mxu0 0.0
          %5794 = vmatprep.subr.mxu0 0.0
          %5795 = vmatpush1.msra.mxu0 0.0
          %5796 = vmatprep.subr.mxu0 0.0
          %5797 = vmatpush1.msra.mxu0 0.0
          %5798 = vmatprep.subr.mxu0 0.0
          %5799 = vmatpush1.msra.mxu0 0.0
          %5800 = vmatprep.subr.mxu0 0.0
          %5801 = vmatpush1.msra.mxu0 0.0
          %5802 = vmatprep.subr.mxu0 0.0
          %5803 = vmatpush1.msra.mxu0 0.0
          %5804 = vmatprep.subr.mxu0 0.0
          %5805 = vmatpush1.msra.mxu0 0.0
          %5806 = vmatprep.subr.mxu0 0.0
          %5807 = vmatpush1.msra.mxu0 0.0
          %5808 = vmatprep.subr.mxu0 0.0
          %5809 = vmatpush1.msra.mxu0 0.0
          %5810 = vmatprep.subr.mxu0 0.0
          %v5811 = vand.u32 %v4311, 4294901760
          %v5812 = vsub.f32 %v4311, %v5811
          %v5813 = vand.u32 %v5812, 4294901760
          %v5814 = vsub.f32 %v5812, %v5813
          %v5815 = vand.u32 %v5814, 4294901760
          %5816 = vmatpush1.msra.mxu0 %v5815
          %5817 = vmatprep.subr.mxu0 0.0
          %v5818 = vand.u32 %v4310, 4294901760
          %v5819 = vsub.f32 %v4310, %v5818
          %v5820 = vand.u32 %v5819, 4294901760
          %v5821 = vsub.f32 %v5819, %v5820
          %v5822 = vand.u32 %v5821, 4294901760
          %5823 = vmatpush1.msra.mxu0 %v5822
          %5824 = vmatprep.subr.mxu0 0.0
          %5825 = vmatpush2.msra.mxu0 0.0
          %5826 = vmatprep.subr.mxu0 0.0
          %5827 = vmatpush2.msra.mxu0 0.0
          %5828 = vmatprep.subr.mxu0 0.0
          %5829 = vmatpush2.msra.mxu0 0.0
          %5830 = vmatprep.subr.mxu0 0.0
          %5831 = vmatpush2.msra.mxu0 0.0
          %5832 = vmatprep.subr.mxu0 0.0
          %5833 = vmatpush2.msra.mxu0 0.0
          %5834 = vmatprep.subr.mxu0 0.0
          %5835 = vmatpush2.msra.mxu0 0.0
          %5836 = vmatprep.subr.mxu0 0.0
          %5837 = vmatpush2.msra.mxu0 0.0
          %5838 = vmatprep.subr.mxu0 0.0
          %5839 = vmatpush2.msra.mxu0 0.0
          %5840 = vmatprep.subr.mxu0 0.0
          %5841 = vmatpush2.msra.mxu0 0.0
          %5842 = vmatprep.subr.mxu0 0.0
          %5843 = vmatpush2.msra.mxu0 0.0
          %5844 = vmatprep.subr.mxu0 0.0
          %5845 = vmatpush2.msra.mxu0 0.0
          %5846 = vmatprep.subr.mxu0 0.0
          %5847 = vmatpush2.msra.mxu0 0.0
          %5848 = vmatprep.subr.mxu0 0.0
          %5849 = vmatpush2.msra.mxu0 0.0
          %5850 = vmatprep.subr.mxu0 0.0
          %5851 = vmatpush2.msra.mxu0 0.0
          %5852 = vmatprep.subr.mxu0 0.0
          %5853 = vmatpush2.msra.mxu0 0.0
          %5854 = vmatprep.subr.mxu0 0.0
          %5855 = vmatpush2.msra.mxu0 0.0
          %5856 = vmatprep.mubr.f32.mxu0 0.0
          %v5857 = vand.u32 %v4326, 4294901760
          %5858 = vmatmul.mubr.f32.gmra.mxu0 %v5857
          %v5859 = vpop.f32.mrf.mxu0
          %v5860 = vadd.f32 %v5779, %v5859
          %v5861 = vpop.f32.mrf.mxu0
          %5862 = vdwg.mxu0
          %5863 = vmatprep.subr.mxu0 0.0
          %5864 = vmatpush1.msra.mxu0 0.0
          %5865 = vmatprep.subr.mxu0 0.0
          %5866 = vmatpush1.msra.mxu0 0.0
          %5867 = vmatprep.subr.mxu0 0.0
          %5868 = vmatpush1.msra.mxu0 0.0
          %5869 = vmatprep.subr.mxu0 0.0
          %5870 = vmatpush1.msra.mxu0 0.0
          %5871 = vmatprep.subr.mxu0 0.0
          %5872 = vmatpush1.msra.mxu0 0.0
          %5873 = vmatprep.subr.mxu0 0.0
          %5874 = vmatpush1.msra.mxu0 0.0
          %5875 = vmatprep.subr.mxu0 0.0
          %5876 = vmatpush1.msra.mxu0 0.0
          %5877 = vmatprep.subr.mxu0 0.0
          %5878 = vmatpush1.msra.mxu0 0.0
          %5879 = vmatprep.subr.mxu0 0.0
          %5880 = vmatpush1.msra.mxu0 0.0
          %5881 = vmatprep.subr.mxu0 0.0
          %5882 = vmatpush1.msra.mxu0 0.0
          %5883 = vmatprep.subr.mxu0 0.0
          %5884 = vmatpush1.msra.mxu0 0.0
          %5885 = vmatprep.subr.mxu0 0.0
          %5886 = vmatpush1.msra.mxu0 0.0
          %5887 = vmatprep.subr.mxu0 0.0
          %5888 = vmatpush1.msra.mxu0 0.0
          %5889 = vmatprep.subr.mxu0 0.0
          %5890 = vmatpush1.msra.mxu0 0.0
          %5891 = vmatprep.subr.mxu0 0.0
          %v5892 = vand.u32 %v4311, 4294901760
          %v5893 = vsub.f32 %v4311, %v5892
          %5894 = vmatpush1.msra.mxu0 %v5893
          %5895 = vmatprep.subr.mxu0 0.0
          %v5896 = vand.u32 %v4310, 4294901760
          %v5897 = vsub.f32 %v4310, %v5896
          %5898 = vmatpush1.msra.mxu0 %v5897
          %5899 = vmatprep.subr.mxu0 0.0
          %5900 = vmatpush2.msra.mxu0 0.0
          %5901 = vmatprep.subr.mxu0 0.0
          %5902 = vmatpush2.msra.mxu0 0.0
          %5903 = vmatprep.subr.mxu0 0.0
          %5904 = vmatpush2.msra.mxu0 0.0
          %5905 = vmatprep.subr.mxu0 0.0
          %5906 = vmatpush2.msra.mxu0 0.0
          %5907 = vmatprep.subr.mxu0 0.0
          %5908 = vmatpush2.msra.mxu0 0.0
          %5909 = vmatprep.subr.mxu0 0.0
          %5910 = vmatpush2.msra.mxu0 0.0
          %5911 = vmatprep.subr.mxu0 0.0
          %5912 = vmatpush2.msra.mxu0 0.0
          %5913 = vmatprep.subr.mxu0 0.0
          %5914 = vmatpush2.msra.mxu0 0.0
          %5915 = vmatprep.subr.mxu0 0.0
          %5916 = vmatpush2.msra.mxu0 0.0
          %5917 = vmatprep.subr.mxu0 0.0
          %5918 = vmatpush2.msra.mxu0 0.0
          %5919 = vmatprep.subr.mxu0 0.0
          %5920 = vmatpush2.msra.mxu0 0.0
          %5921 = vmatprep.subr.mxu0 0.0
          %5922 = vmatpush2.msra.mxu0 0.0
          %5923 = vmatprep.subr.mxu0 0.0
          %5924 = vmatpush2.msra.mxu0 0.0
          %5925 = vmatprep.subr.mxu0 0.0
          %5926 = vmatpush2.msra.mxu0 0.0
          %5927 = vmatprep.subr.mxu0 0.0
          %5928 = vmatpush2.msra.mxu0 0.0
          %5929 = vmatprep.subr.mxu0 0.0
          %5930 = vmatpush2.msra.mxu0 0.0
          %5931 = vmatprep.mubr.f32.mxu0 0.0
          %v5932 = vand.u32 %v4326, 4294901760
          %v5933 = vsub.f32 %v4326, %v5932
          %5934 = vmatmul.mubr.f32.gmra.mxu0 %v5933
          %v5935 = vpop.f32.mrf.mxu0
          %v5936 = vadd.f32 %v5860, %v5935
          %v5937 = vpop.f32.mrf.mxu0
          %5938 = vdwg.mxu0
          %5939 = vmatprep.subr.mxu0 0.0
          %5940 = vmatpush1.msra.mxu0 0.0
          %5941 = vmatprep.subr.mxu0 0.0
          %5942 = vmatpush1.msra.mxu0 0.0
          %5943 = vmatprep.subr.mxu0 0.0
          %5944 = vmatpush1.msra.mxu0 0.0
          %5945 = vmatprep.subr.mxu0 0.0
          %5946 = vmatpush1.msra.mxu0 0.0
          %5947 = vmatprep.subr.mxu0 0.0
          %5948 = vmatpush1.msra.mxu0 0.0
          %5949 = vmatprep.subr.mxu0 0.0
          %5950 = vmatpush1.msra.mxu0 0.0
          %5951 = vmatprep.subr.mxu0 0.0
          %5952 = vmatpush1.msra.mxu0 0.0
          %5953 = vmatprep.subr.mxu0 0.0
          %5954 = vmatpush1.msra.mxu0 0.0
          %5955 = vmatprep.subr.mxu0 0.0
          %5956 = vmatpush1.msra.mxu0 0.0
          %5957 = vmatprep.subr.mxu0 0.0
          %5958 = vmatpush1.msra.mxu0 0.0
          %5959 = vmatprep.subr.mxu0 0.0
          %5960 = vmatpush1.msra.mxu0 0.0
          %5961 = vmatprep.subr.mxu0 0.0
          %5962 = vmatpush1.msra.mxu0 0.0
          %5963 = vmatprep.subr.mxu0 0.0
          %5964 = vmatpush1.msra.mxu0 0.0
          %5965 = vmatprep.subr.mxu0 0.0
          %5966 = vmatpush1.msra.mxu0 0.0
          %5967 = vmatprep.subr.mxu0 0.0
          %v5968 = vand.u32 %v4311, 4294901760
          %5969 = vmatpush1.msra.mxu0 %v5968
          %5970 = vmatprep.subr.mxu0 0.0
          %v5971 = vand.u32 %v4310, 4294901760
          %5972 = vmatpush1.msra.mxu0 %v5971
          %5973 = vmatprep.subr.mxu0 0.0
          %5974 = vmatpush2.msra.mxu0 0.0
          %5975 = vmatprep.subr.mxu0 0.0
          %5976 = vmatpush2.msra.mxu0 0.0
          %5977 = vmatprep.subr.mxu0 0.0
          %5978 = vmatpush2.msra.mxu0 0.0
          %5979 = vmatprep.subr.mxu0 0.0
          %5980 = vmatpush2.msra.mxu0 0.0
          %5981 = vmatprep.subr.mxu0 0.0
          %5982 = vmatpush2.msra.mxu0 0.0
          %5983 = vmatprep.subr.mxu0 0.0
          %5984 = vmatpush2.msra.mxu0 0.0
          %5985 = vmatprep.subr.mxu0 0.0
          %5986 = vmatpush2.msra.mxu0 0.0
          %5987 = vmatprep.subr.mxu0 0.0
          %5988 = vmatpush2.msra.mxu0 0.0
          %5989 = vmatprep.subr.mxu0 0.0
          %5990 = vmatpush2.msra.mxu0 0.0
          %5991 = vmatprep.subr.mxu0 0.0
          %5992 = vmatpush2.msra.mxu0 0.0
          %5993 = vmatprep.subr.mxu0 0.0
          %5994 = vmatpush2.msra.mxu0 0.0
          %5995 = vmatprep.subr.mxu0 0.0
          %5996 = vmatpush2.msra.mxu0 0.0
          %5997 = vmatprep.subr.mxu0 0.0
          %5998 = vmatpush2.msra.mxu0 0.0
          %5999 = vmatprep.subr.mxu0 0.0
          %6000 = vmatpush2.msra.mxu0 0.0
          %6001 = vmatprep.subr.mxu0 0.0
          %6002 = vmatpush2.msra.mxu0 0.0
          %6003 = vmatprep.subr.mxu0 0.0
          %6004 = vmatpush2.msra.mxu0 0.0
          %6005 = vmatprep.mubr.f32.mxu0 0.0
          %v6006 = vand.u32 %v4326, 4294901760
          %v6007 = vsub.f32 %v4326, %v6006
          %v6008 = vand.u32 %v6007, 4294901760
          %6009 = vmatmul.mubr.f32.gmra.mxu0 %v6008
          %v6010 = vpop.f32.mrf.mxu0
          %v6011 = vadd.f32 %v5936, %v6010
          %v6012 = vpop.f32.mrf.mxu0
          %6013 = vdwg.mxu0
          %6014 = vmatprep.subr.mxu0 0.0
          %6015 = vmatpush1.msra.mxu0 0.0
          %6016 = vmatprep.subr.mxu0 0.0
          %6017 = vmatpush1.msra.mxu0 0.0
          %6018 = vmatprep.subr.mxu0 0.0
          %6019 = vmatpush1.msra.mxu0 0.0
          %6020 = vmatprep.subr.mxu0 0.0
          %6021 = vmatpush1.msra.mxu0 0.0
          %6022 = vmatprep.subr.mxu0 0.0
          %6023 = vmatpush1.msra.mxu0 0.0
          %6024 = vmatprep.subr.mxu0 0.0
          %6025 = vmatpush1.msra.mxu0 0.0
          %6026 = vmatprep.subr.mxu0 0.0
          %6027 = vmatpush1.msra.mxu0 0.0
          %6028 = vmatprep.subr.mxu0 0.0
          %6029 = vmatpush1.msra.mxu0 0.0
          %6030 = vmatprep.subr.mxu0 0.0
          %6031 = vmatpush1.msra.mxu0 0.0
          %6032 = vmatprep.subr.mxu0 0.0
          %6033 = vmatpush1.msra.mxu0 0.0
          %6034 = vmatprep.subr.mxu0 0.0
          %6035 = vmatpush1.msra.mxu0 0.0
          %6036 = vmatprep.subr.mxu0 0.0
          %6037 = vmatpush1.msra.mxu0 0.0
          %6038 = vmatprep.subr.mxu0 0.0
          %6039 = vmatpush1.msra.mxu0 0.0
          %6040 = vmatprep.subr.mxu0 0.0
          %6041 = vmatpush1.msra.mxu0 0.0
          %6042 = vmatprep.subr.mxu0 0.0
          %v6043 = vand.u32 %v4311, 4294901760
          %v6044 = vsub.f32 %v4311, %v6043
          %v6045 = vand.u32 %v6044, 4294901760
          %6046 = vmatpush1.msra.mxu0 %v6045
          %6047 = vmatprep.subr.mxu0 0.0
          %v6048 = vand.u32 %v4310, 4294901760
          %v6049 = vsub.f32 %v4310, %v6048
          %v6050 = vand.u32 %v6049, 4294901760
          %6051 = vmatpush1.msra.mxu0 %v6050
          %6052 = vmatprep.subr.mxu0 0.0
          %6053 = vmatpush2.msra.mxu0 0.0
          %6054 = vmatprep.subr.mxu0 0.0
          %6055 = vmatpush2.msra.mxu0 0.0
          %6056 = vmatprep.subr.mxu0 0.0
          %6057 = vmatpush2.msra.mxu0 0.0
          %6058 = vmatprep.subr.mxu0 0.0
          %6059 = vmatpush2.msra.mxu0 0.0
          %6060 = vmatprep.subr.mxu0 0.0
          %6061 = vmatpush2.msra.mxu0 0.0
          %6062 = vmatprep.subr.mxu0 0.0
          %6063 = vmatpush2.msra.mxu0 0.0
          %6064 = vmatprep.subr.mxu0 0.0
          %6065 = vmatpush2.msra.mxu0 0.0
          %6066 = vmatprep.subr.mxu0 0.0
          %6067 = vmatpush2.msra.mxu0 0.0
          %6068 = vmatprep.subr.mxu0 0.0
          %6069 = vmatpush2.msra.mxu0 0.0
          %6070 = vmatprep.subr.mxu0 0.0
          %6071 = vmatpush2.msra.mxu0 0.0
          %6072 = vmatprep.subr.mxu0 0.0
          %6073 = vmatpush2.msra.mxu0 0.0
          %6074 = vmatprep.subr.mxu0 0.0
          %6075 = vmatpush2.msra.mxu0 0.0
          %6076 = vmatprep.subr.mxu0 0.0
          %6077 = vmatpush2.msra.mxu0 0.0
          %6078 = vmatprep.subr.mxu0 0.0
          %6079 = vmatpush2.msra.mxu0 0.0
          %6080 = vmatprep.subr.mxu0 0.0
          %6081 = vmatpush2.msra.mxu0 0.0
          %6082 = vmatprep.subr.mxu0 0.0
          %6083 = vmatpush2.msra.mxu0 0.0
          %6084 = vmatprep.mubr.f32.mxu0 0.0
          %v6085 = vand.u32 %v4326, 4294901760
          %6086 = vmatmul.mubr.f32.gmra.mxu0 %v6085
          %v6087 = vpop.f32.mrf.mxu0
          %v6088 = vadd.f32 %v6011, %v6087
          %v6089 = vpop.f32.mrf.mxu0
          %6090 = vdwg.mxu0
          %6091 = vmatprep.subr.mxu0 0.0
          %6092 = vmatpush1.msra.mxu0 0.0
          %6093 = vmatprep.subr.mxu0 0.0
          %6094 = vmatpush1.msra.mxu0 0.0
          %6095 = vmatprep.subr.mxu0 0.0
          %6096 = vmatpush1.msra.mxu0 0.0
          %6097 = vmatprep.subr.mxu0 0.0
          %6098 = vmatpush1.msra.mxu0 0.0
          %6099 = vmatprep.subr.mxu0 0.0
          %6100 = vmatpush1.msra.mxu0 0.0
          %6101 = vmatprep.subr.mxu0 0.0
          %6102 = vmatpush1.msra.mxu0 0.0
          %6103 = vmatprep.subr.mxu0 0.0
          %6104 = vmatpush1.msra.mxu0 0.0
          %6105 = vmatprep.subr.mxu0 0.0
          %6106 = vmatpush1.msra.mxu0 0.0
          %6107 = vmatprep.subr.mxu0 0.0
          %6108 = vmatpush1.msra.mxu0 0.0
          %6109 = vmatprep.subr.mxu0 0.0
          %6110 = vmatpush1.msra.mxu0 0.0
          %6111 = vmatprep.subr.mxu0 0.0
          %6112 = vmatpush1.msra.mxu0 0.0
          %6113 = vmatprep.subr.mxu0 0.0
          %6114 = vmatpush1.msra.mxu0 0.0
          %6115 = vmatprep.subr.mxu0 0.0
          %6116 = vmatpush1.msra.mxu0 0.0
          %6117 = vmatprep.subr.mxu0 0.0
          %6118 = vmatpush1.msra.mxu0 0.0
          %6119 = vmatprep.subr.mxu0 0.0
          %v6120 = vand.u32 %v4311, 4294901760
          %6121 = vmatpush1.msra.mxu0 %v6120
          %6122 = vmatprep.subr.mxu0 0.0
          %v6123 = vand.u32 %v4310, 4294901760
          %6124 = vmatpush1.msra.mxu0 %v6123
          %6125 = vmatprep.subr.mxu0 0.0
          %6126 = vmatpush2.msra.mxu0 0.0
          %6127 = vmatprep.subr.mxu0 0.0
          %6128 = vmatpush2.msra.mxu0 0.0
          %6129 = vmatprep.subr.mxu0 0.0
          %6130 = vmatpush2.msra.mxu0 0.0
          %6131 = vmatprep.subr.mxu0 0.0
          %6132 = vmatpush2.msra.mxu0 0.0
          %6133 = vmatprep.subr.mxu0 0.0
          %6134 = vmatpush2.msra.mxu0 0.0
          %6135 = vmatprep.subr.mxu0 0.0
          %6136 = vmatpush2.msra.mxu0 0.0
          %6137 = vmatprep.subr.mxu0 0.0
          %6138 = vmatpush2.msra.mxu0 0.0
          %6139 = vmatprep.subr.mxu0 0.0
          %6140 = vmatpush2.msra.mxu0 0.0
          %6141 = vmatprep.subr.mxu0 0.0
          %6142 = vmatpush2.msra.mxu0 0.0
          %6143 = vmatprep.subr.mxu0 0.0
          %6144 = vmatpush2.msra.mxu0 0.0
          %6145 = vmatprep.subr.mxu0 0.0
          %6146 = vmatpush2.msra.mxu0 0.0
          %6147 = vmatprep.subr.mxu0 0.0
          %6148 = vmatpush2.msra.mxu0 0.0
          %6149 = vmatprep.subr.mxu0 0.0
          %6150 = vmatpush2.msra.mxu0 0.0
          %6151 = vmatprep.subr.mxu0 0.0
          %6152 = vmatpush2.msra.mxu0 0.0
          %6153 = vmatprep.subr.mxu0 0.0
          %6154 = vmatpush2.msra.mxu0 0.0
          %6155 = vmatprep.subr.mxu0 0.0
          %6156 = vmatpush2.msra.mxu0 0.0
          %6157 = vmatprep.mubr.f32.mxu0 0.0
          %v6158 = vand.u32 %v4326, 4294901760
          %6159 = vmatmul.mubr.f32.gmra.mxu0 %v6158
          %v6160 = vpop.f32.mrf.mxu0
          %v6161 = vadd.f32 %v6088, %v6160
          %v6162 = vpop.f32.mrf.mxu0
          %6163 = vdwg.mxu0
          %v6164 = vadd.f32 %v4320, %v4784
          %v6165 = vadd.f32 %v4321, %v5243
          %v6166 = vadd.f32 %v4322, %v5702
          %v6167 = vadd.f32 %v4323, %v6161
          %vm6168 = vcmask 261120
          %6169 = vst.msk [vmem:[#allocation2] sm:$0xff] %vm6168, %v6164
          %6170 = vst.msk [vmem:[#allocation2 + $0x8] sm:$0xff] %vm6168, %v6165
          %6171 = vst.msk [vmem:[#allocation2 + $0x10] sm:$0xff] %vm6168, %v6166
          %6172 = vst.msk [vmem:[#allocation2 + $0x18] sm:$0xff] %vm6168, %v6167
          %v6173 = vld [vmem:[#allocation3] sm:$0xff]
          %v6174 = vld [vmem:[#allocation3 + $0x8] sm:$0xff]
          %v6175 = vld [vmem:[#allocation3 + $0x10] sm:$0xff]
          %v6176 = vld [vmem:[#allocation3 + $0x18] sm:$0xff]
          %6177 = vmatprep.subr.mxu0 0.0
          %6178 = vmatpush1.msra.mxu0 0.0
          %6179 = vmatprep.subr.mxu0 0.0
          %6180 = vmatpush1.msra.mxu0 0.0
          %6181 = vmatprep.subr.mxu0 0.0
          %6182 = vmatpush1.msra.mxu0 0.0
          %6183 = vmatprep.subr.mxu0 0.0
          %6184 = vmatpush1.msra.mxu0 0.0
          %6185 = vmatprep.subr.mxu0 0.0
          %6186 = vmatpush1.msra.mxu0 0.0
          %6187 = vmatprep.subr.mxu0 0.0
          %6188 = vmatpush1.msra.mxu0 0.0
          %6189 = vmatprep.subr.mxu0 0.0
          %6190 = vmatpush1.msra.mxu0 0.0
          %6191 = vmatprep.subr.mxu0 0.0
          %6192 = vmatpush1.msra.mxu0 0.0
          %6193 = vmatprep.subr.mxu0 0.0
          %6194 = vmatpush1.msra.mxu0 0.0
          %6195 = vmatprep.subr.mxu0 0.0
          %6196 = vmatpush1.msra.mxu0 0.0
          %6197 = vmatprep.subr.mxu0 0.0
          %6198 = vmatpush1.msra.mxu0 0.0
          %6199 = vmatprep.subr.mxu0 0.0
          %6200 = vmatpush1.msra.mxu0 0.0
          %6201 = vmatprep.subr.mxu0 0.0
          %6202 = vmatpush1.msra.mxu0 0.0
          %6203 = vmatprep.subr.mxu0 0.0
          %6204 = vmatpush1.msra.mxu0 0.0
          %6205 = vmatprep.subr.mxu0 0.0
          %v6206 = vand.u32 %v4313, 4294901760
          %6207 = vmatpush1.msra.mxu0 %v6206
          %6208 = vmatprep.subr.mxu0 0.0
          %v6209 = vand.u32 %v4312, 4294901760
          %6210 = vmatpush1.msra.mxu0 %v6209
          %6211 = vmatprep.subr.mxu0 0.0
          %6212 = vmatpush2.msra.mxu0 0.0
          %6213 = vmatprep.subr.mxu0 0.0
          %6214 = vmatpush2.msra.mxu0 0.0
          %6215 = vmatprep.subr.mxu0 0.0
          %6216 = vmatpush2.msra.mxu0 0.0
          %6217 = vmatprep.subr.mxu0 0.0
          %6218 = vmatpush2.msra.mxu0 0.0
          %6219 = vmatprep.subr.mxu0 0.0
          %6220 = vmatpush2.msra.mxu0 0.0
          %6221 = vmatprep.subr.mxu0 0.0
          %6222 = vmatpush2.msra.mxu0 0.0
          %6223 = vmatprep.subr.mxu0 0.0
          %6224 = vmatpush2.msra.mxu0 0.0
          %6225 = vmatprep.subr.mxu0 0.0
          %6226 = vmatpush2.msra.mxu0 0.0
          %6227 = vmatprep.subr.mxu0 0.0
          %6228 = vmatpush2.msra.mxu0 0.0
          %6229 = vmatprep.subr.mxu0 0.0
          %6230 = vmatpush2.msra.mxu0 0.0
          %6231 = vmatprep.subr.mxu0 0.0
          %6232 = vmatpush2.msra.mxu0 0.0
          %6233 = vmatprep.subr.mxu0 0.0
          %6234 = vmatpush2.msra.mxu0 0.0
          %6235 = vmatprep.subr.mxu0 0.0
          %6236 = vmatpush2.msra.mxu0 0.0
          %6237 = vmatprep.subr.mxu0 0.0
          %6238 = vmatpush2.msra.mxu0 0.0
          %6239 = vmatprep.subr.mxu0 0.0
          %6240 = vmatpush2.msra.mxu0 0.0
          %6241 = vmatprep.subr.mxu0 0.0
          %6242 = vmatpush2.msra.mxu0 0.0
          %6243 = vmatprep.mubr.f32.mxu0 0.0
          %v6244 = vand.u32 %v4326, 4294901760
          %v6245 = vsub.f32 %v4326, %v6244
          %v6246 = vand.u32 %v6245, 4294901760
          %v6247 = vsub.f32 %v6245, %v6246
          %v6248 = vand.u32 %v6247, 4294901760
          %6249 = vmatmul.mubr.f32.gmra.mxu0 %v6248
          %v6250 = vpop.f32.mrf.mxu0
          %v6251 = vadd.f32 0.0, %v6250
          %v6252 = vpop.f32.mrf.mxu0
          %6253 = vdwg.mxu0
          %6254 = vmatprep.subr.mxu0 0.0
          %6255 = vmatpush1.msra.mxu0 0.0
          %6256 = vmatprep.subr.mxu0 0.0
          %6257 = vmatpush1.msra.mxu0 0.0
          %6258 = vmatprep.subr.mxu0 0.0
          %6259 = vmatpush1.msra.mxu0 0.0
          %6260 = vmatprep.subr.mxu0 0.0
          %6261 = vmatpush1.msra.mxu0 0.0
          %6262 = vmatprep.subr.mxu0 0.0
          %6263 = vmatpush1.msra.mxu0 0.0
          %6264 = vmatprep.subr.mxu0 0.0
          %6265 = vmatpush1.msra.mxu0 0.0
          %6266 = vmatprep.subr.mxu0 0.0
          %6267 = vmatpush1.msra.mxu0 0.0
          %6268 = vmatprep.subr.mxu0 0.0
          %6269 = vmatpush1.msra.mxu0 0.0
          %6270 = vmatprep.subr.mxu0 0.0
          %6271 = vmatpush1.msra.mxu0 0.0
          %6272 = vmatprep.subr.mxu0 0.0
          %6273 = vmatpush1.msra.mxu0 0.0
          %6274 = vmatprep.subr.mxu0 0.0
          %6275 = vmatpush1.msra.mxu0 0.0
          %6276 = vmatprep.subr.mxu0 0.0
          %6277 = vmatpush1.msra.mxu0 0.0
          %6278 = vmatprep.subr.mxu0 0.0
          %6279 = vmatpush1.msra.mxu0 0.0
          %6280 = vmatprep.subr.mxu0 0.0
          %6281 = vmatpush1.msra.mxu0 0.0
          %6282 = vmatprep.subr.mxu0 0.0
          %v6283 = vand.u32 %v4313, 4294901760
          %v6284 = vsub.f32 %v4313, %v6283
          %v6285 = vand.u32 %v6284, 4294901760
          %v6286 = vsub.f32 %v6284, %v6285
          %v6287 = vand.u32 %v6286, 4294901760
          %6288 = vmatpush1.msra.mxu0 %v6287
          %6289 = vmatprep.subr.mxu0 0.0
          %v6290 = vand.u32 %v4312, 4294901760
          %v6291 = vsub.f32 %v4312, %v6290
          %v6292 = vand.u32 %v6291, 4294901760
          %v6293 = vsub.f32 %v6291, %v6292
          %v6294 = vand.u32 %v6293, 4294901760
          %6295 = vmatpush1.msra.mxu0 %v6294
          %6296 = vmatprep.subr.mxu0 0.0
          %6297 = vmatpush2.msra.mxu0 0.0
          %6298 = vmatprep.subr.mxu0 0.0
          %6299 = vmatpush2.msra.mxu0 0.0
          %6300 = vmatprep.subr.mxu0 0.0
          %6301 = vmatpush2.msra.mxu0 0.0
          %6302 = vmatprep.subr.mxu0 0.0
          %6303 = vmatpush2.msra.mxu0 0.0
          %6304 = vmatprep.subr.mxu0 0.0
          %6305 = vmatpush2.msra.mxu0 0.0
          %6306 = vmatprep.subr.mxu0 0.0
          %6307 = vmatpush2.msra.mxu0 0.0
          %6308 = vmatprep.subr.mxu0 0.0
          %6309 = vmatpush2.msra.mxu0 0.0
          %6310 = vmatprep.subr.mxu0 0.0
          %6311 = vmatpush2.msra.mxu0 0.0
          %6312 = vmatprep.subr.mxu0 0.0
          %6313 = vmatpush2.msra.mxu0 0.0
          %6314 = vmatprep.subr.mxu0 0.0
          %6315 = vmatpush2.msra.mxu0 0.0
          %6316 = vmatprep.subr.mxu0 0.0
          %6317 = vmatpush2.msra.mxu0 0.0
          %6318 = vmatprep.subr.mxu0 0.0
          %6319 = vmatpush2.msra.mxu0 0.0
          %6320 = vmatprep.subr.mxu0 0.0
          %6321 = vmatpush2.msra.mxu0 0.0
          %6322 = vmatprep.subr.mxu0 0.0
          %6323 = vmatpush2.msra.mxu0 0.0
          %6324 = vmatprep.subr.mxu0 0.0
          %6325 = vmatpush2.msra.mxu0 0.0
          %6326 = vmatprep.subr.mxu0 0.0
          %6327 = vmatpush2.msra.mxu0 0.0
          %6328 = vmatprep.mubr.f32.mxu0 0.0
          %v6329 = vand.u32 %v4326, 4294901760
          %6330 = vmatmul.mubr.f32.gmra.mxu0 %v6329
          %v6331 = vpop.f32.mrf.mxu0
          %v6332 = vadd.f32 %v6251, %v6331
          %v6333 = vpop.f32.mrf.mxu0
          %6334 = vdwg.mxu0
          %6335 = vmatprep.subr.mxu0 0.0
          %6336 = vmatpush1.msra.mxu0 0.0
          %6337 = vmatprep.subr.mxu0 0.0
          %6338 = vmatpush1.msra.mxu0 0.0
          %6339 = vmatprep.subr.mxu0 0.0
          %6340 = vmatpush1.msra.mxu0 0.0
          %6341 = vmatprep.subr.mxu0 0.0
          %6342 = vmatpush1.msra.mxu0 0.0
          %6343 = vmatprep.subr.mxu0 0.0
          %6344 = vmatpush1.msra.mxu0 0.0
          %6345 = vmatprep.subr.mxu0 0.0
          %6346 = vmatpush1.msra.mxu0 0.0
          %6347 = vmatprep.subr.mxu0 0.0
          %6348 = vmatpush1.msra.mxu0 0.0
          %6349 = vmatprep.subr.mxu0 0.0
          %6350 = vmatpush1.msra.mxu0 0.0
          %6351 = vmatprep.subr.mxu0 0.0
          %6352 = vmatpush1.msra.mxu0 0.0
          %6353 = vmatprep.subr.mxu0 0.0
          %6354 = vmatpush1.msra.mxu0 0.0
          %6355 = vmatprep.subr.mxu0 0.0
          %6356 = vmatpush1.msra.mxu0 0.0
          %6357 = vmatprep.subr.mxu0 0.0
          %6358 = vmatpush1.msra.mxu0 0.0
          %6359 = vmatprep.subr.mxu0 0.0
          %6360 = vmatpush1.msra.mxu0 0.0
          %6361 = vmatprep.subr.mxu0 0.0
          %6362 = vmatpush1.msra.mxu0 0.0
          %6363 = vmatprep.subr.mxu0 0.0
          %v6364 = vand.u32 %v4313, 4294901760
          %v6365 = vsub.f32 %v4313, %v6364
          %6366 = vmatpush1.msra.mxu0 %v6365
          %6367 = vmatprep.subr.mxu0 0.0
          %v6368 = vand.u32 %v4312, 4294901760
          %v6369 = vsub.f32 %v4312, %v6368
          %6370 = vmatpush1.msra.mxu0 %v6369
          %6371 = vmatprep.subr.mxu0 0.0
          %6372 = vmatpush2.msra.mxu0 0.0
          %6373 = vmatprep.subr.mxu0 0.0
          %6374 = vmatpush2.msra.mxu0 0.0
          %6375 = vmatprep.subr.mxu0 0.0
          %6376 = vmatpush2.msra.mxu0 0.0
          %6377 = vmatprep.subr.mxu0 0.0
          %6378 = vmatpush2.msra.mxu0 0.0
          %6379 = vmatprep.subr.mxu0 0.0
          %6380 = vmatpush2.msra.mxu0 0.0
          %6381 = vmatprep.subr.mxu0 0.0
          %6382 = vmatpush2.msra.mxu0 0.0
          %6383 = vmatprep.subr.mxu0 0.0
          %6384 = vmatpush2.msra.mxu0 0.0
          %6385 = vmatprep.subr.mxu0 0.0
          %6386 = vmatpush2.msra.mxu0 0.0
          %6387 = vmatprep.subr.mxu0 0.0
          %6388 = vmatpush2.msra.mxu0 0.0
          %6389 = vmatprep.subr.mxu0 0.0
          %6390 = vmatpush2.msra.mxu0 0.0
          %6391 = vmatprep.subr.mxu0 0.0
          %6392 = vmatpush2.msra.mxu0 0.0
          %6393 = vmatprep.subr.mxu0 0.0
          %6394 = vmatpush2.msra.mxu0 0.0
          %6395 = vmatprep.subr.mxu0 0.0
          %6396 = vmatpush2.msra.mxu0 0.0
          %6397 = vmatprep.subr.mxu0 0.0
          %6398 = vmatpush2.msra.mxu0 0.0
          %6399 = vmatprep.subr.mxu0 0.0
          %6400 = vmatpush2.msra.mxu0 0.0
          %6401 = vmatprep.subr.mxu0 0.0
          %6402 = vmatpush2.msra.mxu0 0.0
          %6403 = vmatprep.mubr.f32.mxu0 0.0
          %v6404 = vand.u32 %v4326, 4294901760
          %v6405 = vsub.f32 %v4326, %v6404
          %6406 = vmatmul.mubr.f32.gmra.mxu0 %v6405
          %v6407 = vpop.f32.mrf.mxu0
          %v6408 = vadd.f32 %v6332, %v6407
          %v6409 = vpop.f32.mrf.mxu0
          %6410 = vdwg.mxu0
          %6411 = vmatprep.subr.mxu0 0.0
          %6412 = vmatpush1.msra.mxu0 0.0
          %6413 = vmatprep.subr.mxu0 0.0
          %6414 = vmatpush1.msra.mxu0 0.0
          %6415 = vmatprep.subr.mxu0 0.0
          %6416 = vmatpush1.msra.mxu0 0.0
          %6417 = vmatprep.subr.mxu0 0.0
          %6418 = vmatpush1.msra.mxu0 0.0
          %6419 = vmatprep.subr.mxu0 0.0
          %6420 = vmatpush1.msra.mxu0 0.0
          %6421 = vmatprep.subr.mxu0 0.0
          %6422 = vmatpush1.msra.mxu0 0.0
          %6423 = vmatprep.subr.mxu0 0.0
          %6424 = vmatpush1.msra.mxu0 0.0
          %6425 = vmatprep.subr.mxu0 0.0
          %6426 = vmatpush1.msra.mxu0 0.0
          %6427 = vmatprep.subr.mxu0 0.0
          %6428 = vmatpush1.msra.mxu0 0.0
          %6429 = vmatprep.subr.mxu0 0.0
          %6430 = vmatpush1.msra.mxu0 0.0
          %6431 = vmatprep.subr.mxu0 0.0
          %6432 = vmatpush1.msra.mxu0 0.0
          %6433 = vmatprep.subr.mxu0 0.0
          %6434 = vmatpush1.msra.mxu0 0.0
          %6435 = vmatprep.subr.mxu0 0.0
          %6436 = vmatpush1.msra.mxu0 0.0
          %6437 = vmatprep.subr.mxu0 0.0
          %6438 = vmatpush1.msra.mxu0 0.0
          %6439 = vmatprep.subr.mxu0 0.0
          %v6440 = vand.u32 %v4313, 4294901760
          %6441 = vmatpush1.msra.mxu0 %v6440
          %6442 = vmatprep.subr.mxu0 0.0
          %v6443 = vand.u32 %v4312, 4294901760
          %6444 = vmatpush1.msra.mxu0 %v6443
          %6445 = vmatprep.subr.mxu0 0.0
          %6446 = vmatpush2.msra.mxu0 0.0
          %6447 = vmatprep.subr.mxu0 0.0
          %6448 = vmatpush2.msra.mxu0 0.0
          %6449 = vmatprep.subr.mxu0 0.0
          %6450 = vmatpush2.msra.mxu0 0.0
          %6451 = vmatprep.subr.mxu0 0.0
          %6452 = vmatpush2.msra.mxu0 0.0
          %6453 = vmatprep.subr.mxu0 0.0
          %6454 = vmatpush2.msra.mxu0 0.0
          %6455 = vmatprep.subr.mxu0 0.0
          %6456 = vmatpush2.msra.mxu0 0.0
          %6457 = vmatprep.subr.mxu0 0.0
          %6458 = vmatpush2.msra.mxu0 0.0
          %6459 = vmatprep.subr.mxu0 0.0
          %6460 = vmatpush2.msra.mxu0 0.0
          %6461 = vmatprep.subr.mxu0 0.0
          %6462 = vmatpush2.msra.mxu0 0.0
          %6463 = vmatprep.subr.mxu0 0.0
          %6464 = vmatpush2.msra.mxu0 0.0
          %6465 = vmatprep.subr.mxu0 0.0
          %6466 = vmatpush2.msra.mxu0 0.0
          %6467 = vmatprep.subr.mxu0 0.0
          %6468 = vmatpush2.msra.mxu0 0.0
          %6469 = vmatprep.subr.mxu0 0.0
          %6470 = vmatpush2.msra.mxu0 0.0
          %6471 = vmatprep.subr.mxu0 0.0
          %6472 = vmatpush2.msra.mxu0 0.0
          %6473 = vmatprep.subr.mxu0 0.0
          %6474 = vmatpush2.msra.mxu0 0.0
          %6475 = vmatprep.subr.mxu0 0.0
          %6476 = vmatpush2.msra.mxu0 0.0
          %6477 = vmatprep.mubr.f32.mxu0 0.0
          %v6478 = vand.u32 %v4326, 4294901760
          %v6479 = vsub.f32 %v4326, %v6478
          %v6480 = vand.u32 %v6479, 4294901760
          %6481 = vmatmul.mubr.f32.gmra.mxu0 %v6480
          %v6482 = vpop.f32.mrf.mxu0
          %v6483 = vadd.f32 %v6408, %v6482
          %v6484 = vpop.f32.mrf.mxu0
          %6485 = vdwg.mxu0
          %6486 = vmatprep.subr.mxu0 0.0
          %6487 = vmatpush1.msra.mxu0 0.0
          %6488 = vmatprep.subr.mxu0 0.0
          %6489 = vmatpush1.msra.mxu0 0.0
          %6490 = vmatprep.subr.mxu0 0.0
          %6491 = vmatpush1.msra.mxu0 0.0
          %6492 = vmatprep.subr.mxu0 0.0
          %6493 = vmatpush1.msra.mxu0 0.0
          %6494 = vmatprep.subr.mxu0 0.0
          %6495 = vmatpush1.msra.mxu0 0.0
          %6496 = vmatprep.subr.mxu0 0.0
          %6497 = vmatpush1.msra.mxu0 0.0
          %6498 = vmatprep.subr.mxu0 0.0
          %6499 = vmatpush1.msra.mxu0 0.0
          %6500 = vmatprep.subr.mxu0 0.0
          %6501 = vmatpush1.msra.mxu0 0.0
          %6502 = vmatprep.subr.mxu0 0.0
          %6503 = vmatpush1.msra.mxu0 0.0
          %6504 = vmatprep.subr.mxu0 0.0
          %6505 = vmatpush1.msra.mxu0 0.0
          %6506 = vmatprep.subr.mxu0 0.0
          %6507 = vmatpush1.msra.mxu0 0.0
          %6508 = vmatprep.subr.mxu0 0.0
          %6509 = vmatpush1.msra.mxu0 0.0
          %6510 = vmatprep.subr.mxu0 0.0
          %6511 = vmatpush1.msra.mxu0 0.0
          %6512 = vmatprep.subr.mxu0 0.0
          %6513 = vmatpush1.msra.mxu0 0.0
          %6514 = vmatprep.subr.mxu0 0.0
          %v6515 = vand.u32 %v4313, 4294901760
          %v6516 = vsub.f32 %v4313, %v6515
          %v6517 = vand.u32 %v6516, 4294901760
          %6518 = vmatpush1.msra.mxu0 %v6517
          %6519 = vmatprep.subr.mxu0 0.0
          %v6520 = vand.u32 %v4312, 4294901760
          %v6521 = vsub.f32 %v4312, %v6520
          %v6522 = vand.u32 %v6521, 4294901760
          %6523 = vmatpush1.msra.mxu0 %v6522
          %6524 = vmatprep.subr.mxu0 0.0
          %6525 = vmatpush2.msra.mxu0 0.0
          %6526 = vmatprep.subr.mxu0 0.0
          %6527 = vmatpush2.msra.mxu0 0.0
          %6528 = vmatprep.subr.mxu0 0.0
          %6529 = vmatpush2.msra.mxu0 0.0
          %6530 = vmatprep.subr.mxu0 0.0
          %6531 = vmatpush2.msra.mxu0 0.0
          %6532 = vmatprep.subr.mxu0 0.0
          %6533 = vmatpush2.msra.mxu0 0.0
          %6534 = vmatprep.subr.mxu0 0.0
          %6535 = vmatpush2.msra.mxu0 0.0
          %6536 = vmatprep.subr.mxu0 0.0
          %6537 = vmatpush2.msra.mxu0 0.0
          %6538 = vmatprep.subr.mxu0 0.0
          %6539 = vmatpush2.msra.mxu0 0.0
          %6540 = vmatprep.subr.mxu0 0.0
          %6541 = vmatpush2.msra.mxu0 0.0
          %6542 = vmatprep.subr.mxu0 0.0
          %6543 = vmatpush2.msra.mxu0 0.0
          %6544 = vmatprep.subr.mxu0 0.0
          %6545 = vmatpush2.msra.mxu0 0.0
          %6546 = vmatprep.subr.mxu0 0.0
          %6547 = vmatpush2.msra.mxu0 0.0
          %6548 = vmatprep.subr.mxu0 0.0
          %6549 = vmatpush2.msra.mxu0 0.0
          %6550 = vmatprep.subr.mxu0 0.0
          %6551 = vmatpush2.msra.mxu0 0.0
          %6552 = vmatprep.subr.mxu0 0.0
          %6553 = vmatpush2.msra.mxu0 0.0
          %6554 = vmatprep.subr.mxu0 0.0
          %6555 = vmatpush2.msra.mxu0 0.0
          %6556 = vmatprep.mubr.f32.mxu0 0.0
          %v6557 = vand.u32 %v4326, 4294901760
          %6558 = vmatmul.mubr.f32.gmra.mxu0 %v6557
          %v6559 = vpop.f32.mrf.mxu0
          %v6560 = vadd.f32 %v6483, %v6559
          %v6561 = vpop.f32.mrf.mxu0
          %6562 = vdwg.mxu0
          %6563 = vmatprep.subr.mxu0 0.0
          %6564 = vmatpush1.msra.mxu0 0.0
          %6565 = vmatprep.subr.mxu0 0.0
          %6566 = vmatpush1.msra.mxu0 0.0
          %6567 = vmatprep.subr.mxu0 0.0
          %6568 = vmatpush1.msra.mxu0 0.0
          %6569 = vmatprep.subr.mxu0 0.0
          %6570 = vmatpush1.msra.mxu0 0.0
          %6571 = vmatprep.subr.mxu0 0.0
          %6572 = vmatpush1.msra.mxu0 0.0
          %6573 = vmatprep.subr.mxu0 0.0
          %6574 = vmatpush1.msra.mxu0 0.0
          %6575 = vmatprep.subr.mxu0 0.0
          %6576 = vmatpush1.msra.mxu0 0.0
          %6577 = vmatprep.subr.mxu0 0.0
          %6578 = vmatpush1.msra.mxu0 0.0
          %6579 = vmatprep.subr.mxu0 0.0
          %6580 = vmatpush1.msra.mxu0 0.0
          %6581 = vmatprep.subr.mxu0 0.0
          %6582 = vmatpush1.msra.mxu0 0.0
          %6583 = vmatprep.subr.mxu0 0.0
          %6584 = vmatpush1.msra.mxu0 0.0
          %6585 = vmatprep.subr.mxu0 0.0
          %6586 = vmatpush1.msra.mxu0 0.0
          %6587 = vmatprep.subr.mxu0 0.0
          %6588 = vmatpush1.msra.mxu0 0.0
          %6589 = vmatprep.subr.mxu0 0.0
          %6590 = vmatpush1.msra.mxu0 0.0
          %6591 = vmatprep.subr.mxu0 0.0
          %v6592 = vand.u32 %v4313, 4294901760
          %6593 = vmatpush1.msra.mxu0 %v6592
          %6594 = vmatprep.subr.mxu0 0.0
          %v6595 = vand.u32 %v4312, 4294901760
          %6596 = vmatpush1.msra.mxu0 %v6595
          %6597 = vmatprep.subr.mxu0 0.0
          %6598 = vmatpush2.msra.mxu0 0.0
          %6599 = vmatprep.subr.mxu0 0.0
          %6600 = vmatpush2.msra.mxu0 0.0
          %6601 = vmatprep.subr.mxu0 0.0
          %6602 = vmatpush2.msra.mxu0 0.0
          %6603 = vmatprep.subr.mxu0 0.0
          %6604 = vmatpush2.msra.mxu0 0.0
          %6605 = vmatprep.subr.mxu0 0.0
          %6606 = vmatpush2.msra.mxu0 0.0
          %6607 = vmatprep.subr.mxu0 0.0
          %6608 = vmatpush2.msra.mxu0 0.0
          %6609 = vmatprep.subr.mxu0 0.0
          %6610 = vmatpush2.msra.mxu0 0.0
          %6611 = vmatprep.subr.mxu0 0.0
          %6612 = vmatpush2.msra.mxu0 0.0
          %6613 = vmatprep.subr.mxu0 0.0
          %6614 = vmatpush2.msra.mxu0 0.0
          %6615 = vmatprep.subr.mxu0 0.0
          %6616 = vmatpush2.msra.mxu0 0.0
          %6617 = vmatprep.subr.mxu0 0.0
          %6618 = vmatpush2.msra.mxu0 0.0
          %6619 = vmatprep.subr.mxu0 0.0
          %6620 = vmatpush2.msra.mxu0 0.0
          %6621 = vmatprep.subr.mxu0 0.0
          %6622 = vmatpush2.msra.mxu0 0.0
          %6623 = vmatprep.subr.mxu0 0.0
          %6624 = vmatpush2.msra.mxu0 0.0
          %6625 = vmatprep.subr.mxu0 0.0
          %6626 = vmatpush2.msra.mxu0 0.0
          %6627 = vmatprep.subr.mxu0 0.0
          %6628 = vmatpush2.msra.mxu0 0.0
          %6629 = vmatprep.mubr.f32.mxu0 0.0
          %v6630 = vand.u32 %v4326, 4294901760
          %6631 = vmatmul.mubr.f32.gmra.mxu0 %v6630
          %v6632 = vpop.f32.mrf.mxu0
          %v6633 = vadd.f32 %v6560, %v6632
          %v6634 = vpop.f32.mrf.mxu0
          %6635 = vdwg.mxu0
          %6636 = vmatprep.subr.mxu0 0.0
          %6637 = vmatpush1.msra.mxu0 0.0
          %6638 = vmatprep.subr.mxu0 0.0
          %6639 = vmatpush1.msra.mxu0 0.0
          %6640 = vmatprep.subr.mxu0 0.0
          %6641 = vmatpush1.msra.mxu0 0.0
          %6642 = vmatprep.subr.mxu0 0.0
          %6643 = vmatpush1.msra.mxu0 0.0
          %6644 = vmatprep.subr.mxu0 0.0
          %6645 = vmatpush1.msra.mxu0 0.0
          %6646 = vmatprep.subr.mxu0 0.0
          %6647 = vmatpush1.msra.mxu0 0.0
          %6648 = vmatprep.subr.mxu0 0.0
          %6649 = vmatpush1.msra.mxu0 0.0
          %6650 = vmatprep.subr.mxu0 0.0
          %6651 = vmatpush1.msra.mxu0 0.0
          %6652 = vmatprep.subr.mxu0 0.0
          %6653 = vmatpush1.msra.mxu0 0.0
          %6654 = vmatprep.subr.mxu0 0.0
          %6655 = vmatpush1.msra.mxu0 0.0
          %6656 = vmatprep.subr.mxu0 0.0
          %6657 = vmatpush1.msra.mxu0 0.0
          %6658 = vmatprep.subr.mxu0 0.0
          %6659 = vmatpush1.msra.mxu0 0.0
          %6660 = vmatprep.subr.mxu0 0.0
          %6661 = vmatpush1.msra.mxu0 0.0
          %6662 = vmatprep.subr.mxu0 0.0
          %6663 = vmatpush1.msra.mxu0 0.0
          %6664 = vmatprep.subr.mxu0 0.0
          %v6665 = vand.u32 %v4315, 4294901760
          %6666 = vmatpush1.msra.mxu0 %v6665
          %6667 = vmatprep.subr.mxu0 0.0
          %v6668 = vand.u32 %v4314, 4294901760
          %6669 = vmatpush1.msra.mxu0 %v6668
          %6670 = vmatprep.subr.mxu0 0.0
          %6671 = vmatpush2.msra.mxu0 0.0
          %6672 = vmatprep.subr.mxu0 0.0
          %6673 = vmatpush2.msra.mxu0 0.0
          %6674 = vmatprep.subr.mxu0 0.0
          %6675 = vmatpush2.msra.mxu0 0.0
          %6676 = vmatprep.subr.mxu0 0.0
          %6677 = vmatpush2.msra.mxu0 0.0
          %6678 = vmatprep.subr.mxu0 0.0
          %6679 = vmatpush2.msra.mxu0 0.0
          %6680 = vmatprep.subr.mxu0 0.0
          %6681 = vmatpush2.msra.mxu0 0.0
          %6682 = vmatprep.subr.mxu0 0.0
          %6683 = vmatpush2.msra.mxu0 0.0
          %6684 = vmatprep.subr.mxu0 0.0
          %6685 = vmatpush2.msra.mxu0 0.0
          %6686 = vmatprep.subr.mxu0 0.0
          %6687 = vmatpush2.msra.mxu0 0.0
          %6688 = vmatprep.subr.mxu0 0.0
          %6689 = vmatpush2.msra.mxu0 0.0
          %6690 = vmatprep.subr.mxu0 0.0
          %6691 = vmatpush2.msra.mxu0 0.0
          %6692 = vmatprep.subr.mxu0 0.0
          %6693 = vmatpush2.msra.mxu0 0.0
          %6694 = vmatprep.subr.mxu0 0.0
          %6695 = vmatpush2.msra.mxu0 0.0
          %6696 = vmatprep.subr.mxu0 0.0
          %6697 = vmatpush2.msra.mxu0 0.0
          %6698 = vmatprep.subr.mxu0 0.0
          %6699 = vmatpush2.msra.mxu0 0.0
          %6700 = vmatprep.subr.mxu0 0.0
          %6701 = vmatpush2.msra.mxu0 0.0
          %6702 = vmatprep.mubr.f32.mxu0 0.0
          %v6703 = vand.u32 %v4326, 4294901760
          %v6704 = vsub.f32 %v4326, %v6703
          %v6705 = vand.u32 %v6704, 4294901760
          %v6706 = vsub.f32 %v6704, %v6705
          %v6707 = vand.u32 %v6706, 4294901760
          %6708 = vmatmul.mubr.f32.gmra.mxu0 %v6707
          %v6709 = vpop.f32.mrf.mxu0
          %v6710 = vadd.f32 0.0, %v6709
          %v6711 = vpop.f32.mrf.mxu0
          %6712 = vdwg.mxu0
          %6713 = vmatprep.subr.mxu0 0.0
          %6714 = vmatpush1.msra.mxu0 0.0
          %6715 = vmatprep.subr.mxu0 0.0
          %6716 = vmatpush1.msra.mxu0 0.0
          %6717 = vmatprep.subr.mxu0 0.0
          %6718 = vmatpush1.msra.mxu0 0.0
          %6719 = vmatprep.subr.mxu0 0.0
          %6720 = vmatpush1.msra.mxu0 0.0
          %6721 = vmatprep.subr.mxu0 0.0
          %6722 = vmatpush1.msra.mxu0 0.0
          %6723 = vmatprep.subr.mxu0 0.0
          %6724 = vmatpush1.msra.mxu0 0.0
          %6725 = vmatprep.subr.mxu0 0.0
          %6726 = vmatpush1.msra.mxu0 0.0
          %6727 = vmatprep.subr.mxu0 0.0
          %6728 = vmatpush1.msra.mxu0 0.0
          %6729 = vmatprep.subr.mxu0 0.0
          %6730 = vmatpush1.msra.mxu0 0.0
          %6731 = vmatprep.subr.mxu0 0.0
          %6732 = vmatpush1.msra.mxu0 0.0
          %6733 = vmatprep.subr.mxu0 0.0
          %6734 = vmatpush1.msra.mxu0 0.0
          %6735 = vmatprep.subr.mxu0 0.0
          %6736 = vmatpush1.msra.mxu0 0.0
          %6737 = vmatprep.subr.mxu0 0.0
          %6738 = vmatpush1.msra.mxu0 0.0
          %6739 = vmatprep.subr.mxu0 0.0
          %6740 = vmatpush1.msra.mxu0 0.0
          %6741 = vmatprep.subr.mxu0 0.0
          %v6742 = vand.u32 %v4315, 4294901760
          %v6743 = vsub.f32 %v4315, %v6742
          %v6744 = vand.u32 %v6743, 4294901760
          %v6745 = vsub.f32 %v6743, %v6744
          %v6746 = vand.u32 %v6745, 4294901760
          %6747 = vmatpush1.msra.mxu0 %v6746
          %6748 = vmatprep.subr.mxu0 0.0
          %v6749 = vand.u32 %v4314, 4294901760
          %v6750 = vsub.f32 %v4314, %v6749
          %v6751 = vand.u32 %v6750, 4294901760
          %v6752 = vsub.f32 %v6750, %v6751
          %v6753 = vand.u32 %v6752, 4294901760
          %6754 = vmatpush1.msra.mxu0 %v6753
          %6755 = vmatprep.subr.mxu0 0.0
          %6756 = vmatpush2.msra.mxu0 0.0
          %6757 = vmatprep.subr.mxu0 0.0
          %6758 = vmatpush2.msra.mxu0 0.0
          %6759 = vmatprep.subr.mxu0 0.0
          %6760 = vmatpush2.msra.mxu0 0.0
          %6761 = vmatprep.subr.mxu0 0.0
          %6762 = vmatpush2.msra.mxu0 0.0
          %6763 = vmatprep.subr.mxu0 0.0
          %6764 = vmatpush2.msra.mxu0 0.0
          %6765 = vmatprep.subr.mxu0 0.0
          %6766 = vmatpush2.msra.mxu0 0.0
          %6767 = vmatprep.subr.mxu0 0.0
          %6768 = vmatpush2.msra.mxu0 0.0
          %6769 = vmatprep.subr.mxu0 0.0
          %6770 = vmatpush2.msra.mxu0 0.0
          %6771 = vmatprep.subr.mxu0 0.0
          %6772 = vmatpush2.msra.mxu0 0.0
          %6773 = vmatprep.subr.mxu0 0.0
          %6774 = vmatpush2.msra.mxu0 0.0
          %6775 = vmatprep.subr.mxu0 0.0
          %6776 = vmatpush2.msra.mxu0 0.0
          %6777 = vmatprep.subr.mxu0 0.0
          %6778 = vmatpush2.msra.mxu0 0.0
          %6779 = vmatprep.subr.mxu0 0.0
          %6780 = vmatpush2.msra.mxu0 0.0
          %6781 = vmatprep.subr.mxu0 0.0
          %6782 = vmatpush2.msra.mxu0 0.0
          %6783 = vmatprep.subr.mxu0 0.0
          %6784 = vmatpush2.msra.mxu0 0.0
          %6785 = vmatprep.subr.mxu0 0.0
          %6786 = vmatpush2.msra.mxu0 0.0
          %6787 = vmatprep.mubr.f32.mxu0 0.0
          %v6788 = vand.u32 %v4326, 4294901760
          %6789 = vmatmul.mubr.f32.gmra.mxu0 %v6788
          %v6790 = vpop.f32.mrf.mxu0
          %v6791 = vadd.f32 %v6710, %v6790
          %v6792 = vpop.f32.mrf.mxu0
          %6793 = vdwg.mxu0
          %6794 = vmatprep.subr.mxu0 0.0
          %6795 = vmatpush1.msra.mxu0 0.0
          %6796 = vmatprep.subr.mxu0 0.0
          %6797 = vmatpush1.msra.mxu0 0.0
          %6798 = vmatprep.subr.mxu0 0.0
          %6799 = vmatpush1.msra.mxu0 0.0
          %6800 = vmatprep.subr.mxu0 0.0
          %6801 = vmatpush1.msra.mxu0 0.0
          %6802 = vmatprep.subr.mxu0 0.0
          %6803 = vmatpush1.msra.mxu0 0.0
          %6804 = vmatprep.subr.mxu0 0.0
          %6805 = vmatpush1.msra.mxu0 0.0
          %6806 = vmatprep.subr.mxu0 0.0
          %6807 = vmatpush1.msra.mxu0 0.0
          %6808 = vmatprep.subr.mxu0 0.0
          %6809 = vmatpush1.msra.mxu0 0.0
          %6810 = vmatprep.subr.mxu0 0.0
          %6811 = vmatpush1.msra.mxu0 0.0
          %6812 = vmatprep.subr.mxu0 0.0
          %6813 = vmatpush1.msra.mxu0 0.0
          %6814 = vmatprep.subr.mxu0 0.0
          %6815 = vmatpush1.msra.mxu0 0.0
          %6816 = vmatprep.subr.mxu0 0.0
          %6817 = vmatpush1.msra.mxu0 0.0
          %6818 = vmatprep.subr.mxu0 0.0
          %6819 = vmatpush1.msra.mxu0 0.0
          %6820 = vmatprep.subr.mxu0 0.0
          %6821 = vmatpush1.msra.mxu0 0.0
          %6822 = vmatprep.subr.mxu0 0.0
          %v6823 = vand.u32 %v4315, 4294901760
          %v6824 = vsub.f32 %v4315, %v6823
          %6825 = vmatpush1.msra.mxu0 %v6824
          %6826 = vmatprep.subr.mxu0 0.0
          %v6827 = vand.u32 %v4314, 4294901760
          %v6828 = vsub.f32 %v4314, %v6827
          %6829 = vmatpush1.msra.mxu0 %v6828
          %6830 = vmatprep.subr.mxu0 0.0
          %6831 = vmatpush2.msra.mxu0 0.0
          %6832 = vmatprep.subr.mxu0 0.0
          %6833 = vmatpush2.msra.mxu0 0.0
          %6834 = vmatprep.subr.mxu0 0.0
          %6835 = vmatpush2.msra.mxu0 0.0
          %6836 = vmatprep.subr.mxu0 0.0
          %6837 = vmatpush2.msra.mxu0 0.0
          %6838 = vmatprep.subr.mxu0 0.0
          %6839 = vmatpush2.msra.mxu0 0.0
          %6840 = vmatprep.subr.mxu0 0.0
          %6841 = vmatpush2.msra.mxu0 0.0
          %6842 = vmatprep.subr.mxu0 0.0
          %6843 = vmatpush2.msra.mxu0 0.0
          %6844 = vmatprep.subr.mxu0 0.0
          %6845 = vmatpush2.msra.mxu0 0.0
          %6846 = vmatprep.subr.mxu0 0.0
          %6847 = vmatpush2.msra.mxu0 0.0
          %6848 = vmatprep.subr.mxu0 0.0
          %6849 = vmatpush2.msra.mxu0 0.0
          %6850 = vmatprep.subr.mxu0 0.0
          %6851 = vmatpush2.msra.mxu0 0.0
          %6852 = vmatprep.subr.mxu0 0.0
          %6853 = vmatpush2.msra.mxu0 0.0
          %6854 = vmatprep.subr.mxu0 0.0
          %6855 = vmatpush2.msra.mxu0 0.0
          %6856 = vmatprep.subr.mxu0 0.0
          %6857 = vmatpush2.msra.mxu0 0.0
          %6858 = vmatprep.subr.mxu0 0.0
          %6859 = vmatpush2.msra.mxu0 0.0
          %6860 = vmatprep.subr.mxu0 0.0
          %6861 = vmatpush2.msra.mxu0 0.0
          %6862 = vmatprep.mubr.f32.mxu0 0.0
          %v6863 = vand.u32 %v4326, 4294901760
          %v6864 = vsub.f32 %v4326, %v6863
          %6865 = vmatmul.mubr.f32.gmra.mxu0 %v6864
          %v6866 = vpop.f32.mrf.mxu0
          %v6867 = vadd.f32 %v6791, %v6866
          %v6868 = vpop.f32.mrf.mxu0
          %6869 = vdwg.mxu0
          %6870 = vmatprep.subr.mxu0 0.0
          %6871 = vmatpush1.msra.mxu0 0.0
          %6872 = vmatprep.subr.mxu0 0.0
          %6873 = vmatpush1.msra.mxu0 0.0
          %6874 = vmatprep.subr.mxu0 0.0
          %6875 = vmatpush1.msra.mxu0 0.0
          %6876 = vmatprep.subr.mxu0 0.0
          %6877 = vmatpush1.msra.mxu0 0.0
          %6878 = vmatprep.subr.mxu0 0.0
          %6879 = vmatpush1.msra.mxu0 0.0
          %6880 = vmatprep.subr.mxu0 0.0
          %6881 = vmatpush1.msra.mxu0 0.0
          %6882 = vmatprep.subr.mxu0 0.0
          %6883 = vmatpush1.msra.mxu0 0.0
          %6884 = vmatprep.subr.mxu0 0.0
          %6885 = vmatpush1.msra.mxu0 0.0
          %6886 = vmatprep.subr.mxu0 0.0
          %6887 = vmatpush1.msra.mxu0 0.0
          %6888 = vmatprep.subr.mxu0 0.0
          %6889 = vmatpush1.msra.mxu0 0.0
          %6890 = vmatprep.subr.mxu0 0.0
          %6891 = vmatpush1.msra.mxu0 0.0
          %6892 = vmatprep.subr.mxu0 0.0
          %6893 = vmatpush1.msra.mxu0 0.0
          %6894 = vmatprep.subr.mxu0 0.0
          %6895 = vmatpush1.msra.mxu0 0.0
          %6896 = vmatprep.subr.mxu0 0.0
          %6897 = vmatpush1.msra.mxu0 0.0
          %6898 = vmatprep.subr.mxu0 0.0
          %v6899 = vand.u32 %v4315, 4294901760
          %6900 = vmatpush1.msra.mxu0 %v6899
          %6901 = vmatprep.subr.mxu0 0.0
          %v6902 = vand.u32 %v4314, 4294901760
          %6903 = vmatpush1.msra.mxu0 %v6902
          %6904 = vmatprep.subr.mxu0 0.0
          %6905 = vmatpush2.msra.mxu0 0.0
          %6906 = vmatprep.subr.mxu0 0.0
          %6907 = vmatpush2.msra.mxu0 0.0
          %6908 = vmatprep.subr.mxu0 0.0
          %6909 = vmatpush2.msra.mxu0 0.0
          %6910 = vmatprep.subr.mxu0 0.0
          %6911 = vmatpush2.msra.mxu0 0.0
          %6912 = vmatprep.subr.mxu0 0.0
          %6913 = vmatpush2.msra.mxu0 0.0
          %6914 = vmatprep.subr.mxu0 0.0
          %6915 = vmatpush2.msra.mxu0 0.0
          %6916 = vmatprep.subr.mxu0 0.0
          %6917 = vmatpush2.msra.mxu0 0.0
          %6918 = vmatprep.subr.mxu0 0.0
          %6919 = vmatpush2.msra.mxu0 0.0
          %6920 = vmatprep.subr.mxu0 0.0
          %6921 = vmatpush2.msra.mxu0 0.0
          %6922 = vmatprep.subr.mxu0 0.0
          %6923 = vmatpush2.msra.mxu0 0.0
          %6924 = vmatprep.subr.mxu0 0.0
          %6925 = vmatpush2.msra.mxu0 0.0
          %6926 = vmatprep.subr.mxu0 0.0
          %6927 = vmatpush2.msra.mxu0 0.0
          %6928 = vmatprep.subr.mxu0 0.0
          %6929 = vmatpush2.msra.mxu0 0.0
          %6930 = vmatprep.subr.mxu0 0.0
          %6931 = vmatpush2.msra.mxu0 0.0
          %6932 = vmatprep.subr.mxu0 0.0
          %6933 = vmatpush2.msra.mxu0 0.0
          %6934 = vmatprep.subr.mxu0 0.0
          %6935 = vmatpush2.msra.mxu0 0.0
          %6936 = vmatprep.mubr.f32.mxu0 0.0
          %v6937 = vand.u32 %v4326, 4294901760
          %v6938 = vsub.f32 %v4326, %v6937
          %v6939 = vand.u32 %v6938, 4294901760
          %6940 = vmatmul.mubr.f32.gmra.mxu0 %v6939
          %v6941 = vpop.f32.mrf.mxu0
          %v6942 = vadd.f32 %v6867, %v6941
          %v6943 = vpop.f32.mrf.mxu0
          %6944 = vdwg.mxu0
          %6945 = vmatprep.subr.mxu0 0.0
          %6946 = vmatpush1.msra.mxu0 0.0
          %6947 = vmatprep.subr.mxu0 0.0
          %6948 = vmatpush1.msra.mxu0 0.0
          %6949 = vmatprep.subr.mxu0 0.0
          %6950 = vmatpush1.msra.mxu0 0.0
          %6951 = vmatprep.subr.mxu0 0.0
          %6952 = vmatpush1.msra.mxu0 0.0
          %6953 = vmatprep.subr.mxu0 0.0
          %6954 = vmatpush1.msra.mxu0 0.0
          %6955 = vmatprep.subr.mxu0 0.0
          %6956 = vmatpush1.msra.mxu0 0.0
          %6957 = vmatprep.subr.mxu0 0.0
          %6958 = vmatpush1.msra.mxu0 0.0
          %6959 = vmatprep.subr.mxu0 0.0
          %6960 = vmatpush1.msra.mxu0 0.0
          %6961 = vmatprep.subr.mxu0 0.0
          %6962 = vmatpush1.msra.mxu0 0.0
          %6963 = vmatprep.subr.mxu0 0.0
          %6964 = vmatpush1.msra.mxu0 0.0
          %6965 = vmatprep.subr.mxu0 0.0
          %6966 = vmatpush1.msra.mxu0 0.0
          %6967 = vmatprep.subr.mxu0 0.0
          %6968 = vmatpush1.msra.mxu0 0.0
          %6969 = vmatprep.subr.mxu0 0.0
          %6970 = vmatpush1.msra.mxu0 0.0
          %6971 = vmatprep.subr.mxu0 0.0
          %6972 = vmatpush1.msra.mxu0 0.0
          %6973 = vmatprep.subr.mxu0 0.0
          %v6974 = vand.u32 %v4315, 4294901760
          %v6975 = vsub.f32 %v4315, %v6974
          %v6976 = vand.u32 %v6975, 4294901760
          %6977 = vmatpush1.msra.mxu0 %v6976
          %6978 = vmatprep.subr.mxu0 0.0
          %v6979 = vand.u32 %v4314, 4294901760
          %v6980 = vsub.f32 %v4314, %v6979
          %v6981 = vand.u32 %v6980, 4294901760
          %6982 = vmatpush1.msra.mxu0 %v6981
          %6983 = vmatprep.subr.mxu0 0.0
          %6984 = vmatpush2.msra.mxu0 0.0
          %6985 = vmatprep.subr.mxu0 0.0
          %6986 = vmatpush2.msra.mxu0 0.0
          %6987 = vmatprep.subr.mxu0 0.0
          %6988 = vmatpush2.msra.mxu0 0.0
          %6989 = vmatprep.subr.mxu0 0.0
          %6990 = vmatpush2.msra.mxu0 0.0
          %6991 = vmatprep.subr.mxu0 0.0
          %6992 = vmatpush2.msra.mxu0 0.0
          %6993 = vmatprep.subr.mxu0 0.0
          %6994 = vmatpush2.msra.mxu0 0.0
          %6995 = vmatprep.subr.mxu0 0.0
          %6996 = vmatpush2.msra.mxu0 0.0
          %6997 = vmatprep.subr.mxu0 0.0
          %6998 = vmatpush2.msra.mxu0 0.0
          %6999 = vmatprep.subr.mxu0 0.0
          %7000 = vmatpush2.msra.mxu0 0.0
          %7001 = vmatprep.subr.mxu0 0.0
          %7002 = vmatpush2.msra.mxu0 0.0
          %7003 = vmatprep.subr.mxu0 0.0
          %7004 = vmatpush2.msra.mxu0 0.0
          %7005 = vmatprep.subr.mxu0 0.0
          %7006 = vmatpush2.msra.mxu0 0.0
          %7007 = vmatprep.subr.mxu0 0.0
          %7008 = vmatpush2.msra.mxu0 0.0
          %7009 = vmatprep.subr.mxu0 0.0
          %7010 = vmatpush2.msra.mxu0 0.0
          %7011 = vmatprep.subr.mxu0 0.0
          %7012 = vmatpush2.msra.mxu0 0.0
          %7013 = vmatprep.subr.mxu0 0.0
          %7014 = vmatpush2.msra.mxu0 0.0
          %7015 = vmatprep.mubr.f32.mxu0 0.0
          %v7016 = vand.u32 %v4326, 4294901760
          %7017 = vmatmul.mubr.f32.gmra.mxu0 %v7016
          %v7018 = vpop.f32.mrf.mxu0
          %v7019 = vadd.f32 %v6942, %v7018
          %v7020 = vpop.f32.mrf.mxu0
          %7021 = vdwg.mxu0
          %7022 = vmatprep.subr.mxu0 0.0
          %7023 = vmatpush1.msra.mxu0 0.0
          %7024 = vmatprep.subr.mxu0 0.0
          %7025 = vmatpush1.msra.mxu0 0.0
          %7026 = vmatprep.subr.mxu0 0.0
          %7027 = vmatpush1.msra.mxu0 0.0
          %7028 = vmatprep.subr.mxu0 0.0
          %7029 = vmatpush1.msra.mxu0 0.0
          %7030 = vmatprep.subr.mxu0 0.0
          %7031 = vmatpush1.msra.mxu0 0.0
          %7032 = vmatprep.subr.mxu0 0.0
          %7033 = vmatpush1.msra.mxu0 0.0
          %7034 = vmatprep.subr.mxu0 0.0
          %7035 = vmatpush1.msra.mxu0 0.0
          %7036 = vmatprep.subr.mxu0 0.0
          %7037 = vmatpush1.msra.mxu0 0.0
          %7038 = vmatprep.subr.mxu0 0.0
          %7039 = vmatpush1.msra.mxu0 0.0
          %7040 = vmatprep.subr.mxu0 0.0
          %7041 = vmatpush1.msra.mxu0 0.0
          %7042 = vmatprep.subr.mxu0 0.0
          %7043 = vmatpush1.msra.mxu0 0.0
          %7044 = vmatprep.subr.mxu0 0.0
          %7045 = vmatpush1.msra.mxu0 0.0
          %7046 = vmatprep.subr.mxu0 0.0
          %7047 = vmatpush1.msra.mxu0 0.0
          %7048 = vmatprep.subr.mxu0 0.0
          %7049 = vmatpush1.msra.mxu0 0.0
          %7050 = vmatprep.subr.mxu0 0.0
          %v7051 = vand.u32 %v4315, 4294901760
          %7052 = vmatpush1.msra.mxu0 %v7051
          %7053 = vmatprep.subr.mxu0 0.0
          %v7054 = vand.u32 %v4314, 4294901760
          %7055 = vmatpush1.msra.mxu0 %v7054
          %7056 = vmatprep.subr.mxu0 0.0
          %7057 = vmatpush2.msra.mxu0 0.0
          %7058 = vmatprep.subr.mxu0 0.0
          %7059 = vmatpush2.msra.mxu0 0.0
          %7060 = vmatprep.subr.mxu0 0.0
          %7061 = vmatpush2.msra.mxu0 0.0
          %7062 = vmatprep.subr.mxu0 0.0
          %7063 = vmatpush2.msra.mxu0 0.0
          %7064 = vmatprep.subr.mxu0 0.0
          %7065 = vmatpush2.msra.mxu0 0.0
          %7066 = vmatprep.subr.mxu0 0.0
          %7067 = vmatpush2.msra.mxu0 0.0
          %7068 = vmatprep.subr.mxu0 0.0
          %7069 = vmatpush2.msra.mxu0 0.0
          %7070 = vmatprep.subr.mxu0 0.0
          %7071 = vmatpush2.msra.mxu0 0.0
          %7072 = vmatprep.subr.mxu0 0.0
          %7073 = vmatpush2.msra.mxu0 0.0
          %7074 = vmatprep.subr.mxu0 0.0
          %7075 = vmatpush2.msra.mxu0 0.0
          %7076 = vmatprep.subr.mxu0 0.0
          %7077 = vmatpush2.msra.mxu0 0.0
          %7078 = vmatprep.subr.mxu0 0.0
          %7079 = vmatpush2.msra.mxu0 0.0
          %7080 = vmatprep.subr.mxu0 0.0
          %7081 = vmatpush2.msra.mxu0 0.0
          %7082 = vmatprep.subr.mxu0 0.0
          %7083 = vmatpush2.msra.mxu0 0.0
          %7084 = vmatprep.subr.mxu0 0.0
          %7085 = vmatpush2.msra.mxu0 0.0
          %7086 = vmatprep.subr.mxu0 0.0
          %7087 = vmatpush2.msra.mxu0 0.0
          %7088 = vmatprep.mubr.f32.mxu0 0.0
          %v7089 = vand.u32 %v4326, 4294901760
          %7090 = vmatmul.mubr.f32.gmra.mxu0 %v7089
          %v7091 = vpop.f32.mrf.mxu0
          %v7092 = vadd.f32 %v7019, %v7091
          %v7093 = vpop.f32.mrf.mxu0
          %7094 = vdwg.mxu0
          %7095 = vmatprep.subr.mxu0 0.0
          %7096 = vmatpush1.msra.mxu0 0.0
          %7097 = vmatprep.subr.mxu0 0.0
          %7098 = vmatpush1.msra.mxu0 0.0
          %7099 = vmatprep.subr.mxu0 0.0
          %7100 = vmatpush1.msra.mxu0 0.0
          %7101 = vmatprep.subr.mxu0 0.0
          %7102 = vmatpush1.msra.mxu0 0.0
          %7103 = vmatprep.subr.mxu0 0.0
          %7104 = vmatpush1.msra.mxu0 0.0
          %7105 = vmatprep.subr.mxu0 0.0
          %7106 = vmatpush1.msra.mxu0 0.0
          %7107 = vmatprep.subr.mxu0 0.0
          %7108 = vmatpush1.msra.mxu0 0.0
          %7109 = vmatprep.subr.mxu0 0.0
          %7110 = vmatpush1.msra.mxu0 0.0
          %7111 = vmatprep.subr.mxu0 0.0
          %7112 = vmatpush1.msra.mxu0 0.0
          %7113 = vmatprep.subr.mxu0 0.0
          %7114 = vmatpush1.msra.mxu0 0.0
          %7115 = vmatprep.subr.mxu0 0.0
          %7116 = vmatpush1.msra.mxu0 0.0
          %7117 = vmatprep.subr.mxu0 0.0
          %7118 = vmatpush1.msra.mxu0 0.0
          %7119 = vmatprep.subr.mxu0 0.0
          %7120 = vmatpush1.msra.mxu0 0.0
          %7121 = vmatprep.subr.mxu0 0.0
          %7122 = vmatpush1.msra.mxu0 0.0
          %7123 = vmatprep.subr.mxu0 0.0
          %v7124 = vand.u32 %v4317, 4294901760
          %7125 = vmatpush1.msra.mxu0 %v7124
          %7126 = vmatprep.subr.mxu0 0.0
          %v7127 = vand.u32 %v4316, 4294901760
          %7128 = vmatpush1.msra.mxu0 %v7127
          %7129 = vmatprep.subr.mxu0 0.0
          %7130 = vmatpush2.msra.mxu0 0.0
          %7131 = vmatprep.subr.mxu0 0.0
          %7132 = vmatpush2.msra.mxu0 0.0
          %7133 = vmatprep.subr.mxu0 0.0
          %7134 = vmatpush2.msra.mxu0 0.0
          %7135 = vmatprep.subr.mxu0 0.0
          %7136 = vmatpush2.msra.mxu0 0.0
          %7137 = vmatprep.subr.mxu0 0.0
          %7138 = vmatpush2.msra.mxu0 0.0
          %7139 = vmatprep.subr.mxu0 0.0
          %7140 = vmatpush2.msra.mxu0 0.0
          %7141 = vmatprep.subr.mxu0 0.0
          %7142 = vmatpush2.msra.mxu0 0.0
          %7143 = vmatprep.subr.mxu0 0.0
          %7144 = vmatpush2.msra.mxu0 0.0
          %7145 = vmatprep.subr.mxu0 0.0
          %7146 = vmatpush2.msra.mxu0 0.0
          %7147 = vmatprep.subr.mxu0 0.0
          %7148 = vmatpush2.msra.mxu0 0.0
          %7149 = vmatprep.subr.mxu0 0.0
          %7150 = vmatpush2.msra.mxu0 0.0
          %7151 = vmatprep.subr.mxu0 0.0
          %7152 = vmatpush2.msra.mxu0 0.0
          %7153 = vmatprep.subr.mxu0 0.0
          %7154 = vmatpush2.msra.mxu0 0.0
          %7155 = vmatprep.subr.mxu0 0.0
          %7156 = vmatpush2.msra.mxu0 0.0
          %7157 = vmatprep.subr.mxu0 0.0
          %7158 = vmatpush2.msra.mxu0 0.0
          %7159 = vmatprep.subr.mxu0 0.0
          %7160 = vmatpush2.msra.mxu0 0.0
          %7161 = vmatprep.mubr.f32.mxu0 0.0
          %v7162 = vand.u32 %v4326, 4294901760
          %v7163 = vsub.f32 %v4326, %v7162
          %v7164 = vand.u32 %v7163, 4294901760
          %v7165 = vsub.f32 %v7163, %v7164
          %v7166 = vand.u32 %v7165, 4294901760
          %7167 = vmatmul.mubr.f32.gmra.mxu0 %v7166
          %v7168 = vpop.f32.mrf.mxu0
          %v7169 = vadd.f32 0.0, %v7168
          %v7170 = vpop.f32.mrf.mxu0
          %7171 = vdwg.mxu0
          %7172 = vmatprep.subr.mxu0 0.0
          %7173 = vmatpush1.msra.mxu0 0.0
          %7174 = vmatprep.subr.mxu0 0.0
          %7175 = vmatpush1.msra.mxu0 0.0
          %7176 = vmatprep.subr.mxu0 0.0
          %7177 = vmatpush1.msra.mxu0 0.0
          %7178 = vmatprep.subr.mxu0 0.0
          %7179 = vmatpush1.msra.mxu0 0.0
          %7180 = vmatprep.subr.mxu0 0.0
          %7181 = vmatpush1.msra.mxu0 0.0
          %7182 = vmatprep.subr.mxu0 0.0
          %7183 = vmatpush1.msra.mxu0 0.0
          %7184 = vmatprep.subr.mxu0 0.0
          %7185 = vmatpush1.msra.mxu0 0.0
          %7186 = vmatprep.subr.mxu0 0.0
          %7187 = vmatpush1.msra.mxu0 0.0
          %7188 = vmatprep.subr.mxu0 0.0
          %7189 = vmatpush1.msra.mxu0 0.0
          %7190 = vmatprep.subr.mxu0 0.0
          %7191 = vmatpush1.msra.mxu0 0.0
          %7192 = vmatprep.subr.mxu0 0.0
          %7193 = vmatpush1.msra.mxu0 0.0
          %7194 = vmatprep.subr.mxu0 0.0
          %7195 = vmatpush1.msra.mxu0 0.0
          %7196 = vmatprep.subr.mxu0 0.0
          %7197 = vmatpush1.msra.mxu0 0.0
          %7198 = vmatprep.subr.mxu0 0.0
          %7199 = vmatpush1.msra.mxu0 0.0
          %7200 = vmatprep.subr.mxu0 0.0
          %v7201 = vand.u32 %v4317, 4294901760
          %v7202 = vsub.f32 %v4317, %v7201
          %v7203 = vand.u32 %v7202, 4294901760
          %v7204 = vsub.f32 %v7202, %v7203
          %v7205 = vand.u32 %v7204, 4294901760
          %7206 = vmatpush1.msra.mxu0 %v7205
          %7207 = vmatprep.subr.mxu0 0.0
          %v7208 = vand.u32 %v4316, 4294901760
          %v7209 = vsub.f32 %v4316, %v7208
          %v7210 = vand.u32 %v7209, 4294901760
          %v7211 = vsub.f32 %v7209, %v7210
          %v7212 = vand.u32 %v7211, 4294901760
          %7213 = vmatpush1.msra.mxu0 %v7212
          %7214 = vmatprep.subr.mxu0 0.0
          %7215 = vmatpush2.msra.mxu0 0.0
          %7216 = vmatprep.subr.mxu0 0.0
          %7217 = vmatpush2.msra.mxu0 0.0
          %7218 = vmatprep.subr.mxu0 0.0
          %7219 = vmatpush2.msra.mxu0 0.0
          %7220 = vmatprep.subr.mxu0 0.0
          %7221 = vmatpush2.msra.mxu0 0.0
          %7222 = vmatprep.subr.mxu0 0.0
          %7223 = vmatpush2.msra.mxu0 0.0
          %7224 = vmatprep.subr.mxu0 0.0
          %7225 = vmatpush2.msra.mxu0 0.0
          %7226 = vmatprep.subr.mxu0 0.0
          %7227 = vmatpush2.msra.mxu0 0.0
          %7228 = vmatprep.subr.mxu0 0.0
          %7229 = vmatpush2.msra.mxu0 0.0
          %7230 = vmatprep.subr.mxu0 0.0
          %7231 = vmatpush2.msra.mxu0 0.0
          %7232 = vmatprep.subr.mxu0 0.0
          %7233 = vmatpush2.msra.mxu0 0.0
          %7234 = vmatprep.subr.mxu0 0.0
          %7235 = vmatpush2.msra.mxu0 0.0
          %7236 = vmatprep.subr.mxu0 0.0
          %7237 = vmatpush2.msra.mxu0 0.0
          %7238 = vmatprep.subr.mxu0 0.0
          %7239 = vmatpush2.msra.mxu0 0.0
          %7240 = vmatprep.subr.mxu0 0.0
          %7241 = vmatpush2.msra.mxu0 0.0
          %7242 = vmatprep.subr.mxu0 0.0
          %7243 = vmatpush2.msra.mxu0 0.0
          %7244 = vmatprep.subr.mxu0 0.0
          %7245 = vmatpush2.msra.mxu0 0.0
          %7246 = vmatprep.mubr.f32.mxu0 0.0
          %v7247 = vand.u32 %v4326, 4294901760
          %7248 = vmatmul.mubr.f32.gmra.mxu0 %v7247
          %v7249 = vpop.f32.mrf.mxu0
          %v7250 = vadd.f32 %v7169, %v7249
          %v7251 = vpop.f32.mrf.mxu0
          %7252 = vdwg.mxu0
          %7253 = vmatprep.subr.mxu0 0.0
          %7254 = vmatpush1.msra.mxu0 0.0
          %7255 = vmatprep.subr.mxu0 0.0
          %7256 = vmatpush1.msra.mxu0 0.0
          %7257 = vmatprep.subr.mxu0 0.0
          %7258 = vmatpush1.msra.mxu0 0.0
          %7259 = vmatprep.subr.mxu0 0.0
          %7260 = vmatpush1.msra.mxu0 0.0
          %7261 = vmatprep.subr.mxu0 0.0
          %7262 = vmatpush1.msra.mxu0 0.0
          %7263 = vmatprep.subr.mxu0 0.0
          %7264 = vmatpush1.msra.mxu0 0.0
          %7265 = vmatprep.subr.mxu0 0.0
          %7266 = vmatpush1.msra.mxu0 0.0
          %7267 = vmatprep.subr.mxu0 0.0
          %7268 = vmatpush1.msra.mxu0 0.0
          %7269 = vmatprep.subr.mxu0 0.0
          %7270 = vmatpush1.msra.mxu0 0.0
          %7271 = vmatprep.subr.mxu0 0.0
          %7272 = vmatpush1.msra.mxu0 0.0
          %7273 = vmatprep.subr.mxu0 0.0
          %7274 = vmatpush1.msra.mxu0 0.0
          %7275 = vmatprep.subr.mxu0 0.0
          %7276 = vmatpush1.msra.mxu0 0.0
          %7277 = vmatprep.subr.mxu0 0.0
          %7278 = vmatpush1.msra.mxu0 0.0
          %7279 = vmatprep.subr.mxu0 0.0
          %7280 = vmatpush1.msra.mxu0 0.0
          %7281 = vmatprep.subr.mxu0 0.0
          %v7282 = vand.u32 %v4317, 4294901760
          %v7283 = vsub.f32 %v4317, %v7282
          %7284 = vmatpush1.msra.mxu0 %v7283
          %7285 = vmatprep.subr.mxu0 0.0
          %v7286 = vand.u32 %v4316, 4294901760
          %v7287 = vsub.f32 %v4316, %v7286
          %7288 = vmatpush1.msra.mxu0 %v7287
          %7289 = vmatprep.subr.mxu0 0.0
          %7290 = vmatpush2.msra.mxu0 0.0
          %7291 = vmatprep.subr.mxu0 0.0
          %7292 = vmatpush2.msra.mxu0 0.0
          %7293 = vmatprep.subr.mxu0 0.0
          %7294 = vmatpush2.msra.mxu0 0.0
          %7295 = vmatprep.subr.mxu0 0.0
          %7296 = vmatpush2.msra.mxu0 0.0
          %7297 = vmatprep.subr.mxu0 0.0
          %7298 = vmatpush2.msra.mxu0 0.0
          %7299 = vmatprep.subr.mxu0 0.0
          %7300 = vmatpush2.msra.mxu0 0.0
          %7301 = vmatprep.subr.mxu0 0.0
          %7302 = vmatpush2.msra.mxu0 0.0
          %7303 = vmatprep.subr.mxu0 0.0
          %7304 = vmatpush2.msra.mxu0 0.0
          %7305 = vmatprep.subr.mxu0 0.0
          %7306 = vmatpush2.msra.mxu0 0.0
          %7307 = vmatprep.subr.mxu0 0.0
          %7308 = vmatpush2.msra.mxu0 0.0
          %7309 = vmatprep.subr.mxu0 0.0
          %7310 = vmatpush2.msra.mxu0 0.0
          %7311 = vmatprep.subr.mxu0 0.0
          %7312 = vmatpush2.msra.mxu0 0.0
          %7313 = vmatprep.subr.mxu0 0.0
          %7314 = vmatpush2.msra.mxu0 0.0
          %7315 = vmatprep.subr.mxu0 0.0
          %7316 = vmatpush2.msra.mxu0 0.0
          %7317 = vmatprep.subr.mxu0 0.0
          %7318 = vmatpush2.msra.mxu0 0.0
          %7319 = vmatprep.subr.mxu0 0.0
          %7320 = vmatpush2.msra.mxu0 0.0
          %7321 = vmatprep.mubr.f32.mxu0 0.0
          %v7322 = vand.u32 %v4326, 4294901760
          %v7323 = vsub.f32 %v4326, %v7322
          %7324 = vmatmul.mubr.f32.gmra.mxu0 %v7323
          %v7325 = vpop.f32.mrf.mxu0
          %v7326 = vadd.f32 %v7250, %v7325
          %v7327 = vpop.f32.mrf.mxu0
          %7328 = vdwg.mxu0
          %7329 = vmatprep.subr.mxu0 0.0
          %7330 = vmatpush1.msra.mxu0 0.0
          %7331 = vmatprep.subr.mxu0 0.0
          %7332 = vmatpush1.msra.mxu0 0.0
          %7333 = vmatprep.subr.mxu0 0.0
          %7334 = vmatpush1.msra.mxu0 0.0
          %7335 = vmatprep.subr.mxu0 0.0
          %7336 = vmatpush1.msra.mxu0 0.0
          %7337 = vmatprep.subr.mxu0 0.0
          %7338 = vmatpush1.msra.mxu0 0.0
          %7339 = vmatprep.subr.mxu0 0.0
          %7340 = vmatpush1.msra.mxu0 0.0
          %7341 = vmatprep.subr.mxu0 0.0
          %7342 = vmatpush1.msra.mxu0 0.0
          %7343 = vmatprep.subr.mxu0 0.0
          %7344 = vmatpush1.msra.mxu0 0.0
          %7345 = vmatprep.subr.mxu0 0.0
          %7346 = vmatpush1.msra.mxu0 0.0
          %7347 = vmatprep.subr.mxu0 0.0
          %7348 = vmatpush1.msra.mxu0 0.0
          %7349 = vmatprep.subr.mxu0 0.0
          %7350 = vmatpush1.msra.mxu0 0.0
          %7351 = vmatprep.subr.mxu0 0.0
          %7352 = vmatpush1.msra.mxu0 0.0
          %7353 = vmatprep.subr.mxu0 0.0
          %7354 = vmatpush1.msra.mxu0 0.0
          %7355 = vmatprep.subr.mxu0 0.0
          %7356 = vmatpush1.msra.mxu0 0.0
          %7357 = vmatprep.subr.mxu0 0.0
          %v7358 = vand.u32 %v4317, 4294901760
          %7359 = vmatpush1.msra.mxu0 %v7358
          %7360 = vmatprep.subr.mxu0 0.0
          %v7361 = vand.u32 %v4316, 4294901760
          %7362 = vmatpush1.msra.mxu0 %v7361
          %7363 = vmatprep.subr.mxu0 0.0
          %7364 = vmatpush2.msra.mxu0 0.0
          %7365 = vmatprep.subr.mxu0 0.0
          %7366 = vmatpush2.msra.mxu0 0.0
          %7367 = vmatprep.subr.mxu0 0.0
          %7368 = vmatpush2.msra.mxu0 0.0
          %7369 = vmatprep.subr.mxu0 0.0
          %7370 = vmatpush2.msra.mxu0 0.0
          %7371 = vmatprep.subr.mxu0 0.0
          %7372 = vmatpush2.msra.mxu0 0.0
          %7373 = vmatprep.subr.mxu0 0.0
          %7374 = vmatpush2.msra.mxu0 0.0
          %7375 = vmatprep.subr.mxu0 0.0
          %7376 = vmatpush2.msra.mxu0 0.0
          %7377 = vmatprep.subr.mxu0 0.0
          %7378 = vmatpush2.msra.mxu0 0.0
          %7379 = vmatprep.subr.mxu0 0.0
          %7380 = vmatpush2.msra.mxu0 0.0
          %7381 = vmatprep.subr.mxu0 0.0
          %7382 = vmatpush2.msra.mxu0 0.0
          %7383 = vmatprep.subr.mxu0 0.0
          %7384 = vmatpush2.msra.mxu0 0.0
          %7385 = vmatprep.subr.mxu0 0.0
          %7386 = vmatpush2.msra.mxu0 0.0
          %7387 = vmatprep.subr.mxu0 0.0
          %7388 = vmatpush2.msra.mxu0 0.0
          %7389 = vmatprep.subr.mxu0 0.0
          %7390 = vmatpush2.msra.mxu0 0.0
          %7391 = vmatprep.subr.mxu0 0.0
          %7392 = vmatpush2.msra.mxu0 0.0
          %7393 = vmatprep.subr.mxu0 0.0
          %7394 = vmatpush2.msra.mxu0 0.0
          %7395 = vmatprep.mubr.f32.mxu0 0.0
          %v7396 = vand.u32 %v4326, 4294901760
          %v7397 = vsub.f32 %v4326, %v7396
          %v7398 = vand.u32 %v7397, 4294901760
          %7399 = vmatmul.mubr.f32.gmra.mxu0 %v7398
          %v7400 = vpop.f32.mrf.mxu0
          %v7401 = vadd.f32 %v7326, %v7400
          %v7402 = vpop.f32.mrf.mxu0
          %7403 = vdwg.mxu0
          %7404 = vmatprep.subr.mxu0 0.0
          %7405 = vmatpush1.msra.mxu0 0.0
          %7406 = vmatprep.subr.mxu0 0.0
          %7407 = vmatpush1.msra.mxu0 0.0
          %7408 = vmatprep.subr.mxu0 0.0
          %7409 = vmatpush1.msra.mxu0 0.0
          %7410 = vmatprep.subr.mxu0 0.0
          %7411 = vmatpush1.msra.mxu0 0.0
          %7412 = vmatprep.subr.mxu0 0.0
          %7413 = vmatpush1.msra.mxu0 0.0
          %7414 = vmatprep.subr.mxu0 0.0
          %7415 = vmatpush1.msra.mxu0 0.0
          %7416 = vmatprep.subr.mxu0 0.0
          %7417 = vmatpush1.msra.mxu0 0.0
          %7418 = vmatprep.subr.mxu0 0.0
          %7419 = vmatpush1.msra.mxu0 0.0
          %7420 = vmatprep.subr.mxu0 0.0
          %7421 = vmatpush1.msra.mxu0 0.0
          %7422 = vmatprep.subr.mxu0 0.0
          %7423 = vmatpush1.msra.mxu0 0.0
          %7424 = vmatprep.subr.mxu0 0.0
          %7425 = vmatpush1.msra.mxu0 0.0
          %7426 = vmatprep.subr.mxu0 0.0
          %7427 = vmatpush1.msra.mxu0 0.0
          %7428 = vmatprep.subr.mxu0 0.0
          %7429 = vmatpush1.msra.mxu0 0.0
          %7430 = vmatprep.subr.mxu0 0.0
          %7431 = vmatpush1.msra.mxu0 0.0
          %7432 = vmatprep.subr.mxu0 0.0
          %v7433 = vand.u32 %v4317, 4294901760
          %v7434 = vsub.f32 %v4317, %v7433
          %v7435 = vand.u32 %v7434, 4294901760
          %7436 = vmatpush1.msra.mxu0 %v7435
          %7437 = vmatprep.subr.mxu0 0.0
          %v7438 = vand.u32 %v4316, 4294901760
          %v7439 = vsub.f32 %v4316, %v7438
          %v7440 = vand.u32 %v7439, 4294901760
          %7441 = vmatpush1.msra.mxu0 %v7440
          %7442 = vmatprep.subr.mxu0 0.0
          %7443 = vmatpush2.msra.mxu0 0.0
          %7444 = vmatprep.subr.mxu0 0.0
          %7445 = vmatpush2.msra.mxu0 0.0
          %7446 = vmatprep.subr.mxu0 0.0
          %7447 = vmatpush2.msra.mxu0 0.0
          %7448 = vmatprep.subr.mxu0 0.0
          %7449 = vmatpush2.msra.mxu0 0.0
          %7450 = vmatprep.subr.mxu0 0.0
          %7451 = vmatpush2.msra.mxu0 0.0
          %7452 = vmatprep.subr.mxu0 0.0
          %7453 = vmatpush2.msra.mxu0 0.0
          %7454 = vmatprep.subr.mxu0 0.0
          %7455 = vmatpush2.msra.mxu0 0.0
          %7456 = vmatprep.subr.mxu0 0.0
          %7457 = vmatpush2.msra.mxu0 0.0
          %7458 = vmatprep.subr.mxu0 0.0
          %7459 = vmatpush2.msra.mxu0 0.0
          %7460 = vmatprep.subr.mxu0 0.0
          %7461 = vmatpush2.msra.mxu0 0.0
          %7462 = vmatprep.subr.mxu0 0.0
          %7463 = vmatpush2.msra.mxu0 0.0
          %7464 = vmatprep.subr.mxu0 0.0
          %7465 = vmatpush2.msra.mxu0 0.0
          %7466 = vmatprep.subr.mxu0 0.0
          %7467 = vmatpush2.msra.mxu0 0.0
          %7468 = vmatprep.subr.mxu0 0.0
          %7469 = vmatpush2.msra.mxu0 0.0
          %7470 = vmatprep.subr.mxu0 0.0
          %7471 = vmatpush2.msra.mxu0 0.0
          %7472 = vmatprep.subr.mxu0 0.0
          %7473 = vmatpush2.msra.mxu0 0.0
          %7474 = vmatprep.mubr.f32.mxu0 0.0
          %v7475 = vand.u32 %v4326, 4294901760
          %7476 = vmatmul.mubr.f32.gmra.mxu0 %v7475
          %v7477 = vpop.f32.mrf.mxu0
          %v7478 = vadd.f32 %v7401, %v7477
          %v7479 = vpop.f32.mrf.mxu0
          %7480 = vdwg.mxu0
          %7481 = vmatprep.subr.mxu0 0.0
          %7482 = vmatpush1.msra.mxu0 0.0
          %7483 = vmatprep.subr.mxu0 0.0
          %7484 = vmatpush1.msra.mxu0 0.0
          %7485 = vmatprep.subr.mxu0 0.0
          %7486 = vmatpush1.msra.mxu0 0.0
          %7487 = vmatprep.subr.mxu0 0.0
          %7488 = vmatpush1.msra.mxu0 0.0
          %7489 = vmatprep.subr.mxu0 0.0
          %7490 = vmatpush1.msra.mxu0 0.0
          %7491 = vmatprep.subr.mxu0 0.0
          %7492 = vmatpush1.msra.mxu0 0.0
          %7493 = vmatprep.subr.mxu0 0.0
          %7494 = vmatpush1.msra.mxu0 0.0
          %7495 = vmatprep.subr.mxu0 0.0
          %7496 = vmatpush1.msra.mxu0 0.0
          %7497 = vmatprep.subr.mxu0 0.0
          %7498 = vmatpush1.msra.mxu0 0.0
          %7499 = vmatprep.subr.mxu0 0.0
          %7500 = vmatpush1.msra.mxu0 0.0
          %7501 = vmatprep.subr.mxu0 0.0
          %7502 = vmatpush1.msra.mxu0 0.0
          %7503 = vmatprep.subr.mxu0 0.0
          %7504 = vmatpush1.msra.mxu0 0.0
          %7505 = vmatprep.subr.mxu0 0.0
          %7506 = vmatpush1.msra.mxu0 0.0
          %7507 = vmatprep.subr.mxu0 0.0
          %7508 = vmatpush1.msra.mxu0 0.0
          %7509 = vmatprep.subr.mxu0 0.0
          %v7510 = vand.u32 %v4317, 4294901760
          %7511 = vmatpush1.msra.mxu0 %v7510
          %7512 = vmatprep.subr.mxu0 0.0
          %v7513 = vand.u32 %v4316, 4294901760
          %7514 = vmatpush1.msra.mxu0 %v7513
          %7515 = vmatprep.subr.mxu0 0.0
          %7516 = vmatpush2.msra.mxu0 0.0
          %7517 = vmatprep.subr.mxu0 0.0
          %7518 = vmatpush2.msra.mxu0 0.0
          %7519 = vmatprep.subr.mxu0 0.0
          %7520 = vmatpush2.msra.mxu0 0.0
          %7521 = vmatprep.subr.mxu0 0.0
          %7522 = vmatpush2.msra.mxu0 0.0
          %7523 = vmatprep.subr.mxu0 0.0
          %7524 = vmatpush2.msra.mxu0 0.0
          %7525 = vmatprep.subr.mxu0 0.0
          %7526 = vmatpush2.msra.mxu0 0.0
          %7527 = vmatprep.subr.mxu0 0.0
          %7528 = vmatpush2.msra.mxu0 0.0
          %7529 = vmatprep.subr.mxu0 0.0
          %7530 = vmatpush2.msra.mxu0 0.0
          %7531 = vmatprep.subr.mxu0 0.0
          %7532 = vmatpush2.msra.mxu0 0.0
          %7533 = vmatprep.subr.mxu0 0.0
          %7534 = vmatpush2.msra.mxu0 0.0
          %7535 = vmatprep.subr.mxu0 0.0
          %7536 = vmatpush2.msra.mxu0 0.0
          %7537 = vmatprep.subr.mxu0 0.0
          %7538 = vmatpush2.msra.mxu0 0.0
          %7539 = vmatprep.subr.mxu0 0.0
          %7540 = vmatpush2.msra.mxu0 0.0
          %7541 = vmatprep.subr.mxu0 0.0
          %7542 = vmatpush2.msra.mxu0 0.0
          %7543 = vmatprep.subr.mxu0 0.0
          %7544 = vmatpush2.msra.mxu0 0.0
          %7545 = vmatprep.subr.mxu0 0.0
          %7546 = vmatpush2.msra.mxu0 0.0
          %7547 = vmatprep.mubr.f32.mxu0 0.0
          %v7548 = vand.u32 %v4326, 4294901760
          %7549 = vmatmul.mubr.f32.gmra.mxu0 %v7548
          %v7550 = vpop.f32.mrf.mxu0
          %v7551 = vadd.f32 %v7478, %v7550
          %v7552 = vpop.f32.mrf.mxu0
          %7553 = vdwg.mxu0
          %7554 = vmatprep.subr.mxu0 0.0
          %7555 = vmatpush1.msra.mxu0 0.0
          %7556 = vmatprep.subr.mxu0 0.0
          %7557 = vmatpush1.msra.mxu0 0.0
          %7558 = vmatprep.subr.mxu0 0.0
          %7559 = vmatpush1.msra.mxu0 0.0
          %7560 = vmatprep.subr.mxu0 0.0
          %7561 = vmatpush1.msra.mxu0 0.0
          %7562 = vmatprep.subr.mxu0 0.0
          %7563 = vmatpush1.msra.mxu0 0.0
          %7564 = vmatprep.subr.mxu0 0.0
          %7565 = vmatpush1.msra.mxu0 0.0
          %7566 = vmatprep.subr.mxu0 0.0
          %7567 = vmatpush1.msra.mxu0 0.0
          %7568 = vmatprep.subr.mxu0 0.0
          %7569 = vmatpush1.msra.mxu0 0.0
          %7570 = vmatprep.subr.mxu0 0.0
          %7571 = vmatpush1.msra.mxu0 0.0
          %7572 = vmatprep.subr.mxu0 0.0
          %7573 = vmatpush1.msra.mxu0 0.0
          %7574 = vmatprep.subr.mxu0 0.0
          %7575 = vmatpush1.msra.mxu0 0.0
          %7576 = vmatprep.subr.mxu0 0.0
          %7577 = vmatpush1.msra.mxu0 0.0
          %7578 = vmatprep.subr.mxu0 0.0
          %7579 = vmatpush1.msra.mxu0 0.0
          %7580 = vmatprep.subr.mxu0 0.0
          %7581 = vmatpush1.msra.mxu0 0.0
          %7582 = vmatprep.subr.mxu0 0.0
          %v7583 = vand.u32 %v4319, 4294901760
          %7584 = vmatpush1.msra.mxu0 %v7583
          %7585 = vmatprep.subr.mxu0 0.0
          %v7586 = vand.u32 %v4318, 4294901760
          %7587 = vmatpush1.msra.mxu0 %v7586
          %7588 = vmatprep.subr.mxu0 0.0
          %7589 = vmatpush2.msra.mxu0 0.0
          %7590 = vmatprep.subr.mxu0 0.0
          %7591 = vmatpush2.msra.mxu0 0.0
          %7592 = vmatprep.subr.mxu0 0.0
          %7593 = vmatpush2.msra.mxu0 0.0
          %7594 = vmatprep.subr.mxu0 0.0
          %7595 = vmatpush2.msra.mxu0 0.0
          %7596 = vmatprep.subr.mxu0 0.0
          %7597 = vmatpush2.msra.mxu0 0.0
          %7598 = vmatprep.subr.mxu0 0.0
          %7599 = vmatpush2.msra.mxu0 0.0
          %7600 = vmatprep.subr.mxu0 0.0
          %7601 = vmatpush2.msra.mxu0 0.0
          %7602 = vmatprep.subr.mxu0 0.0
          %7603 = vmatpush2.msra.mxu0 0.0
          %7604 = vmatprep.subr.mxu0 0.0
          %7605 = vmatpush2.msra.mxu0 0.0
          %7606 = vmatprep.subr.mxu0 0.0
          %7607 = vmatpush2.msra.mxu0 0.0
          %7608 = vmatprep.subr.mxu0 0.0
          %7609 = vmatpush2.msra.mxu0 0.0
          %7610 = vmatprep.subr.mxu0 0.0
          %7611 = vmatpush2.msra.mxu0 0.0
          %7612 = vmatprep.subr.mxu0 0.0
          %7613 = vmatpush2.msra.mxu0 0.0
          %7614 = vmatprep.subr.mxu0 0.0
          %7615 = vmatpush2.msra.mxu0 0.0
          %7616 = vmatprep.subr.mxu0 0.0
          %7617 = vmatpush2.msra.mxu0 0.0
          %7618 = vmatprep.subr.mxu0 0.0
          %7619 = vmatpush2.msra.mxu0 0.0
          %7620 = vmatprep.mubr.f32.mxu0 0.0
          %v7621 = vand.u32 %v4326, 4294901760
          %v7622 = vsub.f32 %v4326, %v7621
          %v7623 = vand.u32 %v7622, 4294901760
          %v7624 = vsub.f32 %v7622, %v7623
          %v7625 = vand.u32 %v7624, 4294901760
          %7626 = vmatmul.mubr.f32.gmra.mxu0 %v7625
          %v7627 = vpop.f32.mrf.mxu0
          %v7628 = vadd.f32 0.0, %v7627
          %v7629 = vpop.f32.mrf.mxu0
          %7630 = vdwg.mxu0
          %7631 = vmatprep.subr.mxu0 0.0
          %7632 = vmatpush1.msra.mxu0 0.0
          %7633 = vmatprep.subr.mxu0 0.0
          %7634 = vmatpush1.msra.mxu0 0.0
          %7635 = vmatprep.subr.mxu0 0.0
          %7636 = vmatpush1.msra.mxu0 0.0
          %7637 = vmatprep.subr.mxu0 0.0
          %7638 = vmatpush1.msra.mxu0 0.0
          %7639 = vmatprep.subr.mxu0 0.0
          %7640 = vmatpush1.msra.mxu0 0.0
          %7641 = vmatprep.subr.mxu0 0.0
          %7642 = vmatpush1.msra.mxu0 0.0
          %7643 = vmatprep.subr.mxu0 0.0
          %7644 = vmatpush1.msra.mxu0 0.0
          %7645 = vmatprep.subr.mxu0 0.0
          %7646 = vmatpush1.msra.mxu0 0.0
          %7647 = vmatprep.subr.mxu0 0.0
          %7648 = vmatpush1.msra.mxu0 0.0
          %7649 = vmatprep.subr.mxu0 0.0
          %7650 = vmatpush1.msra.mxu0 0.0
          %7651 = vmatprep.subr.mxu0 0.0
          %7652 = vmatpush1.msra.mxu0 0.0
          %7653 = vmatprep.subr.mxu0 0.0
          %7654 = vmatpush1.msra.mxu0 0.0
          %7655 = vmatprep.subr.mxu0 0.0
          %7656 = vmatpush1.msra.mxu0 0.0
          %7657 = vmatprep.subr.mxu0 0.0
          %7658 = vmatpush1.msra.mxu0 0.0
          %7659 = vmatprep.subr.mxu0 0.0
          %v7660 = vand.u32 %v4319, 4294901760
          %v7661 = vsub.f32 %v4319, %v7660
          %v7662 = vand.u32 %v7661, 4294901760
          %v7663 = vsub.f32 %v7661, %v7662
          %v7664 = vand.u32 %v7663, 4294901760
          %7665 = vmatpush1.msra.mxu0 %v7664
          %7666 = vmatprep.subr.mxu0 0.0
          %v7667 = vand.u32 %v4318, 4294901760
          %v7668 = vsub.f32 %v4318, %v7667
          %v7669 = vand.u32 %v7668, 4294901760
          %v7670 = vsub.f32 %v7668, %v7669
          %v7671 = vand.u32 %v7670, 4294901760
          %7672 = vmatpush1.msra.mxu0 %v7671
          %7673 = vmatprep.subr.mxu0 0.0
          %7674 = vmatpush2.msra.mxu0 0.0
          %7675 = vmatprep.subr.mxu0 0.0
          %7676 = vmatpush2.msra.mxu0 0.0
          %7677 = vmatprep.subr.mxu0 0.0
          %7678 = vmatpush2.msra.mxu0 0.0
          %7679 = vmatprep.subr.mxu0 0.0
          %7680 = vmatpush2.msra.mxu0 0.0
          %7681 = vmatprep.subr.mxu0 0.0
          %7682 = vmatpush2.msra.mxu0 0.0
          %7683 = vmatprep.subr.mxu0 0.0
          %7684 = vmatpush2.msra.mxu0 0.0
          %7685 = vmatprep.subr.mxu0 0.0
          %7686 = vmatpush2.msra.mxu0 0.0
          %7687 = vmatprep.subr.mxu0 0.0
          %7688 = vmatpush2.msra.mxu0 0.0
          %7689 = vmatprep.subr.mxu0 0.0
          %7690 = vmatpush2.msra.mxu0 0.0
          %7691 = vmatprep.subr.mxu0 0.0
          %7692 = vmatpush2.msra.mxu0 0.0
          %7693 = vmatprep.subr.mxu0 0.0
          %7694 = vmatpush2.msra.mxu0 0.0
          %7695 = vmatprep.subr.mxu0 0.0
          %7696 = vmatpush2.msra.mxu0 0.0
          %7697 = vmatprep.subr.mxu0 0.0
          %7698 = vmatpush2.msra.mxu0 0.0
          %7699 = vmatprep.subr.mxu0 0.0
          %7700 = vmatpush2.msra.mxu0 0.0
          %7701 = vmatprep.subr.mxu0 0.0
          %7702 = vmatpush2.msra.mxu0 0.0
          %7703 = vmatprep.subr.mxu0 0.0
          %7704 = vmatpush2.msra.mxu0 0.0
          %7705 = vmatprep.mubr.f32.mxu0 0.0
          %v7706 = vand.u32 %v4326, 4294901760
          %7707 = vmatmul.mubr.f32.gmra.mxu0 %v7706
          %v7708 = vpop.f32.mrf.mxu0
          %v7709 = vadd.f32 %v7628, %v7708
          %v7710 = vpop.f32.mrf.mxu0
          %7711 = vdwg.mxu0
          %7712 = vmatprep.subr.mxu0 0.0
          %7713 = vmatpush1.msra.mxu0 0.0
          %7714 = vmatprep.subr.mxu0 0.0
          %7715 = vmatpush1.msra.mxu0 0.0
          %7716 = vmatprep.subr.mxu0 0.0
          %7717 = vmatpush1.msra.mxu0 0.0
          %7718 = vmatprep.subr.mxu0 0.0
          %7719 = vmatpush1.msra.mxu0 0.0
          %7720 = vmatprep.subr.mxu0 0.0
          %7721 = vmatpush1.msra.mxu0 0.0
          %7722 = vmatprep.subr.mxu0 0.0
          %7723 = vmatpush1.msra.mxu0 0.0
          %7724 = vmatprep.subr.mxu0 0.0
          %7725 = vmatpush1.msra.mxu0 0.0
          %7726 = vmatprep.subr.mxu0 0.0
          %7727 = vmatpush1.msra.mxu0 0.0
          %7728 = vmatprep.subr.mxu0 0.0
          %7729 = vmatpush1.msra.mxu0 0.0
          %7730 = vmatprep.subr.mxu0 0.0
          %7731 = vmatpush1.msra.mxu0 0.0
          %7732 = vmatprep.subr.mxu0 0.0
          %7733 = vmatpush1.msra.mxu0 0.0
          %7734 = vmatprep.subr.mxu0 0.0
          %7735 = vmatpush1.msra.mxu0 0.0
          %7736 = vmatprep.subr.mxu0 0.0
          %7737 = vmatpush1.msra.mxu0 0.0
          %7738 = vmatprep.subr.mxu0 0.0
          %7739 = vmatpush1.msra.mxu0 0.0
          %7740 = vmatprep.subr.mxu0 0.0
          %v7741 = vand.u32 %v4319, 4294901760
          %v7742 = vsub.f32 %v4319, %v7741
          %7743 = vmatpush1.msra.mxu0 %v7742
          %7744 = vmatprep.subr.mxu0 0.0
          %v7745 = vand.u32 %v4318, 4294901760
          %v7746 = vsub.f32 %v4318, %v7745
          %7747 = vmatpush1.msra.mxu0 %v7746
          %7748 = vmatprep.subr.mxu0 0.0
          %7749 = vmatpush2.msra.mxu0 0.0
          %7750 = vmatprep.subr.mxu0 0.0
          %7751 = vmatpush2.msra.mxu0 0.0
          %7752 = vmatprep.subr.mxu0 0.0
          %7753 = vmatpush2.msra.mxu0 0.0
          %7754 = vmatprep.subr.mxu0 0.0
          %7755 = vmatpush2.msra.mxu0 0.0
          %7756 = vmatprep.subr.mxu0 0.0
          %7757 = vmatpush2.msra.mxu0 0.0
          %7758 = vmatprep.subr.mxu0 0.0
          %7759 = vmatpush2.msra.mxu0 0.0
          %7760 = vmatprep.subr.mxu0 0.0
          %7761 = vmatpush2.msra.mxu0 0.0
          %7762 = vmatprep.subr.mxu0 0.0
          %7763 = vmatpush2.msra.mxu0 0.0
          %7764 = vmatprep.subr.mxu0 0.0
          %7765 = vmatpush2.msra.mxu0 0.0
          %7766 = vmatprep.subr.mxu0 0.0
          %7767 = vmatpush2.msra.mxu0 0.0
          %7768 = vmatprep.subr.mxu0 0.0
          %7769 = vmatpush2.msra.mxu0 0.0
          %7770 = vmatprep.subr.mxu0 0.0
          %7771 = vmatpush2.msra.mxu0 0.0
          %7772 = vmatprep.subr.mxu0 0.0
          %7773 = vmatpush2.msra.mxu0 0.0
          %7774 = vmatprep.subr.mxu0 0.0
          %7775 = vmatpush2.msra.mxu0 0.0
          %7776 = vmatprep.subr.mxu0 0.0
          %7777 = vmatpush2.msra.mxu0 0.0
          %7778 = vmatprep.subr.mxu0 0.0
          %7779 = vmatpush2.msra.mxu0 0.0
          %7780 = vmatprep.mubr.f32.mxu0 0.0
          %v7781 = vand.u32 %v4326, 4294901760
          %v7782 = vsub.f32 %v4326, %v7781
          %7783 = vmatmul.mubr.f32.gmra.mxu0 %v7782
          %v7784 = vpop.f32.mrf.mxu0
          %v7785 = vadd.f32 %v7709, %v7784
          %v7786 = vpop.f32.mrf.mxu0
          %7787 = vdwg.mxu0
          %7788 = vmatprep.subr.mxu0 0.0
          %7789 = vmatpush1.msra.mxu0 0.0
          %7790 = vmatprep.subr.mxu0 0.0
          %7791 = vmatpush1.msra.mxu0 0.0
          %7792 = vmatprep.subr.mxu0 0.0
          %7793 = vmatpush1.msra.mxu0 0.0
          %7794 = vmatprep.subr.mxu0 0.0
          %7795 = vmatpush1.msra.mxu0 0.0
          %7796 = vmatprep.subr.mxu0 0.0
          %7797 = vmatpush1.msra.mxu0 0.0
          %7798 = vmatprep.subr.mxu0 0.0
          %7799 = vmatpush1.msra.mxu0 0.0
          %7800 = vmatprep.subr.mxu0 0.0
          %7801 = vmatpush1.msra.mxu0 0.0
          %7802 = vmatprep.subr.mxu0 0.0
          %7803 = vmatpush1.msra.mxu0 0.0
          %7804 = vmatprep.subr.mxu0 0.0
          %7805 = vmatpush1.msra.mxu0 0.0
          %7806 = vmatprep.subr.mxu0 0.0
          %7807 = vmatpush1.msra.mxu0 0.0
          %7808 = vmatprep.subr.mxu0 0.0
          %7809 = vmatpush1.msra.mxu0 0.0
          %7810 = vmatprep.subr.mxu0 0.0
          %7811 = vmatpush1.msra.mxu0 0.0
          %7812 = vmatprep.subr.mxu0 0.0
          %7813 = vmatpush1.msra.mxu0 0.0
          %7814 = vmatprep.subr.mxu0 0.0
          %7815 = vmatpush1.msra.mxu0 0.0
          %7816 = vmatprep.subr.mxu0 0.0
          %v7817 = vand.u32 %v4319, 4294901760
          %7818 = vmatpush1.msra.mxu0 %v7817
          %7819 = vmatprep.subr.mxu0 0.0
          %v7820 = vand.u32 %v4318, 4294901760
          %7821 = vmatpush1.msra.mxu0 %v7820
          %7822 = vmatprep.subr.mxu0 0.0
          %7823 = vmatpush2.msra.mxu0 0.0
          %7824 = vmatprep.subr.mxu0 0.0
          %7825 = vmatpush2.msra.mxu0 0.0
          %7826 = vmatprep.subr.mxu0 0.0
          %7827 = vmatpush2.msra.mxu0 0.0
          %7828 = vmatprep.subr.mxu0 0.0
          %7829 = vmatpush2.msra.mxu0 0.0
          %7830 = vmatprep.subr.mxu0 0.0
          %7831 = vmatpush2.msra.mxu0 0.0
          %7832 = vmatprep.subr.mxu0 0.0
          %7833 = vmatpush2.msra.mxu0 0.0
          %7834 = vmatprep.subr.mxu0 0.0
          %7835 = vmatpush2.msra.mxu0 0.0
          %7836 = vmatprep.subr.mxu0 0.0
          %7837 = vmatpush2.msra.mxu0 0.0
          %7838 = vmatprep.subr.mxu0 0.0
          %7839 = vmatpush2.msra.mxu0 0.0
          %7840 = vmatprep.subr.mxu0 0.0
          %7841 = vmatpush2.msra.mxu0 0.0
          %7842 = vmatprep.subr.mxu0 0.0
          %7843 = vmatpush2.msra.mxu0 0.0
          %7844 = vmatprep.subr.mxu0 0.0
          %7845 = vmatpush2.msra.mxu0 0.0
          %7846 = vmatprep.subr.mxu0 0.0
          %7847 = vmatpush2.msra.mxu0 0.0
          %7848 = vmatprep.subr.mxu0 0.0
          %7849 = vmatpush2.msra.mxu0 0.0
          %7850 = vmatprep.subr.mxu0 0.0
          %7851 = vmatpush2.msra.mxu0 0.0
          %7852 = vmatprep.subr.mxu0 0.0
          %7853 = vmatpush2.msra.mxu0 0.0
          %7854 = vmatprep.mubr.f32.mxu0 0.0
          %v7855 = vand.u32 %v4326, 4294901760
          %v7856 = vsub.f32 %v4326, %v7855
          %v7857 = vand.u32 %v7856, 4294901760
          %7858 = vmatmul.mubr.f32.gmra.mxu0 %v7857
          %v7859 = vpop.f32.mrf.mxu0
          %v7860 = vadd.f32 %v7785, %v7859
          %v7861 = vpop.f32.mrf.mxu0
          %7862 = vdwg.mxu0
          %7863 = vmatprep.subr.mxu0 0.0
          %7864 = vmatpush1.msra.mxu0 0.0
          %7865 = vmatprep.subr.mxu0 0.0
          %7866 = vmatpush1.msra.mxu0 0.0
          %7867 = vmatprep.subr.mxu0 0.0
          %7868 = vmatpush1.msra.mxu0 0.0
          %7869 = vmatprep.subr.mxu0 0.0
          %7870 = vmatpush1.msra.mxu0 0.0
          %7871 = vmatprep.subr.mxu0 0.0
          %7872 = vmatpush1.msra.mxu0 0.0
          %7873 = vmatprep.subr.mxu0 0.0
          %7874 = vmatpush1.msra.mxu0 0.0
          %7875 = vmatprep.subr.mxu0 0.0
          %7876 = vmatpush1.msra.mxu0 0.0
          %7877 = vmatprep.subr.mxu0 0.0
          %7878 = vmatpush1.msra.mxu0 0.0
          %7879 = vmatprep.subr.mxu0 0.0
          %7880 = vmatpush1.msra.mxu0 0.0
          %7881 = vmatprep.subr.mxu0 0.0
          %7882 = vmatpush1.msra.mxu0 0.0
          %7883 = vmatprep.subr.mxu0 0.0
          %7884 = vmatpush1.msra.mxu0 0.0
          %7885 = vmatprep.subr.mxu0 0.0
          %7886 = vmatpush1.msra.mxu0 0.0
          %7887 = vmatprep.subr.mxu0 0.0
          %7888 = vmatpush1.msra.mxu0 0.0
          %7889 = vmatprep.subr.mxu0 0.0
          %7890 = vmatpush1.msra.mxu0 0.0
          %7891 = vmatprep.subr.mxu0 0.0
          %v7892 = vand.u32 %v4319, 4294901760
          %v7893 = vsub.f32 %v4319, %v7892
          %v7894 = vand.u32 %v7893, 4294901760
          %7895 = vmatpush1.msra.mxu0 %v7894
          %7896 = vmatprep.subr.mxu0 0.0
          %v7897 = vand.u32 %v4318, 4294901760
          %v7898 = vsub.f32 %v4318, %v7897
          %v7899 = vand.u32 %v7898, 4294901760
          %7900 = vmatpush1.msra.mxu0 %v7899
          %7901 = vmatprep.subr.mxu0 0.0
          %7902 = vmatpush2.msra.mxu0 0.0
          %7903 = vmatprep.subr.mxu0 0.0
          %7904 = vmatpush2.msra.mxu0 0.0
          %7905 = vmatprep.subr.mxu0 0.0
          %7906 = vmatpush2.msra.mxu0 0.0
          %7907 = vmatprep.subr.mxu0 0.0
          %7908 = vmatpush2.msra.mxu0 0.0
          %7909 = vmatprep.subr.mxu0 0.0
          %7910 = vmatpush2.msra.mxu0 0.0
          %7911 = vmatprep.subr.mxu0 0.0
          %7912 = vmatpush2.msra.mxu0 0.0
          %7913 = vmatprep.subr.mxu0 0.0
          %7914 = vmatpush2.msra.mxu0 0.0
          %7915 = vmatprep.subr.mxu0 0.0
          %7916 = vmatpush2.msra.mxu0 0.0
          %7917 = vmatprep.subr.mxu0 0.0
          %7918 = vmatpush2.msra.mxu0 0.0
          %7919 = vmatprep.subr.mxu0 0.0
          %7920 = vmatpush2.msra.mxu0 0.0
          %7921 = vmatprep.subr.mxu0 0.0
          %7922 = vmatpush2.msra.mxu0 0.0
          %7923 = vmatprep.subr.mxu0 0.0
          %7924 = vmatpush2.msra.mxu0 0.0
          %7925 = vmatprep.subr.mxu0 0.0
          %7926 = vmatpush2.msra.mxu0 0.0
          %7927 = vmatprep.subr.mxu0 0.0
          %7928 = vmatpush2.msra.mxu0 0.0
          %7929 = vmatprep.subr.mxu0 0.0
          %7930 = vmatpush2.msra.mxu0 0.0
          %7931 = vmatprep.subr.mxu0 0.0
          %7932 = vmatpush2.msra.mxu0 0.0
          %7933 = vmatprep.mubr.f32.mxu0 0.0
          %v7934 = vand.u32 %v4326, 4294901760
          %7935 = vmatmul.mubr.f32.gmra.mxu0 %v7934
          %v7936 = vpop.f32.mrf.mxu0
          %v7937 = vadd.f32 %v7860, %v7936
          %v7938 = vpop.f32.mrf.mxu0
          %7939 = vdwg.mxu0
          %7940 = vmatprep.subr.mxu0 0.0
          %7941 = vmatpush1.msra.mxu0 0.0
          %7942 = vmatprep.subr.mxu0 0.0
          %7943 = vmatpush1.msra.mxu0 0.0
          %7944 = vmatprep.subr.mxu0 0.0
          %7945 = vmatpush1.msra.mxu0 0.0
          %7946 = vmatprep.subr.mxu0 0.0
          %7947 = vmatpush1.msra.mxu0 0.0
          %7948 = vmatprep.subr.mxu0 0.0
          %7949 = vmatpush1.msra.mxu0 0.0
          %7950 = vmatprep.subr.mxu0 0.0
          %7951 = vmatpush1.msra.mxu0 0.0
          %7952 = vmatprep.subr.mxu0 0.0
          %7953 = vmatpush1.msra.mxu0 0.0
          %7954 = vmatprep.subr.mxu0 0.0
          %7955 = vmatpush1.msra.mxu0 0.0
          %7956 = vmatprep.subr.mxu0 0.0
          %7957 = vmatpush1.msra.mxu0 0.0
          %7958 = vmatprep.subr.mxu0 0.0
          %7959 = vmatpush1.msra.mxu0 0.0
          %7960 = vmatprep.subr.mxu0 0.0
          %7961 = vmatpush1.msra.mxu0 0.0
          %7962 = vmatprep.subr.mxu0 0.0
          %7963 = vmatpush1.msra.mxu0 0.0
          %7964 = vmatprep.subr.mxu0 0.0
          %7965 = vmatpush1.msra.mxu0 0.0
          %7966 = vmatprep.subr.mxu0 0.0
          %7967 = vmatpush1.msra.mxu0 0.0
          %7968 = vmatprep.subr.mxu0 0.0
          %v7969 = vand.u32 %v4319, 4294901760
          %7970 = vmatpush1.msra.mxu0 %v7969
          %7971 = vmatprep.subr.mxu0 0.0
          %v7972 = vand.u32 %v4318, 4294901760
          %7973 = vmatpush1.msra.mxu0 %v7972
          %7974 = vmatprep.subr.mxu0 0.0
          %7975 = vmatpush2.msra.mxu0 0.0
          %7976 = vmatprep.subr.mxu0 0.0
          %7977 = vmatpush2.msra.mxu0 0.0
          %7978 = vmatprep.subr.mxu0 0.0
          %7979 = vmatpush2.msra.mxu0 0.0
          %7980 = vmatprep.subr.mxu0 0.0
          %7981 = vmatpush2.msra.mxu0 0.0
          %7982 = vmatprep.subr.mxu0 0.0
          %7983 = vmatpush2.msra.mxu0 0.0
          %7984 = vmatprep.subr.mxu0 0.0
          %7985 = vmatpush2.msra.mxu0 0.0
          %7986 = vmatprep.subr.mxu0 0.0
          %7987 = vmatpush2.msra.mxu0 0.0
          %7988 = vmatprep.subr.mxu0 0.0
          %7989 = vmatpush2.msra.mxu0 0.0
          %7990 = vmatprep.subr.mxu0 0.0
          %7991 = vmatpush2.msra.mxu0 0.0
          %7992 = vmatprep.subr.mxu0 0.0
          %7993 = vmatpush2.msra.mxu0 0.0
          %7994 = vmatprep.subr.mxu0 0.0
          %7995 = vmatpush2.msra.mxu0 0.0
          %7996 = vmatprep.subr.mxu0 0.0
          %7997 = vmatpush2.msra.mxu0 0.0
          %7998 = vmatprep.subr.mxu0 0.0
          %7999 = vmatpush2.msra.mxu0 0.0
          %8000 = vmatprep.subr.mxu0 0.0
          %8001 = vmatpush2.msra.mxu0 0.0
          %8002 = vmatprep.subr.mxu0 0.0
          %8003 = vmatpush2.msra.mxu0 0.0
          %8004 = vmatprep.subr.mxu0 0.0
          %8005 = vmatpush2.msra.mxu0 0.0
          %8006 = vmatprep.mubr.f32.mxu0 0.0
          %v8007 = vand.u32 %v4326, 4294901760
          %8008 = vmatmul.mubr.f32.gmra.mxu0 %v8007
          %v8009 = vpop.f32.mrf.mxu0
          %v8010 = vadd.f32 %v7937, %v8009
          %v8011 = vpop.f32.mrf.mxu0
          %8012 = vdwg.mxu0
          %v8013 = vadd.f32 %v6173, %v6633
          %v8014 = vadd.f32 %v6174, %v7092
          %v8015 = vadd.f32 %v6175, %v7551
          %v8016 = vadd.f32 %v6176, %v8010
          %8017 = vst.msk [vmem:[#allocation3] sm:$0xff] %vm6168, %v8013
          %8018 = vst.msk [vmem:[#allocation3 + $0x8] sm:$0xff] %vm6168, %v8014
          %8019 = vst.msk [vmem:[#allocation3 + $0x10] sm:$0xff] %vm6168, %v8015
          %8020 = vst.msk [vmem:[#allocation3 + $0x18] sm:$0xff] %vm6168, %v8016
        $region144: #{tpu_custom_call.1} parent=123 // pred_fallthru
          _
        %p8021 = scmp.eq.s32.totalorder %s26, 2
        // Predicated region
        $region145: #{tpu_custom_call.1} parent=123 // pred_check
          %p8022 = pneg %p8021
        $region146: #{tpu_custom_call.1} parent=123 // pred_check_branch
          %8024 = sbr.rel (%p8022) target = $region148
        $region147: #{tpu_custom_call.1} parent=123 // pred_region
          %v8025 = vld [vmem:[#allocation2] sm:$0xff]
          %v8026 = vld [vmem:[#allocation2 + $0x8] sm:$0xff]
          %v8027 = vld [vmem:[#allocation2 + $0x10] sm:$0xff]
          %v8028 = vld [vmem:[#allocation2 + $0x18] sm:$0xff]
          %vm8029 = vcmask 261120
          %8030 = vst.msk [vmem:[%s528] sm:$0xff] %vm8029, %v8025
          %8031 = vst.msk [vmem:[%s528 + $0x8] sm:$0xff] %vm8029, %v8026
          %8032 = vst.msk [vmem:[%s528 + $0x10] sm:$0xff] %vm8029, %v8027
          %8033 = vst.msk [vmem:[%s528 + $0x18] sm:$0xff] %vm8029, %v8028
          %v8034 = vld [vmem:[#allocation3] sm:$0xff]
          %v8035 = vld [vmem:[#allocation3 + $0x8] sm:$0xff]
          %v8036 = vld [vmem:[#allocation3 + $0x10] sm:$0xff]
          %v8037 = vld [vmem:[#allocation3 + $0x18] sm:$0xff]
          %8038 = vst.msk [vmem:[%s535] sm:$0xff] %vm8029, %v8034
          %8039 = vst.msk [vmem:[%s535 + $0x8] sm:$0xff] %vm8029, %v8035
          %8040 = vst.msk [vmem:[%s535 + $0x10] sm:$0xff] %vm8029, %v8036
          %8041 = vst.msk [vmem:[%s535 + $0x18] sm:$0xff] %vm8029, %v8037
        $region148: #{tpu_custom_call.1} parent=123 // pred_fallthru
          _
        %s8042 = sand.u32 %s109, 1
        %s8043 = scalar_lea.sflag [#allocation7], %s8042
        %s8044 = sand.u32 %s109, 1
        %s8045 = smul.addr %s8044, 32
        %s8046 = scalar_lea.vmem [#allocation6], %s8045
        %s8047 = sand.u32 %s135, 1
        %s8048 = scalar_lea.sflag [#allocation9], %s8047
        %s8049 = sand.u32 %s135, 1
        %s8050 = smul.addr %s8049, 32
        %s8051 = scalar_lea.vmem [#allocation8], %s8050
        // Predicated region
        $region149: #{tpu_custom_call.1} parent=123 // pred_check
          %p8052 = pneg %p119
        $region150: #{tpu_custom_call.1} parent=123 // pred_check_branch
          %8054 = sbr.rel (%p8052) target = $region152
        $region151: #{tpu_custom_call.1} parent=123 // pred_region
          %s8056 = ssub.s32 512, 512
          %8057 = vsyncadd %s8043, %s8056
          %s8058 = smul.addr %s25, 4
          %s8059 = smul.addr %s8058, 128
          %s8060 = scalar_lea.hbm %s2, %s8059
          %s8061 = sshll.u32 %s8046, 4
          %s8062 = int_to_ptr.vmem [resolvable:$true] %s8061
          %8067 = dma.vmem_to_hbm [thread:$0]  %s8062, 512, %s8060, %s8043, 128, 128, 8
        $region152: #{tpu_custom_call.1} parent=123 // pred_fallthru
          _
        // Predicated region
        $region153: #{tpu_custom_call.1} parent=123 // pred_check
          %p8068 = pneg %p145
        $region154: #{tpu_custom_call.1} parent=123 // pred_check_branch
          %8070 = sbr.rel (%p8068) target = $region156
        $region155: #{tpu_custom_call.1} parent=123 // pred_region
          %s8072 = ssub.s32 512, 512
          %8073 = vsyncadd %s8048, %s8072
          %s8074 = smul.addr %s25, 4
          %s8075 = smul.addr %s8074, 128
          %s8076 = scalar_lea.hbm %s3, %s8075
          %s8077 = sshll.u32 %s8051, 4
          %s8078 = int_to_ptr.vmem [resolvable:$true] %s8077
          %8083 = dma.vmem_to_hbm [thread:$0]  %s8078, 512, %s8076, %s8048, 128, 128, 8
        $region156: #{tpu_custom_call.1} parent=123 // pred_fallthru
          _
      $region124: #{tpu_custom_call.1} parent=5 // pred_fallthru
        _
      %p8084 = scmp.le.s32.totalorder 2, %s16
      // Predicated region
      $region157: #{tpu_custom_call.1} parent=5 // pred_check
        %p8085 = pneg %p8084
      $region158: #{tpu_custom_call.1} parent=5 // pred_check_branch
        %8087 = sbr.rel (%p8085) target = $region160
      $region159: #{tpu_custom_call.1} parent=5 // pred_region
        %s8088 = ssub.s32 %s16, 2
        // Predicated region
        $region161: #{tpu_custom_call.1} parent=159 // pred_check
          %p8089 = pneg %p125
        $region162: #{tpu_custom_call.1} parent=159 // pred_check_branch
          %8091 = sbr.rel (%p8089) target = $region164
        $region163: #{tpu_custom_call.1} parent=159 // pred_region
          %s8092 = sand.u32 %s110, 1
          %s8093 = scalar_lea.sflag [#allocation7], %s8092
          %s8094 = sand.u32 %s110, 1
          %s8095 = smul.addr %s8094, 32
          %s8096 = scalar_lea.vmem [#allocation6], %s8095
          %8097 = dma.done %s8093, 512
        $region164: #{tpu_custom_call.1} parent=159 // pred_fallthru
          _
        // Predicated region
        $region165: #{tpu_custom_call.1} parent=159 // pred_check
          %p8098 = pneg %p151
        $region166: #{tpu_custom_call.1} parent=159 // pred_check_branch
          %8100 = sbr.rel (%p8098) target = $region168
        $region167: #{tpu_custom_call.1} parent=159 // pred_region
          %s8101 = sand.u32 %s136, 1
          %s8102 = scalar_lea.sflag [#allocation9], %s8101
          %s8103 = sand.u32 %s136, 1
          %s8104 = smul.addr %s8103, 32
          %s8105 = scalar_lea.vmem [#allocation8], %s8104
          %8106 = dma.done %s8102, 512
        $region168: #{tpu_custom_call.1} parent=159 // pred_fallthru
          _
      $region160: #{tpu_custom_call.1} parent=5 // pred_fallthru
        _
    $region6: #{tpu_custom_call.1} parent=1 // loop_footer
      %s20 = sadd.s32 1, %s16
    $region7: #{tpu_custom_call.1} parent=1 // loop_footer_branch
      %15 = sbr.rel target = $region3
    $region8: #{tpu_custom_call.1} parent=1 // loop_exit
      _
    %8107 = vsyncpa [#allocation7], 1
    %s8108 = scalar_lea.sflag [#allocation7], 1
    %8109 = vsyncpa %s8108, 1
    %8110 = vsyncpa [#allocation9], 1
    %s8111 = scalar_lea.sflag [#allocation9], 1
    %8112 = vsyncpa %s8111, 1

</llo_original>
